<compile_context>
chip_gen: v7x
topology: tpu7x:2x2x1
jax: 0.10.0
libtpu: 0.0.40
codegen_flags: <defaults>
</compile_context>

<pallas_src>
import math

import jax
import jax.numpy as jnp
from jax.experimental import pallas as pl
from jax.experimental.pallas import tpu as pltpu


_PACK = 64                    # batch elements packed per 128-lane row (2 f32 each)
_TILE_ROWS = 512              # packed rows per grid step -> 32768 elements / step
_VMEM_LIMIT = 48 * 1024 * 1024  # safe on v5e/v6e (128 MiB) and v7x (64 MiB physical)


def _mlp_kernel(x_ref, w1_ref, b1_ref, w2_ref, b2_ref, w3_ref, b3_ref, o_ref):
    # x_ref: (T, 128) packed rows; each row = 64 elements * (x0, x1).
    x = x_ref[...]
    # Layer 1: (T,128) @ (128,1024)  -> 64 groups x 16 features, still lane-packed.
    h1 = jnp.dot(x, w1_ref[...], preferred_element_type=jnp.float32) + b1_ref[...]
    h1 = jnp.maximum(h1, 0.0)
    # Layer 2: (T,1024) @ (1024,2048) -> 64 groups x 32 features.
    h2 = jnp.dot(h1, w2_ref[...], preferred_element_type=jnp.float32) + b2_ref[...]
    h2 = jnp.maximum(h2, 0.0)
    # Layer 3: (T,2048) @ (2048,128) -> packed (y0, y1) pairs, same layout as the input.
    y = jnp.dot(h2, w3_ref[...], preferred_element_type=jnp.float32) + b3_ref[...]
    o_ref[...] = y.astype(o_ref.dtype)


def pack_params(params):
    """Fold the 64-way packing into the weights (done once, like nn.Module init).

    Torch-layout (out, in) weights / (out,) biases -> block-diagonal kron(I_64, W^T)
    matrices and lane-tiled biases, so every layer is a single lane-dense MXU matmul
    on the packed (rows, 128) activation layout.  The extra entries are exact zeros,
    so the math is identical to the per-element MLP.
    """
    w1, b1, w2, b2, w3, b3 = params
    eye = jnp.eye(_PACK, dtype=jnp.float32)
    W1 = jnp.kron(eye, w1.T.astype(jnp.float32))            # (128, 1024)
    W2 = jnp.kron(eye, w2.T.astype(jnp.float32))            # (1024, 2048)
    W3 = jnp.kron(eye, w3.T.astype(jnp.float32))            # (2048, 128)
    B1 = jnp.tile(b1.astype(jnp.float32), _PACK)[None, :]   # (1, 1024)
    B2 = jnp.tile(b2.astype(jnp.float32), _PACK)[None, :]   # (1, 2048)
    B3 = jnp.tile(b3.astype(jnp.float32), _PACK)[None, :]   # (1, 128)
    return (W1, B1, W2, B2, W3, B3)


def _choose_tile_rows(rows):
    if rows <= 8:
        return rows  # full-extent block (allowed even when < 8 sublanes)
    # Aim for >= 2 grid steps (v7x: 2 TensorCores over the parallel axis), cap at
    # _TILE_ROWS, keep the block a multiple of 8 sublanes.
    t = min(_TILE_ROWS, pl.cdiv(rows, 2))
    t = max(8, (t // 8) * 8)
    return min(t, rows)


def simple_generator_forward(x, packed_params):
    """Fused MLP forward: x (B, 2) float32 -> (B, 2) float32 (same as the torch module)."""
    W1, B1, W2, B2, W3, B3 = packed_params
    B = x.shape[0]

    # Pad the batch to a multiple of 64 so (B, 2) reshapes (for free: contiguous
    # row-major bitcast) into lane-dense (rows, 128) packed rows.  No transposes.
    pad = (-B) % _PACK
    if pad:
        # TODO(synk): for huge ragged batches, handle the tail in a separate tiny call
        # instead of copying the whole array with pad.
        x = jnp.pad(x, ((0, pad), (0, 0)))
    rows = (B + pad) // _PACK
    xp = x.reshape(rows, 2 * _PACK)

    t = _choose_tile_rows(rows)
    grid = (pl.cdiv(rows, t),)

    act_spec = pl.BlockSpec((t, 2 * _PACK), lambda i: (i, 0))
    const = lambda a: pl.BlockSpec(a.shape, lambda i: (0, 0))  # VMEM-resident, fetched once

    weight_bytes = sum(int(a.size) * 4 for a in packed_params)
    cost = pl.CostEstimate(
        flops=2 * B * (2 * 16 + 16 * 32 + 32 * 2),   # 1216 * B useful flops
        transcendentals=0,
        bytes_accessed=16 * B + weight_bytes,        # streaming 16 B / element + weights
    )

    try:  # generation-aware VMEM cap; fall back to the conservative constant.
        vmem_cap = pltpu.get_tpu_info().vmem_capacity_bytes
        vmem_limit = min(_VMEM_LIMIT, int(vmem_cap) * 3 // 4)
    except Exception:
        vmem_limit = _VMEM_LIMIT

    out_p = pl.pallas_call(
        _mlp_kernel,
        out_shape=jax.ShapeDtypeStruct((rows, 2 * _PACK), x.dtype),
        grid=grid,
        in_specs=[
            act_spec,             # packed activations, tiled over rows
            const(W1), const(B1),
            const(W2), const(B2),
            const(W3), const(B3),
        ],
        out_specs=act_spec,
        compiler_params=pltpu.CompilerParams(
            dimension_semantics=("parallel",),
            vmem_limit_bytes=vmem_limit,
        ),
        cost_estimate=cost,
    )(xp, W1, B1, W2, B2, W3, B3)

    out = out_p.reshape(rows * _PACK, 2)             # free reshape back to row-major (.., 2)
    return out[:B] if pad else out


def init_params(key):
    """Deterministic init mirroring torch.nn.Linear defaults (uniform +-1/sqrt(fan_in)).

    Weights in PyTorch's native (out_features, in_features) layout, biases (out_features,).
    """
    dims = [(2, 16), (16, 32), (32, 2)]  # (fan_in, fan_out)
    params = []
    for fan_in, fan_out in dims:
        key, kw, kb = jax.random.split(key, 3)
        bound = 1.0 / math.sqrt(fan_in)
        w = jax.random.uniform(kw, (fan_out, fan_in), jnp.float32, -bound, bound)
        b = jax.random.uniform(kb, (fan_out,), jnp.float32, -bound, bound)
        params += [w, b]
    return tuple(params)


def reference_forward(x, params):
    w1, b1, w2, b2, w3, b3 = params
    h1 = jnp.maximum(x @ w1.T + b1, 0.0)
    h2 = jnp.maximum(h1 @ w2.T + b2, 0.0)
    return h2 @ w3.T + b3


if __name__ == "__main__":
    key = jax.random.PRNGKey(0)
    key, kx = jax.random.split(key)
    params = init_params(key)
    packed = pack_params(params)  # done once, like module init

    # Small test: batch padded up to one packed row, single grid step.
    batch = 8
    x = jax.random.normal(kx, (batch, 2), jnp.float32)
    out = jax.block_until_ready(simple_generator_forward(x, packed))
    ref = reference_forward(x, params)
    assert out.shape == (batch, 2)
    assert jnp.allclose(out, ref, atol=1e-4, rtol=1e-4), float(jnp.max(jnp.abs(out - ref)))

    # Larger test: multiple grid steps (parallel axis) including a partial last block.
    key, kx2 = jax.random.split(key)
    batch2 = 2560
    x2 = jax.random.normal(kx2, (batch2, 2), jnp.float32)
    out2 = jax.block_until_ready(simple_generator_forward(x2, packed))
    ref2 = reference_forward(x2, params)
    assert out2.shape == (batch2, 2)
    assert jnp.allclose(out2, ref2, atol=1e-4, rtol=1e-4), float(jnp.max(jnp.abs(out2 - ref2)))

    print("KERNEL_OK")
</pallas_src>

<mosaic_0001>
module attributes {stable_mosaic.version = 11 : i64} {
  func.func @_mlp_kernel(%arg0: i32, %arg1: memref<1x128xf32, #tpu.memory_space<vmem>>, %arg2: memref<128x1024xf32, #tpu.memory_space<vmem>>, %arg3: memref<1x1024xf32, #tpu.memory_space<vmem>>, %arg4: memref<1024x2048xf32, #tpu.memory_space<vmem>>, %arg5: memref<1x2048xf32, #tpu.memory_space<vmem>>, %arg6: memref<2048x128xf32, #tpu.memory_space<vmem>>, %arg7: memref<1x128xf32, #tpu.memory_space<vmem>>, %arg8: memref<1x128xf32, #tpu.memory_space<vmem>>) attributes {dimension_semantics = [#tpu.dimension_semantics<parallel>], iteration_bounds = array<i64: 1>, scalar_prefetch = 0 : i64, scratch_operands = 0 : i64, tpu.core_type = #tpu.core_type<tc>, window_params = [{transform_indices = @transform_0, window_bounds = array<i64: 1, 128>}, {pipeline_mode = #tpu.pipeline_mode<synchronous>, transform_indices = @transform_1, window_bounds = array<i64: 128, 1024>}, {pipeline_mode = #tpu.pipeline_mode<synchronous>, transform_indices = @transform_2, window_bounds = array<i64: 1, 1024>}, {pipeline_mode = #tpu.pipeline_mode<synchronous>, transform_indices = @transform_3, window_bounds = array<i64: 1024, 2048>}, {pipeline_mode = #tpu.pipeline_mode<synchronous>, transform_indices = @transform_4, window_bounds = array<i64: 1, 2048>}, {pipeline_mode = #tpu.pipeline_mode<synchronous>, transform_indices = @transform_5, window_bounds = array<i64: 2048, 128>}, {pipeline_mode = #tpu.pipeline_mode<synchronous>, transform_indices = @transform_6, window_bounds = array<i64: 1, 128>}, {transform_indices = @transform_7, window_bounds = array<i64: 1, 128>}]} {
    %c0 = arith.constant 0 : index
    %c0_0 = arith.constant 0 : index
    %0 = vector.load %arg1[%c0, %c0_0] : memref<1x128xf32, #tpu.memory_space<vmem>>, vector<1x128xf32>
    %c0_1 = arith.constant 0 : index
    %c0_2 = arith.constant 0 : index
    %1 = vector.load %arg2[%c0_1, %c0_2] : memref<128x1024xf32, #tpu.memory_space<vmem>>, vector<128x1024xf32>
    %cst = arith.constant dense<0.000000e+00> : vector<1x1024xf32>
    %2 = tpu.matmul %0, %1, %cst {dimension_numbers = #tpu.dot_dimension_numbers<[1], [0], [0], [1], [0, 0, 1, 1], [], []>} : vector<1x128xf32>, vector<128x1024xf32>, vector<1x1024xf32> -> vector<1x1024xf32>
    %c0_3 = arith.constant 0 : index
    %c0_4 = arith.constant 0 : index
    %3 = vector.load %arg3[%c0_3, %c0_4] : memref<1x1024xf32, #tpu.memory_space<vmem>>, vector<1x1024xf32>
    %4 = arith.addf %2, %3 : vector<1x1024xf32>
    %cst_5 = arith.constant 0.000000e+00 : f32
    %5 = vector.broadcast %cst_5 : f32 to vector<1x1024xf32>
    %6 = arith.maximumf %4, %5 : vector<1x1024xf32>
    %c0_6 = arith.constant 0 : index
    %c0_7 = arith.constant 0 : index
    %7 = vector.load %arg4[%c0_6, %c0_7] : memref<1024x2048xf32, #tpu.memory_space<vmem>>, vector<1024x2048xf32>
    %cst_8 = arith.constant dense<0.000000e+00> : vector<1x2048xf32>
    %8 = tpu.matmul %6, %7, %cst_8 {dimension_numbers = #tpu.dot_dimension_numbers<[1], [0], [0], [1], [0, 0, 1, 1], [], []>} : vector<1x1024xf32>, vector<1024x2048xf32>, vector<1x2048xf32> -> vector<1x2048xf32>
    %c0_9 = arith.constant 0 : index
    %c0_10 = arith.constant 0 : index
    %9 = vector.load %arg5[%c0_9, %c0_10] : memref<1x2048xf32, #tpu.memory_space<vmem>>, vector<1x2048xf32>
    %10 = arith.addf %8, %9 : vector<1x2048xf32>
    %cst_11 = arith.constant 0.000000e+00 : f32
    %11 = vector.broadcast %cst_11 : f32 to vector<1x2048xf32>
    %12 = arith.maximumf %10, %11 : vector<1x2048xf32>
    %c0_12 = arith.constant 0 : index
    %c0_13 = arith.constant 0 : index
    %13 = vector.load %arg6[%c0_12, %c0_13] : memref<2048x128xf32, #tpu.memory_space<vmem>>, vector<2048x128xf32>
    %cst_14 = arith.constant dense<0.000000e+00> : vector<1x128xf32>
    %14 = tpu.matmul %12, %13, %cst_14 {dimension_numbers = #tpu.dot_dimension_numbers<[1], [0], [0], [1], [0, 0, 1, 1], [], []>} : vector<1x2048xf32>, vector<2048x128xf32>, vector<1x128xf32> -> vector<1x128xf32>
    %c0_15 = arith.constant 0 : index
    %c0_16 = arith.constant 0 : index
    %15 = vector.load %arg7[%c0_15, %c0_16] : memref<1x128xf32, #tpu.memory_space<vmem>>, vector<1x128xf32>
    %16 = arith.addf %14, %15 : vector<1x128xf32>
    %c0_17 = arith.constant 0 : index
    %c0_18 = arith.constant 0 : index
    %17 = vector.load %arg8[%c0_17, %c0_18] : memref<1x128xf32, #tpu.memory_space<vmem>>, vector<1x128xf32>
    tpu.vector_store %arg8[%c0_17, %c0_18], %16 {strides = array<i32>} : memref<1x128xf32, #tpu.memory_space<vmem>>, vector<1x128xf32>,
    return
  }
  func.func @transform_0(%arg0: i32) -> (i32, i32) {
    %c0_i32 = arith.constant 0 : i32
    %c0_i32_0 = arith.constant 0 : i32
    return %arg0, %c0_i32 : i32, i32
  }
  func.func @transform_1(%arg0: i32) -> (i32, i32) {
    %c0_i32 = arith.constant 0 : i32
    %c0_i32_0 = arith.constant 0 : i32
    %c0_i32_1 = arith.constant 0 : i32
    return %c0_i32, %c0_i32_0 : i32, i32
  }
  func.func @transform_2(%arg0: i32) -> (i32, i32) {
    %c0_i32 = arith.constant 0 : i32
    %c0_i32_0 = arith.constant 0 : i32
    %c0_i32_1 = arith.constant 0 : i32
    return %c0_i32, %c0_i32_0 : i32, i32
  }
  func.func @transform_3(%arg0: i32) -> (i32, i32) {
    %c0_i32 = arith.constant 0 : i32
    %c0_i32_0 = arith.constant 0 : i32
    %c0_i32_1 = arith.constant 0 : i32
    return %c0_i32, %c0_i32_0 : i32, i32
  }
  func.func @transform_4(%arg0: i32) -> (i32, i32) {
    %c0_i32 = arith.constant 0 : i32
    %c0_i32_0 = arith.constant 0 : i32
    %c0_i32_1 = arith.constant 0 : i32
    return %c0_i32, %c0_i32_0 : i32, i32
  }
  func.func @transform_5(%arg0: i32) -> (i32, i32) {
    %c0_i32 = arith.constant 0 : i32
    %c0_i32_0 = arith.constant 0 : i32
    %c0_i32_1 = arith.constant 0 : i32
    return %c0_i32, %c0_i32_0 : i32, i32
  }
  func.func @transform_6(%arg0: i32) -> (i32, i32) {
    %c0_i32 = arith.constant 0 : i32
    %c0_i32_0 = arith.constant 0 : i32
    %c0_i32_1 = arith.constant 0 : i32
    return %c0_i32, %c0_i32_0 : i32, i32
  }
  func.func @transform_7(%arg0: i32) -> (i32, i32) {
    %c0_i32 = arith.constant 0 : i32
    %c0_i32_0 = arith.constant 0 : i32
    return %arg0, %c0_i32 : i32, i32
  }
}

</mosaic_0001>

<llo_original>
// kernel: tpu_custom_call.1
$region0: #{tpu_custom_call.1}
  #allocation0 [shape = 'u32[]', space=smem, size = 0x4, offset = 0x4, fixed_abs, tag = 'smem constant byte address 0x4 - core index']
  #allocation1 [shape = 'u32[144,128]{1,0:T(1,128)}', space=vmem, size = 0x12000, scoped, tag = 'internal scratch']
  %s0 = inlined_call_operand.hbm [shape: f32[1,128], index: 0, kind: input, shape index: {}]
  %s1 = inlined_call_operand.hbm [shape: f32[128,1024], index: 1, kind: input, shape index: {}]
  %s2 = inlined_call_operand.hbm [shape: f32[1,1024], index: 2, kind: input, shape index: {}]
  %s3 = inlined_call_operand.hbm [shape: f32[1024,2048], index: 3, kind: input, shape index: {}]
  %s4 = inlined_call_operand.hbm [shape: f32[1,2048], index: 4, kind: input, shape index: {}]
  %s5 = inlined_call_operand.hbm [shape: f32[2048,128], index: 5, kind: input, shape index: {}]
  %s6 = inlined_call_operand.hbm [shape: f32[1,128], index: 6, kind: input, shape index: {}]
  %s7 = inlined_call_operand.hbm [shape: f32[1,128], index: 7, kind: output, shape index: {}]
  %s8 = sld [smem:[#allocation0]]
  $region66: #{tpu_custom_call.1} parent=0
    _
  %s10 = ssub.s32 1, %s8
  %s11 = scalar_select 0, %s10, %s8
  $region1: #{tpu_custom_call.1} parent=0
    #allocation2 [shape = 'u8[512]{0}', space=vmem, size = 0x400, scoped, tag = 'input window, operand 0, single buffered']
    #allocation3 [shape = 's32[1]{0}', space=sflag, size = 0x4, scoped, tag = 'scoped memory for tpu_custom_call.1']
    #allocation4 [shape = 's32[1]{0}', space=sflag, size = 0x4, scoped, tag = 'scoped memory for tpu_custom_call.1']
    #allocation5 [shape = 'u8[524288]{0}', space=vmem, size = 0x80000, scoped, tag = 'input window, operand 1, single buffered']
    #allocation6 [shape = 's32[1]{0}', space=sflag, size = 0x4, scoped, tag = 'scoped memory for tpu_custom_call.1']
    #allocation7 [shape = 'u8[4096]{0}', space=vmem, size = 0x1000, scoped, tag = 'input window, operand 2, single buffered']
    #allocation8 [shape = 'u8[8388608]{0}', space=vmem, size = 0x800000, scoped, tag = 'input window, operand 3, single buffered']
    #allocation9 [shape = 's32[1]{0}', space=sflag, size = 0x4, scoped, tag = 'scoped memory for tpu_custom_call.1']
    #allocation10 [shape = 'u8[8192]{0}', space=vmem, size = 0x2000, scoped, tag = 'input window, operand 4, single buffered']
    #allocation11 [shape = 'u8[1048576]{0}', space=vmem, size = 0x100000, scoped, tag = 'input window, operand 5, single buffered']
    #allocation12 [shape = 's32[1]{0}', space=sflag, size = 0x4, scoped, tag = 'scoped memory for tpu_custom_call.1']
    #allocation13 [shape = 'u8[512]{0}', space=vmem, size = 0x400, scoped, tag = 'input window, operand 6, single buffered']
    #allocation14 [shape = 'u8[512]{0}', space=vmem, size = 0x400, scoped, tag = 'output window, operand 0, single buffered']
    %12 = vsyncpa [#allocation3], 0
    %13 = vsyncpa [#allocation6], 0
    %14 = vsyncpa [#allocation9], 0
    %15 = vsyncpa [#allocation12], 0
    %16 = vsyncpa [#allocation4], 0
    // Predicated region
    $region2: #{tpu_custom_call.1} parent=1 // pred_check
      _
    $region3: #{tpu_custom_call.1} parent=1 // pred_check_branch
      %18 = sbr.rel (0) target = $region5
    $region4: #{tpu_custom_call.1} parent=1 // pred_region
      %s20 = ssub.s32 16, 16
      %21 = vsyncadd [#allocation3], %s20
      %s23 = sshll.u32 [#allocation2], 4
      %s24 = int_to_ptr.vmem [resolvable:$true] %s23
      %26 = dma.hbm_to_vmem [thread:$0]  %s0, 16, %s24, [#allocation3]
    $region5: #{tpu_custom_call.1} parent=1 // pred_fallthru
      _
    // Predicated region
    $region6: #{tpu_custom_call.1} parent=1 // pred_check
      _
    $region7: #{tpu_custom_call.1} parent=1 // pred_check_branch
      %28 = sbr.rel (0) target = $region9
    $region8: #{tpu_custom_call.1} parent=1 // pred_region
      %s30 = ssub.s32 16384, 16384
      %31 = vsyncadd [#allocation6], %s30
      %s32 = sshll.u32 [#allocation5], 4
      %s33 = int_to_ptr.vmem [resolvable:$true] %s32
      %38 = dma.hbm_to_vmem [thread:$0]  %s1, 16384, %s33, [#allocation6], 1024, 1024, 64
    $region9: #{tpu_custom_call.1} parent=1 // pred_fallthru
      _
    // Predicated region
    $region10: #{tpu_custom_call.1} parent=1 // pred_check
      _
    $region11: #{tpu_custom_call.1} parent=1 // pred_check_branch
      %40 = sbr.rel (0) target = $region13
    $region12: #{tpu_custom_call.1} parent=1 // pred_region
      %s42 = ssub.s32 128, 128
      %43 = vsyncadd [#allocation6], %s42
      %s45 = sshll.u32 [#allocation7], 4
      %s46 = int_to_ptr.vmem [resolvable:$true] %s45
      %48 = dma.hbm_to_vmem [thread:$0]  %s2, 128, %s46, [#allocation6]
    $region13: #{tpu_custom_call.1} parent=1 // pred_fallthru
      _
    // Predicated region
    $region14: #{tpu_custom_call.1} parent=1 // pred_check
      _
    $region15: #{tpu_custom_call.1} parent=1 // pred_check_branch
      %50 = sbr.rel (0) target = $region17
    $region16: #{tpu_custom_call.1} parent=1 // pred_region
      %s52 = ssub.s32 262144, 262144
      %53 = vsyncadd [#allocation9], %s52
      %s54 = sshll.u32 [#allocation8], 4
      %s55 = int_to_ptr.vmem [resolvable:$true] %s54
      %60 = dma.hbm_to_vmem [thread:$0]  %s3, 262144, %s55, [#allocation9], 2048, 2048, 128
    $region17: #{tpu_custom_call.1} parent=1 // pred_fallthru
      _
    // Predicated region
    $region18: #{tpu_custom_call.1} parent=1 // pred_check
      _
    $region19: #{tpu_custom_call.1} parent=1 // pred_check_branch
      %62 = sbr.rel (0) target = $region21
    $region20: #{tpu_custom_call.1} parent=1 // pred_region
      %s64 = ssub.s32 256, 256
      %65 = vsyncadd [#allocation9], %s64
      %s67 = sshll.u32 [#allocation10], 4
      %s68 = int_to_ptr.vmem [resolvable:$true] %s67
      %70 = dma.hbm_to_vmem [thread:$0]  %s4, 256, %s68, [#allocation9]
    $region21: #{tpu_custom_call.1} parent=1 // pred_fallthru
      _
    // Predicated region
    $region22: #{tpu_custom_call.1} parent=1 // pred_check
      _
    $region23: #{tpu_custom_call.1} parent=1 // pred_check_branch
      %72 = sbr.rel (0) target = $region25
    $region24: #{tpu_custom_call.1} parent=1 // pred_region
      %s74 = ssub.s32 32768, 32768
      %75 = vsyncadd [#allocation12], %s74
      %s76 = sshll.u32 [#allocation11], 4
      %s77 = int_to_ptr.vmem [resolvable:$true] %s76
      %82 = dma.hbm_to_vmem [thread:$0]  %s5, 32768, %s77, [#allocation12], 128, 128, 8
    $region25: #{tpu_custom_call.1} parent=1 // pred_fallthru
      _
    // Predicated region
    $region26: #{tpu_custom_call.1} parent=1 // pred_check
      _
    $region27: #{tpu_custom_call.1} parent=1 // pred_check_branch
      %84 = sbr.rel (0) target = $region29
    $region28: #{tpu_custom_call.1} parent=1 // pred_region
      %s86 = ssub.s32 16, 16
      %87 = vsyncadd [#allocation12], %s86
      %s89 = sshll.u32 [#allocation13], 4
      %s90 = int_to_ptr.vmem [resolvable:$true] %s89
      %92 = dma.hbm_to_vmem [thread:$0]  %s6, 16, %s90, [#allocation12]
    $region29: #{tpu_custom_call.1} parent=1 // pred_fallthru
      _
    // Predicated region
    $region30: #{tpu_custom_call.1} parent=1 // pred_check
      _
    $region31: #{tpu_custom_call.1} parent=1 // pred_check_branch
      %94 = sbr.rel (0) target = $region33
    $region32: #{tpu_custom_call.1} parent=1 // pred_region
      %95 = dma.done [#allocation3], 16
    $region33: #{tpu_custom_call.1} parent=1 // pred_fallthru
      _
    // Predicated region
    $region34: #{tpu_custom_call.1} parent=1 // pred_check
      _
    $region35: #{tpu_custom_call.1} parent=1 // pred_check_branch
      %97 = sbr.rel (0) target = $region37
    $region36: #{tpu_custom_call.1} parent=1 // pred_region
      %98 = dma.done [#allocation6], 16384
    $region37: #{tpu_custom_call.1} parent=1 // pred_fallthru
      _
    // Predicated region
    $region38: #{tpu_custom_call.1} parent=1 // pred_check
      _
    $region39: #{tpu_custom_call.1} parent=1 // pred_check_branch
      %100 = sbr.rel (0) target = $region41
    $region40: #{tpu_custom_call.1} parent=1 // pred_region
      %101 = dma.done [#allocation6], 128
    $region41: #{tpu_custom_call.1} parent=1 // pred_fallthru
      _
    // Predicated region
    $region42: #{tpu_custom_call.1} parent=1 // pred_check
      _
    $region43: #{tpu_custom_call.1} parent=1 // pred_check_branch
      %103 = sbr.rel (0) target = $region45
    $region44: #{tpu_custom_call.1} parent=1 // pred_region
      %104 = dma.done [#allocation9], 262144
    $region45: #{tpu_custom_call.1} parent=1 // pred_fallthru
      _
    // Predicated region
    $region46: #{tpu_custom_call.1} parent=1 // pred_check
      _
    $region47: #{tpu_custom_call.1} parent=1 // pred_check_branch
      %106 = sbr.rel (0) target = $region49
    $region48: #{tpu_custom_call.1} parent=1 // pred_region
      %107 = dma.done [#allocation9], 256
    $region49: #{tpu_custom_call.1} parent=1 // pred_fallthru
      _
    // Predicated region
    $region50: #{tpu_custom_call.1} parent=1 // pred_check
      _
    $region51: #{tpu_custom_call.1} parent=1 // pred_check_branch
      %109 = sbr.rel (0) target = $region53
    $region52: #{tpu_custom_call.1} parent=1 // pred_region
      %110 = dma.done [#allocation12], 32768
    $region53: #{tpu_custom_call.1} parent=1 // pred_fallthru
      _
    // Predicated region
    $region54: #{tpu_custom_call.1} parent=1 // pred_check
      _
    $region55: #{tpu_custom_call.1} parent=1 // pred_check_branch
      %112 = sbr.rel (0) target = $region57
    $region56: #{tpu_custom_call.1} parent=1 // pred_region
      %113 = dma.done [#allocation12], 16
    $region57: #{tpu_custom_call.1} parent=1 // pred_fallthru
      _
    %v114 = vld [vmem:[#allocation2] sm:$0x1]
    %v115 = vld [vmem:[#allocation5] sm:$0xff]
    %v116 = vld [vmem:[#allocation5 + $0x8] sm:$0xff]
    %v117 = vld [vmem:[#allocation5 + $0x10] sm:$0xff]
    %v118 = vld [vmem:[#allocation5 + $0x18] sm:$0xff]
    %v119 = vld [vmem:[#allocation5 + $0x20] sm:$0xff]
    %v120 = vld [vmem:[#allocation5 + $0x28] sm:$0xff]
    %v121 = vld [vmem:[#allocation5 + $0x30] sm:$0xff]
    %v122 = vld [vmem:[#allocation5 + $0x38] sm:$0xff]
    %v123 = vld [vmem:[#allocation5 + $0x40] sm:$0xff]
    %v124 = vld [vmem:[#allocation5 + $0x48] sm:$0xff]
    %v125 = vld [vmem:[#allocation5 + $0x50] sm:$0xff]
    %v126 = vld [vmem:[#allocation5 + $0x58] sm:$0xff]
    %v127 = vld [vmem:[#allocation5 + $0x60] sm:$0xff]
    %v128 = vld [vmem:[#allocation5 + $0x68] sm:$0xff]
    %v129 = vld [vmem:[#allocation5 + $0x70] sm:$0xff]
    %v130 = vld [vmem:[#allocation5 + $0x78] sm:$0xff]
    %v131 = vld [vmem:[#allocation5 + $0x80] sm:$0xff]
    %v132 = vld [vmem:[#allocation5 + $0x88] sm:$0xff]
    %v133 = vld [vmem:[#allocation5 + $0x90] sm:$0xff]
    %v134 = vld [vmem:[#allocation5 + $0x98] sm:$0xff]
    %v135 = vld [vmem:[#allocation5 + $0xa0] sm:$0xff]
    %v136 = vld [vmem:[#allocation5 + $0xa8] sm:$0xff]
    %v137 = vld [vmem:[#allocation5 + $0xb0] sm:$0xff]
    %v138 = vld [vmem:[#allocation5 + $0xb8] sm:$0xff]
    %v139 = vld [vmem:[#allocation5 + $0xc0] sm:$0xff]
    %v140 = vld [vmem:[#allocation5 + $0xc8] sm:$0xff]
    %v141 = vld [vmem:[#allocation5 + $0xd0] sm:$0xff]
    %v142 = vld [vmem:[#allocation5 + $0xd8] sm:$0xff]
    %v143 = vld [vmem:[#allocation5 + $0xe0] sm:$0xff]
    %v144 = vld [vmem:[#allocation5 + $0xe8] sm:$0xff]
    %v145 = vld [vmem:[#allocation5 + $0xf0] sm:$0xff]
    %v146 = vld [vmem:[#allocation5 + $0xf8] sm:$0xff]
    %v147 = vld [vmem:[#allocation5 + $0x100] sm:$0xff]
    %v148 = vld [vmem:[#allocation5 + $0x108] sm:$0xff]
    %v149 = vld [vmem:[#allocation5 + $0x110] sm:$0xff]
    %v150 = vld [vmem:[#allocation5 + $0x118] sm:$0xff]
    %v151 = vld [vmem:[#allocation5 + $0x120] sm:$0xff]
    %v152 = vld [vmem:[#allocation5 + $0x128] sm:$0xff]
    %v153 = vld [vmem:[#allocation5 + $0x130] sm:$0xff]
    %v154 = vld [vmem:[#allocation5 + $0x138] sm:$0xff]
    %v155 = vld [vmem:[#allocation5 + $0x140] sm:$0xff]
    %v156 = vld [vmem:[#allocation5 + $0x148] sm:$0xff]
    %v157 = vld [vmem:[#allocation5 + $0x150] sm:$0xff]
    %v158 = vld [vmem:[#allocation5 + $0x158] sm:$0xff]
    %v159 = vld [vmem:[#allocation5 + $0x160] sm:$0xff]
    %v160 = vld [vmem:[#allocation5 + $0x168] sm:$0xff]
    %v161 = vld [vmem:[#allocation5 + $0x170] sm:$0xff]
    %v162 = vld [vmem:[#allocation5 + $0x178] sm:$0xff]
    %v163 = vld [vmem:[#allocation5 + $0x180] sm:$0xff]
    %v164 = vld [vmem:[#allocation5 + $0x188] sm:$0xff]
    %v165 = vld [vmem:[#allocation5 + $0x190] sm:$0xff]
    %v166 = vld [vmem:[#allocation5 + $0x198] sm:$0xff]
    %v167 = vld [vmem:[#allocation5 + $0x1a0] sm:$0xff]
    %v168 = vld [vmem:[#allocation5 + $0x1a8] sm:$0xff]
    %v169 = vld [vmem:[#allocation5 + $0x1b0] sm:$0xff]
    %v170 = vld [vmem:[#allocation5 + $0x1b8] sm:$0xff]
    %v171 = vld [vmem:[#allocation5 + $0x1c0] sm:$0xff]
    %v172 = vld [vmem:[#allocation5 + $0x1c8] sm:$0xff]
    %v173 = vld [vmem:[#allocation5 + $0x1d0] sm:$0xff]
    %v174 = vld [vmem:[#allocation5 + $0x1d8] sm:$0xff]
    %v175 = vld [vmem:[#allocation5 + $0x1e0] sm:$0xff]
    %v176 = vld [vmem:[#allocation5 + $0x1e8] sm:$0xff]
    %v177 = vld [vmem:[#allocation5 + $0x1f0] sm:$0xff]
    %v178 = vld [vmem:[#allocation5 + $0x1f8] sm:$0xff]
    %v179 = vld [vmem:[#allocation5 + $0x200] sm:$0xff]
    %v180 = vld [vmem:[#allocation5 + $0x208] sm:$0xff]
    %v181 = vld [vmem:[#allocation5 + $0x210] sm:$0xff]
    %v182 = vld [vmem:[#allocation5 + $0x218] sm:$0xff]
    %v183 = vld [vmem:[#allocation5 + $0x220] sm:$0xff]
    %v184 = vld [vmem:[#allocation5 + $0x228] sm:$0xff]
    %v185 = vld [vmem:[#allocation5 + $0x230] sm:$0xff]
    %v186 = vld [vmem:[#allocation5 + $0x238] sm:$0xff]
    %v187 = vld [vmem:[#allocation5 + $0x240] sm:$0xff]
    %v188 = vld [vmem:[#allocation5 + $0x248] sm:$0xff]
    %v189 = vld [vmem:[#allocation5 + $0x250] sm:$0xff]
    %v190 = vld [vmem:[#allocation5 + $0x258] sm:$0xff]
    %v191 = vld [vmem:[#allocation5 + $0x260] sm:$0xff]
    %v192 = vld [vmem:[#allocation5 + $0x268] sm:$0xff]
    %v193 = vld [vmem:[#allocation5 + $0x270] sm:$0xff]
    %v194 = vld [vmem:[#allocation5 + $0x278] sm:$0xff]
    %v195 = vld [vmem:[#allocation5 + $0x280] sm:$0xff]
    %v196 = vld [vmem:[#allocation5 + $0x288] sm:$0xff]
    %v197 = vld [vmem:[#allocation5 + $0x290] sm:$0xff]
    %v198 = vld [vmem:[#allocation5 + $0x298] sm:$0xff]
    %v199 = vld [vmem:[#allocation5 + $0x2a0] sm:$0xff]
    %v200 = vld [vmem:[#allocation5 + $0x2a8] sm:$0xff]
    %v201 = vld [vmem:[#allocation5 + $0x2b0] sm:$0xff]
    %v202 = vld [vmem:[#allocation5 + $0x2b8] sm:$0xff]
    %v203 = vld [vmem:[#allocation5 + $0x2c0] sm:$0xff]
    %v204 = vld [vmem:[#allocation5 + $0x2c8] sm:$0xff]
    %v205 = vld [vmem:[#allocation5 + $0x2d0] sm:$0xff]
    %v206 = vld [vmem:[#allocation5 + $0x2d8] sm:$0xff]
    %v207 = vld [vmem:[#allocation5 + $0x2e0] sm:$0xff]
    %v208 = vld [vmem:[#allocation5 + $0x2e8] sm:$0xff]
    %v209 = vld [vmem:[#allocation5 + $0x2f0] sm:$0xff]
    %v210 = vld [vmem:[#allocation5 + $0x2f8] sm:$0xff]
    %v211 = vld [vmem:[#allocation5 + $0x300] sm:$0xff]
    %v212 = vld [vmem:[#allocation5 + $0x308] sm:$0xff]
    %v213 = vld [vmem:[#allocation5 + $0x310] sm:$0xff]
    %v214 = vld [vmem:[#allocation5 + $0x318] sm:$0xff]
    %v215 = vld [vmem:[#allocation5 + $0x320] sm:$0xff]
    %v216 = vld [vmem:[#allocation5 + $0x328] sm:$0xff]
    %v217 = vld [vmem:[#allocation5 + $0x330] sm:$0xff]
    %v218 = vld [vmem:[#allocation5 + $0x338] sm:$0xff]
    %v219 = vld [vmem:[#allocation5 + $0x340] sm:$0xff]
    %v220 = vld [vmem:[#allocation5 + $0x348] sm:$0xff]
    %v221 = vld [vmem:[#allocation5 + $0x350] sm:$0xff]
    %v222 = vld [vmem:[#allocation5 + $0x358] sm:$0xff]
    %v223 = vld [vmem:[#allocation5 + $0x360] sm:$0xff]
    %v224 = vld [vmem:[#allocation5 + $0x368] sm:$0xff]
    %v225 = vld [vmem:[#allocation5 + $0x370] sm:$0xff]
    %v226 = vld [vmem:[#allocation5 + $0x378] sm:$0xff]
    %v227 = vld [vmem:[#allocation5 + $0x380] sm:$0xff]
    %v228 = vld [vmem:[#allocation5 + $0x388] sm:$0xff]
    %v229 = vld [vmem:[#allocation5 + $0x390] sm:$0xff]
    %v230 = vld [vmem:[#allocation5 + $0x398] sm:$0xff]
    %v231 = vld [vmem:[#allocation5 + $0x3a0] sm:$0xff]
    %v232 = vld [vmem:[#allocation5 + $0x3a8] sm:$0xff]
    %v233 = vld [vmem:[#allocation5 + $0x3b0] sm:$0xff]
    %v234 = vld [vmem:[#allocation5 + $0x3b8] sm:$0xff]
    %v235 = vld [vmem:[#allocation5 + $0x3c0] sm:$0xff]
    %v236 = vld [vmem:[#allocation5 + $0x3c8] sm:$0xff]
    %v237 = vld [vmem:[#allocation5 + $0x3d0] sm:$0xff]
    %v238 = vld [vmem:[#allocation5 + $0x3d8] sm:$0xff]
    %v239 = vld [vmem:[#allocation5 + $0x3e0] sm:$0xff]
    %v240 = vld [vmem:[#allocation5 + $0x3e8] sm:$0xff]
    %v241 = vld [vmem:[#allocation5 + $0x3f0] sm:$0xff]
    %v242 = vld [vmem:[#allocation5 + $0x3f8] sm:$0xff]
    %v243 = vld [vmem:[#allocation7] sm:$0xff]
    %v245 = vlaneseq
    %v246 = vshrl.u32 %v245, 7
    %v247 = vsub.s32 0, %v246
    %v248 = vrot.slane %v243, %v247
    %v249 = vlaneseq
    %v250 = vshrl.u32 %v249, 7
    %v251 = vsub.s32 1, %v250
    %v252 = vrot.slane %v243, %v251
    %v253 = vlaneseq
    %v254 = vshrl.u32 %v253, 7
    %v255 = vsub.s32 2, %v254
    %v256 = vrot.slane %v243, %v255
    %v257 = vlaneseq
    %v258 = vshrl.u32 %v257, 7
    %v259 = vsub.s32 3, %v258
    %v260 = vrot.slane %v243, %v259
    %v261 = vlaneseq
    %v262 = vshrl.u32 %v261, 7
    %v263 = vsub.s32 4, %v262
    %v264 = vrot.slane %v243, %v263
    %v265 = vlaneseq
    %v266 = vshrl.u32 %v265, 7
    %v267 = vsub.s32 5, %v266
    %v268 = vrot.slane %v243, %v267
    %v269 = vlaneseq
    %v270 = vshrl.u32 %v269, 7
    %v271 = vsub.s32 6, %v270
    %v272 = vrot.slane %v243, %v271
    %v273 = vlaneseq
    %v274 = vshrl.u32 %v273, 7
    %v275 = vsub.s32 7, %v274
    %v276 = vrot.slane %v243, %v275
    %285 = vmatprep.subr.mxu0 %v116
    %286 = vmatpush1.msra.mxu0 %v115
    %287 = vmatprep.subr.mxu0 %v124
    %288 = vmatpush1.msra.mxu0 %v123
    %289 = vmatprep.subr.mxu0 %v132
    %290 = vmatpush1.msra.mxu0 %v131
    %291 = vmatprep.subr.mxu0 %v140
    %292 = vmatpush1.msra.mxu0 %v139
    %293 = vmatprep.subr.mxu0 %v148
    %294 = vmatpush1.msra.mxu0 %v147
    %295 = vmatprep.subr.mxu0 %v156
    %296 = vmatpush1.msra.mxu0 %v155
    %297 = vmatprep.subr.mxu0 %v164
    %298 = vmatpush1.msra.mxu0 %v163
    %299 = vmatprep.subr.mxu0 %v172
    %300 = vmatpush1.msra.mxu0 %v171
    %301 = vmatprep.subr.mxu0 %v180
    %302 = vmatpush1.msra.mxu0 %v179
    %303 = vmatprep.subr.mxu0 %v188
    %304 = vmatpush1.msra.mxu0 %v187
    %305 = vmatprep.subr.mxu0 %v196
    %306 = vmatpush1.msra.mxu0 %v195
    %307 = vmatprep.subr.mxu0 %v204
    %308 = vmatpush1.msra.mxu0 %v203
    %309 = vmatprep.subr.mxu0 %v212
    %310 = vmatpush1.msra.mxu0 %v211
    %311 = vmatprep.subr.mxu0 %v220
    %312 = vmatpush1.msra.mxu0 %v219
    %313 = vmatprep.subr.mxu0 %v228
    %314 = vmatpush1.msra.mxu0 %v227
    %315 = vmatprep.subr.mxu0 %v236
    %316 = vmatpush1.msra.mxu0 %v235
    %317 = vmatprep.subr.mxu0 0.0
    %318 = vmatpush1.msra.mxu0 0.0
    %319 = vmatprep.subr.mxu0 0.0
    %320 = vmatpush1.msra.mxu0 0.0
    %321 = vmatprep.subr.mxu0 0.0
    %322 = vmatpush1.msra.mxu0 0.0
    %323 = vmatprep.subr.mxu0 0.0
    %324 = vmatpush1.msra.mxu0 0.0
    %325 = vmatprep.subr.mxu0 0.0
    %326 = vmatpush1.msra.mxu0 0.0
    %327 = vmatprep.subr.mxu0 0.0
    %328 = vmatpush1.msra.mxu0 0.0
    %329 = vmatprep.subr.mxu0 0.0
    %330 = vmatpush1.msra.mxu0 0.0
    %331 = vmatprep.subr.mxu0 0.0
    %332 = vmatpush1.msra.mxu0 0.0
    %333 = vmatprep.subr.mxu0 0.0
    %334 = vmatpush1.msra.mxu0 0.0
    %335 = vmatprep.subr.mxu0 0.0
    %336 = vmatpush1.msra.mxu0 0.0
    %337 = vmatprep.subr.mxu0 0.0
    %338 = vmatpush1.msra.mxu0 0.0
    %339 = vmatprep.subr.mxu0 0.0
    %340 = vmatpush1.msra.mxu0 0.0
    %341 = vmatprep.subr.mxu0 0.0
    %342 = vmatpush1.msra.mxu0 0.0
    %343 = vmatprep.subr.mxu0 0.0
    %344 = vmatpush1.msra.mxu0 0.0
    %345 = vmatprep.subr.mxu0 0.0
    %346 = vmatpush1.msra.mxu0 0.0
    %347 = vmatprep.subr.mxu0 0.0
    %348 = vmatpush1.msra.mxu0 0.0
    %349 = vmatprep.mubr.f32.mxu0 0.0
    %350 = vmatmul.mubr.f32.gmra.mrb[0].mxu0 %v114
    %v351 = vpop.f32.mrb[0].mxu0
    %v352 = vadd.f32 %v248, %v351
    %v353 = vpop.f32.mrb[0].mxu0
    %v354 = vadd.f32 %v252, %v353
    %355 = vdwg.mxu0
    %356 = vmatprep.subr.mxu0 %v118
    %357 = vmatpush1.msra.mxu0 %v117
    %358 = vmatprep.subr.mxu0 %v126
    %359 = vmatpush1.msra.mxu0 %v125
    %360 = vmatprep.subr.mxu0 %v134
    %361 = vmatpush1.msra.mxu0 %v133
    %362 = vmatprep.subr.mxu0 %v142
    %363 = vmatpush1.msra.mxu0 %v141
    %364 = vmatprep.subr.mxu0 %v150
    %365 = vmatpush1.msra.mxu0 %v149
    %366 = vmatprep.subr.mxu0 %v158
    %367 = vmatpush1.msra.mxu0 %v157
    %368 = vmatprep.subr.mxu0 %v166
    %369 = vmatpush1.msra.mxu0 %v165
    %370 = vmatprep.subr.mxu0 %v174
    %371 = vmatpush1.msra.mxu0 %v173
    %372 = vmatprep.subr.mxu0 %v182
    %373 = vmatpush1.msra.mxu0 %v181
    %374 = vmatprep.subr.mxu0 %v190
    %375 = vmatpush1.msra.mxu0 %v189
    %376 = vmatprep.subr.mxu0 %v198
    %377 = vmatpush1.msra.mxu0 %v197
    %378 = vmatprep.subr.mxu0 %v206
    %379 = vmatpush1.msra.mxu0 %v205
    %380 = vmatprep.subr.mxu0 %v214
    %381 = vmatpush1.msra.mxu0 %v213
    %382 = vmatprep.subr.mxu0 %v222
    %383 = vmatpush1.msra.mxu0 %v221
    %384 = vmatprep.subr.mxu0 %v230
    %385 = vmatpush1.msra.mxu0 %v229
    %386 = vmatprep.subr.mxu0 %v238
    %387 = vmatpush1.msra.mxu0 %v237
    %388 = vmatprep.subr.mxu0 0.0
    %389 = vmatpush1.msra.mxu0 0.0
    %390 = vmatprep.subr.mxu0 0.0
    %391 = vmatpush1.msra.mxu0 0.0
    %392 = vmatprep.subr.mxu0 0.0
    %393 = vmatpush1.msra.mxu0 0.0
    %394 = vmatprep.subr.mxu0 0.0
    %395 = vmatpush1.msra.mxu0 0.0
    %396 = vmatprep.subr.mxu0 0.0
    %397 = vmatpush1.msra.mxu0 0.0
    %398 = vmatprep.subr.mxu0 0.0
    %399 = vmatpush1.msra.mxu0 0.0
    %400 = vmatprep.subr.mxu0 0.0
    %401 = vmatpush1.msra.mxu0 0.0
    %402 = vmatprep.subr.mxu0 0.0
    %403 = vmatpush1.msra.mxu0 0.0
    %404 = vmatprep.subr.mxu0 0.0
    %405 = vmatpush1.msra.mxu0 0.0
    %406 = vmatprep.subr.mxu0 0.0
    %407 = vmatpush1.msra.mxu0 0.0
    %408 = vmatprep.subr.mxu0 0.0
    %409 = vmatpush1.msra.mxu0 0.0
    %410 = vmatprep.subr.mxu0 0.0
    %411 = vmatpush1.msra.mxu0 0.0
    %412 = vmatprep.subr.mxu0 0.0
    %413 = vmatpush1.msra.mxu0 0.0
    %414 = vmatprep.subr.mxu0 0.0
    %415 = vmatpush1.msra.mxu0 0.0
    %416 = vmatprep.subr.mxu0 0.0
    %417 = vmatpush1.msra.mxu0 0.0
    %418 = vmatprep.subr.mxu0 0.0
    %419 = vmatpush1.msra.mxu0 0.0
    %420 = vmatprep.mubr.f32.mxu0 0.0
    %421 = vmatmul.mubr.f32.gmra.mrb[0].mxu0 %v114
    %v422 = vpop.f32.mrb[0].mxu0
    %v423 = vadd.f32 %v256, %v422
    %v424 = vpop.f32.mrb[0].mxu0
    %v425 = vadd.f32 %v260, %v424
    %426 = vdwg.mxu0
    %427 = vmatprep.subr.mxu0 %v120
    %428 = vmatpush1.msra.mxu0 %v119
    %429 = vmatprep.subr.mxu0 %v128
    %430 = vmatpush1.msra.mxu0 %v127
    %431 = vmatprep.subr.mxu0 %v136
    %432 = vmatpush1.msra.mxu0 %v135
    %433 = vmatprep.subr.mxu0 %v144
    %434 = vmatpush1.msra.mxu0 %v143
    %435 = vmatprep.subr.mxu0 %v152
    %436 = vmatpush1.msra.mxu0 %v151
    %437 = vmatprep.subr.mxu0 %v160
    %438 = vmatpush1.msra.mxu0 %v159
    %439 = vmatprep.subr.mxu0 %v168
    %440 = vmatpush1.msra.mxu0 %v167
    %441 = vmatprep.subr.mxu0 %v176
    %442 = vmatpush1.msra.mxu0 %v175
    %443 = vmatprep.subr.mxu0 %v184
    %444 = vmatpush1.msra.mxu0 %v183
    %445 = vmatprep.subr.mxu0 %v192
    %446 = vmatpush1.msra.mxu0 %v191
    %447 = vmatprep.subr.mxu0 %v200
    %448 = vmatpush1.msra.mxu0 %v199
    %449 = vmatprep.subr.mxu0 %v208
    %450 = vmatpush1.msra.mxu0 %v207
    %451 = vmatprep.subr.mxu0 %v216
    %452 = vmatpush1.msra.mxu0 %v215
    %453 = vmatprep.subr.mxu0 %v224
    %454 = vmatpush1.msra.mxu0 %v223
    %455 = vmatprep.subr.mxu0 %v232
    %456 = vmatpush1.msra.mxu0 %v231
    %457 = vmatprep.subr.mxu0 %v240
    %458 = vmatpush1.msra.mxu0 %v239
    %459 = vmatprep.subr.mxu0 0.0
    %460 = vmatpush1.msra.mxu0 0.0
    %461 = vmatprep.subr.mxu0 0.0
    %462 = vmatpush1.msra.mxu0 0.0
    %463 = vmatprep.subr.mxu0 0.0
    %464 = vmatpush1.msra.mxu0 0.0
    %465 = vmatprep.subr.mxu0 0.0
    %466 = vmatpush1.msra.mxu0 0.0
    %467 = vmatprep.subr.mxu0 0.0
    %468 = vmatpush1.msra.mxu0 0.0
    %469 = vmatprep.subr.mxu0 0.0
    %470 = vmatpush1.msra.mxu0 0.0
    %471 = vmatprep.subr.mxu0 0.0
    %472 = vmatpush1.msra.mxu0 0.0
    %473 = vmatprep.subr.mxu0 0.0
    %474 = vmatpush1.msra.mxu0 0.0
    %475 = vmatprep.subr.mxu0 0.0
    %476 = vmatpush1.msra.mxu0 0.0
    %477 = vmatprep.subr.mxu0 0.0
    %478 = vmatpush1.msra.mxu0 0.0
    %479 = vmatprep.subr.mxu0 0.0
    %480 = vmatpush1.msra.mxu0 0.0
    %481 = vmatprep.subr.mxu0 0.0
    %482 = vmatpush1.msra.mxu0 0.0
    %483 = vmatprep.subr.mxu0 0.0
    %484 = vmatpush1.msra.mxu0 0.0
    %485 = vmatprep.subr.mxu0 0.0
    %486 = vmatpush1.msra.mxu0 0.0
    %487 = vmatprep.subr.mxu0 0.0
    %488 = vmatpush1.msra.mxu0 0.0
    %489 = vmatprep.subr.mxu0 0.0
    %490 = vmatpush1.msra.mxu0 0.0
    %491 = vmatprep.mubr.f32.mxu0 0.0
    %492 = vmatmul.mubr.f32.gmra.mrb[0].mxu0 %v114
    %v493 = vpop.f32.mrb[0].mxu0
    %v494 = vadd.f32 %v264, %v493
    %v495 = vpop.f32.mrb[0].mxu0
    %v496 = vadd.f32 %v268, %v495
    %497 = vdwg.mxu0
    %498 = vmatprep.subr.mxu0 %v122
    %499 = vmatpush1.msra.mxu0 %v121
    %500 = vmatprep.subr.mxu0 %v130
    %501 = vmatpush1.msra.mxu0 %v129
    %502 = vmatprep.subr.mxu0 %v138
    %503 = vmatpush1.msra.mxu0 %v137
    %504 = vmatprep.subr.mxu0 %v146
    %505 = vmatpush1.msra.mxu0 %v145
    %506 = vmatprep.subr.mxu0 %v154
    %507 = vmatpush1.msra.mxu0 %v153
    %508 = vmatprep.subr.mxu0 %v162
    %509 = vmatpush1.msra.mxu0 %v161
    %510 = vmatprep.subr.mxu0 %v170
    %511 = vmatpush1.msra.mxu0 %v169
    %512 = vmatprep.subr.mxu0 %v178
    %513 = vmatpush1.msra.mxu0 %v177
    %514 = vmatprep.subr.mxu0 %v186
    %515 = vmatpush1.msra.mxu0 %v185
    %516 = vmatprep.subr.mxu0 %v194
    %517 = vmatpush1.msra.mxu0 %v193
    %518 = vmatprep.subr.mxu0 %v202
    %519 = vmatpush1.msra.mxu0 %v201
    %520 = vmatprep.subr.mxu0 %v210
    %521 = vmatpush1.msra.mxu0 %v209
    %522 = vmatprep.subr.mxu0 %v218
    %523 = vmatpush1.msra.mxu0 %v217
    %524 = vmatprep.subr.mxu0 %v226
    %525 = vmatpush1.msra.mxu0 %v225
    %526 = vmatprep.subr.mxu0 %v234
    %527 = vmatpush1.msra.mxu0 %v233
    %528 = vmatprep.subr.mxu0 %v242
    %529 = vmatpush1.msra.mxu0 %v241
    %530 = vmatprep.subr.mxu0 0.0
    %531 = vmatpush1.msra.mxu0 0.0
    %532 = vmatprep.subr.mxu0 0.0
    %533 = vmatpush1.msra.mxu0 0.0
    %534 = vmatprep.subr.mxu0 0.0
    %535 = vmatpush1.msra.mxu0 0.0
    %536 = vmatprep.subr.mxu0 0.0
    %537 = vmatpush1.msra.mxu0 0.0
    %538 = vmatprep.subr.mxu0 0.0
    %539 = vmatpush1.msra.mxu0 0.0
    %540 = vmatprep.subr.mxu0 0.0
    %541 = vmatpush1.msra.mxu0 0.0
    %542 = vmatprep.subr.mxu0 0.0
    %543 = vmatpush1.msra.mxu0 0.0
    %544 = vmatprep.subr.mxu0 0.0
    %545 = vmatpush1.msra.mxu0 0.0
    %546 = vmatprep.subr.mxu0 0.0
    %547 = vmatpush1.msra.mxu0 0.0
    %548 = vmatprep.subr.mxu0 0.0
    %549 = vmatpush1.msra.mxu0 0.0
    %550 = vmatprep.subr.mxu0 0.0
    %551 = vmatpush1.msra.mxu0 0.0
    %552 = vmatprep.subr.mxu0 0.0
    %553 = vmatpush1.msra.mxu0 0.0
    %554 = vmatprep.subr.mxu0 0.0
    %555 = vmatpush1.msra.mxu0 0.0
    %556 = vmatprep.subr.mxu0 0.0
    %557 = vmatpush1.msra.mxu0 0.0
    %558 = vmatprep.subr.mxu0 0.0
    %559 = vmatpush1.msra.mxu0 0.0
    %560 = vmatprep.subr.mxu0 0.0
    %561 = vmatpush1.msra.mxu0 0.0
    %562 = vmatprep.mubr.f32.mxu0 0.0
    %563 = vmatmul.mubr.f32.gmra.mrb[0].mxu0 %v114
    %v564 = vpop.f32.mrb[0].mxu0
    %v565 = vadd.f32 %v272, %v564
    %v566 = vpop.f32.mrb[0].mxu0
    %v567 = vadd.f32 %v276, %v566
    %568 = vdwg.mxu0
    %v569 = vmax.f32 %v352, 0.0
    %v570 = vmax.f32 %v354, 0.0
    %v571 = vmax.f32 %v423, 0.0
    %v572 = vmax.f32 %v425, 0.0
    %v573 = vmax.f32 %v494, 0.0
    %v574 = vmax.f32 %v496, 0.0
    %v575 = vmax.f32 %v565, 0.0
    %v576 = vmax.f32 %v567, 0.0
    %v577 = vld [vmem:[#allocation8] sm:$0xff]
    %v578 = vld [vmem:[#allocation8 + $0x8] sm:$0xff]
    %v579 = vld [vmem:[#allocation8 + $0x10] sm:$0xff]
    %v580 = vld [vmem:[#allocation8 + $0x18] sm:$0xff]
    %v581 = vld [vmem:[#allocation8 + $0x20] sm:$0xff]
    %v582 = vld [vmem:[#allocation8 + $0x28] sm:$0xff]
    %v583 = vld [vmem:[#allocation8 + $0x30] sm:$0xff]
    %v584 = vld [vmem:[#allocation8 + $0x38] sm:$0xff]
    %v585 = vld [vmem:[#allocation8 + $0x40] sm:$0xff]
    %v586 = vld [vmem:[#allocation8 + $0x48] sm:$0xff]
    %v587 = vld [vmem:[#allocation8 + $0x50] sm:$0xff]
    %v588 = vld [vmem:[#allocation8 + $0x58] sm:$0xff]
    %v589 = vld [vmem:[#allocation8 + $0x60] sm:$0xff]
    %v590 = vld [vmem:[#allocation8 + $0x68] sm:$0xff]
    %v591 = vld [vmem:[#allocation8 + $0x70] sm:$0xff]
    %v592 = vld [vmem:[#allocation8 + $0x78] sm:$0xff]
    %v593 = vld [vmem:[#allocation8 + $0x80] sm:$0xff]
    %v594 = vld [vmem:[#allocation8 + $0x88] sm:$0xff]
    %v595 = vld [vmem:[#allocation8 + $0x90] sm:$0xff]
    %v596 = vld [vmem:[#allocation8 + $0x98] sm:$0xff]
    %v597 = vld [vmem:[#allocation8 + $0xa0] sm:$0xff]
    %v598 = vld [vmem:[#allocation8 + $0xa8] sm:$0xff]
    %v599 = vld [vmem:[#allocation8 + $0xb0] sm:$0xff]
    %v600 = vld [vmem:[#allocation8 + $0xb8] sm:$0xff]
    %v601 = vld [vmem:[#allocation8 + $0xc0] sm:$0xff]
    %v602 = vld [vmem:[#allocation8 + $0xc8] sm:$0xff]
    %v603 = vld [vmem:[#allocation8 + $0xd0] sm:$0xff]
    %v604 = vld [vmem:[#allocation8 + $0xd8] sm:$0xff]
    %v605 = vld [vmem:[#allocation8 + $0xe0] sm:$0xff]
    %v606 = vld [vmem:[#allocation8 + $0xe8] sm:$0xff]
    %v607 = vld [vmem:[#allocation8 + $0xf0] sm:$0xff]
    %v608 = vld [vmem:[#allocation8 + $0xf8] sm:$0xff]
    %v609 = vld [vmem:[#allocation8 + $0x100] sm:$0xff]
    %v610 = vld [vmem:[#allocation8 + $0x108] sm:$0xff]
    %v611 = vld [vmem:[#allocation8 + $0x110] sm:$0xff]
    %v612 = vld [vmem:[#allocation8 + $0x118] sm:$0xff]
    %v613 = vld [vmem:[#allocation8 + $0x120] sm:$0xff]
    %v614 = vld [vmem:[#allocation8 + $0x128] sm:$0xff]
    %v615 = vld [vmem:[#allocation8 + $0x130] sm:$0xff]
    %v616 = vld [vmem:[#allocation8 + $0x138] sm:$0xff]
    %v617 = vld [vmem:[#allocation8 + $0x140] sm:$0xff]
    %v618 = vld [vmem:[#allocation8 + $0x148] sm:$0xff]
    %v619 = vld [vmem:[#allocation8 + $0x150] sm:$0xff]
    %v620 = vld [vmem:[#allocation8 + $0x158] sm:$0xff]
    %v621 = vld [vmem:[#allocation8 + $0x160] sm:$0xff]
    %v622 = vld [vmem:[#allocation8 + $0x168] sm:$0xff]
    %v623 = vld [vmem:[#allocation8 + $0x170] sm:$0xff]
    %v624 = vld [vmem:[#allocation8 + $0x178] sm:$0xff]
    %v625 = vld [vmem:[#allocation8 + $0x180] sm:$0xff]
    %v626 = vld [vmem:[#allocation8 + $0x188] sm:$0xff]
    %v627 = vld [vmem:[#allocation8 + $0x190] sm:$0xff]
    %v628 = vld [vmem:[#allocation8 + $0x198] sm:$0xff]
    %v629 = vld [vmem:[#allocation8 + $0x1a0] sm:$0xff]
    %v630 = vld [vmem:[#allocation8 + $0x1a8] sm:$0xff]
    %v631 = vld [vmem:[#allocation8 + $0x1b0] sm:$0xff]
    %v632 = vld [vmem:[#allocation8 + $0x1b8] sm:$0xff]
    %v633 = vld [vmem:[#allocation8 + $0x1c0] sm:$0xff]
    %v634 = vld [vmem:[#allocation8 + $0x1c8] sm:$0xff]
    %v635 = vld [vmem:[#allocation8 + $0x1d0] sm:$0xff]
    %v636 = vld [vmem:[#allocation8 + $0x1d8] sm:$0xff]
    %v637 = vld [vmem:[#allocation8 + $0x1e0] sm:$0xff]
    %v638 = vld [vmem:[#allocation8 + $0x1e8] sm:$0xff]
    %v639 = vld [vmem:[#allocation8 + $0x1f0] sm:$0xff]
    %v640 = vld [vmem:[#allocation8 + $0x1f8] sm:$0xff]
    %v641 = vld [vmem:[#allocation8 + $0x200] sm:$0xff]
    %v642 = vld [vmem:[#allocation8 + $0x208] sm:$0xff]
    %v643 = vld [vmem:[#allocation8 + $0x210] sm:$0xff]
    %v644 = vld [vmem:[#allocation8 + $0x218] sm:$0xff]
    %v645 = vld [vmem:[#allocation8 + $0x220] sm:$0xff]
    %v646 = vld [vmem:[#allocation8 + $0x228] sm:$0xff]
    %v647 = vld [vmem:[#allocation8 + $0x230] sm:$0xff]
    %v648 = vld [vmem:[#allocation8 + $0x238] sm:$0xff]
    %v649 = vld [vmem:[#allocation8 + $0x240] sm:$0xff]
    %v650 = vld [vmem:[#allocation8 + $0x248] sm:$0xff]
    %v651 = vld [vmem:[#allocation8 + $0x250] sm:$0xff]
    %v652 = vld [vmem:[#allocation8 + $0x258] sm:$0xff]
    %v653 = vld [vmem:[#allocation8 + $0x260] sm:$0xff]
    %v654 = vld [vmem:[#allocation8 + $0x268] sm:$0xff]
    %v655 = vld [vmem:[#allocation8 + $0x270] sm:$0xff]
    %v656 = vld [vmem:[#allocation8 + $0x278] sm:$0xff]
    %v657 = vld [vmem:[#allocation8 + $0x280] sm:$0xff]
    %v658 = vld [vmem:[#allocation8 + $0x288] sm:$0xff]
    %v659 = vld [vmem:[#allocation8 + $0x290] sm:$0xff]
    %v660 = vld [vmem:[#allocation8 + $0x298] sm:$0xff]
    %v661 = vld [vmem:[#allocation8 + $0x2a0] sm:$0xff]
    %v662 = vld [vmem:[#allocation8 + $0x2a8] sm:$0xff]
    %v663 = vld [vmem:[#allocation8 + $0x2b0] sm:$0xff]
    %v664 = vld [vmem:[#allocation8 + $0x2b8] sm:$0xff]
    %v665 = vld [vmem:[#allocation8 + $0x2c0] sm:$0xff]
    %v666 = vld [vmem:[#allocation8 + $0x2c8] sm:$0xff]
    %v667 = vld [vmem:[#allocation8 + $0x2d0] sm:$0xff]
    %v668 = vld [vmem:[#allocation8 + $0x2d8] sm:$0xff]
    %v669 = vld [vmem:[#allocation8 + $0x2e0] sm:$0xff]
    %v670 = vld [vmem:[#allocation8 + $0x2e8] sm:$0xff]
    %v671 = vld [vmem:[#allocation8 + $0x2f0] sm:$0xff]
    %v672 = vld [vmem:[#allocation8 + $0x2f8] sm:$0xff]
    %v673 = vld [vmem:[#allocation8 + $0x300] sm:$0xff]
    %v674 = vld [vmem:[#allocation8 + $0x308] sm:$0xff]
    %v675 = vld [vmem:[#allocation8 + $0x310] sm:$0xff]
    %v676 = vld [vmem:[#allocation8 + $0x318] sm:$0xff]
    %v677 = vld [vmem:[#allocation8 + $0x320] sm:$0xff]
    %v678 = vld [vmem:[#allocation8 + $0x328] sm:$0xff]
    %v679 = vld [vmem:[#allocation8 + $0x330] sm:$0xff]
    %v680 = vld [vmem:[#allocation8 + $0x338] sm:$0xff]
    %v681 = vld [vmem:[#allocation8 + $0x340] sm:$0xff]
    %v682 = vld [vmem:[#allocation8 + $0x348] sm:$0xff]
    %v683 = vld [vmem:[#allocation8 + $0x350] sm:$0xff]
    %v684 = vld [vmem:[#allocation8 + $0x358] sm:$0xff]
    %v685 = vld [vmem:[#allocation8 + $0x360] sm:$0xff]
    %v686 = vld [vmem:[#allocation8 + $0x368] sm:$0xff]
    %v687 = vld [vmem:[#allocation8 + $0x370] sm:$0xff]
    %v688 = vld [vmem:[#allocation8 + $0x378] sm:$0xff]
    %v689 = vld [vmem:[#allocation8 + $0x380] sm:$0xff]
    %v690 = vld [vmem:[#allocation8 + $0x388] sm:$0xff]
    %v691 = vld [vmem:[#allocation8 + $0x390] sm:$0xff]
    %v692 = vld [vmem:[#allocation8 + $0x398] sm:$0xff]
    %v693 = vld [vmem:[#allocation8 + $0x3a0] sm:$0xff]
    %v694 = vld [vmem:[#allocation8 + $0x3a8] sm:$0xff]
    %v695 = vld [vmem:[#allocation8 + $0x3b0] sm:$0xff]
    %v696 = vld [vmem:[#allocation8 + $0x3b8] sm:$0xff]
    %v697 = vld [vmem:[#allocation8 + $0x3c0] sm:$0xff]
    %v698 = vld [vmem:[#allocation8 + $0x3c8] sm:$0xff]
    %v699 = vld [vmem:[#allocation8 + $0x3d0] sm:$0xff]
    %v700 = vld [vmem:[#allocation8 + $0x3d8] sm:$0xff]
    %v701 = vld [vmem:[#allocation8 + $0x3e0] sm:$0xff]
    %v702 = vld [vmem:[#allocation8 + $0x3e8] sm:$0xff]
    %v703 = vld [vmem:[#allocation8 + $0x3f0] sm:$0xff]
    %v704 = vld [vmem:[#allocation8 + $0x3f8] sm:$0xff]
    %v705 = vld [vmem:[#allocation8 + $0x400] sm:$0xff]
    %v706 = vld [vmem:[#allocation8 + $0x408] sm:$0xff]
    %v707 = vld [vmem:[#allocation8 + $0x410] sm:$0xff]
    %v708 = vld [vmem:[#allocation8 + $0x418] sm:$0xff]
    %v709 = vld [vmem:[#allocation8 + $0x420] sm:$0xff]
    %v710 = vld [vmem:[#allocation8 + $0x428] sm:$0xff]
    %v711 = vld [vmem:[#allocation8 + $0x430] sm:$0xff]
    %v712 = vld [vmem:[#allocation8 + $0x438] sm:$0xff]
    %v713 = vld [vmem:[#allocation8 + $0x440] sm:$0xff]
    %v714 = vld [vmem:[#allocation8 + $0x448] sm:$0xff]
    %v715 = vld [vmem:[#allocation8 + $0x450] sm:$0xff]
    %v716 = vld [vmem:[#allocation8 + $0x458] sm:$0xff]
    %v717 = vld [vmem:[#allocation8 + $0x460] sm:$0xff]
    %v718 = vld [vmem:[#allocation8 + $0x468] sm:$0xff]
    %v719 = vld [vmem:[#allocation8 + $0x470] sm:$0xff]
    %v720 = vld [vmem:[#allocation8 + $0x478] sm:$0xff]
    %v721 = vld [vmem:[#allocation8 + $0x480] sm:$0xff]
    %v722 = vld [vmem:[#allocation8 + $0x488] sm:$0xff]
    %v723 = vld [vmem:[#allocation8 + $0x490] sm:$0xff]
    %v724 = vld [vmem:[#allocation8 + $0x498] sm:$0xff]
    %v725 = vld [vmem:[#allocation8 + $0x4a0] sm:$0xff]
    %v726 = vld [vmem:[#allocation8 + $0x4a8] sm:$0xff]
    %v727 = vld [vmem:[#allocation8 + $0x4b0] sm:$0xff]
    %v728 = vld [vmem:[#allocation8 + $0x4b8] sm:$0xff]
    %v729 = vld [vmem:[#allocation8 + $0x4c0] sm:$0xff]
    %v730 = vld [vmem:[#allocation8 + $0x4c8] sm:$0xff]
    %v731 = vld [vmem:[#allocation8 + $0x4d0] sm:$0xff]
    %v732 = vld [vmem:[#allocation8 + $0x4d8] sm:$0xff]
    %v733 = vld [vmem:[#allocation8 + $0x4e0] sm:$0xff]
    %v734 = vld [vmem:[#allocation8 + $0x4e8] sm:$0xff]
    %v735 = vld [vmem:[#allocation8 + $0x4f0] sm:$0xff]
    %v736 = vld [vmem:[#allocation8 + $0x4f8] sm:$0xff]
    %v737 = vld [vmem:[#allocation8 + $0x500] sm:$0xff]
    %v738 = vld [vmem:[#allocation8 + $0x508] sm:$0xff]
    %v739 = vld [vmem:[#allocation8 + $0x510] sm:$0xff]
    %v740 = vld [vmem:[#allocation8 + $0x518] sm:$0xff]
    %v741 = vld [vmem:[#allocation8 + $0x520] sm:$0xff]
    %v742 = vld [vmem:[#allocation8 + $0x528] sm:$0xff]
    %v743 = vld [vmem:[#allocation8 + $0x530] sm:$0xff]
    %v744 = vld [vmem:[#allocation8 + $0x538] sm:$0xff]
    %v745 = vld [vmem:[#allocation8 + $0x540] sm:$0xff]
    %v746 = vld [vmem:[#allocation8 + $0x548] sm:$0xff]
    %v747 = vld [vmem:[#allocation8 + $0x550] sm:$0xff]
    %v748 = vld [vmem:[#allocation8 + $0x558] sm:$0xff]
    %v749 = vld [vmem:[#allocation8 + $0x560] sm:$0xff]
    %v750 = vld [vmem:[#allocation8 + $0x568] sm:$0xff]
    %v751 = vld [vmem:[#allocation8 + $0x570] sm:$0xff]
    %v752 = vld [vmem:[#allocation8 + $0x578] sm:$0xff]
    %v753 = vld [vmem:[#allocation8 + $0x580] sm:$0xff]
    %v754 = vld [vmem:[#allocation8 + $0x588] sm:$0xff]
    %v755 = vld [vmem:[#allocation8 + $0x590] sm:$0xff]
    %v756 = vld [vmem:[#allocation8 + $0x598] sm:$0xff]
    %v757 = vld [vmem:[#allocation8 + $0x5a0] sm:$0xff]
    %v758 = vld [vmem:[#allocation8 + $0x5a8] sm:$0xff]
    %v759 = vld [vmem:[#allocation8 + $0x5b0] sm:$0xff]
    %v760 = vld [vmem:[#allocation8 + $0x5b8] sm:$0xff]
    %v761 = vld [vmem:[#allocation8 + $0x5c0] sm:$0xff]
    %v762 = vld [vmem:[#allocation8 + $0x5c8] sm:$0xff]
    %v763 = vld [vmem:[#allocation8 + $0x5d0] sm:$0xff]
    %v764 = vld [vmem:[#allocation8 + $0x5d8] sm:$0xff]
    %v765 = vld [vmem:[#allocation8 + $0x5e0] sm:$0xff]
    %v766 = vld [vmem:[#allocation8 + $0x5e8] sm:$0xff]
    %v767 = vld [vmem:[#allocation8 + $0x5f0] sm:$0xff]
    %v768 = vld [vmem:[#allocation8 + $0x5f8] sm:$0xff]
    %v769 = vld [vmem:[#allocation8 + $0x600] sm:$0xff]
    %v770 = vld [vmem:[#allocation8 + $0x608] sm:$0xff]
    %v771 = vld [vmem:[#allocation8 + $0x610] sm:$0xff]
    %v772 = vld [vmem:[#allocation8 + $0x618] sm:$0xff]
    %v773 = vld [vmem:[#allocation8 + $0x620] sm:$0xff]
    %v774 = vld [vmem:[#allocation8 + $0x628] sm:$0xff]
    %v775 = vld [vmem:[#allocation8 + $0x630] sm:$0xff]
    %v776 = vld [vmem:[#allocation8 + $0x638] sm:$0xff]
    %v777 = vld [vmem:[#allocation8 + $0x640] sm:$0xff]
    %v778 = vld [vmem:[#allocation8 + $0x648] sm:$0xff]
    %v779 = vld [vmem:[#allocation8 + $0x650] sm:$0xff]
    %v780 = vld [vmem:[#allocation8 + $0x658] sm:$0xff]
    %v781 = vld [vmem:[#allocation8 + $0x660] sm:$0xff]
    %v782 = vld [vmem:[#allocation8 + $0x668] sm:$0xff]
    %v783 = vld [vmem:[#allocation8 + $0x670] sm:$0xff]
    %v784 = vld [vmem:[#allocation8 + $0x678] sm:$0xff]
    %v785 = vld [vmem:[#allocation8 + $0x680] sm:$0xff]
    %v786 = vld [vmem:[#allocation8 + $0x688] sm:$0xff]
    %v787 = vld [vmem:[#allocation8 + $0x690] sm:$0xff]
    %v788 = vld [vmem:[#allocation8 + $0x698] sm:$0xff]
    %v789 = vld [vmem:[#allocation8 + $0x6a0] sm:$0xff]
    %v790 = vld [vmem:[#allocation8 + $0x6a8] sm:$0xff]
    %v791 = vld [vmem:[#allocation8 + $0x6b0] sm:$0xff]
    %v792 = vld [vmem:[#allocation8 + $0x6b8] sm:$0xff]
    %v793 = vld [vmem:[#allocation8 + $0x6c0] sm:$0xff]
    %v794 = vld [vmem:[#allocation8 + $0x6c8] sm:$0xff]
    %v795 = vld [vmem:[#allocation8 + $0x6d0] sm:$0xff]
    %v796 = vld [vmem:[#allocation8 + $0x6d8] sm:$0xff]
    %v797 = vld [vmem:[#allocation8 + $0x6e0] sm:$0xff]
    %v798 = vld [vmem:[#allocation8 + $0x6e8] sm:$0xff]
    %v799 = vld [vmem:[#allocation8 + $0x6f0] sm:$0xff]
    %v800 = vld [vmem:[#allocation8 + $0x6f8] sm:$0xff]
    %v801 = vld [vmem:[#allocation8 + $0x700] sm:$0xff]
    %v802 = vld [vmem:[#allocation8 + $0x708] sm:$0xff]
    %v803 = vld [vmem:[#allocation8 + $0x710] sm:$0xff]
    %v804 = vld [vmem:[#allocation8 + $0x718] sm:$0xff]
    %v805 = vld [vmem:[#allocation8 + $0x720] sm:$0xff]
    %v806 = vld [vmem:[#allocation8 + $0x728] sm:$0xff]
    %v807 = vld [vmem:[#allocation8 + $0x730] sm:$0xff]
    %v808 = vld [vmem:[#allocation8 + $0x738] sm:$0xff]
    %v809 = vld [vmem:[#allocation8 + $0x740] sm:$0xff]
    %v810 = vld [vmem:[#allocation8 + $0x748] sm:$0xff]
    %v811 = vld [vmem:[#allocation8 + $0x750] sm:$0xff]
    %v812 = vld [vmem:[#allocation8 + $0x758] sm:$0xff]
    %v813 = vld [vmem:[#allocation8 + $0x760] sm:$0xff]
    %v814 = vld [vmem:[#allocation8 + $0x768] sm:$0xff]
    %v815 = vld [vmem:[#allocation8 + $0x770] sm:$0xff]
    %v816 = vld [vmem:[#allocation8 + $0x778] sm:$0xff]
    %v817 = vld [vmem:[#allocation8 + $0x780] sm:$0xff]
    %v818 = vld [vmem:[#allocation8 + $0x788] sm:$0xff]
    %v819 = vld [vmem:[#allocation8 + $0x790] sm:$0xff]
    %v820 = vld [vmem:[#allocation8 + $0x798] sm:$0xff]
    %v821 = vld [vmem:[#allocation8 + $0x7a0] sm:$0xff]
    %v822 = vld [vmem:[#allocation8 + $0x7a8] sm:$0xff]
    %v823 = vld [vmem:[#allocation8 + $0x7b0] sm:$0xff]
    %v824 = vld [vmem:[#allocation8 + $0x7b8] sm:$0xff]
    %v825 = vld [vmem:[#allocation8 + $0x7c0] sm:$0xff]
    %v826 = vld [vmem:[#allocation8 + $0x7c8] sm:$0xff]
    %v827 = vld [vmem:[#allocation8 + $0x7d0] sm:$0xff]
    %v828 = vld [vmem:[#allocation8 + $0x7d8] sm:$0xff]
    %v829 = vld [vmem:[#allocation8 + $0x7e0] sm:$0xff]
    %v830 = vld [vmem:[#allocation8 + $0x7e8] sm:$0xff]
    %v831 = vld [vmem:[#allocation8 + $0x7f0] sm:$0xff]
    %v832 = vld [vmem:[#allocation8 + $0x7f8] sm:$0xff]
    %v833 = vld [vmem:[#allocation8 + $0x800] sm:$0xff]
    %v834 = vld [vmem:[#allocation8 + $0x808] sm:$0xff]
    %v835 = vld [vmem:[#allocation8 + $0x810] sm:$0xff]
    %v836 = vld [vmem:[#allocation8 + $0x818] sm:$0xff]
    %v837 = vld [vmem:[#allocation8 + $0x820] sm:$0xff]
    %v838 = vld [vmem:[#allocation8 + $0x828] sm:$0xff]
    %v839 = vld [vmem:[#allocation8 + $0x830] sm:$0xff]
    %v840 = vld [vmem:[#allocation8 + $0x838] sm:$0xff]
    %v841 = vld [vmem:[#allocation8 + $0x840] sm:$0xff]
    %v842 = vld [vmem:[#allocation8 + $0x848] sm:$0xff]
    %v843 = vld [vmem:[#allocation8 + $0x850] sm:$0xff]
    %v844 = vld [vmem:[#allocation8 + $0x858] sm:$0xff]
    %v845 = vld [vmem:[#allocation8 + $0x860] sm:$0xff]
    %v846 = vld [vmem:[#allocation8 + $0x868] sm:$0xff]
    %v847 = vld [vmem:[#allocation8 + $0x870] sm:$0xff]
    %v848 = vld [vmem:[#allocation8 + $0x878] sm:$0xff]
    %v849 = vld [vmem:[#allocation8 + $0x880] sm:$0xff]
    %v850 = vld [vmem:[#allocation8 + $0x888] sm:$0xff]
    %v851 = vld [vmem:[#allocation8 + $0x890] sm:$0xff]
    %v852 = vld [vmem:[#allocation8 + $0x898] sm:$0xff]
    %v853 = vld [vmem:[#allocation8 + $0x8a0] sm:$0xff]
    %v854 = vld [vmem:[#allocation8 + $0x8a8] sm:$0xff]
    %v855 = vld [vmem:[#allocation8 + $0x8b0] sm:$0xff]
    %v856 = vld [vmem:[#allocation8 + $0x8b8] sm:$0xff]
    %v857 = vld [vmem:[#allocation8 + $0x8c0] sm:$0xff]
    %v858 = vld [vmem:[#allocation8 + $0x8c8] sm:$0xff]
    %v859 = vld [vmem:[#allocation8 + $0x8d0] sm:$0xff]
    %v860 = vld [vmem:[#allocation8 + $0x8d8] sm:$0xff]
    %v861 = vld [vmem:[#allocation8 + $0x8e0] sm:$0xff]
    %v862 = vld [vmem:[#allocation8 + $0x8e8] sm:$0xff]
    %v863 = vld [vmem:[#allocation8 + $0x8f0] sm:$0xff]
    %v864 = vld [vmem:[#allocation8 + $0x8f8] sm:$0xff]
    %v865 = vld [vmem:[#allocation8 + $0x900] sm:$0xff]
    %v866 = vld [vmem:[#allocation8 + $0x908] sm:$0xff]
    %v867 = vld [vmem:[#allocation8 + $0x910] sm:$0xff]
    %v868 = vld [vmem:[#allocation8 + $0x918] sm:$0xff]
    %v869 = vld [vmem:[#allocation8 + $0x920] sm:$0xff]
    %v870 = vld [vmem:[#allocation8 + $0x928] sm:$0xff]
    %v871 = vld [vmem:[#allocation8 + $0x930] sm:$0xff]
    %v872 = vld [vmem:[#allocation8 + $0x938] sm:$0xff]
    %v873 = vld [vmem:[#allocation8 + $0x940] sm:$0xff]
    %v874 = vld [vmem:[#allocation8 + $0x948] sm:$0xff]
    %v875 = vld [vmem:[#allocation8 + $0x950] sm:$0xff]
    %v876 = vld [vmem:[#allocation8 + $0x958] sm:$0xff]
    %v877 = vld [vmem:[#allocation8 + $0x960] sm:$0xff]
    %v878 = vld [vmem:[#allocation8 + $0x968] sm:$0xff]
    %v879 = vld [vmem:[#allocation8 + $0x970] sm:$0xff]
    %v880 = vld [vmem:[#allocation8 + $0x978] sm:$0xff]
    %v881 = vld [vmem:[#allocation8 + $0x980] sm:$0xff]
    %v882 = vld [vmem:[#allocation8 + $0x988] sm:$0xff]
    %v883 = vld [vmem:[#allocation8 + $0x990] sm:$0xff]
    %v884 = vld [vmem:[#allocation8 + $0x998] sm:$0xff]
    %v885 = vld [vmem:[#allocation8 + $0x9a0] sm:$0xff]
    %v886 = vld [vmem:[#allocation8 + $0x9a8] sm:$0xff]
    %v887 = vld [vmem:[#allocation8 + $0x9b0] sm:$0xff]
    %v888 = vld [vmem:[#allocation8 + $0x9b8] sm:$0xff]
    %v889 = vld [vmem:[#allocation8 + $0x9c0] sm:$0xff]
    %v890 = vld [vmem:[#allocation8 + $0x9c8] sm:$0xff]
    %v891 = vld [vmem:[#allocation8 + $0x9d0] sm:$0xff]
    %v892 = vld [vmem:[#allocation8 + $0x9d8] sm:$0xff]
    %v893 = vld [vmem:[#allocation8 + $0x9e0] sm:$0xff]
    %v894 = vld [vmem:[#allocation8 + $0x9e8] sm:$0xff]
    %v895 = vld [vmem:[#allocation8 + $0x9f0] sm:$0xff]
    %v896 = vld [vmem:[#allocation8 + $0x9f8] sm:$0xff]
    %v897 = vld [vmem:[#allocation8 + $0xa00] sm:$0xff]
    %v898 = vld [vmem:[#allocation8 + $0xa08] sm:$0xff]
    %v899 = vld [vmem:[#allocation8 + $0xa10] sm:$0xff]
    %v900 = vld [vmem:[#allocation8 + $0xa18] sm:$0xff]
    %v901 = vld [vmem:[#allocation8 + $0xa20] sm:$0xff]
    %v902 = vld [vmem:[#allocation8 + $0xa28] sm:$0xff]
    %v903 = vld [vmem:[#allocation8 + $0xa30] sm:$0xff]
    %v904 = vld [vmem:[#allocation8 + $0xa38] sm:$0xff]
    %v905 = vld [vmem:[#allocation8 + $0xa40] sm:$0xff]
    %v906 = vld [vmem:[#allocation8 + $0xa48] sm:$0xff]
    %v907 = vld [vmem:[#allocation8 + $0xa50] sm:$0xff]
    %v908 = vld [vmem:[#allocation8 + $0xa58] sm:$0xff]
    %v909 = vld [vmem:[#allocation8 + $0xa60] sm:$0xff]
    %v910 = vld [vmem:[#allocation8 + $0xa68] sm:$0xff]
    %v911 = vld [vmem:[#allocation8 + $0xa70] sm:$0xff]
    %v912 = vld [vmem:[#allocation8 + $0xa78] sm:$0xff]
    %v913 = vld [vmem:[#allocation8 + $0xa80] sm:$0xff]
    %v914 = vld [vmem:[#allocation8 + $0xa88] sm:$0xff]
    %v915 = vld [vmem:[#allocation8 + $0xa90] sm:$0xff]
    %v916 = vld [vmem:[#allocation8 + $0xa98] sm:$0xff]
    %v917 = vld [vmem:[#allocation8 + $0xaa0] sm:$0xff]
    %v918 = vld [vmem:[#allocation8 + $0xaa8] sm:$0xff]
    %v919 = vld [vmem:[#allocation8 + $0xab0] sm:$0xff]
    %v920 = vld [vmem:[#allocation8 + $0xab8] sm:$0xff]
    %v921 = vld [vmem:[#allocation8 + $0xac0] sm:$0xff]
    %v922 = vld [vmem:[#allocation8 + $0xac8] sm:$0xff]
    %v923 = vld [vmem:[#allocation8 + $0xad0] sm:$0xff]
    %v924 = vld [vmem:[#allocation8 + $0xad8] sm:$0xff]
    %v925 = vld [vmem:[#allocation8 + $0xae0] sm:$0xff]
    %v926 = vld [vmem:[#allocation8 + $0xae8] sm:$0xff]
    %v927 = vld [vmem:[#allocation8 + $0xaf0] sm:$0xff]
    %v928 = vld [vmem:[#allocation8 + $0xaf8] sm:$0xff]
    %v929 = vld [vmem:[#allocation8 + $0xb00] sm:$0xff]
    %v930 = vld [vmem:[#allocation8 + $0xb08] sm:$0xff]
    %v931 = vld [vmem:[#allocation8 + $0xb10] sm:$0xff]
    %v932 = vld [vmem:[#allocation8 + $0xb18] sm:$0xff]
    %v933 = vld [vmem:[#allocation8 + $0xb20] sm:$0xff]
    %v934 = vld [vmem:[#allocation8 + $0xb28] sm:$0xff]
    %v935 = vld [vmem:[#allocation8 + $0xb30] sm:$0xff]
    %v936 = vld [vmem:[#allocation8 + $0xb38] sm:$0xff]
    %v937 = vld [vmem:[#allocation8 + $0xb40] sm:$0xff]
    %v938 = vld [vmem:[#allocation8 + $0xb48] sm:$0xff]
    %v939 = vld [vmem:[#allocation8 + $0xb50] sm:$0xff]
    %v940 = vld [vmem:[#allocation8 + $0xb58] sm:$0xff]
    %v941 = vld [vmem:[#allocation8 + $0xb60] sm:$0xff]
    %v942 = vld [vmem:[#allocation8 + $0xb68] sm:$0xff]
    %v943 = vld [vmem:[#allocation8 + $0xb70] sm:$0xff]
    %v944 = vld [vmem:[#allocation8 + $0xb78] sm:$0xff]
    %v945 = vld [vmem:[#allocation8 + $0xb80] sm:$0xff]
    %v946 = vld [vmem:[#allocation8 + $0xb88] sm:$0xff]
    %v947 = vld [vmem:[#allocation8 + $0xb90] sm:$0xff]
    %v948 = vld [vmem:[#allocation8 + $0xb98] sm:$0xff]
    %v949 = vld [vmem:[#allocation8 + $0xba0] sm:$0xff]
    %v950 = vld [vmem:[#allocation8 + $0xba8] sm:$0xff]
    %v951 = vld [vmem:[#allocation8 + $0xbb0] sm:$0xff]
    %v952 = vld [vmem:[#allocation8 + $0xbb8] sm:$0xff]
    %v953 = vld [vmem:[#allocation8 + $0xbc0] sm:$0xff]
    %v954 = vld [vmem:[#allocation8 + $0xbc8] sm:$0xff]
    %v955 = vld [vmem:[#allocation8 + $0xbd0] sm:$0xff]
    %v956 = vld [vmem:[#allocation8 + $0xbd8] sm:$0xff]
    %v957 = vld [vmem:[#allocation8 + $0xbe0] sm:$0xff]
    %v958 = vld [vmem:[#allocation8 + $0xbe8] sm:$0xff]
    %v959 = vld [vmem:[#allocation8 + $0xbf0] sm:$0xff]
    %v960 = vld [vmem:[#allocation8 + $0xbf8] sm:$0xff]
    %v961 = vld [vmem:[#allocation8 + $0xc00] sm:$0xff]
    %v962 = vld [vmem:[#allocation8 + $0xc08] sm:$0xff]
    %v963 = vld [vmem:[#allocation8 + $0xc10] sm:$0xff]
    %v964 = vld [vmem:[#allocation8 + $0xc18] sm:$0xff]
    %v965 = vld [vmem:[#allocation8 + $0xc20] sm:$0xff]
    %v966 = vld [vmem:[#allocation8 + $0xc28] sm:$0xff]
    %v967 = vld [vmem:[#allocation8 + $0xc30] sm:$0xff]
    %v968 = vld [vmem:[#allocation8 + $0xc38] sm:$0xff]
    %v969 = vld [vmem:[#allocation8 + $0xc40] sm:$0xff]
    %v970 = vld [vmem:[#allocation8 + $0xc48] sm:$0xff]
    %v971 = vld [vmem:[#allocation8 + $0xc50] sm:$0xff]
    %v972 = vld [vmem:[#allocation8 + $0xc58] sm:$0xff]
    %v973 = vld [vmem:[#allocation8 + $0xc60] sm:$0xff]
    %v974 = vld [vmem:[#allocation8 + $0xc68] sm:$0xff]
    %v975 = vld [vmem:[#allocation8 + $0xc70] sm:$0xff]
    %v976 = vld [vmem:[#allocation8 + $0xc78] sm:$0xff]
    %v977 = vld [vmem:[#allocation8 + $0xc80] sm:$0xff]
    %v978 = vld [vmem:[#allocation8 + $0xc88] sm:$0xff]
    %v979 = vld [vmem:[#allocation8 + $0xc90] sm:$0xff]
    %v980 = vld [vmem:[#allocation8 + $0xc98] sm:$0xff]
    %v981 = vld [vmem:[#allocation8 + $0xca0] sm:$0xff]
    %v982 = vld [vmem:[#allocation8 + $0xca8] sm:$0xff]
    %v983 = vld [vmem:[#allocation8 + $0xcb0] sm:$0xff]
    %v984 = vld [vmem:[#allocation8 + $0xcb8] sm:$0xff]
    %v985 = vld [vmem:[#allocation8 + $0xcc0] sm:$0xff]
    %v986 = vld [vmem:[#allocation8 + $0xcc8] sm:$0xff]
    %v987 = vld [vmem:[#allocation8 + $0xcd0] sm:$0xff]
    %v988 = vld [vmem:[#allocation8 + $0xcd8] sm:$0xff]
    %v989 = vld [vmem:[#allocation8 + $0xce0] sm:$0xff]
    %v990 = vld [vmem:[#allocation8 + $0xce8] sm:$0xff]
    %v991 = vld [vmem:[#allocation8 + $0xcf0] sm:$0xff]
    %v992 = vld [vmem:[#allocation8 + $0xcf8] sm:$0xff]
    %v993 = vld [vmem:[#allocation8 + $0xd00] sm:$0xff]
    %v994 = vld [vmem:[#allocation8 + $0xd08] sm:$0xff]
    %v995 = vld [vmem:[#allocation8 + $0xd10] sm:$0xff]
    %v996 = vld [vmem:[#allocation8 + $0xd18] sm:$0xff]
    %v997 = vld [vmem:[#allocation8 + $0xd20] sm:$0xff]
    %v998 = vld [vmem:[#allocation8 + $0xd28] sm:$0xff]
    %v999 = vld [vmem:[#allocation8 + $0xd30] sm:$0xff]
    %v1000 = vld [vmem:[#allocation8 + $0xd38] sm:$0xff]
    %v1001 = vld [vmem:[#allocation8 + $0xd40] sm:$0xff]
    %v1002 = vld [vmem:[#allocation8 + $0xd48] sm:$0xff]
    %v1003 = vld [vmem:[#allocation8 + $0xd50] sm:$0xff]
    %v1004 = vld [vmem:[#allocation8 + $0xd58] sm:$0xff]
    %v1005 = vld [vmem:[#allocation8 + $0xd60] sm:$0xff]
    %v1006 = vld [vmem:[#allocation8 + $0xd68] sm:$0xff]
    %v1007 = vld [vmem:[#allocation8 + $0xd70] sm:$0xff]
    %v1008 = vld [vmem:[#allocation8 + $0xd78] sm:$0xff]
    %v1009 = vld [vmem:[#allocation8 + $0xd80] sm:$0xff]
    %v1010 = vld [vmem:[#allocation8 + $0xd88] sm:$0xff]
    %v1011 = vld [vmem:[#allocation8 + $0xd90] sm:$0xff]
    %v1012 = vld [vmem:[#allocation8 + $0xd98] sm:$0xff]
    %v1013 = vld [vmem:[#allocation8 + $0xda0] sm:$0xff]
    %v1014 = vld [vmem:[#allocation8 + $0xda8] sm:$0xff]
    %v1015 = vld [vmem:[#allocation8 + $0xdb0] sm:$0xff]
    %v1016 = vld [vmem:[#allocation8 + $0xdb8] sm:$0xff]
    %v1017 = vld [vmem:[#allocation8 + $0xdc0] sm:$0xff]
    %v1018 = vld [vmem:[#allocation8 + $0xdc8] sm:$0xff]
    %v1019 = vld [vmem:[#allocation8 + $0xdd0] sm:$0xff]
    %v1020 = vld [vmem:[#allocation8 + $0xdd8] sm:$0xff]
    %v1021 = vld [vmem:[#allocation8 + $0xde0] sm:$0xff]
    %v1022 = vld [vmem:[#allocation8 + $0xde8] sm:$0xff]
    %v1023 = vld [vmem:[#allocation8 + $0xdf0] sm:$0xff]
    %v1024 = vld [vmem:[#allocation8 + $0xdf8] sm:$0xff]
    %v1025 = vld [vmem:[#allocation8 + $0xe00] sm:$0xff]
    %v1026 = vld [vmem:[#allocation8 + $0xe08] sm:$0xff]
    %v1027 = vld [vmem:[#allocation8 + $0xe10] sm:$0xff]
    %v1028 = vld [vmem:[#allocation8 + $0xe18] sm:$0xff]
    %v1029 = vld [vmem:[#allocation8 + $0xe20] sm:$0xff]
    %v1030 = vld [vmem:[#allocation8 + $0xe28] sm:$0xff]
    %v1031 = vld [vmem:[#allocation8 + $0xe30] sm:$0xff]
    %v1032 = vld [vmem:[#allocation8 + $0xe38] sm:$0xff]
    %v1033 = vld [vmem:[#allocation8 + $0xe40] sm:$0xff]
    %v1034 = vld [vmem:[#allocation8 + $0xe48] sm:$0xff]
    %v1035 = vld [vmem:[#allocation8 + $0xe50] sm:$0xff]
    %v1036 = vld [vmem:[#allocation8 + $0xe58] sm:$0xff]
    %v1037 = vld [vmem:[#allocation8 + $0xe60] sm:$0xff]
    %v1038 = vld [vmem:[#allocation8 + $0xe68] sm:$0xff]
    %v1039 = vld [vmem:[#allocation8 + $0xe70] sm:$0xff]
    %v1040 = vld [vmem:[#allocation8 + $0xe78] sm:$0xff]
    %v1041 = vld [vmem:[#allocation8 + $0xe80] sm:$0xff]
    %v1042 = vld [vmem:[#allocation8 + $0xe88] sm:$0xff]
    %v1043 = vld [vmem:[#allocation8 + $0xe90] sm:$0xff]
    %v1044 = vld [vmem:[#allocation8 + $0xe98] sm:$0xff]
    %v1045 = vld [vmem:[#allocation8 + $0xea0] sm:$0xff]
    %v1046 = vld [vmem:[#allocation8 + $0xea8] sm:$0xff]
    %v1047 = vld [vmem:[#allocation8 + $0xeb0] sm:$0xff]
    %v1048 = vld [vmem:[#allocation8 + $0xeb8] sm:$0xff]
    %v1049 = vld [vmem:[#allocation8 + $0xec0] sm:$0xff]
    %v1050 = vld [vmem:[#allocation8 + $0xec8] sm:$0xff]
    %v1051 = vld [vmem:[#allocation8 + $0xed0] sm:$0xff]
    %v1052 = vld [vmem:[#allocation8 + $0xed8] sm:$0xff]
    %v1053 = vld [vmem:[#allocation8 + $0xee0] sm:$0xff]
    %v1054 = vld [vmem:[#allocation8 + $0xee8] sm:$0xff]
    %v1055 = vld [vmem:[#allocation8 + $0xef0] sm:$0xff]
    %v1056 = vld [vmem:[#allocation8 + $0xef8] sm:$0xff]
    %v1057 = vld [vmem:[#allocation8 + $0xf00] sm:$0xff]
    %v1058 = vld [vmem:[#allocation8 + $0xf08] sm:$0xff]
    %v1059 = vld [vmem:[#allocation8 + $0xf10] sm:$0xff]
    %v1060 = vld [vmem:[#allocation8 + $0xf18] sm:$0xff]
    %v1061 = vld [vmem:[#allocation8 + $0xf20] sm:$0xff]
    %v1062 = vld [vmem:[#allocation8 + $0xf28] sm:$0xff]
    %v1063 = vld [vmem:[#allocation8 + $0xf30] sm:$0xff]
    %v1064 = vld [vmem:[#allocation8 + $0xf38] sm:$0xff]
    %v1065 = vld [vmem:[#allocation8 + $0xf40] sm:$0xff]
    %v1066 = vld [vmem:[#allocation8 + $0xf48] sm:$0xff]
    %v1067 = vld [vmem:[#allocation8 + $0xf50] sm:$0xff]
    %v1068 = vld [vmem:[#allocation8 + $0xf58] sm:$0xff]
    %v1069 = vld [vmem:[#allocation8 + $0xf60] sm:$0xff]
    %v1070 = vld [vmem:[#allocation8 + $0xf68] sm:$0xff]
    %v1071 = vld [vmem:[#allocation8 + $0xf70] sm:$0xff]
    %v1072 = vld [vmem:[#allocation8 + $0xf78] sm:$0xff]
    %v1073 = vld [vmem:[#allocation8 + $0xf80] sm:$0xff]
    %v1074 = vld [vmem:[#allocation8 + $0xf88] sm:$0xff]
    %v1075 = vld [vmem:[#allocation8 + $0xf90] sm:$0xff]
    %v1076 = vld [vmem:[#allocation8 + $0xf98] sm:$0xff]
    %v1077 = vld [vmem:[#allocation8 + $0xfa0] sm:$0xff]
    %v1078 = vld [vmem:[#allocation8 + $0xfa8] sm:$0xff]
    %v1079 = vld [vmem:[#allocation8 + $0xfb0] sm:$0xff]
    %v1080 = vld [vmem:[#allocation8 + $0xfb8] sm:$0xff]
    %v1081 = vld [vmem:[#allocation8 + $0xfc0] sm:$0xff]
    %v1082 = vld [vmem:[#allocation8 + $0xfc8] sm:$0xff]
    %v1083 = vld [vmem:[#allocation8 + $0xfd0] sm:$0xff]
    %v1084 = vld [vmem:[#allocation8 + $0xfd8] sm:$0xff]
    %v1085 = vld [vmem:[#allocation8 + $0xfe0] sm:$0xff]
    %v1086 = vld [vmem:[#allocation8 + $0xfe8] sm:$0xff]
    %v1087 = vld [vmem:[#allocation8 + $0xff0] sm:$0xff]
    %v1088 = vld [vmem:[#allocation8 + $0xff8] sm:$0xff]
    %v1089 = vld [vmem:[#allocation8 + $0x1000] sm:$0xff]
    %v1090 = vld [vmem:[#allocation8 + $0x1008] sm:$0xff]
    %v1091 = vld [vmem:[#allocation8 + $0x1010] sm:$0xff]
    %v1092 = vld [vmem:[#allocation8 + $0x1018] sm:$0xff]
    %v1093 = vld [vmem:[#allocation8 + $0x1020] sm:$0xff]
    %v1094 = vld [vmem:[#allocation8 + $0x1028] sm:$0xff]
    %v1095 = vld [vmem:[#allocation8 + $0x1030] sm:$0xff]
    %v1096 = vld [vmem:[#allocation8 + $0x1038] sm:$0xff]
    %v1097 = vld [vmem:[#allocation8 + $0x1040] sm:$0xff]
    %v1098 = vld [vmem:[#allocation8 + $0x1048] sm:$0xff]
    %v1099 = vld [vmem:[#allocation8 + $0x1050] sm:$0xff]
    %v1100 = vld [vmem:[#allocation8 + $0x1058] sm:$0xff]
    %v1101 = vld [vmem:[#allocation8 + $0x1060] sm:$0xff]
    %v1102 = vld [vmem:[#allocation8 + $0x1068] sm:$0xff]
    %v1103 = vld [vmem:[#allocation8 + $0x1070] sm:$0xff]
    %v1104 = vld [vmem:[#allocation8 + $0x1078] sm:$0xff]
    %v1105 = vld [vmem:[#allocation8 + $0x1080] sm:$0xff]
    %v1106 = vld [vmem:[#allocation8 + $0x1088] sm:$0xff]
    %v1107 = vld [vmem:[#allocation8 + $0x1090] sm:$0xff]
    %v1108 = vld [vmem:[#allocation8 + $0x1098] sm:$0xff]
    %v1109 = vld [vmem:[#allocation8 + $0x10a0] sm:$0xff]
    %v1110 = vld [vmem:[#allocation8 + $0x10a8] sm:$0xff]
    %v1111 = vld [vmem:[#allocation8 + $0x10b0] sm:$0xff]
    %v1112 = vld [vmem:[#allocation8 + $0x10b8] sm:$0xff]
    %v1113 = vld [vmem:[#allocation8 + $0x10c0] sm:$0xff]
    %v1114 = vld [vmem:[#allocation8 + $0x10c8] sm:$0xff]
    %v1115 = vld [vmem:[#allocation8 + $0x10d0] sm:$0xff]
    %v1116 = vld [vmem:[#allocation8 + $0x10d8] sm:$0xff]
    %v1117 = vld [vmem:[#allocation8 + $0x10e0] sm:$0xff]
    %v1118 = vld [vmem:[#allocation8 + $0x10e8] sm:$0xff]
    %v1119 = vld [vmem:[#allocation8 + $0x10f0] sm:$0xff]
    %v1120 = vld [vmem:[#allocation8 + $0x10f8] sm:$0xff]
    %v1121 = vld [vmem:[#allocation8 + $0x1100] sm:$0xff]
    %v1122 = vld [vmem:[#allocation8 + $0x1108] sm:$0xff]
    %v1123 = vld [vmem:[#allocation8 + $0x1110] sm:$0xff]
    %v1124 = vld [vmem:[#allocation8 + $0x1118] sm:$0xff]
    %v1125 = vld [vmem:[#allocation8 + $0x1120] sm:$0xff]
    %v1126 = vld [vmem:[#allocation8 + $0x1128] sm:$0xff]
    %v1127 = vld [vmem:[#allocation8 + $0x1130] sm:$0xff]
    %v1128 = vld [vmem:[#allocation8 + $0x1138] sm:$0xff]
    %v1129 = vld [vmem:[#allocation8 + $0x1140] sm:$0xff]
    %v1130 = vld [vmem:[#allocation8 + $0x1148] sm:$0xff]
    %v1131 = vld [vmem:[#allocation8 + $0x1150] sm:$0xff]
    %v1132 = vld [vmem:[#allocation8 + $0x1158] sm:$0xff]
    %v1133 = vld [vmem:[#allocation8 + $0x1160] sm:$0xff]
    %v1134 = vld [vmem:[#allocation8 + $0x1168] sm:$0xff]
    %v1135 = vld [vmem:[#allocation8 + $0x1170] sm:$0xff]
    %v1136 = vld [vmem:[#allocation8 + $0x1178] sm:$0xff]
    %v1137 = vld [vmem:[#allocation8 + $0x1180] sm:$0xff]
    %v1138 = vld [vmem:[#allocation8 + $0x1188] sm:$0xff]
    %v1139 = vld [vmem:[#allocation8 + $0x1190] sm:$0xff]
    %v1140 = vld [vmem:[#allocation8 + $0x1198] sm:$0xff]
    %v1141 = vld [vmem:[#allocation8 + $0x11a0] sm:$0xff]
    %v1142 = vld [vmem:[#allocation8 + $0x11a8] sm:$0xff]
    %v1143 = vld [vmem:[#allocation8 + $0x11b0] sm:$0xff]
    %v1144 = vld [vmem:[#allocation8 + $0x11b8] sm:$0xff]
    %v1145 = vld [vmem:[#allocation8 + $0x11c0] sm:$0xff]
    %v1146 = vld [vmem:[#allocation8 + $0x11c8] sm:$0xff]
    %v1147 = vld [vmem:[#allocation8 + $0x11d0] sm:$0xff]
    %v1148 = vld [vmem:[#allocation8 + $0x11d8] sm:$0xff]
    %v1149 = vld [vmem:[#allocation8 + $0x11e0] sm:$0xff]
    %v1150 = vld [vmem:[#allocation8 + $0x11e8] sm:$0xff]
    %v1151 = vld [vmem:[#allocation8 + $0x11f0] sm:$0xff]
    %v1152 = vld [vmem:[#allocation8 + $0x11f8] sm:$0xff]
    %v1153 = vld [vmem:[#allocation8 + $0x1200] sm:$0xff]
    %v1154 = vld [vmem:[#allocation8 + $0x1208] sm:$0xff]
    %v1155 = vld [vmem:[#allocation8 + $0x1210] sm:$0xff]
    %v1156 = vld [vmem:[#allocation8 + $0x1218] sm:$0xff]
    %v1157 = vld [vmem:[#allocation8 + $0x1220] sm:$0xff]
    %v1158 = vld [vmem:[#allocation8 + $0x1228] sm:$0xff]
    %v1159 = vld [vmem:[#allocation8 + $0x1230] sm:$0xff]
    %v1160 = vld [vmem:[#allocation8 + $0x1238] sm:$0xff]
    %v1161 = vld [vmem:[#allocation8 + $0x1240] sm:$0xff]
    %v1162 = vld [vmem:[#allocation8 + $0x1248] sm:$0xff]
    %v1163 = vld [vmem:[#allocation8 + $0x1250] sm:$0xff]
    %v1164 = vld [vmem:[#allocation8 + $0x1258] sm:$0xff]
    %v1165 = vld [vmem:[#allocation8 + $0x1260] sm:$0xff]
    %v1166 = vld [vmem:[#allocation8 + $0x1268] sm:$0xff]
    %v1167 = vld [vmem:[#allocation8 + $0x1270] sm:$0xff]
    %v1168 = vld [vmem:[#allocation8 + $0x1278] sm:$0xff]
    %v1169 = vld [vmem:[#allocation8 + $0x1280] sm:$0xff]
    %v1170 = vld [vmem:[#allocation8 + $0x1288] sm:$0xff]
    %v1171 = vld [vmem:[#allocation8 + $0x1290] sm:$0xff]
    %v1172 = vld [vmem:[#allocation8 + $0x1298] sm:$0xff]
    %v1173 = vld [vmem:[#allocation8 + $0x12a0] sm:$0xff]
    %v1174 = vld [vmem:[#allocation8 + $0x12a8] sm:$0xff]
    %v1175 = vld [vmem:[#allocation8 + $0x12b0] sm:$0xff]
    %v1176 = vld [vmem:[#allocation8 + $0x12b8] sm:$0xff]
    %v1177 = vld [vmem:[#allocation8 + $0x12c0] sm:$0xff]
    %v1178 = vld [vmem:[#allocation8 + $0x12c8] sm:$0xff]
    %v1179 = vld [vmem:[#allocation8 + $0x12d0] sm:$0xff]
    %v1180 = vld [vmem:[#allocation8 + $0x12d8] sm:$0xff]
    %v1181 = vld [vmem:[#allocation8 + $0x12e0] sm:$0xff]
    %v1182 = vld [vmem:[#allocation8 + $0x12e8] sm:$0xff]
    %v1183 = vld [vmem:[#allocation8 + $0x12f0] sm:$0xff]
    %v1184 = vld [vmem:[#allocation8 + $0x12f8] sm:$0xff]
    %v1185 = vld [vmem:[#allocation8 + $0x1300] sm:$0xff]
    %v1186 = vld [vmem:[#allocation8 + $0x1308] sm:$0xff]
    %v1187 = vld [vmem:[#allocation8 + $0x1310] sm:$0xff]
    %v1188 = vld [vmem:[#allocation8 + $0x1318] sm:$0xff]
    %v1189 = vld [vmem:[#allocation8 + $0x1320] sm:$0xff]
    %v1190 = vld [vmem:[#allocation8 + $0x1328] sm:$0xff]
    %v1191 = vld [vmem:[#allocation8 + $0x1330] sm:$0xff]
    %v1192 = vld [vmem:[#allocation8 + $0x1338] sm:$0xff]
    %v1193 = vld [vmem:[#allocation8 + $0x1340] sm:$0xff]
    %v1194 = vld [vmem:[#allocation8 + $0x1348] sm:$0xff]
    %v1195 = vld [vmem:[#allocation8 + $0x1350] sm:$0xff]
    %v1196 = vld [vmem:[#allocation8 + $0x1358] sm:$0xff]
    %v1197 = vld [vmem:[#allocation8 + $0x1360] sm:$0xff]
    %v1198 = vld [vmem:[#allocation8 + $0x1368] sm:$0xff]
    %v1199 = vld [vmem:[#allocation8 + $0x1370] sm:$0xff]
    %v1200 = vld [vmem:[#allocation8 + $0x1378] sm:$0xff]
    %v1201 = vld [vmem:[#allocation8 + $0x1380] sm:$0xff]
    %v1202 = vld [vmem:[#allocation8 + $0x1388] sm:$0xff]
    %v1203 = vld [vmem:[#allocation8 + $0x1390] sm:$0xff]
    %v1204 = vld [vmem:[#allocation8 + $0x1398] sm:$0xff]
    %v1205 = vld [vmem:[#allocation8 + $0x13a0] sm:$0xff]
    %v1206 = vld [vmem:[#allocation8 + $0x13a8] sm:$0xff]
    %v1207 = vld [vmem:[#allocation8 + $0x13b0] sm:$0xff]
    %v1208 = vld [vmem:[#allocation8 + $0x13b8] sm:$0xff]
    %v1209 = vld [vmem:[#allocation8 + $0x13c0] sm:$0xff]
    %v1210 = vld [vmem:[#allocation8 + $0x13c8] sm:$0xff]
    %v1211 = vld [vmem:[#allocation8 + $0x13d0] sm:$0xff]
    %v1212 = vld [vmem:[#allocation8 + $0x13d8] sm:$0xff]
    %v1213 = vld [vmem:[#allocation8 + $0x13e0] sm:$0xff]
    %v1214 = vld [vmem:[#allocation8 + $0x13e8] sm:$0xff]
    %v1215 = vld [vmem:[#allocation8 + $0x13f0] sm:$0xff]
    %v1216 = vld [vmem:[#allocation8 + $0x13f8] sm:$0xff]
    %v1217 = vld [vmem:[#allocation8 + $0x1400] sm:$0xff]
    %v1218 = vld [vmem:[#allocation8 + $0x1408] sm:$0xff]
    %v1219 = vld [vmem:[#allocation8 + $0x1410] sm:$0xff]
    %v1220 = vld [vmem:[#allocation8 + $0x1418] sm:$0xff]
    %v1221 = vld [vmem:[#allocation8 + $0x1420] sm:$0xff]
    %v1222 = vld [vmem:[#allocation8 + $0x1428] sm:$0xff]
    %v1223 = vld [vmem:[#allocation8 + $0x1430] sm:$0xff]
    %v1224 = vld [vmem:[#allocation8 + $0x1438] sm:$0xff]
    %v1225 = vld [vmem:[#allocation8 + $0x1440] sm:$0xff]
    %v1226 = vld [vmem:[#allocation8 + $0x1448] sm:$0xff]
    %v1227 = vld [vmem:[#allocation8 + $0x1450] sm:$0xff]
    %v1228 = vld [vmem:[#allocation8 + $0x1458] sm:$0xff]
    %v1229 = vld [vmem:[#allocation8 + $0x1460] sm:$0xff]
    %v1230 = vld [vmem:[#allocation8 + $0x1468] sm:$0xff]
    %v1231 = vld [vmem:[#allocation8 + $0x1470] sm:$0xff]
    %v1232 = vld [vmem:[#allocation8 + $0x1478] sm:$0xff]
    %v1233 = vld [vmem:[#allocation8 + $0x1480] sm:$0xff]
    %v1234 = vld [vmem:[#allocation8 + $0x1488] sm:$0xff]
    %v1235 = vld [vmem:[#allocation8 + $0x1490] sm:$0xff]
    %v1236 = vld [vmem:[#allocation8 + $0x1498] sm:$0xff]
    %v1237 = vld [vmem:[#allocation8 + $0x14a0] sm:$0xff]
    %v1238 = vld [vmem:[#allocation8 + $0x14a8] sm:$0xff]
    %v1239 = vld [vmem:[#allocation8 + $0x14b0] sm:$0xff]
    %v1240 = vld [vmem:[#allocation8 + $0x14b8] sm:$0xff]
    %v1241 = vld [vmem:[#allocation8 + $0x14c0] sm:$0xff]
    %v1242 = vld [vmem:[#allocation8 + $0x14c8] sm:$0xff]
    %v1243 = vld [vmem:[#allocation8 + $0x14d0] sm:$0xff]
    %v1244 = vld [vmem:[#allocation8 + $0x14d8] sm:$0xff]
    %v1245 = vld [vmem:[#allocation8 + $0x14e0] sm:$0xff]
    %v1246 = vld [vmem:[#allocation8 + $0x14e8] sm:$0xff]
    %v1247 = vld [vmem:[#allocation8 + $0x14f0] sm:$0xff]
    %v1248 = vld [vmem:[#allocation8 + $0x14f8] sm:$0xff]
    %v1249 = vld [vmem:[#allocation8 + $0x1500] sm:$0xff]
    %v1250 = vld [vmem:[#allocation8 + $0x1508] sm:$0xff]
    %v1251 = vld [vmem:[#allocation8 + $0x1510] sm:$0xff]
    %v1252 = vld [vmem:[#allocation8 + $0x1518] sm:$0xff]
    %v1253 = vld [vmem:[#allocation8 + $0x1520] sm:$0xff]
    %v1254 = vld [vmem:[#allocation8 + $0x1528] sm:$0xff]
    %v1255 = vld [vmem:[#allocation8 + $0x1530] sm:$0xff]
    %v1256 = vld [vmem:[#allocation8 + $0x1538] sm:$0xff]
    %v1257 = vld [vmem:[#allocation8 + $0x1540] sm:$0xff]
    %v1258 = vld [vmem:[#allocation8 + $0x1548] sm:$0xff]
    %v1259 = vld [vmem:[#allocation8 + $0x1550] sm:$0xff]
    %v1260 = vld [vmem:[#allocation8 + $0x1558] sm:$0xff]
    %v1261 = vld [vmem:[#allocation8 + $0x1560] sm:$0xff]
    %v1262 = vld [vmem:[#allocation8 + $0x1568] sm:$0xff]
    %v1263 = vld [vmem:[#allocation8 + $0x1570] sm:$0xff]
    %v1264 = vld [vmem:[#allocation8 + $0x1578] sm:$0xff]
    %v1265 = vld [vmem:[#allocation8 + $0x1580] sm:$0xff]
    %v1266 = vld [vmem:[#allocation8 + $0x1588] sm:$0xff]
    %v1267 = vld [vmem:[#allocation8 + $0x1590] sm:$0xff]
    %v1268 = vld [vmem:[#allocation8 + $0x1598] sm:$0xff]
    %v1269 = vld [vmem:[#allocation8 + $0x15a0] sm:$0xff]
    %v1270 = vld [vmem:[#allocation8 + $0x15a8] sm:$0xff]
    %v1271 = vld [vmem:[#allocation8 + $0x15b0] sm:$0xff]
    %v1272 = vld [vmem:[#allocation8 + $0x15b8] sm:$0xff]
    %v1273 = vld [vmem:[#allocation8 + $0x15c0] sm:$0xff]
    %v1274 = vld [vmem:[#allocation8 + $0x15c8] sm:$0xff]
    %v1275 = vld [vmem:[#allocation8 + $0x15d0] sm:$0xff]
    %v1276 = vld [vmem:[#allocation8 + $0x15d8] sm:$0xff]
    %v1277 = vld [vmem:[#allocation8 + $0x15e0] sm:$0xff]
    %v1278 = vld [vmem:[#allocation8 + $0x15e8] sm:$0xff]
    %v1279 = vld [vmem:[#allocation8 + $0x15f0] sm:$0xff]
    %v1280 = vld [vmem:[#allocation8 + $0x15f8] sm:$0xff]
    %v1281 = vld [vmem:[#allocation8 + $0x1600] sm:$0xff]
    %v1282 = vld [vmem:[#allocation8 + $0x1608] sm:$0xff]
    %v1283 = vld [vmem:[#allocation8 + $0x1610] sm:$0xff]
    %v1284 = vld [vmem:[#allocation8 + $0x1618] sm:$0xff]
    %v1285 = vld [vmem:[#allocation8 + $0x1620] sm:$0xff]
    %v1286 = vld [vmem:[#allocation8 + $0x1628] sm:$0xff]
    %v1287 = vld [vmem:[#allocation8 + $0x1630] sm:$0xff]
    %v1288 = vld [vmem:[#allocation8 + $0x1638] sm:$0xff]
    %v1289 = vld [vmem:[#allocation8 + $0x1640] sm:$0xff]
    %v1290 = vld [vmem:[#allocation8 + $0x1648] sm:$0xff]
    %v1291 = vld [vmem:[#allocation8 + $0x1650] sm:$0xff]
    %v1292 = vld [vmem:[#allocation8 + $0x1658] sm:$0xff]
    %v1293 = vld [vmem:[#allocation8 + $0x1660] sm:$0xff]
    %v1294 = vld [vmem:[#allocation8 + $0x1668] sm:$0xff]
    %v1295 = vld [vmem:[#allocation8 + $0x1670] sm:$0xff]
    %v1296 = vld [vmem:[#allocation8 + $0x1678] sm:$0xff]
    %v1297 = vld [vmem:[#allocation8 + $0x1680] sm:$0xff]
    %v1298 = vld [vmem:[#allocation8 + $0x1688] sm:$0xff]
    %v1299 = vld [vmem:[#allocation8 + $0x1690] sm:$0xff]
    %v1300 = vld [vmem:[#allocation8 + $0x1698] sm:$0xff]
    %v1301 = vld [vmem:[#allocation8 + $0x16a0] sm:$0xff]
    %v1302 = vld [vmem:[#allocation8 + $0x16a8] sm:$0xff]
    %v1303 = vld [vmem:[#allocation8 + $0x16b0] sm:$0xff]
    %v1304 = vld [vmem:[#allocation8 + $0x16b8] sm:$0xff]
    %v1305 = vld [vmem:[#allocation8 + $0x16c0] sm:$0xff]
    %v1306 = vld [vmem:[#allocation8 + $0x16c8] sm:$0xff]
    %v1307 = vld [vmem:[#allocation8 + $0x16d0] sm:$0xff]
    %v1308 = vld [vmem:[#allocation8 + $0x16d8] sm:$0xff]
    %v1309 = vld [vmem:[#allocation8 + $0x16e0] sm:$0xff]
    %v1310 = vld [vmem:[#allocation8 + $0x16e8] sm:$0xff]
    %v1311 = vld [vmem:[#allocation8 + $0x16f0] sm:$0xff]
    %v1312 = vld [vmem:[#allocation8 + $0x16f8] sm:$0xff]
    %v1313 = vld [vmem:[#allocation8 + $0x1700] sm:$0xff]
    %v1314 = vld [vmem:[#allocation8 + $0x1708] sm:$0xff]
    %v1315 = vld [vmem:[#allocation8 + $0x1710] sm:$0xff]
    %v1316 = vld [vmem:[#allocation8 + $0x1718] sm:$0xff]
    %v1317 = vld [vmem:[#allocation8 + $0x1720] sm:$0xff]
    %v1318 = vld [vmem:[#allocation8 + $0x1728] sm:$0xff]
    %v1319 = vld [vmem:[#allocation8 + $0x1730] sm:$0xff]
    %v1320 = vld [vmem:[#allocation8 + $0x1738] sm:$0xff]
    %v1321 = vld [vmem:[#allocation8 + $0x1740] sm:$0xff]
    %v1322 = vld [vmem:[#allocation8 + $0x1748] sm:$0xff]
    %v1323 = vld [vmem:[#allocation8 + $0x1750] sm:$0xff]
    %v1324 = vld [vmem:[#allocation8 + $0x1758] sm:$0xff]
    %v1325 = vld [vmem:[#allocation8 + $0x1760] sm:$0xff]
    %v1326 = vld [vmem:[#allocation8 + $0x1768] sm:$0xff]
    %v1327 = vld [vmem:[#allocation8 + $0x1770] sm:$0xff]
    %v1328 = vld [vmem:[#allocation8 + $0x1778] sm:$0xff]
    %v1329 = vld [vmem:[#allocation8 + $0x1780] sm:$0xff]
    %v1330 = vld [vmem:[#allocation8 + $0x1788] sm:$0xff]
    %v1331 = vld [vmem:[#allocation8 + $0x1790] sm:$0xff]
    %v1332 = vld [vmem:[#allocation8 + $0x1798] sm:$0xff]
    %v1333 = vld [vmem:[#allocation8 + $0x17a0] sm:$0xff]
    %v1334 = vld [vmem:[#allocation8 + $0x17a8] sm:$0xff]
    %v1335 = vld [vmem:[#allocation8 + $0x17b0] sm:$0xff]
    %v1336 = vld [vmem:[#allocation8 + $0x17b8] sm:$0xff]
    %v1337 = vld [vmem:[#allocation8 + $0x17c0] sm:$0xff]
    %v1338 = vld [vmem:[#allocation8 + $0x17c8] sm:$0xff]
    %v1339 = vld [vmem:[#allocation8 + $0x17d0] sm:$0xff]
    %v1340 = vld [vmem:[#allocation8 + $0x17d8] sm:$0xff]
    %v1341 = vld [vmem:[#allocation8 + $0x17e0] sm:$0xff]
    %v1342 = vld [vmem:[#allocation8 + $0x17e8] sm:$0xff]
    %v1343 = vld [vmem:[#allocation8 + $0x17f0] sm:$0xff]
    %v1344 = vld [vmem:[#allocation8 + $0x17f8] sm:$0xff]
    %v1345 = vld [vmem:[#allocation8 + $0x1800] sm:$0xff]
    %v1346 = vld [vmem:[#allocation8 + $0x1808] sm:$0xff]
    %v1347 = vld [vmem:[#allocation8 + $0x1810] sm:$0xff]
    %v1348 = vld [vmem:[#allocation8 + $0x1818] sm:$0xff]
    %v1349 = vld [vmem:[#allocation8 + $0x1820] sm:$0xff]
    %v1350 = vld [vmem:[#allocation8 + $0x1828] sm:$0xff]
    %v1351 = vld [vmem:[#allocation8 + $0x1830] sm:$0xff]
    %v1352 = vld [vmem:[#allocation8 + $0x1838] sm:$0xff]
    %v1353 = vld [vmem:[#allocation8 + $0x1840] sm:$0xff]
    %v1354 = vld [vmem:[#allocation8 + $0x1848] sm:$0xff]
    %v1355 = vld [vmem:[#allocation8 + $0x1850] sm:$0xff]
    %v1356 = vld [vmem:[#allocation8 + $0x1858] sm:$0xff]
    %v1357 = vld [vmem:[#allocation8 + $0x1860] sm:$0xff]
    %v1358 = vld [vmem:[#allocation8 + $0x1868] sm:$0xff]
    %v1359 = vld [vmem:[#allocation8 + $0x1870] sm:$0xff]
    %v1360 = vld [vmem:[#allocation8 + $0x1878] sm:$0xff]
    %v1361 = vld [vmem:[#allocation8 + $0x1880] sm:$0xff]
    %v1362 = vld [vmem:[#allocation8 + $0x1888] sm:$0xff]
    %v1363 = vld [vmem:[#allocation8 + $0x1890] sm:$0xff]
    %v1364 = vld [vmem:[#allocation8 + $0x1898] sm:$0xff]
    %v1365 = vld [vmem:[#allocation8 + $0x18a0] sm:$0xff]
    %v1366 = vld [vmem:[#allocation8 + $0x18a8] sm:$0xff]
    %v1367 = vld [vmem:[#allocation8 + $0x18b0] sm:$0xff]
    %v1368 = vld [vmem:[#allocation8 + $0x18b8] sm:$0xff]
    %v1369 = vld [vmem:[#allocation8 + $0x18c0] sm:$0xff]
    %v1370 = vld [vmem:[#allocation8 + $0x18c8] sm:$0xff]
    %v1371 = vld [vmem:[#allocation8 + $0x18d0] sm:$0xff]
    %v1372 = vld [vmem:[#allocation8 + $0x18d8] sm:$0xff]
    %v1373 = vld [vmem:[#allocation8 + $0x18e0] sm:$0xff]
    %v1374 = vld [vmem:[#allocation8 + $0x18e8] sm:$0xff]
    %v1375 = vld [vmem:[#allocation8 + $0x18f0] sm:$0xff]
    %v1376 = vld [vmem:[#allocation8 + $0x18f8] sm:$0xff]
    %v1377 = vld [vmem:[#allocation8 + $0x1900] sm:$0xff]
    %v1378 = vld [vmem:[#allocation8 + $0x1908] sm:$0xff]
    %v1379 = vld [vmem:[#allocation8 + $0x1910] sm:$0xff]
    %v1380 = vld [vmem:[#allocation8 + $0x1918] sm:$0xff]
    %v1381 = vld [vmem:[#allocation8 + $0x1920] sm:$0xff]
    %v1382 = vld [vmem:[#allocation8 + $0x1928] sm:$0xff]
    %v1383 = vld [vmem:[#allocation8 + $0x1930] sm:$0xff]
    %v1384 = vld [vmem:[#allocation8 + $0x1938] sm:$0xff]
    %v1385 = vld [vmem:[#allocation8 + $0x1940] sm:$0xff]
    %v1386 = vld [vmem:[#allocation8 + $0x1948] sm:$0xff]
    %v1387 = vld [vmem:[#allocation8 + $0x1950] sm:$0xff]
    %v1388 = vld [vmem:[#allocation8 + $0x1958] sm:$0xff]
    %v1389 = vld [vmem:[#allocation8 + $0x1960] sm:$0xff]
    %v1390 = vld [vmem:[#allocation8 + $0x1968] sm:$0xff]
    %v1391 = vld [vmem:[#allocation8 + $0x1970] sm:$0xff]
    %v1392 = vld [vmem:[#allocation8 + $0x1978] sm:$0xff]
    %v1393 = vld [vmem:[#allocation8 + $0x1980] sm:$0xff]
    %v1394 = vld [vmem:[#allocation8 + $0x1988] sm:$0xff]
    %v1395 = vld [vmem:[#allocation8 + $0x1990] sm:$0xff]
    %v1396 = vld [vmem:[#allocation8 + $0x1998] sm:$0xff]
    %v1397 = vld [vmem:[#allocation8 + $0x19a0] sm:$0xff]
    %v1398 = vld [vmem:[#allocation8 + $0x19a8] sm:$0xff]
    %v1399 = vld [vmem:[#allocation8 + $0x19b0] sm:$0xff]
    %v1400 = vld [vmem:[#allocation8 + $0x19b8] sm:$0xff]
    %v1401 = vld [vmem:[#allocation8 + $0x19c0] sm:$0xff]
    %v1402 = vld [vmem:[#allocation8 + $0x19c8] sm:$0xff]
    %v1403 = vld [vmem:[#allocation8 + $0x19d0] sm:$0xff]
    %v1404 = vld [vmem:[#allocation8 + $0x19d8] sm:$0xff]
    %v1405 = vld [vmem:[#allocation8 + $0x19e0] sm:$0xff]
    %v1406 = vld [vmem:[#allocation8 + $0x19e8] sm:$0xff]
    %v1407 = vld [vmem:[#allocation8 + $0x19f0] sm:$0xff]
    %v1408 = vld [vmem:[#allocation8 + $0x19f8] sm:$0xff]
    %v1409 = vld [vmem:[#allocation8 + $0x1a00] sm:$0xff]
    %v1410 = vld [vmem:[#allocation8 + $0x1a08] sm:$0xff]
    %v1411 = vld [vmem:[#allocation8 + $0x1a10] sm:$0xff]
    %v1412 = vld [vmem:[#allocation8 + $0x1a18] sm:$0xff]
    %v1413 = vld [vmem:[#allocation8 + $0x1a20] sm:$0xff]
    %v1414 = vld [vmem:[#allocation8 + $0x1a28] sm:$0xff]
    %v1415 = vld [vmem:[#allocation8 + $0x1a30] sm:$0xff]
    %v1416 = vld [vmem:[#allocation8 + $0x1a38] sm:$0xff]
    %v1417 = vld [vmem:[#allocation8 + $0x1a40] sm:$0xff]
    %v1418 = vld [vmem:[#allocation8 + $0x1a48] sm:$0xff]
    %v1419 = vld [vmem:[#allocation8 + $0x1a50] sm:$0xff]
    %v1420 = vld [vmem:[#allocation8 + $0x1a58] sm:$0xff]
    %v1421 = vld [vmem:[#allocation8 + $0x1a60] sm:$0xff]
    %v1422 = vld [vmem:[#allocation8 + $0x1a68] sm:$0xff]
    %v1423 = vld [vmem:[#allocation8 + $0x1a70] sm:$0xff]
    %v1424 = vld [vmem:[#allocation8 + $0x1a78] sm:$0xff]
    %v1425 = vld [vmem:[#allocation8 + $0x1a80] sm:$0xff]
    %v1426 = vld [vmem:[#allocation8 + $0x1a88] sm:$0xff]
    %v1427 = vld [vmem:[#allocation8 + $0x1a90] sm:$0xff]
    %v1428 = vld [vmem:[#allocation8 + $0x1a98] sm:$0xff]
    %v1429 = vld [vmem:[#allocation8 + $0x1aa0] sm:$0xff]
    %v1430 = vld [vmem:[#allocation8 + $0x1aa8] sm:$0xff]
    %v1431 = vld [vmem:[#allocation8 + $0x1ab0] sm:$0xff]
    %v1432 = vld [vmem:[#allocation8 + $0x1ab8] sm:$0xff]
    %v1433 = vld [vmem:[#allocation8 + $0x1ac0] sm:$0xff]
    %v1434 = vld [vmem:[#allocation8 + $0x1ac8] sm:$0xff]
    %v1435 = vld [vmem:[#allocation8 + $0x1ad0] sm:$0xff]
    %v1436 = vld [vmem:[#allocation8 + $0x1ad8] sm:$0xff]
    %v1437 = vld [vmem:[#allocation8 + $0x1ae0] sm:$0xff]
    %v1438 = vld [vmem:[#allocation8 + $0x1ae8] sm:$0xff]
    %v1439 = vld [vmem:[#allocation8 + $0x1af0] sm:$0xff]
    %v1440 = vld [vmem:[#allocation8 + $0x1af8] sm:$0xff]
    %v1441 = vld [vmem:[#allocation8 + $0x1b00] sm:$0xff]
    %v1442 = vld [vmem:[#allocation8 + $0x1b08] sm:$0xff]
    %v1443 = vld [vmem:[#allocation8 + $0x1b10] sm:$0xff]
    %v1444 = vld [vmem:[#allocation8 + $0x1b18] sm:$0xff]
    %v1445 = vld [vmem:[#allocation8 + $0x1b20] sm:$0xff]
    %v1446 = vld [vmem:[#allocation8 + $0x1b28] sm:$0xff]
    %v1447 = vld [vmem:[#allocation8 + $0x1b30] sm:$0xff]
    %v1448 = vld [vmem:[#allocation8 + $0x1b38] sm:$0xff]
    %v1449 = vld [vmem:[#allocation8 + $0x1b40] sm:$0xff]
    %v1450 = vld [vmem:[#allocation8 + $0x1b48] sm:$0xff]
    %v1451 = vld [vmem:[#allocation8 + $0x1b50] sm:$0xff]
    %v1452 = vld [vmem:[#allocation8 + $0x1b58] sm:$0xff]
    %v1453 = vld [vmem:[#allocation8 + $0x1b60] sm:$0xff]
    %v1454 = vld [vmem:[#allocation8 + $0x1b68] sm:$0xff]
    %v1455 = vld [vmem:[#allocation8 + $0x1b70] sm:$0xff]
    %v1456 = vld [vmem:[#allocation8 + $0x1b78] sm:$0xff]
    %v1457 = vld [vmem:[#allocation8 + $0x1b80] sm:$0xff]
    %v1458 = vld [vmem:[#allocation8 + $0x1b88] sm:$0xff]
    %v1459 = vld [vmem:[#allocation8 + $0x1b90] sm:$0xff]
    %v1460 = vld [vmem:[#allocation8 + $0x1b98] sm:$0xff]
    %v1461 = vld [vmem:[#allocation8 + $0x1ba0] sm:$0xff]
    %v1462 = vld [vmem:[#allocation8 + $0x1ba8] sm:$0xff]
    %v1463 = vld [vmem:[#allocation8 + $0x1bb0] sm:$0xff]
    %v1464 = vld [vmem:[#allocation8 + $0x1bb8] sm:$0xff]
    %v1465 = vld [vmem:[#allocation8 + $0x1bc0] sm:$0xff]
    %v1466 = vld [vmem:[#allocation8 + $0x1bc8] sm:$0xff]
    %v1467 = vld [vmem:[#allocation8 + $0x1bd0] sm:$0xff]
    %v1468 = vld [vmem:[#allocation8 + $0x1bd8] sm:$0xff]
    %v1469 = vld [vmem:[#allocation8 + $0x1be0] sm:$0xff]
    %v1470 = vld [vmem:[#allocation8 + $0x1be8] sm:$0xff]
    %v1471 = vld [vmem:[#allocation8 + $0x1bf0] sm:$0xff]
    %v1472 = vld [vmem:[#allocation8 + $0x1bf8] sm:$0xff]
    %v1473 = vld [vmem:[#allocation8 + $0x1c00] sm:$0xff]
    %v1474 = vld [vmem:[#allocation8 + $0x1c08] sm:$0xff]
    %v1475 = vld [vmem:[#allocation8 + $0x1c10] sm:$0xff]
    %v1476 = vld [vmem:[#allocation8 + $0x1c18] sm:$0xff]
    %v1477 = vld [vmem:[#allocation8 + $0x1c20] sm:$0xff]
    %v1478 = vld [vmem:[#allocation8 + $0x1c28] sm:$0xff]
    %v1479 = vld [vmem:[#allocation8 + $0x1c30] sm:$0xff]
    %v1480 = vld [vmem:[#allocation8 + $0x1c38] sm:$0xff]
    %v1481 = vld [vmem:[#allocation8 + $0x1c40] sm:$0xff]
    %v1482 = vld [vmem:[#allocation8 + $0x1c48] sm:$0xff]
    %v1483 = vld [vmem:[#allocation8 + $0x1c50] sm:$0xff]
    %v1484 = vld [vmem:[#allocation8 + $0x1c58] sm:$0xff]
    %v1485 = vld [vmem:[#allocation8 + $0x1c60] sm:$0xff]
    %v1486 = vld [vmem:[#allocation8 + $0x1c68] sm:$0xff]
    %v1487 = vld [vmem:[#allocation8 + $0x1c70] sm:$0xff]
    %v1488 = vld [vmem:[#allocation8 + $0x1c78] sm:$0xff]
    %v1489 = vld [vmem:[#allocation8 + $0x1c80] sm:$0xff]
    %v1490 = vld [vmem:[#allocation8 + $0x1c88] sm:$0xff]
    %v1491 = vld [vmem:[#allocation8 + $0x1c90] sm:$0xff]
    %v1492 = vld [vmem:[#allocation8 + $0x1c98] sm:$0xff]
    %v1493 = vld [vmem:[#allocation8 + $0x1ca0] sm:$0xff]
    %v1494 = vld [vmem:[#allocation8 + $0x1ca8] sm:$0xff]
    %v1495 = vld [vmem:[#allocation8 + $0x1cb0] sm:$0xff]
    %v1496 = vld [vmem:[#allocation8 + $0x1cb8] sm:$0xff]
    %v1497 = vld [vmem:[#allocation8 + $0x1cc0] sm:$0xff]
    %v1498 = vld [vmem:[#allocation8 + $0x1cc8] sm:$0xff]
    %v1499 = vld [vmem:[#allocation8 + $0x1cd0] sm:$0xff]
    %v1500 = vld [vmem:[#allocation8 + $0x1cd8] sm:$0xff]
    %v1501 = vld [vmem:[#allocation8 + $0x1ce0] sm:$0xff]
    %v1502 = vld [vmem:[#allocation8 + $0x1ce8] sm:$0xff]
    %v1503 = vld [vmem:[#allocation8 + $0x1cf0] sm:$0xff]
    %v1504 = vld [vmem:[#allocation8 + $0x1cf8] sm:$0xff]
    %v1505 = vld [vmem:[#allocation8 + $0x1d00] sm:$0xff]
    %v1506 = vld [vmem:[#allocation8 + $0x1d08] sm:$0xff]
    %v1507 = vld [vmem:[#allocation8 + $0x1d10] sm:$0xff]
    %v1508 = vld [vmem:[#allocation8 + $0x1d18] sm:$0xff]
    %v1509 = vld [vmem:[#allocation8 + $0x1d20] sm:$0xff]
    %v1510 = vld [vmem:[#allocation8 + $0x1d28] sm:$0xff]
    %v1511 = vld [vmem:[#allocation8 + $0x1d30] sm:$0xff]
    %v1512 = vld [vmem:[#allocation8 + $0x1d38] sm:$0xff]
    %v1513 = vld [vmem:[#allocation8 + $0x1d40] sm:$0xff]
    %v1514 = vld [vmem:[#allocation8 + $0x1d48] sm:$0xff]
    %v1515 = vld [vmem:[#allocation8 + $0x1d50] sm:$0xff]
    %v1516 = vld [vmem:[#allocation8 + $0x1d58] sm:$0xff]
    %v1517 = vld [vmem:[#allocation8 + $0x1d60] sm:$0xff]
    %v1518 = vld [vmem:[#allocation8 + $0x1d68] sm:$0xff]
    %v1519 = vld [vmem:[#allocation8 + $0x1d70] sm:$0xff]
    %v1520 = vld [vmem:[#allocation8 + $0x1d78] sm:$0xff]
    %v1521 = vld [vmem:[#allocation8 + $0x1d80] sm:$0xff]
    %v1522 = vld [vmem:[#allocation8 + $0x1d88] sm:$0xff]
    %v1523 = vld [vmem:[#allocation8 + $0x1d90] sm:$0xff]
    %v1524 = vld [vmem:[#allocation8 + $0x1d98] sm:$0xff]
    %v1525 = vld [vmem:[#allocation8 + $0x1da0] sm:$0xff]
    %v1526 = vld [vmem:[#allocation8 + $0x1da8] sm:$0xff]
    %v1527 = vld [vmem:[#allocation8 + $0x1db0] sm:$0xff]
    %v1528 = vld [vmem:[#allocation8 + $0x1db8] sm:$0xff]
    %v1529 = vld [vmem:[#allocation8 + $0x1dc0] sm:$0xff]
    %v1530 = vld [vmem:[#allocation8 + $0x1dc8] sm:$0xff]
    %v1531 = vld [vmem:[#allocation8 + $0x1dd0] sm:$0xff]
    %v1532 = vld [vmem:[#allocation8 + $0x1dd8] sm:$0xff]
    %v1533 = vld [vmem:[#allocation8 + $0x1de0] sm:$0xff]
    %v1534 = vld [vmem:[#allocation8 + $0x1de8] sm:$0xff]
    %v1535 = vld [vmem:[#allocation8 + $0x1df0] sm:$0xff]
    %v1536 = vld [vmem:[#allocation8 + $0x1df8] sm:$0xff]
    %v1537 = vld [vmem:[#allocation8 + $0x1e00] sm:$0xff]
    %v1538 = vld [vmem:[#allocation8 + $0x1e08] sm:$0xff]
    %v1539 = vld [vmem:[#allocation8 + $0x1e10] sm:$0xff]
    %v1540 = vld [vmem:[#allocation8 + $0x1e18] sm:$0xff]
    %v1541 = vld [vmem:[#allocation8 + $0x1e20] sm:$0xff]
    %v1542 = vld [vmem:[#allocation8 + $0x1e28] sm:$0xff]
    %v1543 = vld [vmem:[#allocation8 + $0x1e30] sm:$0xff]
    %v1544 = vld [vmem:[#allocation8 + $0x1e38] sm:$0xff]
    %v1545 = vld [vmem:[#allocation8 + $0x1e40] sm:$0xff]
    %v1546 = vld [vmem:[#allocation8 + $0x1e48] sm:$0xff]
    %v1547 = vld [vmem:[#allocation8 + $0x1e50] sm:$0xff]
    %v1548 = vld [vmem:[#allocation8 + $0x1e58] sm:$0xff]
    %v1549 = vld [vmem:[#allocation8 + $0x1e60] sm:$0xff]
    %v1550 = vld [vmem:[#allocation8 + $0x1e68] sm:$0xff]
    %v1551 = vld [vmem:[#allocation8 + $0x1e70] sm:$0xff]
    %v1552 = vld [vmem:[#allocation8 + $0x1e78] sm:$0xff]
    %v1553 = vld [vmem:[#allocation8 + $0x1e80] sm:$0xff]
    %v1554 = vld [vmem:[#allocation8 + $0x1e88] sm:$0xff]
    %v1555 = vld [vmem:[#allocation8 + $0x1e90] sm:$0xff]
    %v1556 = vld [vmem:[#allocation8 + $0x1e98] sm:$0xff]
    %v1557 = vld [vmem:[#allocation8 + $0x1ea0] sm:$0xff]
    %v1558 = vld [vmem:[#allocation8 + $0x1ea8] sm:$0xff]
    %v1559 = vld [vmem:[#allocation8 + $0x1eb0] sm:$0xff]
    %v1560 = vld [vmem:[#allocation8 + $0x1eb8] sm:$0xff]
    %v1561 = vld [vmem:[#allocation8 + $0x1ec0] sm:$0xff]
    %v1562 = vld [vmem:[#allocation8 + $0x1ec8] sm:$0xff]
    %v1563 = vld [vmem:[#allocation8 + $0x1ed0] sm:$0xff]
    %v1564 = vld [vmem:[#allocation8 + $0x1ed8] sm:$0xff]
    %v1565 = vld [vmem:[#allocation8 + $0x1ee0] sm:$0xff]
    %v1566 = vld [vmem:[#allocation8 + $0x1ee8] sm:$0xff]
    %v1567 = vld [vmem:[#allocation8 + $0x1ef0] sm:$0xff]
    %v1568 = vld [vmem:[#allocation8 + $0x1ef8] sm:$0xff]
    %v1569 = vld [vmem:[#allocation8 + $0x1f00] sm:$0xff]
    %v1570 = vld [vmem:[#allocation8 + $0x1f08] sm:$0xff]
    %v1571 = vld [vmem:[#allocation8 + $0x1f10] sm:$0xff]
    %v1572 = vld [vmem:[#allocation8 + $0x1f18] sm:$0xff]
    %v1573 = vld [vmem:[#allocation8 + $0x1f20] sm:$0xff]
    %v1574 = vld [vmem:[#allocation8 + $0x1f28] sm:$0xff]
    %v1575 = vld [vmem:[#allocation8 + $0x1f30] sm:$0xff]
    %v1576 = vld [vmem:[#allocation8 + $0x1f38] sm:$0xff]
    %v1577 = vld [vmem:[#allocation8 + $0x1f40] sm:$0xff]
    %v1578 = vld [vmem:[#allocation8 + $0x1f48] sm:$0xff]
    %v1579 = vld [vmem:[#allocation8 + $0x1f50] sm:$0xff]
    %v1580 = vld [vmem:[#allocation8 + $0x1f58] sm:$0xff]
    %v1581 = vld [vmem:[#allocation8 + $0x1f60] sm:$0xff]
    %v1582 = vld [vmem:[#allocation8 + $0x1f68] sm:$0xff]
    %v1583 = vld [vmem:[#allocation8 + $0x1f70] sm:$0xff]
    %v1584 = vld [vmem:[#allocation8 + $0x1f78] sm:$0xff]
    %v1585 = vld [vmem:[#allocation8 + $0x1f80] sm:$0xff]
    %v1586 = vld [vmem:[#allocation8 + $0x1f88] sm:$0xff]
    %v1587 = vld [vmem:[#allocation8 + $0x1f90] sm:$0xff]
    %v1588 = vld [vmem:[#allocation8 + $0x1f98] sm:$0xff]
    %v1589 = vld [vmem:[#allocation8 + $0x1fa0] sm:$0xff]
    %v1590 = vld [vmem:[#allocation8 + $0x1fa8] sm:$0xff]
    %v1591 = vld [vmem:[#allocation8 + $0x1fb0] sm:$0xff]
    %v1592 = vld [vmem:[#allocation8 + $0x1fb8] sm:$0xff]
    %v1593 = vld [vmem:[#allocation8 + $0x1fc0] sm:$0xff]
    %v1594 = vld [vmem:[#allocation8 + $0x1fc8] sm:$0xff]
    %v1595 = vld [vmem:[#allocation8 + $0x1fd0] sm:$0xff]
    %v1596 = vld [vmem:[#allocation8 + $0x1fd8] sm:$0xff]
    %v1597 = vld [vmem:[#allocation8 + $0x1fe0] sm:$0xff]
    %v1598 = vld [vmem:[#allocation8 + $0x1fe8] sm:$0xff]
    %v1599 = vld [vmem:[#allocation8 + $0x1ff0] sm:$0xff]
    %v1600 = vld [vmem:[#allocation8 + $0x1ff8] sm:$0xff]
    %v1601 = vld [vmem:[#allocation8 + $0x2000] sm:$0xff]
    %v1602 = vld [vmem:[#allocation8 + $0x2008] sm:$0xff]
    %v1603 = vld [vmem:[#allocation8 + $0x2010] sm:$0xff]
    %v1604 = vld [vmem:[#allocation8 + $0x2018] sm:$0xff]
    %v1605 = vld [vmem:[#allocation8 + $0x2020] sm:$0xff]
    %v1606 = vld [vmem:[#allocation8 + $0x2028] sm:$0xff]
    %v1607 = vld [vmem:[#allocation8 + $0x2030] sm:$0xff]
    %v1608 = vld [vmem:[#allocation8 + $0x2038] sm:$0xff]
    %v1609 = vld [vmem:[#allocation8 + $0x2040] sm:$0xff]
    %v1610 = vld [vmem:[#allocation8 + $0x2048] sm:$0xff]
    %v1611 = vld [vmem:[#allocation8 + $0x2050] sm:$0xff]
    %v1612 = vld [vmem:[#allocation8 + $0x2058] sm:$0xff]
    %v1613 = vld [vmem:[#allocation8 + $0x2060] sm:$0xff]
    %v1614 = vld [vmem:[#allocation8 + $0x2068] sm:$0xff]
    %v1615 = vld [vmem:[#allocation8 + $0x2070] sm:$0xff]
    %v1616 = vld [vmem:[#allocation8 + $0x2078] sm:$0xff]
    %v1617 = vld [vmem:[#allocation8 + $0x2080] sm:$0xff]
    %v1618 = vld [vmem:[#allocation8 + $0x2088] sm:$0xff]
    %v1619 = vld [vmem:[#allocation8 + $0x2090] sm:$0xff]
    %v1620 = vld [vmem:[#allocation8 + $0x2098] sm:$0xff]
    %v1621 = vld [vmem:[#allocation8 + $0x20a0] sm:$0xff]
    %v1622 = vld [vmem:[#allocation8 + $0x20a8] sm:$0xff]
    %v1623 = vld [vmem:[#allocation8 + $0x20b0] sm:$0xff]
    %v1624 = vld [vmem:[#allocation8 + $0x20b8] sm:$0xff]
    %v1625 = vld [vmem:[#allocation8 + $0x20c0] sm:$0xff]
    %v1626 = vld [vmem:[#allocation8 + $0x20c8] sm:$0xff]
    %v1627 = vld [vmem:[#allocation8 + $0x20d0] sm:$0xff]
    %v1628 = vld [vmem:[#allocation8 + $0x20d8] sm:$0xff]
    %v1629 = vld [vmem:[#allocation8 + $0x20e0] sm:$0xff]
    %v1630 = vld [vmem:[#allocation8 + $0x20e8] sm:$0xff]
    %v1631 = vld [vmem:[#allocation8 + $0x20f0] sm:$0xff]
    %v1632 = vld [vmem:[#allocation8 + $0x20f8] sm:$0xff]
    %v1633 = vld [vmem:[#allocation8 + $0x2100] sm:$0xff]
    %v1634 = vld [vmem:[#allocation8 + $0x2108] sm:$0xff]
    %v1635 = vld [vmem:[#allocation8 + $0x2110] sm:$0xff]
    %v1636 = vld [vmem:[#allocation8 + $0x2118] sm:$0xff]
    %v1637 = vld [vmem:[#allocation8 + $0x2120] sm:$0xff]
    %v1638 = vld [vmem:[#allocation8 + $0x2128] sm:$0xff]
    %v1639 = vld [vmem:[#allocation8 + $0x2130] sm:$0xff]
    %v1640 = vld [vmem:[#allocation8 + $0x2138] sm:$0xff]
    %v1641 = vld [vmem:[#allocation8 + $0x2140] sm:$0xff]
    %v1642 = vld [vmem:[#allocation8 + $0x2148] sm:$0xff]
    %v1643 = vld [vmem:[#allocation8 + $0x2150] sm:$0xff]
    %v1644 = vld [vmem:[#allocation8 + $0x2158] sm:$0xff]
    %v1645 = vld [vmem:[#allocation8 + $0x2160] sm:$0xff]
    %v1646 = vld [vmem:[#allocation8 + $0x2168] sm:$0xff]
    %v1647 = vld [vmem:[#allocation8 + $0x2170] sm:$0xff]
    %v1648 = vld [vmem:[#allocation8 + $0x2178] sm:$0xff]
    %v1649 = vld [vmem:[#allocation8 + $0x2180] sm:$0xff]
    %v1650 = vld [vmem:[#allocation8 + $0x2188] sm:$0xff]
    %v1651 = vld [vmem:[#allocation8 + $0x2190] sm:$0xff]
    %v1652 = vld [vmem:[#allocation8 + $0x2198] sm:$0xff]
    %v1653 = vld [vmem:[#allocation8 + $0x21a0] sm:$0xff]
    %v1654 = vld [vmem:[#allocation8 + $0x21a8] sm:$0xff]
    %v1655 = vld [vmem:[#allocation8 + $0x21b0] sm:$0xff]
    %v1656 = vld [vmem:[#allocation8 + $0x21b8] sm:$0xff]
    %v1657 = vld [vmem:[#allocation8 + $0x21c0] sm:$0xff]
    %v1658 = vld [vmem:[#allocation8 + $0x21c8] sm:$0xff]
    %v1659 = vld [vmem:[#allocation8 + $0x21d0] sm:$0xff]
    %v1660 = vld [vmem:[#allocation8 + $0x21d8] sm:$0xff]
    %v1661 = vld [vmem:[#allocation8 + $0x21e0] sm:$0xff]
    %v1662 = vld [vmem:[#allocation8 + $0x21e8] sm:$0xff]
    %v1663 = vld [vmem:[#allocation8 + $0x21f0] sm:$0xff]
    %v1664 = vld [vmem:[#allocation8 + $0x21f8] sm:$0xff]
    %v1665 = vld [vmem:[#allocation8 + $0x2200] sm:$0xff]
    %v1666 = vld [vmem:[#allocation8 + $0x2208] sm:$0xff]
    %v1667 = vld [vmem:[#allocation8 + $0x2210] sm:$0xff]
    %v1668 = vld [vmem:[#allocation8 + $0x2218] sm:$0xff]
    %v1669 = vld [vmem:[#allocation8 + $0x2220] sm:$0xff]
    %v1670 = vld [vmem:[#allocation8 + $0x2228] sm:$0xff]
    %v1671 = vld [vmem:[#allocation8 + $0x2230] sm:$0xff]
    %v1672 = vld [vmem:[#allocation8 + $0x2238] sm:$0xff]
    %v1673 = vld [vmem:[#allocation8 + $0x2240] sm:$0xff]
    %v1674 = vld [vmem:[#allocation8 + $0x2248] sm:$0xff]
    %v1675 = vld [vmem:[#allocation8 + $0x2250] sm:$0xff]
    %v1676 = vld [vmem:[#allocation8 + $0x2258] sm:$0xff]
    %v1677 = vld [vmem:[#allocation8 + $0x2260] sm:$0xff]
    %v1678 = vld [vmem:[#allocation8 + $0x2268] sm:$0xff]
    %v1679 = vld [vmem:[#allocation8 + $0x2270] sm:$0xff]
    %v1680 = vld [vmem:[#allocation8 + $0x2278] sm:$0xff]
    %v1681 = vld [vmem:[#allocation8 + $0x2280] sm:$0xff]
    %v1682 = vld [vmem:[#allocation8 + $0x2288] sm:$0xff]
    %v1683 = vld [vmem:[#allocation8 + $0x2290] sm:$0xff]
    %v1684 = vld [vmem:[#allocation8 + $0x2298] sm:$0xff]
    %v1685 = vld [vmem:[#allocation8 + $0x22a0] sm:$0xff]
    %v1686 = vld [vmem:[#allocation8 + $0x22a8] sm:$0xff]
    %v1687 = vld [vmem:[#allocation8 + $0x22b0] sm:$0xff]
    %v1688 = vld [vmem:[#allocation8 + $0x22b8] sm:$0xff]
    %v1689 = vld [vmem:[#allocation8 + $0x22c0] sm:$0xff]
    %v1690 = vld [vmem:[#allocation8 + $0x22c8] sm:$0xff]
    %v1691 = vld [vmem:[#allocation8 + $0x22d0] sm:$0xff]
    %v1692 = vld [vmem:[#allocation8 + $0x22d8] sm:$0xff]
    %v1693 = vld [vmem:[#allocation8 + $0x22e0] sm:$0xff]
    %v1694 = vld [vmem:[#allocation8 + $0x22e8] sm:$0xff]
    %v1695 = vld [vmem:[#allocation8 + $0x22f0] sm:$0xff]
    %v1696 = vld [vmem:[#allocation8 + $0x22f8] sm:$0xff]
    %v1697 = vld [vmem:[#allocation8 + $0x2300] sm:$0xff]
    %v1698 = vld [vmem:[#allocation8 + $0x2308] sm:$0xff]
    %v1699 = vld [vmem:[#allocation8 + $0x2310] sm:$0xff]
    %v1700 = vld [vmem:[#allocation8 + $0x2318] sm:$0xff]
    %v1701 = vld [vmem:[#allocation8 + $0x2320] sm:$0xff]
    %v1702 = vld [vmem:[#allocation8 + $0x2328] sm:$0xff]
    %v1703 = vld [vmem:[#allocation8 + $0x2330] sm:$0xff]
    %v1704 = vld [vmem:[#allocation8 + $0x2338] sm:$0xff]
    %v1705 = vld [vmem:[#allocation8 + $0x2340] sm:$0xff]
    %v1706 = vld [vmem:[#allocation8 + $0x2348] sm:$0xff]
    %v1707 = vld [vmem:[#allocation8 + $0x2350] sm:$0xff]
    %v1708 = vld [vmem:[#allocation8 + $0x2358] sm:$0xff]
    %v1709 = vld [vmem:[#allocation8 + $0x2360] sm:$0xff]
    %v1710 = vld [vmem:[#allocation8 + $0x2368] sm:$0xff]
    %v1711 = vld [vmem:[#allocation8 + $0x2370] sm:$0xff]
    %v1712 = vld [vmem:[#allocation8 + $0x2378] sm:$0xff]
    %v1713 = vld [vmem:[#allocation8 + $0x2380] sm:$0xff]
    %v1714 = vld [vmem:[#allocation8 + $0x2388] sm:$0xff]
    %v1715 = vld [vmem:[#allocation8 + $0x2390] sm:$0xff]
    %v1716 = vld [vmem:[#allocation8 + $0x2398] sm:$0xff]
    %v1717 = vld [vmem:[#allocation8 + $0x23a0] sm:$0xff]
    %v1718 = vld [vmem:[#allocation8 + $0x23a8] sm:$0xff]
    %v1719 = vld [vmem:[#allocation8 + $0x23b0] sm:$0xff]
    %v1720 = vld [vmem:[#allocation8 + $0x23b8] sm:$0xff]
    %v1721 = vld [vmem:[#allocation8 + $0x23c0] sm:$0xff]
    %v1722 = vld [vmem:[#allocation8 + $0x23c8] sm:$0xff]
    %v1723 = vld [vmem:[#allocation8 + $0x23d0] sm:$0xff]
    %v1724 = vld [vmem:[#allocation8 + $0x23d8] sm:$0xff]
    %v1725 = vld [vmem:[#allocation8 + $0x23e0] sm:$0xff]
    %v1726 = vld [vmem:[#allocation8 + $0x23e8] sm:$0xff]
    %v1727 = vld [vmem:[#allocation8 + $0x23f0] sm:$0xff]
    %v1728 = vld [vmem:[#allocation8 + $0x23f8] sm:$0xff]
    %v1729 = vld [vmem:[#allocation8 + $0x2400] sm:$0xff]
    %v1730 = vld [vmem:[#allocation8 + $0x2408] sm:$0xff]
    %v1731 = vld [vmem:[#allocation8 + $0x2410] sm:$0xff]
    %v1732 = vld [vmem:[#allocation8 + $0x2418] sm:$0xff]
    %v1733 = vld [vmem:[#allocation8 + $0x2420] sm:$0xff]
    %v1734 = vld [vmem:[#allocation8 + $0x2428] sm:$0xff]
    %v1735 = vld [vmem:[#allocation8 + $0x2430] sm:$0xff]
    %v1736 = vld [vmem:[#allocation8 + $0x2438] sm:$0xff]
    %v1737 = vld [vmem:[#allocation8 + $0x2440] sm:$0xff]
    %v1738 = vld [vmem:[#allocation8 + $0x2448] sm:$0xff]
    %v1739 = vld [vmem:[#allocation8 + $0x2450] sm:$0xff]
    %v1740 = vld [vmem:[#allocation8 + $0x2458] sm:$0xff]
    %v1741 = vld [vmem:[#allocation8 + $0x2460] sm:$0xff]
    %v1742 = vld [vmem:[#allocation8 + $0x2468] sm:$0xff]
    %v1743 = vld [vmem:[#allocation8 + $0x2470] sm:$0xff]
    %v1744 = vld [vmem:[#allocation8 + $0x2478] sm:$0xff]
    %v1745 = vld [vmem:[#allocation8 + $0x2480] sm:$0xff]
    %v1746 = vld [vmem:[#allocation8 + $0x2488] sm:$0xff]
    %v1747 = vld [vmem:[#allocation8 + $0x2490] sm:$0xff]
    %v1748 = vld [vmem:[#allocation8 + $0x2498] sm:$0xff]
    %v1749 = vld [vmem:[#allocation8 + $0x24a0] sm:$0xff]
    %v1750 = vld [vmem:[#allocation8 + $0x24a8] sm:$0xff]
    %v1751 = vld [vmem:[#allocation8 + $0x24b0] sm:$0xff]
    %v1752 = vld [vmem:[#allocation8 + $0x24b8] sm:$0xff]
    %v1753 = vld [vmem:[#allocation8 + $0x24c0] sm:$0xff]
    %v1754 = vld [vmem:[#allocation8 + $0x24c8] sm:$0xff]
    %v1755 = vld [vmem:[#allocation8 + $0x24d0] sm:$0xff]
    %v1756 = vld [vmem:[#allocation8 + $0x24d8] sm:$0xff]
    %v1757 = vld [vmem:[#allocation8 + $0x24e0] sm:$0xff]
    %v1758 = vld [vmem:[#allocation8 + $0x24e8] sm:$0xff]
    %v1759 = vld [vmem:[#allocation8 + $0x24f0] sm:$0xff]
    %v1760 = vld [vmem:[#allocation8 + $0x24f8] sm:$0xff]
    %v1761 = vld [vmem:[#allocation8 + $0x2500] sm:$0xff]
    %v1762 = vld [vmem:[#allocation8 + $0x2508] sm:$0xff]
    %v1763 = vld [vmem:[#allocation8 + $0x2510] sm:$0xff]
    %v1764 = vld [vmem:[#allocation8 + $0x2518] sm:$0xff]
    %v1765 = vld [vmem:[#allocation8 + $0x2520] sm:$0xff]
    %v1766 = vld [vmem:[#allocation8 + $0x2528] sm:$0xff]
    %v1767 = vld [vmem:[#allocation8 + $0x2530] sm:$0xff]
    %v1768 = vld [vmem:[#allocation8 + $0x2538] sm:$0xff]
    %v1769 = vld [vmem:[#allocation8 + $0x2540] sm:$0xff]
    %v1770 = vld [vmem:[#allocation8 + $0x2548] sm:$0xff]
    %v1771 = vld [vmem:[#allocation8 + $0x2550] sm:$0xff]
    %v1772 = vld [vmem:[#allocation8 + $0x2558] sm:$0xff]
    %v1773 = vld [vmem:[#allocation8 + $0x2560] sm:$0xff]
    %v1774 = vld [vmem:[#allocation8 + $0x2568] sm:$0xff]
    %v1775 = vld [vmem:[#allocation8 + $0x2570] sm:$0xff]
    %v1776 = vld [vmem:[#allocation8 + $0x2578] sm:$0xff]
    %v1777 = vld [vmem:[#allocation8 + $0x2580] sm:$0xff]
    %v1778 = vld [vmem:[#allocation8 + $0x2588] sm:$0xff]
    %v1779 = vld [vmem:[#allocation8 + $0x2590] sm:$0xff]
    %v1780 = vld [vmem:[#allocation8 + $0x2598] sm:$0xff]
    %v1781 = vld [vmem:[#allocation8 + $0x25a0] sm:$0xff]
    %v1782 = vld [vmem:[#allocation8 + $0x25a8] sm:$0xff]
    %v1783 = vld [vmem:[#allocation8 + $0x25b0] sm:$0xff]
    %v1784 = vld [vmem:[#allocation8 + $0x25b8] sm:$0xff]
    %v1785 = vld [vmem:[#allocation8 + $0x25c0] sm:$0xff]
    %v1786 = vld [vmem:[#allocation8 + $0x25c8] sm:$0xff]
    %v1787 = vld [vmem:[#allocation8 + $0x25d0] sm:$0xff]
    %v1788 = vld [vmem:[#allocation8 + $0x25d8] sm:$0xff]
    %v1789 = vld [vmem:[#allocation8 + $0x25e0] sm:$0xff]
    %v1790 = vld [vmem:[#allocation8 + $0x25e8] sm:$0xff]
    %v1791 = vld [vmem:[#allocation8 + $0x25f0] sm:$0xff]
    %v1792 = vld [vmem:[#allocation8 + $0x25f8] sm:$0xff]
    %v1793 = vld [vmem:[#allocation8 + $0x2600] sm:$0xff]
    %v1794 = vld [vmem:[#allocation8 + $0x2608] sm:$0xff]
    %v1795 = vld [vmem:[#allocation8 + $0x2610] sm:$0xff]
    %v1796 = vld [vmem:[#allocation8 + $0x2618] sm:$0xff]
    %v1797 = vld [vmem:[#allocation8 + $0x2620] sm:$0xff]
    %v1798 = vld [vmem:[#allocation8 + $0x2628] sm:$0xff]
    %v1799 = vld [vmem:[#allocation8 + $0x2630] sm:$0xff]
    %v1800 = vld [vmem:[#allocation8 + $0x2638] sm:$0xff]
    %v1801 = vld [vmem:[#allocation8 + $0x2640] sm:$0xff]
    %v1802 = vld [vmem:[#allocation8 + $0x2648] sm:$0xff]
    %v1803 = vld [vmem:[#allocation8 + $0x2650] sm:$0xff]
    %v1804 = vld [vmem:[#allocation8 + $0x2658] sm:$0xff]
    %v1805 = vld [vmem:[#allocation8 + $0x2660] sm:$0xff]
    %v1806 = vld [vmem:[#allocation8 + $0x2668] sm:$0xff]
    %v1807 = vld [vmem:[#allocation8 + $0x2670] sm:$0xff]
    %v1808 = vld [vmem:[#allocation8 + $0x2678] sm:$0xff]
    %v1809 = vld [vmem:[#allocation8 + $0x2680] sm:$0xff]
    %v1810 = vld [vmem:[#allocation8 + $0x2688] sm:$0xff]
    %v1811 = vld [vmem:[#allocation8 + $0x2690] sm:$0xff]
    %v1812 = vld [vmem:[#allocation8 + $0x2698] sm:$0xff]
    %v1813 = vld [vmem:[#allocation8 + $0x26a0] sm:$0xff]
    %v1814 = vld [vmem:[#allocation8 + $0x26a8] sm:$0xff]
    %v1815 = vld [vmem:[#allocation8 + $0x26b0] sm:$0xff]
    %v1816 = vld [vmem:[#allocation8 + $0x26b8] sm:$0xff]
    %v1817 = vld [vmem:[#allocation8 + $0x26c0] sm:$0xff]
    %v1818 = vld [vmem:[#allocation8 + $0x26c8] sm:$0xff]
    %v1819 = vld [vmem:[#allocation8 + $0x26d0] sm:$0xff]
    %v1820 = vld [vmem:[#allocation8 + $0x26d8] sm:$0xff]
    %v1821 = vld [vmem:[#allocation8 + $0x26e0] sm:$0xff]
    %v1822 = vld [vmem:[#allocation8 + $0x26e8] sm:$0xff]
    %v1823 = vld [vmem:[#allocation8 + $0x26f0] sm:$0xff]
    %v1824 = vld [vmem:[#allocation8 + $0x26f8] sm:$0xff]
    %v1825 = vld [vmem:[#allocation8 + $0x2700] sm:$0xff]
    %v1826 = vld [vmem:[#allocation8 + $0x2708] sm:$0xff]
    %v1827 = vld [vmem:[#allocation8 + $0x2710] sm:$0xff]
    %v1828 = vld [vmem:[#allocation8 + $0x2718] sm:$0xff]
    %v1829 = vld [vmem:[#allocation8 + $0x2720] sm:$0xff]
    %v1830 = vld [vmem:[#allocation8 + $0x2728] sm:$0xff]
    %v1831 = vld [vmem:[#allocation8 + $0x2730] sm:$0xff]
    %v1832 = vld [vmem:[#allocation8 + $0x2738] sm:$0xff]
    %v1833 = vld [vmem:[#allocation8 + $0x2740] sm:$0xff]
    %v1834 = vld [vmem:[#allocation8 + $0x2748] sm:$0xff]
    %v1835 = vld [vmem:[#allocation8 + $0x2750] sm:$0xff]
    %v1836 = vld [vmem:[#allocation8 + $0x2758] sm:$0xff]
    %v1837 = vld [vmem:[#allocation8 + $0x2760] sm:$0xff]
    %v1838 = vld [vmem:[#allocation8 + $0x2768] sm:$0xff]
    %v1839 = vld [vmem:[#allocation8 + $0x2770] sm:$0xff]
    %v1840 = vld [vmem:[#allocation8 + $0x2778] sm:$0xff]
    %v1841 = vld [vmem:[#allocation8 + $0x2780] sm:$0xff]
    %v1842 = vld [vmem:[#allocation8 + $0x2788] sm:$0xff]
    %v1843 = vld [vmem:[#allocation8 + $0x2790] sm:$0xff]
    %v1844 = vld [vmem:[#allocation8 + $0x2798] sm:$0xff]
    %v1845 = vld [vmem:[#allocation8 + $0x27a0] sm:$0xff]
    %v1846 = vld [vmem:[#allocation8 + $0x27a8] sm:$0xff]
    %v1847 = vld [vmem:[#allocation8 + $0x27b0] sm:$0xff]
    %v1848 = vld [vmem:[#allocation8 + $0x27b8] sm:$0xff]
    %v1849 = vld [vmem:[#allocation8 + $0x27c0] sm:$0xff]
    %v1850 = vld [vmem:[#allocation8 + $0x27c8] sm:$0xff]
    %v1851 = vld [vmem:[#allocation8 + $0x27d0] sm:$0xff]
    %v1852 = vld [vmem:[#allocation8 + $0x27d8] sm:$0xff]
    %v1853 = vld [vmem:[#allocation8 + $0x27e0] sm:$0xff]
    %v1854 = vld [vmem:[#allocation8 + $0x27e8] sm:$0xff]
    %v1855 = vld [vmem:[#allocation8 + $0x27f0] sm:$0xff]
    %v1856 = vld [vmem:[#allocation8 + $0x27f8] sm:$0xff]
    %v1857 = vld [vmem:[#allocation8 + $0x2800] sm:$0xff]
    %v1858 = vld [vmem:[#allocation8 + $0x2808] sm:$0xff]
    %v1859 = vld [vmem:[#allocation8 + $0x2810] sm:$0xff]
    %v1860 = vld [vmem:[#allocation8 + $0x2818] sm:$0xff]
    %v1861 = vld [vmem:[#allocation8 + $0x2820] sm:$0xff]
    %v1862 = vld [vmem:[#allocation8 + $0x2828] sm:$0xff]
    %v1863 = vld [vmem:[#allocation8 + $0x2830] sm:$0xff]
    %v1864 = vld [vmem:[#allocation8 + $0x2838] sm:$0xff]
    %v1865 = vld [vmem:[#allocation8 + $0x2840] sm:$0xff]
    %v1866 = vld [vmem:[#allocation8 + $0x2848] sm:$0xff]
    %v1867 = vld [vmem:[#allocation8 + $0x2850] sm:$0xff]
    %v1868 = vld [vmem:[#allocation8 + $0x2858] sm:$0xff]
    %v1869 = vld [vmem:[#allocation8 + $0x2860] sm:$0xff]
    %v1870 = vld [vmem:[#allocation8 + $0x2868] sm:$0xff]
    %v1871 = vld [vmem:[#allocation8 + $0x2870] sm:$0xff]
    %v1872 = vld [vmem:[#allocation8 + $0x2878] sm:$0xff]
    %v1873 = vld [vmem:[#allocation8 + $0x2880] sm:$0xff]
    %v1874 = vld [vmem:[#allocation8 + $0x2888] sm:$0xff]
    %v1875 = vld [vmem:[#allocation8 + $0x2890] sm:$0xff]
    %v1876 = vld [vmem:[#allocation8 + $0x2898] sm:$0xff]
    %v1877 = vld [vmem:[#allocation8 + $0x28a0] sm:$0xff]
    %v1878 = vld [vmem:[#allocation8 + $0x28a8] sm:$0xff]
    %v1879 = vld [vmem:[#allocation8 + $0x28b0] sm:$0xff]
    %v1880 = vld [vmem:[#allocation8 + $0x28b8] sm:$0xff]
    %v1881 = vld [vmem:[#allocation8 + $0x28c0] sm:$0xff]
    %v1882 = vld [vmem:[#allocation8 + $0x28c8] sm:$0xff]
    %v1883 = vld [vmem:[#allocation8 + $0x28d0] sm:$0xff]
    %v1884 = vld [vmem:[#allocation8 + $0x28d8] sm:$0xff]
    %v1885 = vld [vmem:[#allocation8 + $0x28e0] sm:$0xff]
    %v1886 = vld [vmem:[#allocation8 + $0x28e8] sm:$0xff]
    %v1887 = vld [vmem:[#allocation8 + $0x28f0] sm:$0xff]
    %v1888 = vld [vmem:[#allocation8 + $0x28f8] sm:$0xff]
    %v1889 = vld [vmem:[#allocation8 + $0x2900] sm:$0xff]
    %v1890 = vld [vmem:[#allocation8 + $0x2908] sm:$0xff]
    %v1891 = vld [vmem:[#allocation8 + $0x2910] sm:$0xff]
    %v1892 = vld [vmem:[#allocation8 + $0x2918] sm:$0xff]
    %v1893 = vld [vmem:[#allocation8 + $0x2920] sm:$0xff]
    %v1894 = vld [vmem:[#allocation8 + $0x2928] sm:$0xff]
    %v1895 = vld [vmem:[#allocation8 + $0x2930] sm:$0xff]
    %v1896 = vld [vmem:[#allocation8 + $0x2938] sm:$0xff]
    %v1897 = vld [vmem:[#allocation8 + $0x2940] sm:$0xff]
    %v1898 = vld [vmem:[#allocation8 + $0x2948] sm:$0xff]
    %v1899 = vld [vmem:[#allocation8 + $0x2950] sm:$0xff]
    %v1900 = vld [vmem:[#allocation8 + $0x2958] sm:$0xff]
    %v1901 = vld [vmem:[#allocation8 + $0x2960] sm:$0xff]
    %v1902 = vld [vmem:[#allocation8 + $0x2968] sm:$0xff]
    %v1903 = vld [vmem:[#allocation8 + $0x2970] sm:$0xff]
    %v1904 = vld [vmem:[#allocation8 + $0x2978] sm:$0xff]
    %v1905 = vld [vmem:[#allocation8 + $0x2980] sm:$0xff]
    %v1906 = vld [vmem:[#allocation8 + $0x2988] sm:$0xff]
    %v1907 = vld [vmem:[#allocation8 + $0x2990] sm:$0xff]
    %v1908 = vld [vmem:[#allocation8 + $0x2998] sm:$0xff]
    %v1909 = vld [vmem:[#allocation8 + $0x29a0] sm:$0xff]
    %v1910 = vld [vmem:[#allocation8 + $0x29a8] sm:$0xff]
    %v1911 = vld [vmem:[#allocation8 + $0x29b0] sm:$0xff]
    %v1912 = vld [vmem:[#allocation8 + $0x29b8] sm:$0xff]
    %v1913 = vld [vmem:[#allocation8 + $0x29c0] sm:$0xff]
    %v1914 = vld [vmem:[#allocation8 + $0x29c8] sm:$0xff]
    %v1915 = vld [vmem:[#allocation8 + $0x29d0] sm:$0xff]
    %v1916 = vld [vmem:[#allocation8 + $0x29d8] sm:$0xff]
    %v1917 = vld [vmem:[#allocation8 + $0x29e0] sm:$0xff]
    %v1918 = vld [vmem:[#allocation8 + $0x29e8] sm:$0xff]
    %v1919 = vld [vmem:[#allocation8 + $0x29f0] sm:$0xff]
    %v1920 = vld [vmem:[#allocation8 + $0x29f8] sm:$0xff]
    %v1921 = vld [vmem:[#allocation8 + $0x2a00] sm:$0xff]
    %v1922 = vld [vmem:[#allocation8 + $0x2a08] sm:$0xff]
    %v1923 = vld [vmem:[#allocation8 + $0x2a10] sm:$0xff]
    %v1924 = vld [vmem:[#allocation8 + $0x2a18] sm:$0xff]
    %v1925 = vld [vmem:[#allocation8 + $0x2a20] sm:$0xff]
    %v1926 = vld [vmem:[#allocation8 + $0x2a28] sm:$0xff]
    %v1927 = vld [vmem:[#allocation8 + $0x2a30] sm:$0xff]
    %v1928 = vld [vmem:[#allocation8 + $0x2a38] sm:$0xff]
    %v1929 = vld [vmem:[#allocation8 + $0x2a40] sm:$0xff]
    %v1930 = vld [vmem:[#allocation8 + $0x2a48] sm:$0xff]
    %v1931 = vld [vmem:[#allocation8 + $0x2a50] sm:$0xff]
    %v1932 = vld [vmem:[#allocation8 + $0x2a58] sm:$0xff]
    %v1933 = vld [vmem:[#allocation8 + $0x2a60] sm:$0xff]
    %v1934 = vld [vmem:[#allocation8 + $0x2a68] sm:$0xff]
    %v1935 = vld [vmem:[#allocation8 + $0x2a70] sm:$0xff]
    %v1936 = vld [vmem:[#allocation8 + $0x2a78] sm:$0xff]
    %v1937 = vld [vmem:[#allocation8 + $0x2a80] sm:$0xff]
    %v1938 = vld [vmem:[#allocation8 + $0x2a88] sm:$0xff]
    %v1939 = vld [vmem:[#allocation8 + $0x2a90] sm:$0xff]
    %v1940 = vld [vmem:[#allocation8 + $0x2a98] sm:$0xff]
    %v1941 = vld [vmem:[#allocation8 + $0x2aa0] sm:$0xff]
    %v1942 = vld [vmem:[#allocation8 + $0x2aa8] sm:$0xff]
    %v1943 = vld [vmem:[#allocation8 + $0x2ab0] sm:$0xff]
    %v1944 = vld [vmem:[#allocation8 + $0x2ab8] sm:$0xff]
    %v1945 = vld [vmem:[#allocation8 + $0x2ac0] sm:$0xff]
    %v1946 = vld [vmem:[#allocation8 + $0x2ac8] sm:$0xff]
    %v1947 = vld [vmem:[#allocation8 + $0x2ad0] sm:$0xff]
    %v1948 = vld [vmem:[#allocation8 + $0x2ad8] sm:$0xff]
    %v1949 = vld [vmem:[#allocation8 + $0x2ae0] sm:$0xff]
    %v1950 = vld [vmem:[#allocation8 + $0x2ae8] sm:$0xff]
    %v1951 = vld [vmem:[#allocation8 + $0x2af0] sm:$0xff]
    %v1952 = vld [vmem:[#allocation8 + $0x2af8] sm:$0xff]
    %v1953 = vld [vmem:[#allocation8 + $0x2b00] sm:$0xff]
    %v1954 = vld [vmem:[#allocation8 + $0x2b08] sm:$0xff]
    %v1955 = vld [vmem:[#allocation8 + $0x2b10] sm:$0xff]
    %v1956 = vld [vmem:[#allocation8 + $0x2b18] sm:$0xff]
    %v1957 = vld [vmem:[#allocation8 + $0x2b20] sm:$0xff]
    %v1958 = vld [vmem:[#allocation8 + $0x2b28] sm:$0xff]
    %v1959 = vld [vmem:[#allocation8 + $0x2b30] sm:$0xff]
    %v1960 = vld [vmem:[#allocation8 + $0x2b38] sm:$0xff]
    %v1961 = vld [vmem:[#allocation8 + $0x2b40] sm:$0xff]
    %v1962 = vld [vmem:[#allocation8 + $0x2b48] sm:$0xff]
    %v1963 = vld [vmem:[#allocation8 + $0x2b50] sm:$0xff]
    %v1964 = vld [vmem:[#allocation8 + $0x2b58] sm:$0xff]
    %v1965 = vld [vmem:[#allocation8 + $0x2b60] sm:$0xff]
    %v1966 = vld [vmem:[#allocation8 + $0x2b68] sm:$0xff]
    %v1967 = vld [vmem:[#allocation8 + $0x2b70] sm:$0xff]
    %v1968 = vld [vmem:[#allocation8 + $0x2b78] sm:$0xff]
    %v1969 = vld [vmem:[#allocation8 + $0x2b80] sm:$0xff]
    %v1970 = vld [vmem:[#allocation8 + $0x2b88] sm:$0xff]
    %v1971 = vld [vmem:[#allocation8 + $0x2b90] sm:$0xff]
    %v1972 = vld [vmem:[#allocation8 + $0x2b98] sm:$0xff]
    %v1973 = vld [vmem:[#allocation8 + $0x2ba0] sm:$0xff]
    %v1974 = vld [vmem:[#allocation8 + $0x2ba8] sm:$0xff]
    %v1975 = vld [vmem:[#allocation8 + $0x2bb0] sm:$0xff]
    %v1976 = vld [vmem:[#allocation8 + $0x2bb8] sm:$0xff]
    %v1977 = vld [vmem:[#allocation8 + $0x2bc0] sm:$0xff]
    %v1978 = vld [vmem:[#allocation8 + $0x2bc8] sm:$0xff]
    %v1979 = vld [vmem:[#allocation8 + $0x2bd0] sm:$0xff]
    %v1980 = vld [vmem:[#allocation8 + $0x2bd8] sm:$0xff]
    %v1981 = vld [vmem:[#allocation8 + $0x2be0] sm:$0xff]
    %v1982 = vld [vmem:[#allocation8 + $0x2be8] sm:$0xff]
    %v1983 = vld [vmem:[#allocation8 + $0x2bf0] sm:$0xff]
    %v1984 = vld [vmem:[#allocation8 + $0x2bf8] sm:$0xff]
    %v1985 = vld [vmem:[#allocation8 + $0x2c00] sm:$0xff]
    %v1986 = vld [vmem:[#allocation8 + $0x2c08] sm:$0xff]
    %v1987 = vld [vmem:[#allocation8 + $0x2c10] sm:$0xff]
    %v1988 = vld [vmem:[#allocation8 + $0x2c18] sm:$0xff]
    %v1989 = vld [vmem:[#allocation8 + $0x2c20] sm:$0xff]
    %v1990 = vld [vmem:[#allocation8 + $0x2c28] sm:$0xff]
    %v1991 = vld [vmem:[#allocation8 + $0x2c30] sm:$0xff]
    %v1992 = vld [vmem:[#allocation8 + $0x2c38] sm:$0xff]
    %v1993 = vld [vmem:[#allocation8 + $0x2c40] sm:$0xff]
    %v1994 = vld [vmem:[#allocation8 + $0x2c48] sm:$0xff]
    %v1995 = vld [vmem:[#allocation8 + $0x2c50] sm:$0xff]
    %v1996 = vld [vmem:[#allocation8 + $0x2c58] sm:$0xff]
    %v1997 = vld [vmem:[#allocation8 + $0x2c60] sm:$0xff]
    %v1998 = vld [vmem:[#allocation8 + $0x2c68] sm:$0xff]
    %v1999 = vld [vmem:[#allocation8 + $0x2c70] sm:$0xff]
    %v2000 = vld [vmem:[#allocation8 + $0x2c78] sm:$0xff]
    %v2001 = vld [vmem:[#allocation8 + $0x2c80] sm:$0xff]
    %v2002 = vld [vmem:[#allocation8 + $0x2c88] sm:$0xff]
    %v2003 = vld [vmem:[#allocation8 + $0x2c90] sm:$0xff]
    %v2004 = vld [vmem:[#allocation8 + $0x2c98] sm:$0xff]
    %v2005 = vld [vmem:[#allocation8 + $0x2ca0] sm:$0xff]
    %v2006 = vld [vmem:[#allocation8 + $0x2ca8] sm:$0xff]
    %v2007 = vld [vmem:[#allocation8 + $0x2cb0] sm:$0xff]
    %v2008 = vld [vmem:[#allocation8 + $0x2cb8] sm:$0xff]
    %v2009 = vld [vmem:[#allocation8 + $0x2cc0] sm:$0xff]
    %v2010 = vld [vmem:[#allocation8 + $0x2cc8] sm:$0xff]
    %v2011 = vld [vmem:[#allocation8 + $0x2cd0] sm:$0xff]
    %v2012 = vld [vmem:[#allocation8 + $0x2cd8] sm:$0xff]
    %v2013 = vld [vmem:[#allocation8 + $0x2ce0] sm:$0xff]
    %v2014 = vld [vmem:[#allocation8 + $0x2ce8] sm:$0xff]
    %v2015 = vld [vmem:[#allocation8 + $0x2cf0] sm:$0xff]
    %v2016 = vld [vmem:[#allocation8 + $0x2cf8] sm:$0xff]
    %v2017 = vld [vmem:[#allocation8 + $0x2d00] sm:$0xff]
    %v2018 = vld [vmem:[#allocation8 + $0x2d08] sm:$0xff]
    %v2019 = vld [vmem:[#allocation8 + $0x2d10] sm:$0xff]
    %v2020 = vld [vmem:[#allocation8 + $0x2d18] sm:$0xff]
    %v2021 = vld [vmem:[#allocation8 + $0x2d20] sm:$0xff]
    %v2022 = vld [vmem:[#allocation8 + $0x2d28] sm:$0xff]
    %v2023 = vld [vmem:[#allocation8 + $0x2d30] sm:$0xff]
    %v2024 = vld [vmem:[#allocation8 + $0x2d38] sm:$0xff]
    %v2025 = vld [vmem:[#allocation8 + $0x2d40] sm:$0xff]
    %v2026 = vld [vmem:[#allocation8 + $0x2d48] sm:$0xff]
    %v2027 = vld [vmem:[#allocation8 + $0x2d50] sm:$0xff]
    %v2028 = vld [vmem:[#allocation8 + $0x2d58] sm:$0xff]
    %v2029 = vld [vmem:[#allocation8 + $0x2d60] sm:$0xff]
    %v2030 = vld [vmem:[#allocation8 + $0x2d68] sm:$0xff]
    %v2031 = vld [vmem:[#allocation8 + $0x2d70] sm:$0xff]
    %v2032 = vld [vmem:[#allocation8 + $0x2d78] sm:$0xff]
    %v2033 = vld [vmem:[#allocation8 + $0x2d80] sm:$0xff]
    %v2034 = vld [vmem:[#allocation8 + $0x2d88] sm:$0xff]
    %v2035 = vld [vmem:[#allocation8 + $0x2d90] sm:$0xff]
    %v2036 = vld [vmem:[#allocation8 + $0x2d98] sm:$0xff]
    %v2037 = vld [vmem:[#allocation8 + $0x2da0] sm:$0xff]
    %v2038 = vld [vmem:[#allocation8 + $0x2da8] sm:$0xff]
    %v2039 = vld [vmem:[#allocation8 + $0x2db0] sm:$0xff]
    %v2040 = vld [vmem:[#allocation8 + $0x2db8] sm:$0xff]
    %v2041 = vld [vmem:[#allocation8 + $0x2dc0] sm:$0xff]
    %v2042 = vld [vmem:[#allocation8 + $0x2dc8] sm:$0xff]
    %v2043 = vld [vmem:[#allocation8 + $0x2dd0] sm:$0xff]
    %v2044 = vld [vmem:[#allocation8 + $0x2dd8] sm:$0xff]
    %v2045 = vld [vmem:[#allocation8 + $0x2de0] sm:$0xff]
    %v2046 = vld [vmem:[#allocation8 + $0x2de8] sm:$0xff]
    %v2047 = vld [vmem:[#allocation8 + $0x2df0] sm:$0xff]
    %v2048 = vld [vmem:[#allocation8 + $0x2df8] sm:$0xff]
    %v2049 = vld [vmem:[#allocation8 + $0x2e00] sm:$0xff]
    %v2050 = vld [vmem:[#allocation8 + $0x2e08] sm:$0xff]
    %v2051 = vld [vmem:[#allocation8 + $0x2e10] sm:$0xff]
    %v2052 = vld [vmem:[#allocation8 + $0x2e18] sm:$0xff]
    %v2053 = vld [vmem:[#allocation8 + $0x2e20] sm:$0xff]
    %v2054 = vld [vmem:[#allocation8 + $0x2e28] sm:$0xff]
    %v2055 = vld [vmem:[#allocation8 + $0x2e30] sm:$0xff]
    %v2056 = vld [vmem:[#allocation8 + $0x2e38] sm:$0xff]
    %v2057 = vld [vmem:[#allocation8 + $0x2e40] sm:$0xff]
    %v2058 = vld [vmem:[#allocation8 + $0x2e48] sm:$0xff]
    %v2059 = vld [vmem:[#allocation8 + $0x2e50] sm:$0xff]
    %v2060 = vld [vmem:[#allocation8 + $0x2e58] sm:$0xff]
    %v2061 = vld [vmem:[#allocation8 + $0x2e60] sm:$0xff]
    %v2062 = vld [vmem:[#allocation8 + $0x2e68] sm:$0xff]
    %v2063 = vld [vmem:[#allocation8 + $0x2e70] sm:$0xff]
    %v2064 = vld [vmem:[#allocation8 + $0x2e78] sm:$0xff]
    %v2065 = vld [vmem:[#allocation8 + $0x2e80] sm:$0xff]
    %v2066 = vld [vmem:[#allocation8 + $0x2e88] sm:$0xff]
    %v2067 = vld [vmem:[#allocation8 + $0x2e90] sm:$0xff]
    %v2068 = vld [vmem:[#allocation8 + $0x2e98] sm:$0xff]
    %v2069 = vld [vmem:[#allocation8 + $0x2ea0] sm:$0xff]
    %v2070 = vld [vmem:[#allocation8 + $0x2ea8] sm:$0xff]
    %v2071 = vld [vmem:[#allocation8 + $0x2eb0] sm:$0xff]
    %v2072 = vld [vmem:[#allocation8 + $0x2eb8] sm:$0xff]
    %v2073 = vld [vmem:[#allocation8 + $0x2ec0] sm:$0xff]
    %v2074 = vld [vmem:[#allocation8 + $0x2ec8] sm:$0xff]
    %v2075 = vld [vmem:[#allocation8 + $0x2ed0] sm:$0xff]
    %v2076 = vld [vmem:[#allocation8 + $0x2ed8] sm:$0xff]
    %v2077 = vld [vmem:[#allocation8 + $0x2ee0] sm:$0xff]
    %v2078 = vld [vmem:[#allocation8 + $0x2ee8] sm:$0xff]
    %v2079 = vld [vmem:[#allocation8 + $0x2ef0] sm:$0xff]
    %v2080 = vld [vmem:[#allocation8 + $0x2ef8] sm:$0xff]
    %v2081 = vld [vmem:[#allocation8 + $0x2f00] sm:$0xff]
    %v2082 = vld [vmem:[#allocation8 + $0x2f08] sm:$0xff]
    %v2083 = vld [vmem:[#allocation8 + $0x2f10] sm:$0xff]
    %v2084 = vld [vmem:[#allocation8 + $0x2f18] sm:$0xff]
    %v2085 = vld [vmem:[#allocation8 + $0x2f20] sm:$0xff]
    %v2086 = vld [vmem:[#allocation8 + $0x2f28] sm:$0xff]
    %v2087 = vld [vmem:[#allocation8 + $0x2f30] sm:$0xff]
    %v2088 = vld [vmem:[#allocation8 + $0x2f38] sm:$0xff]
    %v2089 = vld [vmem:[#allocation8 + $0x2f40] sm:$0xff]
    %v2090 = vld [vmem:[#allocation8 + $0x2f48] sm:$0xff]
    %v2091 = vld [vmem:[#allocation8 + $0x2f50] sm:$0xff]
    %v2092 = vld [vmem:[#allocation8 + $0x2f58] sm:$0xff]
    %v2093 = vld [vmem:[#allocation8 + $0x2f60] sm:$0xff]
    %v2094 = vld [vmem:[#allocation8 + $0x2f68] sm:$0xff]
    %v2095 = vld [vmem:[#allocation8 + $0x2f70] sm:$0xff]
    %v2096 = vld [vmem:[#allocation8 + $0x2f78] sm:$0xff]
    %v2097 = vld [vmem:[#allocation8 + $0x2f80] sm:$0xff]
    %v2098 = vld [vmem:[#allocation8 + $0x2f88] sm:$0xff]
    %v2099 = vld [vmem:[#allocation8 + $0x2f90] sm:$0xff]
    %v2100 = vld [vmem:[#allocation8 + $0x2f98] sm:$0xff]
    %v2101 = vld [vmem:[#allocation8 + $0x2fa0] sm:$0xff]
    %v2102 = vld [vmem:[#allocation8 + $0x2fa8] sm:$0xff]
    %v2103 = vld [vmem:[#allocation8 + $0x2fb0] sm:$0xff]
    %v2104 = vld [vmem:[#allocation8 + $0x2fb8] sm:$0xff]
    %v2105 = vld [vmem:[#allocation8 + $0x2fc0] sm:$0xff]
    %v2106 = vld [vmem:[#allocation8 + $0x2fc8] sm:$0xff]
    %v2107 = vld [vmem:[#allocation8 + $0x2fd0] sm:$0xff]
    %v2108 = vld [vmem:[#allocation8 + $0x2fd8] sm:$0xff]
    %v2109 = vld [vmem:[#allocation8 + $0x2fe0] sm:$0xff]
    %v2110 = vld [vmem:[#allocation8 + $0x2fe8] sm:$0xff]
    %v2111 = vld [vmem:[#allocation8 + $0x2ff0] sm:$0xff]
    %v2112 = vld [vmem:[#allocation8 + $0x2ff8] sm:$0xff]
    %v2113 = vld [vmem:[#allocation8 + $0x3000] sm:$0xff]
    %v2114 = vld [vmem:[#allocation8 + $0x3008] sm:$0xff]
    %v2115 = vld [vmem:[#allocation8 + $0x3010] sm:$0xff]
    %v2116 = vld [vmem:[#allocation8 + $0x3018] sm:$0xff]
    %v2117 = vld [vmem:[#allocation8 + $0x3020] sm:$0xff]
    %v2118 = vld [vmem:[#allocation8 + $0x3028] sm:$0xff]
    %v2119 = vld [vmem:[#allocation8 + $0x3030] sm:$0xff]
    %v2120 = vld [vmem:[#allocation8 + $0x3038] sm:$0xff]
    %v2121 = vld [vmem:[#allocation8 + $0x3040] sm:$0xff]
    %v2122 = vld [vmem:[#allocation8 + $0x3048] sm:$0xff]
    %v2123 = vld [vmem:[#allocation8 + $0x3050] sm:$0xff]
    %v2124 = vld [vmem:[#allocation8 + $0x3058] sm:$0xff]
    %v2125 = vld [vmem:[#allocation8 + $0x3060] sm:$0xff]
    %v2126 = vld [vmem:[#allocation8 + $0x3068] sm:$0xff]
    %v2127 = vld [vmem:[#allocation8 + $0x3070] sm:$0xff]
    %v2128 = vld [vmem:[#allocation8 + $0x3078] sm:$0xff]
    %v2129 = vld [vmem:[#allocation8 + $0x3080] sm:$0xff]
    %v2130 = vld [vmem:[#allocation8 + $0x3088] sm:$0xff]
    %v2131 = vld [vmem:[#allocation8 + $0x3090] sm:$0xff]
    %v2132 = vld [vmem:[#allocation8 + $0x3098] sm:$0xff]
    %v2133 = vld [vmem:[#allocation8 + $0x30a0] sm:$0xff]
    %v2134 = vld [vmem:[#allocation8 + $0x30a8] sm:$0xff]
    %v2135 = vld [vmem:[#allocation8 + $0x30b0] sm:$0xff]
    %v2136 = vld [vmem:[#allocation8 + $0x30b8] sm:$0xff]
    %v2137 = vld [vmem:[#allocation8 + $0x30c0] sm:$0xff]
    %v2138 = vld [vmem:[#allocation8 + $0x30c8] sm:$0xff]
    %v2139 = vld [vmem:[#allocation8 + $0x30d0] sm:$0xff]
    %v2140 = vld [vmem:[#allocation8 + $0x30d8] sm:$0xff]
    %v2141 = vld [vmem:[#allocation8 + $0x30e0] sm:$0xff]
    %v2142 = vld [vmem:[#allocation8 + $0x30e8] sm:$0xff]
    %v2143 = vld [vmem:[#allocation8 + $0x30f0] sm:$0xff]
    %v2144 = vld [vmem:[#allocation8 + $0x30f8] sm:$0xff]
    %v2145 = vld [vmem:[#allocation8 + $0x3100] sm:$0xff]
    %v2146 = vld [vmem:[#allocation8 + $0x3108] sm:$0xff]
    %v2147 = vld [vmem:[#allocation8 + $0x3110] sm:$0xff]
    %v2148 = vld [vmem:[#allocation8 + $0x3118] sm:$0xff]
    %v2149 = vld [vmem:[#allocation8 + $0x3120] sm:$0xff]
    %v2150 = vld [vmem:[#allocation8 + $0x3128] sm:$0xff]
    %v2151 = vld [vmem:[#allocation8 + $0x3130] sm:$0xff]
    %v2152 = vld [vmem:[#allocation8 + $0x3138] sm:$0xff]
    %v2153 = vld [vmem:[#allocation8 + $0x3140] sm:$0xff]
    %v2154 = vld [vmem:[#allocation8 + $0x3148] sm:$0xff]
    %v2155 = vld [vmem:[#allocation8 + $0x3150] sm:$0xff]
    %v2156 = vld [vmem:[#allocation8 + $0x3158] sm:$0xff]
    %v2157 = vld [vmem:[#allocation8 + $0x3160] sm:$0xff]
    %v2158 = vld [vmem:[#allocation8 + $0x3168] sm:$0xff]
    %v2159 = vld [vmem:[#allocation8 + $0x3170] sm:$0xff]
    %v2160 = vld [vmem:[#allocation8 + $0x3178] sm:$0xff]
    %v2161 = vld [vmem:[#allocation8 + $0x3180] sm:$0xff]
    %v2162 = vld [vmem:[#allocation8 + $0x3188] sm:$0xff]
    %v2163 = vld [vmem:[#allocation8 + $0x3190] sm:$0xff]
    %v2164 = vld [vmem:[#allocation8 + $0x3198] sm:$0xff]
    %v2165 = vld [vmem:[#allocation8 + $0x31a0] sm:$0xff]
    %v2166 = vld [vmem:[#allocation8 + $0x31a8] sm:$0xff]
    %v2167 = vld [vmem:[#allocation8 + $0x31b0] sm:$0xff]
    %v2168 = vld [vmem:[#allocation8 + $0x31b8] sm:$0xff]
    %v2169 = vld [vmem:[#allocation8 + $0x31c0] sm:$0xff]
    %v2170 = vld [vmem:[#allocation8 + $0x31c8] sm:$0xff]
    %v2171 = vld [vmem:[#allocation8 + $0x31d0] sm:$0xff]
    %v2172 = vld [vmem:[#allocation8 + $0x31d8] sm:$0xff]
    %v2173 = vld [vmem:[#allocation8 + $0x31e0] sm:$0xff]
    %v2174 = vld [vmem:[#allocation8 + $0x31e8] sm:$0xff]
    %v2175 = vld [vmem:[#allocation8 + $0x31f0] sm:$0xff]
    %v2176 = vld [vmem:[#allocation8 + $0x31f8] sm:$0xff]
    %v2177 = vld [vmem:[#allocation8 + $0x3200] sm:$0xff]
    %v2178 = vld [vmem:[#allocation8 + $0x3208] sm:$0xff]
    %v2179 = vld [vmem:[#allocation8 + $0x3210] sm:$0xff]
    %v2180 = vld [vmem:[#allocation8 + $0x3218] sm:$0xff]
    %v2181 = vld [vmem:[#allocation8 + $0x3220] sm:$0xff]
    %v2182 = vld [vmem:[#allocation8 + $0x3228] sm:$0xff]
    %v2183 = vld [vmem:[#allocation8 + $0x3230] sm:$0xff]
    %v2184 = vld [vmem:[#allocation8 + $0x3238] sm:$0xff]
    %v2185 = vld [vmem:[#allocation8 + $0x3240] sm:$0xff]
    %v2186 = vld [vmem:[#allocation8 + $0x3248] sm:$0xff]
    %v2187 = vld [vmem:[#allocation8 + $0x3250] sm:$0xff]
    %v2188 = vld [vmem:[#allocation8 + $0x3258] sm:$0xff]
    %v2189 = vld [vmem:[#allocation8 + $0x3260] sm:$0xff]
    %v2190 = vld [vmem:[#allocation8 + $0x3268] sm:$0xff]
    %v2191 = vld [vmem:[#allocation8 + $0x3270] sm:$0xff]
    %v2192 = vld [vmem:[#allocation8 + $0x3278] sm:$0xff]
    %v2193 = vld [vmem:[#allocation8 + $0x3280] sm:$0xff]
    %v2194 = vld [vmem:[#allocation8 + $0x3288] sm:$0xff]
    %v2195 = vld [vmem:[#allocation8 + $0x3290] sm:$0xff]
    %v2196 = vld [vmem:[#allocation8 + $0x3298] sm:$0xff]
    %v2197 = vld [vmem:[#allocation8 + $0x32a0] sm:$0xff]
    %v2198 = vld [vmem:[#allocation8 + $0x32a8] sm:$0xff]
    %v2199 = vld [vmem:[#allocation8 + $0x32b0] sm:$0xff]
    %v2200 = vld [vmem:[#allocation8 + $0x32b8] sm:$0xff]
    %v2201 = vld [vmem:[#allocation8 + $0x32c0] sm:$0xff]
    %v2202 = vld [vmem:[#allocation8 + $0x32c8] sm:$0xff]
    %v2203 = vld [vmem:[#allocation8 + $0x32d0] sm:$0xff]
    %v2204 = vld [vmem:[#allocation8 + $0x32d8] sm:$0xff]
    %v2205 = vld [vmem:[#allocation8 + $0x32e0] sm:$0xff]
    %v2206 = vld [vmem:[#allocation8 + $0x32e8] sm:$0xff]
    %v2207 = vld [vmem:[#allocation8 + $0x32f0] sm:$0xff]
    %v2208 = vld [vmem:[#allocation8 + $0x32f8] sm:$0xff]
    %v2209 = vld [vmem:[#allocation8 + $0x3300] sm:$0xff]
    %v2210 = vld [vmem:[#allocation8 + $0x3308] sm:$0xff]
    %v2211 = vld [vmem:[#allocation8 + $0x3310] sm:$0xff]
    %v2212 = vld [vmem:[#allocation8 + $0x3318] sm:$0xff]
    %v2213 = vld [vmem:[#allocation8 + $0x3320] sm:$0xff]
    %v2214 = vld [vmem:[#allocation8 + $0x3328] sm:$0xff]
    %v2215 = vld [vmem:[#allocation8 + $0x3330] sm:$0xff]
    %v2216 = vld [vmem:[#allocation8 + $0x3338] sm:$0xff]
    %v2217 = vld [vmem:[#allocation8 + $0x3340] sm:$0xff]
    %v2218 = vld [vmem:[#allocation8 + $0x3348] sm:$0xff]
    %v2219 = vld [vmem:[#allocation8 + $0x3350] sm:$0xff]
    %v2220 = vld [vmem:[#allocation8 + $0x3358] sm:$0xff]
    %v2221 = vld [vmem:[#allocation8 + $0x3360] sm:$0xff]
    %v2222 = vld [vmem:[#allocation8 + $0x3368] sm:$0xff]
    %v2223 = vld [vmem:[#allocation8 + $0x3370] sm:$0xff]
    %v2224 = vld [vmem:[#allocation8 + $0x3378] sm:$0xff]
    %v2225 = vld [vmem:[#allocation8 + $0x3380] sm:$0xff]
    %v2226 = vld [vmem:[#allocation8 + $0x3388] sm:$0xff]
    %v2227 = vld [vmem:[#allocation8 + $0x3390] sm:$0xff]
    %v2228 = vld [vmem:[#allocation8 + $0x3398] sm:$0xff]
    %v2229 = vld [vmem:[#allocation8 + $0x33a0] sm:$0xff]
    %v2230 = vld [vmem:[#allocation8 + $0x33a8] sm:$0xff]
    %v2231 = vld [vmem:[#allocation8 + $0x33b0] sm:$0xff]
    %v2232 = vld [vmem:[#allocation8 + $0x33b8] sm:$0xff]
    %v2233 = vld [vmem:[#allocation8 + $0x33c0] sm:$0xff]
    %v2234 = vld [vmem:[#allocation8 + $0x33c8] sm:$0xff]
    %v2235 = vld [vmem:[#allocation8 + $0x33d0] sm:$0xff]
    %v2236 = vld [vmem:[#allocation8 + $0x33d8] sm:$0xff]
    %v2237 = vld [vmem:[#allocation8 + $0x33e0] sm:$0xff]
    %v2238 = vld [vmem:[#allocation8 + $0x33e8] sm:$0xff]
    %v2239 = vld [vmem:[#allocation8 + $0x33f0] sm:$0xff]
    %v2240 = vld [vmem:[#allocation8 + $0x33f8] sm:$0xff]
    %v2241 = vld [vmem:[#allocation8 + $0x3400] sm:$0xff]
    %v2242 = vld [vmem:[#allocation8 + $0x3408] sm:$0xff]
    %v2243 = vld [vmem:[#allocation8 + $0x3410] sm:$0xff]
    %v2244 = vld [vmem:[#allocation8 + $0x3418] sm:$0xff]
    %v2245 = vld [vmem:[#allocation8 + $0x3420] sm:$0xff]
    %v2246 = vld [vmem:[#allocation8 + $0x3428] sm:$0xff]
    %v2247 = vld [vmem:[#allocation8 + $0x3430] sm:$0xff]
    %v2248 = vld [vmem:[#allocation8 + $0x3438] sm:$0xff]
    %v2249 = vld [vmem:[#allocation8 + $0x3440] sm:$0xff]
    %v2250 = vld [vmem:[#allocation8 + $0x3448] sm:$0xff]
    %v2251 = vld [vmem:[#allocation8 + $0x3450] sm:$0xff]
    %v2252 = vld [vmem:[#allocation8 + $0x3458] sm:$0xff]
    %v2253 = vld [vmem:[#allocation8 + $0x3460] sm:$0xff]
    %v2254 = vld [vmem:[#allocation8 + $0x3468] sm:$0xff]
    %v2255 = vld [vmem:[#allocation8 + $0x3470] sm:$0xff]
    %v2256 = vld [vmem:[#allocation8 + $0x3478] sm:$0xff]
    %v2257 = vld [vmem:[#allocation8 + $0x3480] sm:$0xff]
    %v2258 = vld [vmem:[#allocation8 + $0x3488] sm:$0xff]
    %v2259 = vld [vmem:[#allocation8 + $0x3490] sm:$0xff]
    %v2260 = vld [vmem:[#allocation8 + $0x3498] sm:$0xff]
    %v2261 = vld [vmem:[#allocation8 + $0x34a0] sm:$0xff]
    %v2262 = vld [vmem:[#allocation8 + $0x34a8] sm:$0xff]
    %v2263 = vld [vmem:[#allocation8 + $0x34b0] sm:$0xff]
    %v2264 = vld [vmem:[#allocation8 + $0x34b8] sm:$0xff]
    %v2265 = vld [vmem:[#allocation8 + $0x34c0] sm:$0xff]
    %v2266 = vld [vmem:[#allocation8 + $0x34c8] sm:$0xff]
    %v2267 = vld [vmem:[#allocation8 + $0x34d0] sm:$0xff]
    %v2268 = vld [vmem:[#allocation8 + $0x34d8] sm:$0xff]
    %v2269 = vld [vmem:[#allocation8 + $0x34e0] sm:$0xff]
    %v2270 = vld [vmem:[#allocation8 + $0x34e8] sm:$0xff]
    %v2271 = vld [vmem:[#allocation8 + $0x34f0] sm:$0xff]
    %v2272 = vld [vmem:[#allocation8 + $0x34f8] sm:$0xff]
    %v2273 = vld [vmem:[#allocation8 + $0x3500] sm:$0xff]
    %v2274 = vld [vmem:[#allocation8 + $0x3508] sm:$0xff]
    %v2275 = vld [vmem:[#allocation8 + $0x3510] sm:$0xff]
    %v2276 = vld [vmem:[#allocation8 + $0x3518] sm:$0xff]
    %v2277 = vld [vmem:[#allocation8 + $0x3520] sm:$0xff]
    %v2278 = vld [vmem:[#allocation8 + $0x3528] sm:$0xff]
    %v2279 = vld [vmem:[#allocation8 + $0x3530] sm:$0xff]
    %v2280 = vld [vmem:[#allocation8 + $0x3538] sm:$0xff]
    %v2281 = vld [vmem:[#allocation8 + $0x3540] sm:$0xff]
    %v2282 = vld [vmem:[#allocation8 + $0x3548] sm:$0xff]
    %v2283 = vld [vmem:[#allocation8 + $0x3550] sm:$0xff]
    %v2284 = vld [vmem:[#allocation8 + $0x3558] sm:$0xff]
    %v2285 = vld [vmem:[#allocation8 + $0x3560] sm:$0xff]
    %v2286 = vld [vmem:[#allocation8 + $0x3568] sm:$0xff]
    %v2287 = vld [vmem:[#allocation8 + $0x3570] sm:$0xff]
    %v2288 = vld [vmem:[#allocation8 + $0x3578] sm:$0xff]
    %v2289 = vld [vmem:[#allocation8 + $0x3580] sm:$0xff]
    %v2290 = vld [vmem:[#allocation8 + $0x3588] sm:$0xff]
    %v2291 = vld [vmem:[#allocation8 + $0x3590] sm:$0xff]
    %v2292 = vld [vmem:[#allocation8 + $0x3598] sm:$0xff]
    %v2293 = vld [vmem:[#allocation8 + $0x35a0] sm:$0xff]
    %v2294 = vld [vmem:[#allocation8 + $0x35a8] sm:$0xff]
    %v2295 = vld [vmem:[#allocation8 + $0x35b0] sm:$0xff]
    %v2296 = vld [vmem:[#allocation8 + $0x35b8] sm:$0xff]
    %v2297 = vld [vmem:[#allocation8 + $0x35c0] sm:$0xff]
    %v2298 = vld [vmem:[#allocation8 + $0x35c8] sm:$0xff]
    %v2299 = vld [vmem:[#allocation8 + $0x35d0] sm:$0xff]
    %v2300 = vld [vmem:[#allocation8 + $0x35d8] sm:$0xff]
    %v2301 = vld [vmem:[#allocation8 + $0x35e0] sm:$0xff]
    %v2302 = vld [vmem:[#allocation8 + $0x35e8] sm:$0xff]
    %v2303 = vld [vmem:[#allocation8 + $0x35f0] sm:$0xff]
    %v2304 = vld [vmem:[#allocation8 + $0x35f8] sm:$0xff]
    %v2305 = vld [vmem:[#allocation8 + $0x3600] sm:$0xff]
    %v2306 = vld [vmem:[#allocation8 + $0x3608] sm:$0xff]
    %v2307 = vld [vmem:[#allocation8 + $0x3610] sm:$0xff]
    %v2308 = vld [vmem:[#allocation8 + $0x3618] sm:$0xff]
    %v2309 = vld [vmem:[#allocation8 + $0x3620] sm:$0xff]
    %v2310 = vld [vmem:[#allocation8 + $0x3628] sm:$0xff]
    %v2311 = vld [vmem:[#allocation8 + $0x3630] sm:$0xff]
    %v2312 = vld [vmem:[#allocation8 + $0x3638] sm:$0xff]
    %v2313 = vld [vmem:[#allocation8 + $0x3640] sm:$0xff]
    %v2314 = vld [vmem:[#allocation8 + $0x3648] sm:$0xff]
    %v2315 = vld [vmem:[#allocation8 + $0x3650] sm:$0xff]
    %v2316 = vld [vmem:[#allocation8 + $0x3658] sm:$0xff]
    %v2317 = vld [vmem:[#allocation8 + $0x3660] sm:$0xff]
    %v2318 = vld [vmem:[#allocation8 + $0x3668] sm:$0xff]
    %v2319 = vld [vmem:[#allocation8 + $0x3670] sm:$0xff]
    %v2320 = vld [vmem:[#allocation8 + $0x3678] sm:$0xff]
    %v2321 = vld [vmem:[#allocation8 + $0x3680] sm:$0xff]
    %v2322 = vld [vmem:[#allocation8 + $0x3688] sm:$0xff]
    %v2323 = vld [vmem:[#allocation8 + $0x3690] sm:$0xff]
    %v2324 = vld [vmem:[#allocation8 + $0x3698] sm:$0xff]
    %v2325 = vld [vmem:[#allocation8 + $0x36a0] sm:$0xff]
    %v2326 = vld [vmem:[#allocation8 + $0x36a8] sm:$0xff]
    %v2327 = vld [vmem:[#allocation8 + $0x36b0] sm:$0xff]
    %v2328 = vld [vmem:[#allocation8 + $0x36b8] sm:$0xff]
    %v2329 = vld [vmem:[#allocation8 + $0x36c0] sm:$0xff]
    %v2330 = vld [vmem:[#allocation8 + $0x36c8] sm:$0xff]
    %v2331 = vld [vmem:[#allocation8 + $0x36d0] sm:$0xff]
    %v2332 = vld [vmem:[#allocation8 + $0x36d8] sm:$0xff]
    %v2333 = vld [vmem:[#allocation8 + $0x36e0] sm:$0xff]
    %v2334 = vld [vmem:[#allocation8 + $0x36e8] sm:$0xff]
    %v2335 = vld [vmem:[#allocation8 + $0x36f0] sm:$0xff]
    %v2336 = vld [vmem:[#allocation8 + $0x36f8] sm:$0xff]
    %v2337 = vld [vmem:[#allocation8 + $0x3700] sm:$0xff]
    %v2338 = vld [vmem:[#allocation8 + $0x3708] sm:$0xff]
    %v2339 = vld [vmem:[#allocation8 + $0x3710] sm:$0xff]
    %v2340 = vld [vmem:[#allocation8 + $0x3718] sm:$0xff]
    %v2341 = vld [vmem:[#allocation8 + $0x3720] sm:$0xff]
    %v2342 = vld [vmem:[#allocation8 + $0x3728] sm:$0xff]
    %v2343 = vld [vmem:[#allocation8 + $0x3730] sm:$0xff]
    %v2344 = vld [vmem:[#allocation8 + $0x3738] sm:$0xff]
    %v2345 = vld [vmem:[#allocation8 + $0x3740] sm:$0xff]
    %v2346 = vld [vmem:[#allocation8 + $0x3748] sm:$0xff]
    %v2347 = vld [vmem:[#allocation8 + $0x3750] sm:$0xff]
    %v2348 = vld [vmem:[#allocation8 + $0x3758] sm:$0xff]
    %v2349 = vld [vmem:[#allocation8 + $0x3760] sm:$0xff]
    %v2350 = vld [vmem:[#allocation8 + $0x3768] sm:$0xff]
    %v2351 = vld [vmem:[#allocation8 + $0x3770] sm:$0xff]
    %v2352 = vld [vmem:[#allocation8 + $0x3778] sm:$0xff]
    %v2353 = vld [vmem:[#allocation8 + $0x3780] sm:$0xff]
    %v2354 = vld [vmem:[#allocation8 + $0x3788] sm:$0xff]
    %v2355 = vld [vmem:[#allocation8 + $0x3790] sm:$0xff]
    %v2356 = vld [vmem:[#allocation8 + $0x3798] sm:$0xff]
    %v2357 = vld [vmem:[#allocation8 + $0x37a0] sm:$0xff]
    %v2358 = vld [vmem:[#allocation8 + $0x37a8] sm:$0xff]
    %v2359 = vld [vmem:[#allocation8 + $0x37b0] sm:$0xff]
    %v2360 = vld [vmem:[#allocation8 + $0x37b8] sm:$0xff]
    %v2361 = vld [vmem:[#allocation8 + $0x37c0] sm:$0xff]
    %v2362 = vld [vmem:[#allocation8 + $0x37c8] sm:$0xff]
    %v2363 = vld [vmem:[#allocation8 + $0x37d0] sm:$0xff]
    %v2364 = vld [vmem:[#allocation8 + $0x37d8] sm:$0xff]
    %v2365 = vld [vmem:[#allocation8 + $0x37e0] sm:$0xff]
    %v2366 = vld [vmem:[#allocation8 + $0x37e8] sm:$0xff]
    %v2367 = vld [vmem:[#allocation8 + $0x37f0] sm:$0xff]
    %v2368 = vld [vmem:[#allocation8 + $0x37f8] sm:$0xff]
    %v2369 = vld [vmem:[#allocation8 + $0x3800] sm:$0xff]
    %v2370 = vld [vmem:[#allocation8 + $0x3808] sm:$0xff]
    %v2371 = vld [vmem:[#allocation8 + $0x3810] sm:$0xff]
    %v2372 = vld [vmem:[#allocation8 + $0x3818] sm:$0xff]
    %v2373 = vld [vmem:[#allocation8 + $0x3820] sm:$0xff]
    %v2374 = vld [vmem:[#allocation8 + $0x3828] sm:$0xff]
    %v2375 = vld [vmem:[#allocation8 + $0x3830] sm:$0xff]
    %v2376 = vld [vmem:[#allocation8 + $0x3838] sm:$0xff]
    %v2377 = vld [vmem:[#allocation8 + $0x3840] sm:$0xff]
    %v2378 = vld [vmem:[#allocation8 + $0x3848] sm:$0xff]
    %v2379 = vld [vmem:[#allocation8 + $0x3850] sm:$0xff]
    %v2380 = vld [vmem:[#allocation8 + $0x3858] sm:$0xff]
    %v2381 = vld [vmem:[#allocation8 + $0x3860] sm:$0xff]
    %v2382 = vld [vmem:[#allocation8 + $0x3868] sm:$0xff]
    %v2383 = vld [vmem:[#allocation8 + $0x3870] sm:$0xff]
    %v2384 = vld [vmem:[#allocation8 + $0x3878] sm:$0xff]
    %v2385 = vld [vmem:[#allocation8 + $0x3880] sm:$0xff]
    %v2386 = vld [vmem:[#allocation8 + $0x3888] sm:$0xff]
    %v2387 = vld [vmem:[#allocation8 + $0x3890] sm:$0xff]
    %v2388 = vld [vmem:[#allocation8 + $0x3898] sm:$0xff]
    %v2389 = vld [vmem:[#allocation8 + $0x38a0] sm:$0xff]
    %v2390 = vld [vmem:[#allocation8 + $0x38a8] sm:$0xff]
    %v2391 = vld [vmem:[#allocation8 + $0x38b0] sm:$0xff]
    %v2392 = vld [vmem:[#allocation8 + $0x38b8] sm:$0xff]
    %v2393 = vld [vmem:[#allocation8 + $0x38c0] sm:$0xff]
    %v2394 = vld [vmem:[#allocation8 + $0x38c8] sm:$0xff]
    %v2395 = vld [vmem:[#allocation8 + $0x38d0] sm:$0xff]
    %v2396 = vld [vmem:[#allocation8 + $0x38d8] sm:$0xff]
    %v2397 = vld [vmem:[#allocation8 + $0x38e0] sm:$0xff]
    %v2398 = vld [vmem:[#allocation8 + $0x38e8] sm:$0xff]
    %v2399 = vld [vmem:[#allocation8 + $0x38f0] sm:$0xff]
    %v2400 = vld [vmem:[#allocation8 + $0x38f8] sm:$0xff]
    %v2401 = vld [vmem:[#allocation8 + $0x3900] sm:$0xff]
    %v2402 = vld [vmem:[#allocation8 + $0x3908] sm:$0xff]
    %v2403 = vld [vmem:[#allocation8 + $0x3910] sm:$0xff]
    %v2404 = vld [vmem:[#allocation8 + $0x3918] sm:$0xff]
    %v2405 = vld [vmem:[#allocation8 + $0x3920] sm:$0xff]
    %v2406 = vld [vmem:[#allocation8 + $0x3928] sm:$0xff]
    %v2407 = vld [vmem:[#allocation8 + $0x3930] sm:$0xff]
    %v2408 = vld [vmem:[#allocation8 + $0x3938] sm:$0xff]
    %v2409 = vld [vmem:[#allocation8 + $0x3940] sm:$0xff]
    %v2410 = vld [vmem:[#allocation8 + $0x3948] sm:$0xff]
    %v2411 = vld [vmem:[#allocation8 + $0x3950] sm:$0xff]
    %v2412 = vld [vmem:[#allocation8 + $0x3958] sm:$0xff]
    %v2413 = vld [vmem:[#allocation8 + $0x3960] sm:$0xff]
    %v2414 = vld [vmem:[#allocation8 + $0x3968] sm:$0xff]
    %v2415 = vld [vmem:[#allocation8 + $0x3970] sm:$0xff]
    %v2416 = vld [vmem:[#allocation8 + $0x3978] sm:$0xff]
    %v2417 = vld [vmem:[#allocation8 + $0x3980] sm:$0xff]
    %v2418 = vld [vmem:[#allocation8 + $0x3988] sm:$0xff]
    %v2419 = vld [vmem:[#allocation8 + $0x3990] sm:$0xff]
    %v2420 = vld [vmem:[#allocation8 + $0x3998] sm:$0xff]
    %v2421 = vld [vmem:[#allocation8 + $0x39a0] sm:$0xff]
    %v2422 = vld [vmem:[#allocation8 + $0x39a8] sm:$0xff]
    %v2423 = vld [vmem:[#allocation8 + $0x39b0] sm:$0xff]
    %v2424 = vld [vmem:[#allocation8 + $0x39b8] sm:$0xff]
    %v2425 = vld [vmem:[#allocation8 + $0x39c0] sm:$0xff]
    %v2426 = vld [vmem:[#allocation8 + $0x39c8] sm:$0xff]
    %v2427 = vld [vmem:[#allocation8 + $0x39d0] sm:$0xff]
    %v2428 = vld [vmem:[#allocation8 + $0x39d8] sm:$0xff]
    %v2429 = vld [vmem:[#allocation8 + $0x39e0] sm:$0xff]
    %v2430 = vld [vmem:[#allocation8 + $0x39e8] sm:$0xff]
    %v2431 = vld [vmem:[#allocation8 + $0x39f0] sm:$0xff]
    %v2432 = vld [vmem:[#allocation8 + $0x39f8] sm:$0xff]
    %v2433 = vld [vmem:[#allocation8 + $0x3a00] sm:$0xff]
    %v2434 = vld [vmem:[#allocation8 + $0x3a08] sm:$0xff]
    %v2435 = vld [vmem:[#allocation8 + $0x3a10] sm:$0xff]
    %v2436 = vld [vmem:[#allocation8 + $0x3a18] sm:$0xff]
    %v2437 = vld [vmem:[#allocation8 + $0x3a20] sm:$0xff]
    %v2438 = vld [vmem:[#allocation8 + $0x3a28] sm:$0xff]
    %v2439 = vld [vmem:[#allocation8 + $0x3a30] sm:$0xff]
    %v2440 = vld [vmem:[#allocation8 + $0x3a38] sm:$0xff]
    %v2441 = vld [vmem:[#allocation8 + $0x3a40] sm:$0xff]
    %v2442 = vld [vmem:[#allocation8 + $0x3a48] sm:$0xff]
    %v2443 = vld [vmem:[#allocation8 + $0x3a50] sm:$0xff]
    %v2444 = vld [vmem:[#allocation8 + $0x3a58] sm:$0xff]
    %v2445 = vld [vmem:[#allocation8 + $0x3a60] sm:$0xff]
    %v2446 = vld [vmem:[#allocation8 + $0x3a68] sm:$0xff]
    %v2447 = vld [vmem:[#allocation8 + $0x3a70] sm:$0xff]
    %v2448 = vld [vmem:[#allocation8 + $0x3a78] sm:$0xff]
    %v2449 = vld [vmem:[#allocation8 + $0x3a80] sm:$0xff]
    %v2450 = vld [vmem:[#allocation8 + $0x3a88] sm:$0xff]
    %v2451 = vld [vmem:[#allocation8 + $0x3a90] sm:$0xff]
    %v2452 = vld [vmem:[#allocation8 + $0x3a98] sm:$0xff]
    %v2453 = vld [vmem:[#allocation8 + $0x3aa0] sm:$0xff]
    %v2454 = vld [vmem:[#allocation8 + $0x3aa8] sm:$0xff]
    %v2455 = vld [vmem:[#allocation8 + $0x3ab0] sm:$0xff]
    %v2456 = vld [vmem:[#allocation8 + $0x3ab8] sm:$0xff]
    %v2457 = vld [vmem:[#allocation8 + $0x3ac0] sm:$0xff]
    %v2458 = vld [vmem:[#allocation8 + $0x3ac8] sm:$0xff]
    %v2459 = vld [vmem:[#allocation8 + $0x3ad0] sm:$0xff]
    %v2460 = vld [vmem:[#allocation8 + $0x3ad8] sm:$0xff]
    %v2461 = vld [vmem:[#allocation8 + $0x3ae0] sm:$0xff]
    %v2462 = vld [vmem:[#allocation8 + $0x3ae8] sm:$0xff]
    %v2463 = vld [vmem:[#allocation8 + $0x3af0] sm:$0xff]
    %v2464 = vld [vmem:[#allocation8 + $0x3af8] sm:$0xff]
    %v2465 = vld [vmem:[#allocation8 + $0x3b00] sm:$0xff]
    %v2466 = vld [vmem:[#allocation8 + $0x3b08] sm:$0xff]
    %v2467 = vld [vmem:[#allocation8 + $0x3b10] sm:$0xff]
    %v2468 = vld [vmem:[#allocation8 + $0x3b18] sm:$0xff]
    %v2469 = vld [vmem:[#allocation8 + $0x3b20] sm:$0xff]
    %v2470 = vld [vmem:[#allocation8 + $0x3b28] sm:$0xff]
    %v2471 = vld [vmem:[#allocation8 + $0x3b30] sm:$0xff]
    %v2472 = vld [vmem:[#allocation8 + $0x3b38] sm:$0xff]
    %v2473 = vld [vmem:[#allocation8 + $0x3b40] sm:$0xff]
    %v2474 = vld [vmem:[#allocation8 + $0x3b48] sm:$0xff]
    %v2475 = vld [vmem:[#allocation8 + $0x3b50] sm:$0xff]
    %v2476 = vld [vmem:[#allocation8 + $0x3b58] sm:$0xff]
    %v2477 = vld [vmem:[#allocation8 + $0x3b60] sm:$0xff]
    %v2478 = vld [vmem:[#allocation8 + $0x3b68] sm:$0xff]
    %v2479 = vld [vmem:[#allocation8 + $0x3b70] sm:$0xff]
    %v2480 = vld [vmem:[#allocation8 + $0x3b78] sm:$0xff]
    %v2481 = vld [vmem:[#allocation8 + $0x3b80] sm:$0xff]
    %v2482 = vld [vmem:[#allocation8 + $0x3b88] sm:$0xff]
    %v2483 = vld [vmem:[#allocation8 + $0x3b90] sm:$0xff]
    %v2484 = vld [vmem:[#allocation8 + $0x3b98] sm:$0xff]
    %v2485 = vld [vmem:[#allocation8 + $0x3ba0] sm:$0xff]
    %v2486 = vld [vmem:[#allocation8 + $0x3ba8] sm:$0xff]
    %v2487 = vld [vmem:[#allocation8 + $0x3bb0] sm:$0xff]
    %v2488 = vld [vmem:[#allocation8 + $0x3bb8] sm:$0xff]
    %v2489 = vld [vmem:[#allocation8 + $0x3bc0] sm:$0xff]
    %v2490 = vld [vmem:[#allocation8 + $0x3bc8] sm:$0xff]
    %v2491 = vld [vmem:[#allocation8 + $0x3bd0] sm:$0xff]
    %v2492 = vld [vmem:[#allocation8 + $0x3bd8] sm:$0xff]
    %v2493 = vld [vmem:[#allocation8 + $0x3be0] sm:$0xff]
    %v2494 = vld [vmem:[#allocation8 + $0x3be8] sm:$0xff]
    %v2495 = vld [vmem:[#allocation8 + $0x3bf0] sm:$0xff]
    %v2496 = vld [vmem:[#allocation8 + $0x3bf8] sm:$0xff]
    %v2497 = vld [vmem:[#allocation8 + $0x3c00] sm:$0xff]
    %v2498 = vld [vmem:[#allocation8 + $0x3c08] sm:$0xff]
    %v2499 = vld [vmem:[#allocation8 + $0x3c10] sm:$0xff]
    %v2500 = vld [vmem:[#allocation8 + $0x3c18] sm:$0xff]
    %v2501 = vld [vmem:[#allocation8 + $0x3c20] sm:$0xff]
    %v2502 = vld [vmem:[#allocation8 + $0x3c28] sm:$0xff]
    %v2503 = vld [vmem:[#allocation8 + $0x3c30] sm:$0xff]
    %v2504 = vld [vmem:[#allocation8 + $0x3c38] sm:$0xff]
    %v2505 = vld [vmem:[#allocation8 + $0x3c40] sm:$0xff]
    %v2506 = vld [vmem:[#allocation8 + $0x3c48] sm:$0xff]
    %v2507 = vld [vmem:[#allocation8 + $0x3c50] sm:$0xff]
    %v2508 = vld [vmem:[#allocation8 + $0x3c58] sm:$0xff]
    %v2509 = vld [vmem:[#allocation8 + $0x3c60] sm:$0xff]
    %v2510 = vld [vmem:[#allocation8 + $0x3c68] sm:$0xff]
    %v2511 = vld [vmem:[#allocation8 + $0x3c70] sm:$0xff]
    %v2512 = vld [vmem:[#allocation8 + $0x3c78] sm:$0xff]
    %v2513 = vld [vmem:[#allocation8 + $0x3c80] sm:$0xff]
    %v2514 = vld [vmem:[#allocation8 + $0x3c88] sm:$0xff]
    %v2515 = vld [vmem:[#allocation8 + $0x3c90] sm:$0xff]
    %v2516 = vld [vmem:[#allocation8 + $0x3c98] sm:$0xff]
    %v2517 = vld [vmem:[#allocation8 + $0x3ca0] sm:$0xff]
    %v2518 = vld [vmem:[#allocation8 + $0x3ca8] sm:$0xff]
    %v2519 = vld [vmem:[#allocation8 + $0x3cb0] sm:$0xff]
    %v2520 = vld [vmem:[#allocation8 + $0x3cb8] sm:$0xff]
    %v2521 = vld [vmem:[#allocation8 + $0x3cc0] sm:$0xff]
    %v2522 = vld [vmem:[#allocation8 + $0x3cc8] sm:$0xff]
    %v2523 = vld [vmem:[#allocation8 + $0x3cd0] sm:$0xff]
    %v2524 = vld [vmem:[#allocation8 + $0x3cd8] sm:$0xff]
    %v2525 = vld [vmem:[#allocation8 + $0x3ce0] sm:$0xff]
    %v2526 = vld [vmem:[#allocation8 + $0x3ce8] sm:$0xff]
    %v2527 = vld [vmem:[#allocation8 + $0x3cf0] sm:$0xff]
    %v2528 = vld [vmem:[#allocation8 + $0x3cf8] sm:$0xff]
    %v2529 = vld [vmem:[#allocation8 + $0x3d00] sm:$0xff]
    %v2530 = vld [vmem:[#allocation8 + $0x3d08] sm:$0xff]
    %v2531 = vld [vmem:[#allocation8 + $0x3d10] sm:$0xff]
    %v2532 = vld [vmem:[#allocation8 + $0x3d18] sm:$0xff]
    %v2533 = vld [vmem:[#allocation8 + $0x3d20] sm:$0xff]
    %v2534 = vld [vmem:[#allocation8 + $0x3d28] sm:$0xff]
    %v2535 = vld [vmem:[#allocation8 + $0x3d30] sm:$0xff]
    %v2536 = vld [vmem:[#allocation8 + $0x3d38] sm:$0xff]
    %v2537 = vld [vmem:[#allocation8 + $0x3d40] sm:$0xff]
    %v2538 = vld [vmem:[#allocation8 + $0x3d48] sm:$0xff]
    %v2539 = vld [vmem:[#allocation8 + $0x3d50] sm:$0xff]
    %v2540 = vld [vmem:[#allocation8 + $0x3d58] sm:$0xff]
    %v2541 = vld [vmem:[#allocation8 + $0x3d60] sm:$0xff]
    %v2542 = vld [vmem:[#allocation8 + $0x3d68] sm:$0xff]
    %v2543 = vld [vmem:[#allocation8 + $0x3d70] sm:$0xff]
    %v2544 = vld [vmem:[#allocation8 + $0x3d78] sm:$0xff]
    %v2545 = vld [vmem:[#allocation8 + $0x3d80] sm:$0xff]
    %v2546 = vld [vmem:[#allocation8 + $0x3d88] sm:$0xff]
    %v2547 = vld [vmem:[#allocation8 + $0x3d90] sm:$0xff]
    %v2548 = vld [vmem:[#allocation8 + $0x3d98] sm:$0xff]
    %v2549 = vld [vmem:[#allocation8 + $0x3da0] sm:$0xff]
    %v2550 = vld [vmem:[#allocation8 + $0x3da8] sm:$0xff]
    %v2551 = vld [vmem:[#allocation8 + $0x3db0] sm:$0xff]
    %v2552 = vld [vmem:[#allocation8 + $0x3db8] sm:$0xff]
    %v2553 = vld [vmem:[#allocation8 + $0x3dc0] sm:$0xff]
    %v2554 = vld [vmem:[#allocation8 + $0x3dc8] sm:$0xff]
    %v2555 = vld [vmem:[#allocation8 + $0x3dd0] sm:$0xff]
    %v2556 = vld [vmem:[#allocation8 + $0x3dd8] sm:$0xff]
    %v2557 = vld [vmem:[#allocation8 + $0x3de0] sm:$0xff]
    %v2558 = vld [vmem:[#allocation8 + $0x3de8] sm:$0xff]
    %v2559 = vld [vmem:[#allocation8 + $0x3df0] sm:$0xff]
    %v2560 = vld [vmem:[#allocation8 + $0x3df8] sm:$0xff]
    %v2561 = vld [vmem:[#allocation8 + $0x3e00] sm:$0xff]
    %v2562 = vld [vmem:[#allocation8 + $0x3e08] sm:$0xff]
    %v2563 = vld [vmem:[#allocation8 + $0x3e10] sm:$0xff]
    %v2564 = vld [vmem:[#allocation8 + $0x3e18] sm:$0xff]
    %v2565 = vld [vmem:[#allocation8 + $0x3e20] sm:$0xff]
    %v2566 = vld [vmem:[#allocation8 + $0x3e28] sm:$0xff]
    %v2567 = vld [vmem:[#allocation8 + $0x3e30] sm:$0xff]
    %v2568 = vld [vmem:[#allocation8 + $0x3e38] sm:$0xff]
    %v2569 = vld [vmem:[#allocation8 + $0x3e40] sm:$0xff]
    %v2570 = vld [vmem:[#allocation8 + $0x3e48] sm:$0xff]
    %v2571 = vld [vmem:[#allocation8 + $0x3e50] sm:$0xff]
    %v2572 = vld [vmem:[#allocation8 + $0x3e58] sm:$0xff]
    %v2573 = vld [vmem:[#allocation8 + $0x3e60] sm:$0xff]
    %v2574 = vld [vmem:[#allocation8 + $0x3e68] sm:$0xff]
    %v2575 = vld [vmem:[#allocation8 + $0x3e70] sm:$0xff]
    %v2576 = vld [vmem:[#allocation8 + $0x3e78] sm:$0xff]
    %v2577 = vld [vmem:[#allocation8 + $0x3e80] sm:$0xff]
    %v2578 = vld [vmem:[#allocation8 + $0x3e88] sm:$0xff]
    %v2579 = vld [vmem:[#allocation8 + $0x3e90] sm:$0xff]
    %v2580 = vld [vmem:[#allocation8 + $0x3e98] sm:$0xff]
    %v2581 = vld [vmem:[#allocation8 + $0x3ea0] sm:$0xff]
    %v2582 = vld [vmem:[#allocation8 + $0x3ea8] sm:$0xff]
    %v2583 = vld [vmem:[#allocation8 + $0x3eb0] sm:$0xff]
    %v2584 = vld [vmem:[#allocation8 + $0x3eb8] sm:$0xff]
    %v2585 = vld [vmem:[#allocation8 + $0x3ec0] sm:$0xff]
    %v2586 = vld [vmem:[#allocation8 + $0x3ec8] sm:$0xff]
    %v2587 = vld [vmem:[#allocation8 + $0x3ed0] sm:$0xff]
    %v2588 = vld [vmem:[#allocation8 + $0x3ed8] sm:$0xff]
    %v2589 = vld [vmem:[#allocation8 + $0x3ee0] sm:$0xff]
    %v2590 = vld [vmem:[#allocation8 + $0x3ee8] sm:$0xff]
    %v2591 = vld [vmem:[#allocation8 + $0x3ef0] sm:$0xff]
    %v2592 = vld [vmem:[#allocation8 + $0x3ef8] sm:$0xff]
    %v2593 = vld [vmem:[#allocation8 + $0x3f00] sm:$0xff]
    %v2594 = vld [vmem:[#allocation8 + $0x3f08] sm:$0xff]
    %v2595 = vld [vmem:[#allocation8 + $0x3f10] sm:$0xff]
    %v2596 = vld [vmem:[#allocation8 + $0x3f18] sm:$0xff]
    %v2597 = vld [vmem:[#allocation8 + $0x3f20] sm:$0xff]
    %v2598 = vld [vmem:[#allocation8 + $0x3f28] sm:$0xff]
    %v2599 = vld [vmem:[#allocation8 + $0x3f30] sm:$0xff]
    %v2600 = vld [vmem:[#allocation8 + $0x3f38] sm:$0xff]
    %v2601 = vld [vmem:[#allocation8 + $0x3f40] sm:$0xff]
    %v2602 = vld [vmem:[#allocation8 + $0x3f48] sm:$0xff]
    %v2603 = vld [vmem:[#allocation8 + $0x3f50] sm:$0xff]
    %v2604 = vld [vmem:[#allocation8 + $0x3f58] sm:$0xff]
    %v2605 = vld [vmem:[#allocation8 + $0x3f60] sm:$0xff]
    %v2606 = vld [vmem:[#allocation8 + $0x3f68] sm:$0xff]
    %v2607 = vld [vmem:[#allocation8 + $0x3f70] sm:$0xff]
    %v2608 = vld [vmem:[#allocation8 + $0x3f78] sm:$0xff]
    %v2609 = vld [vmem:[#allocation8 + $0x3f80] sm:$0xff]
    %v2610 = vld [vmem:[#allocation8 + $0x3f88] sm:$0xff]
    %v2611 = vld [vmem:[#allocation8 + $0x3f90] sm:$0xff]
    %v2612 = vld [vmem:[#allocation8 + $0x3f98] sm:$0xff]
    %v2613 = vld [vmem:[#allocation8 + $0x3fa0] sm:$0xff]
    %v2614 = vld [vmem:[#allocation8 + $0x3fa8] sm:$0xff]
    %v2615 = vld [vmem:[#allocation8 + $0x3fb0] sm:$0xff]
    %v2616 = vld [vmem:[#allocation8 + $0x3fb8] sm:$0xff]
    %v2617 = vld [vmem:[#allocation8 + $0x3fc0] sm:$0xff]
    %v2618 = vld [vmem:[#allocation8 + $0x3fc8] sm:$0xff]
    %v2619 = vld [vmem:[#allocation8 + $0x3fd0] sm:$0xff]
    %v2620 = vld [vmem:[#allocation8 + $0x3fd8] sm:$0xff]
    %v2621 = vld [vmem:[#allocation8 + $0x3fe0] sm:$0xff]
    %v2622 = vld [vmem:[#allocation8 + $0x3fe8] sm:$0xff]
    %v2623 = vld [vmem:[#allocation8 + $0x3ff0] sm:$0xff]
    %v2624 = vld [vmem:[#allocation8 + $0x3ff8] sm:$0xff]
    %v2625 = vld [vmem:[#allocation10] sm:$0xff]
    %v2626 = vld [vmem:[#allocation10 + $0x8] sm:$0xff]
    %v2629 = vlaneseq
    %v2630 = vshrl.u32 %v2629, 7
    %v2631 = vsub.s32 0, %v2630
    %v2632 = vrot.slane %v2625, %v2631
    %v2633 = vlaneseq
    %v2634 = vshrl.u32 %v2633, 7
    %v2635 = vsub.s32 1, %v2634
    %v2636 = vrot.slane %v2625, %v2635
    %v2637 = vlaneseq
    %v2638 = vshrl.u32 %v2637, 7
    %v2639 = vsub.s32 2, %v2638
    %v2640 = vrot.slane %v2625, %v2639
    %v2641 = vlaneseq
    %v2642 = vshrl.u32 %v2641, 7
    %v2643 = vsub.s32 3, %v2642
    %v2644 = vrot.slane %v2625, %v2643
    %v2645 = vlaneseq
    %v2646 = vshrl.u32 %v2645, 7
    %v2647 = vsub.s32 4, %v2646
    %v2648 = vrot.slane %v2625, %v2647
    %v2649 = vlaneseq
    %v2650 = vshrl.u32 %v2649, 7
    %v2651 = vsub.s32 5, %v2650
    %v2652 = vrot.slane %v2625, %v2651
    %v2653 = vlaneseq
    %v2654 = vshrl.u32 %v2653, 7
    %v2655 = vsub.s32 6, %v2654
    %v2656 = vrot.slane %v2625, %v2655
    %v2657 = vlaneseq
    %v2658 = vshrl.u32 %v2657, 7
    %v2659 = vsub.s32 7, %v2658
    %v2660 = vrot.slane %v2625, %v2659
    %v2661 = vlaneseq
    %v2662 = vshrl.u32 %v2661, 7
    %v2663 = vsub.s32 0, %v2662
    %v2664 = vrot.slane %v2626, %v2663
    %v2665 = vlaneseq
    %v2666 = vshrl.u32 %v2665, 7
    %v2667 = vsub.s32 1, %v2666
    %v2668 = vrot.slane %v2626, %v2667
    %v2669 = vlaneseq
    %v2670 = vshrl.u32 %v2669, 7
    %v2671 = vsub.s32 2, %v2670
    %v2672 = vrot.slane %v2626, %v2671
    %v2673 = vlaneseq
    %v2674 = vshrl.u32 %v2673, 7
    %v2675 = vsub.s32 3, %v2674
    %v2676 = vrot.slane %v2626, %v2675
    %v2677 = vlaneseq
    %v2678 = vshrl.u32 %v2677, 7
    %v2679 = vsub.s32 4, %v2678
    %v2680 = vrot.slane %v2626, %v2679
    %v2681 = vlaneseq
    %v2682 = vshrl.u32 %v2681, 7
    %v2683 = vsub.s32 5, %v2682
    %v2684 = vrot.slane %v2626, %v2683
    %v2685 = vlaneseq
    %v2686 = vshrl.u32 %v2685, 7
    %v2687 = vsub.s32 6, %v2686
    %v2688 = vrot.slane %v2626, %v2687
    %v2689 = vlaneseq
    %v2690 = vshrl.u32 %v2689, 7
    %v2691 = vsub.s32 7, %v2690
    %v2692 = vrot.slane %v2626, %v2691
    %2709 = vmatprep.subr.mxu0 %v578
    %2710 = vmatpush1.msra.mxu0 %v577
    %2711 = vmatprep.subr.mxu0 %v594
    %2712 = vmatpush1.msra.mxu0 %v593
    %2713 = vmatprep.subr.mxu0 %v610
    %2714 = vmatpush1.msra.mxu0 %v609
    %2715 = vmatprep.subr.mxu0 %v626
    %2716 = vmatpush1.msra.mxu0 %v625
    %2717 = vmatprep.subr.mxu0 %v642
    %2718 = vmatpush1.msra.mxu0 %v641
    %2719 = vmatprep.subr.mxu0 %v658
    %2720 = vmatpush1.msra.mxu0 %v657
    %2721 = vmatprep.subr.mxu0 %v674
    %2722 = vmatpush1.msra.mxu0 %v673
    %2723 = vmatprep.subr.mxu0 %v690
    %2724 = vmatpush1.msra.mxu0 %v689
    %2725 = vmatprep.subr.mxu0 %v706
    %2726 = vmatpush1.msra.mxu0 %v705
    %2727 = vmatprep.subr.mxu0 %v722
    %2728 = vmatpush1.msra.mxu0 %v721
    %2729 = vmatprep.subr.mxu0 %v738
    %2730 = vmatpush1.msra.mxu0 %v737
    %2731 = vmatprep.subr.mxu0 %v754
    %2732 = vmatpush1.msra.mxu0 %v753
    %2733 = vmatprep.subr.mxu0 %v770
    %2734 = vmatpush1.msra.mxu0 %v769
    %2735 = vmatprep.subr.mxu0 %v786
    %2736 = vmatpush1.msra.mxu0 %v785
    %2737 = vmatprep.subr.mxu0 %v802
    %2738 = vmatpush1.msra.mxu0 %v801
    %2739 = vmatprep.subr.mxu0 %v818
    %2740 = vmatpush1.msra.mxu0 %v817
    %2741 = vmatprep.subr.mxu0 %v834
    %2742 = vmatpush1.msra.mxu0 %v833
    %2743 = vmatprep.subr.mxu0 %v850
    %2744 = vmatpush1.msra.mxu0 %v849
    %2745 = vmatprep.subr.mxu0 %v866
    %2746 = vmatpush1.msra.mxu0 %v865
    %2747 = vmatprep.subr.mxu0 %v882
    %2748 = vmatpush1.msra.mxu0 %v881
    %2749 = vmatprep.subr.mxu0 %v898
    %2750 = vmatpush1.msra.mxu0 %v897
    %2751 = vmatprep.subr.mxu0 %v914
    %2752 = vmatpush1.msra.mxu0 %v913
    %2753 = vmatprep.subr.mxu0 %v930
    %2754 = vmatpush1.msra.mxu0 %v929
    %2755 = vmatprep.subr.mxu0 %v946
    %2756 = vmatpush1.msra.mxu0 %v945
    %2757 = vmatprep.subr.mxu0 %v962
    %2758 = vmatpush1.msra.mxu0 %v961
    %2759 = vmatprep.subr.mxu0 %v978
    %2760 = vmatpush1.msra.mxu0 %v977
    %2761 = vmatprep.subr.mxu0 %v994
    %2762 = vmatpush1.msra.mxu0 %v993
    %2763 = vmatprep.subr.mxu0 %v1010
    %2764 = vmatpush1.msra.mxu0 %v1009
    %2765 = vmatprep.subr.mxu0 %v1026
    %2766 = vmatpush1.msra.mxu0 %v1025
    %2767 = vmatprep.subr.mxu0 %v1042
    %2768 = vmatpush1.msra.mxu0 %v1041
    %2769 = vmatprep.subr.mxu0 %v1058
    %2770 = vmatpush1.msra.mxu0 %v1057
    %2771 = vmatprep.subr.mxu0 %v1074
    %2772 = vmatpush1.msra.mxu0 %v1073
    %2773 = vmatprep.mubr.f32.mxu0 %v570
    %2774 = vmatmul.mubr.f32.gmra.mrb[0].mxu0 %v569
    %v2775 = vpop.f32.mrb[0].mxu0
    %v2776 = vadd.f32 %v2632, %v2775
    %v2777 = vpop.f32.mrb[0].mxu0
    %v2778 = vadd.f32 %v2636, %v2777
    %2779 = vdwg.mxu0
    %2780 = vmatprep.subr.mxu0 %v1090
    %2781 = vmatpush1.msra.mxu0 %v1089
    %2782 = vmatprep.subr.mxu0 %v1106
    %2783 = vmatpush1.msra.mxu0 %v1105
    %2784 = vmatprep.subr.mxu0 %v1122
    %2785 = vmatpush1.msra.mxu0 %v1121
    %2786 = vmatprep.subr.mxu0 %v1138
    %2787 = vmatpush1.msra.mxu0 %v1137
    %2788 = vmatprep.subr.mxu0 %v1154
    %2789 = vmatpush1.msra.mxu0 %v1153
    %2790 = vmatprep.subr.mxu0 %v1170
    %2791 = vmatpush1.msra.mxu0 %v1169
    %2792 = vmatprep.subr.mxu0 %v1186
    %2793 = vmatpush1.msra.mxu0 %v1185
    %2794 = vmatprep.subr.mxu0 %v1202
    %2795 = vmatpush1.msra.mxu0 %v1201
    %2796 = vmatprep.subr.mxu0 %v1218
    %2797 = vmatpush1.msra.mxu0 %v1217
    %2798 = vmatprep.subr.mxu0 %v1234
    %2799 = vmatpush1.msra.mxu0 %v1233
    %2800 = vmatprep.subr.mxu0 %v1250
    %2801 = vmatpush1.msra.mxu0 %v1249
    %2802 = vmatprep.subr.mxu0 %v1266
    %2803 = vmatpush1.msra.mxu0 %v1265
    %2804 = vmatprep.subr.mxu0 %v1282
    %2805 = vmatpush1.msra.mxu0 %v1281
    %2806 = vmatprep.subr.mxu0 %v1298
    %2807 = vmatpush1.msra.mxu0 %v1297
    %2808 = vmatprep.subr.mxu0 %v1314
    %2809 = vmatpush1.msra.mxu0 %v1313
    %2810 = vmatprep.subr.mxu0 %v1330
    %2811 = vmatpush1.msra.mxu0 %v1329
    %2812 = vmatprep.subr.mxu0 %v1346
    %2813 = vmatpush1.msra.mxu0 %v1345
    %2814 = vmatprep.subr.mxu0 %v1362
    %2815 = vmatpush1.msra.mxu0 %v1361
    %2816 = vmatprep.subr.mxu0 %v1378
    %2817 = vmatpush1.msra.mxu0 %v1377
    %2818 = vmatprep.subr.mxu0 %v1394
    %2819 = vmatpush1.msra.mxu0 %v1393
    %2820 = vmatprep.subr.mxu0 %v1410
    %2821 = vmatpush1.msra.mxu0 %v1409
    %2822 = vmatprep.subr.mxu0 %v1426
    %2823 = vmatpush1.msra.mxu0 %v1425
    %2824 = vmatprep.subr.mxu0 %v1442
    %2825 = vmatpush1.msra.mxu0 %v1441
    %2826 = vmatprep.subr.mxu0 %v1458
    %2827 = vmatpush1.msra.mxu0 %v1457
    %2828 = vmatprep.subr.mxu0 %v1474
    %2829 = vmatpush1.msra.mxu0 %v1473
    %2830 = vmatprep.subr.mxu0 %v1490
    %2831 = vmatpush1.msra.mxu0 %v1489
    %2832 = vmatprep.subr.mxu0 %v1506
    %2833 = vmatpush1.msra.mxu0 %v1505
    %2834 = vmatprep.subr.mxu0 %v1522
    %2835 = vmatpush1.msra.mxu0 %v1521
    %2836 = vmatprep.subr.mxu0 %v1538
    %2837 = vmatpush1.msra.mxu0 %v1537
    %2838 = vmatprep.subr.mxu0 %v1554
    %2839 = vmatpush1.msra.mxu0 %v1553
    %2840 = vmatprep.subr.mxu0 %v1570
    %2841 = vmatpush1.msra.mxu0 %v1569
    %2842 = vmatprep.subr.mxu0 %v1586
    %2843 = vmatpush1.msra.mxu0 %v1585
    %2844 = vmatprep.mubr.f32.mxu0 %v572
    %2845 = vmatmul.mubr.f32.gmra.mrb[0].mxu0 %v571
    %v2846 = vpop.f32.mrb[0].mxu0
    %v2847 = vadd.f32 %v2776, %v2846
    %v2848 = vpop.f32.mrb[0].mxu0
    %v2849 = vadd.f32 %v2778, %v2848
    %2850 = vdwg.mxu0
    %2851 = vmatprep.subr.mxu0 %v1602
    %2852 = vmatpush1.msra.mxu0 %v1601
    %2853 = vmatprep.subr.mxu0 %v1618
    %2854 = vmatpush1.msra.mxu0 %v1617
    %2855 = vmatprep.subr.mxu0 %v1634
    %2856 = vmatpush1.msra.mxu0 %v1633
    %2857 = vmatprep.subr.mxu0 %v1650
    %2858 = vmatpush1.msra.mxu0 %v1649
    %2859 = vmatprep.subr.mxu0 %v1666
    %2860 = vmatpush1.msra.mxu0 %v1665
    %2861 = vmatprep.subr.mxu0 %v1682
    %2862 = vmatpush1.msra.mxu0 %v1681
    %2863 = vmatprep.subr.mxu0 %v1698
    %2864 = vmatpush1.msra.mxu0 %v1697
    %2865 = vmatprep.subr.mxu0 %v1714
    %2866 = vmatpush1.msra.mxu0 %v1713
    %2867 = vmatprep.subr.mxu0 %v1730
    %2868 = vmatpush1.msra.mxu0 %v1729
    %2869 = vmatprep.subr.mxu0 %v1746
    %2870 = vmatpush1.msra.mxu0 %v1745
    %2871 = vmatprep.subr.mxu0 %v1762
    %2872 = vmatpush1.msra.mxu0 %v1761
    %2873 = vmatprep.subr.mxu0 %v1778
    %2874 = vmatpush1.msra.mxu0 %v1777
    %2875 = vmatprep.subr.mxu0 %v1794
    %2876 = vmatpush1.msra.mxu0 %v1793
    %2877 = vmatprep.subr.mxu0 %v1810
    %2878 = vmatpush1.msra.mxu0 %v1809
    %2879 = vmatprep.subr.mxu0 %v1826
    %2880 = vmatpush1.msra.mxu0 %v1825
    %2881 = vmatprep.subr.mxu0 %v1842
    %2882 = vmatpush1.msra.mxu0 %v1841
    %2883 = vmatprep.subr.mxu0 %v1858
    %2884 = vmatpush1.msra.mxu0 %v1857
    %2885 = vmatprep.subr.mxu0 %v1874
    %2886 = vmatpush1.msra.mxu0 %v1873
    %2887 = vmatprep.subr.mxu0 %v1890
    %2888 = vmatpush1.msra.mxu0 %v1889
    %2889 = vmatprep.subr.mxu0 %v1906
    %2890 = vmatpush1.msra.mxu0 %v1905
    %2891 = vmatprep.subr.mxu0 %v1922
    %2892 = vmatpush1.msra.mxu0 %v1921
    %2893 = vmatprep.subr.mxu0 %v1938
    %2894 = vmatpush1.msra.mxu0 %v1937
    %2895 = vmatprep.subr.mxu0 %v1954
    %2896 = vmatpush1.msra.mxu0 %v1953
    %2897 = vmatprep.subr.mxu0 %v1970
    %2898 = vmatpush1.msra.mxu0 %v1969
    %2899 = vmatprep.subr.mxu0 %v1986
    %2900 = vmatpush1.msra.mxu0 %v1985
    %2901 = vmatprep.subr.mxu0 %v2002
    %2902 = vmatpush1.msra.mxu0 %v2001
    %2903 = vmatprep.subr.mxu0 %v2018
    %2904 = vmatpush1.msra.mxu0 %v2017
    %2905 = vmatprep.subr.mxu0 %v2034
    %2906 = vmatpush1.msra.mxu0 %v2033
    %2907 = vmatprep.subr.mxu0 %v2050
    %2908 = vmatpush1.msra.mxu0 %v2049
    %2909 = vmatprep.subr.mxu0 %v2066
    %2910 = vmatpush1.msra.mxu0 %v2065
    %2911 = vmatprep.subr.mxu0 %v2082
    %2912 = vmatpush1.msra.mxu0 %v2081
    %2913 = vmatprep.subr.mxu0 %v2098
    %2914 = vmatpush1.msra.mxu0 %v2097
    %2915 = vmatprep.mubr.f32.mxu0 %v574
    %2916 = vmatmul.mubr.f32.gmra.mrb[0].mxu0 %v573
    %v2917 = vpop.f32.mrb[0].mxu0
    %v2918 = vadd.f32 %v2847, %v2917
    %v2919 = vpop.f32.mrb[0].mxu0
    %v2920 = vadd.f32 %v2849, %v2919
    %2921 = vdwg.mxu0
    %2922 = vmatprep.subr.mxu0 %v2114
    %2923 = vmatpush1.msra.mxu0 %v2113
    %2924 = vmatprep.subr.mxu0 %v2130
    %2925 = vmatpush1.msra.mxu0 %v2129
    %2926 = vmatprep.subr.mxu0 %v2146
    %2927 = vmatpush1.msra.mxu0 %v2145
    %2928 = vmatprep.subr.mxu0 %v2162
    %2929 = vmatpush1.msra.mxu0 %v2161
    %2930 = vmatprep.subr.mxu0 %v2178
    %2931 = vmatpush1.msra.mxu0 %v2177
    %2932 = vmatprep.subr.mxu0 %v2194
    %2933 = vmatpush1.msra.mxu0 %v2193
    %2934 = vmatprep.subr.mxu0 %v2210
    %2935 = vmatpush1.msra.mxu0 %v2209
    %2936 = vmatprep.subr.mxu0 %v2226
    %2937 = vmatpush1.msra.mxu0 %v2225
    %2938 = vmatprep.subr.mxu0 %v2242
    %2939 = vmatpush1.msra.mxu0 %v2241
    %2940 = vmatprep.subr.mxu0 %v2258
    %2941 = vmatpush1.msra.mxu0 %v2257
    %2942 = vmatprep.subr.mxu0 %v2274
    %2943 = vmatpush1.msra.mxu0 %v2273
    %2944 = vmatprep.subr.mxu0 %v2290
    %2945 = vmatpush1.msra.mxu0 %v2289
    %2946 = vmatprep.subr.mxu0 %v2306
    %2947 = vmatpush1.msra.mxu0 %v2305
    %2948 = vmatprep.subr.mxu0 %v2322
    %2949 = vmatpush1.msra.mxu0 %v2321
    %2950 = vmatprep.subr.mxu0 %v2338
    %2951 = vmatpush1.msra.mxu0 %v2337
    %2952 = vmatprep.subr.mxu0 %v2354
    %2953 = vmatpush1.msra.mxu0 %v2353
    %2954 = vmatprep.subr.mxu0 %v2370
    %2955 = vmatpush1.msra.mxu0 %v2369
    %2956 = vmatprep.subr.mxu0 %v2386
    %2957 = vmatpush1.msra.mxu0 %v2385
    %2958 = vmatprep.subr.mxu0 %v2402
    %2959 = vmatpush1.msra.mxu0 %v2401
    %2960 = vmatprep.subr.mxu0 %v2418
    %2961 = vmatpush1.msra.mxu0 %v2417
    %2962 = vmatprep.subr.mxu0 %v2434
    %2963 = vmatpush1.msra.mxu0 %v2433
    %2964 = vmatprep.subr.mxu0 %v2450
    %2965 = vmatpush1.msra.mxu0 %v2449
    %2966 = vmatprep.subr.mxu0 %v2466
    %2967 = vmatpush1.msra.mxu0 %v2465
    %2968 = vmatprep.subr.mxu0 %v2482
    %2969 = vmatpush1.msra.mxu0 %v2481
    %2970 = vmatprep.subr.mxu0 %v2498
    %2971 = vmatpush1.msra.mxu0 %v2497
    %2972 = vmatprep.subr.mxu0 %v2514
    %2973 = vmatpush1.msra.mxu0 %v2513
    %2974 = vmatprep.subr.mxu0 %v2530
    %2975 = vmatpush1.msra.mxu0 %v2529
    %2976 = vmatprep.subr.mxu0 %v2546
    %2977 = vmatpush1.msra.mxu0 %v2545
    %2978 = vmatprep.subr.mxu0 %v2562
    %2979 = vmatpush1.msra.mxu0 %v2561
    %2980 = vmatprep.subr.mxu0 %v2578
    %2981 = vmatpush1.msra.mxu0 %v2577
    %2982 = vmatprep.subr.mxu0 %v2594
    %2983 = vmatpush1.msra.mxu0 %v2593
    %2984 = vmatprep.subr.mxu0 %v2610
    %2985 = vmatpush1.msra.mxu0 %v2609
    %2986 = vmatprep.mubr.f32.mxu0 %v576
    %2987 = vmatmul.mubr.f32.gmra.mrb[0].mxu0 %v575
    %v2988 = vpop.f32.mrb[0].mxu0
    %v2989 = vadd.f32 %v2918, %v2988
    %v2990 = vpop.f32.mrb[0].mxu0
    %v2991 = vadd.f32 %v2920, %v2990
    %2992 = vdwg.mxu0
    %2993 = vmatprep.subr.mxu0 %v580
    %2994 = vmatpush1.msra.mxu0 %v579
    %2995 = vmatprep.subr.mxu0 %v596
    %2996 = vmatpush1.msra.mxu0 %v595
    %2997 = vmatprep.subr.mxu0 %v612
    %2998 = vmatpush1.msra.mxu0 %v611
    %2999 = vmatprep.subr.mxu0 %v628
    %3000 = vmatpush1.msra.mxu0 %v627
    %3001 = vmatprep.subr.mxu0 %v644
    %3002 = vmatpush1.msra.mxu0 %v643
    %3003 = vmatprep.subr.mxu0 %v660
    %3004 = vmatpush1.msra.mxu0 %v659
    %3005 = vmatprep.subr.mxu0 %v676
    %3006 = vmatpush1.msra.mxu0 %v675
    %3007 = vmatprep.subr.mxu0 %v692
    %3008 = vmatpush1.msra.mxu0 %v691
    %3009 = vmatprep.subr.mxu0 %v708
    %3010 = vmatpush1.msra.mxu0 %v707
    %3011 = vmatprep.subr.mxu0 %v724
    %3012 = vmatpush1.msra.mxu0 %v723
    %3013 = vmatprep.subr.mxu0 %v740
    %3014 = vmatpush1.msra.mxu0 %v739
    %3015 = vmatprep.subr.mxu0 %v756
    %3016 = vmatpush1.msra.mxu0 %v755
    %3017 = vmatprep.subr.mxu0 %v772
    %3018 = vmatpush1.msra.mxu0 %v771
    %3019 = vmatprep.subr.mxu0 %v788
    %3020 = vmatpush1.msra.mxu0 %v787
    %3021 = vmatprep.subr.mxu0 %v804
    %3022 = vmatpush1.msra.mxu0 %v803
    %3023 = vmatprep.subr.mxu0 %v820
    %3024 = vmatpush1.msra.mxu0 %v819
    %3025 = vmatprep.subr.mxu0 %v836
    %3026 = vmatpush1.msra.mxu0 %v835
    %3027 = vmatprep.subr.mxu0 %v852
    %3028 = vmatpush1.msra.mxu0 %v851
    %3029 = vmatprep.subr.mxu0 %v868
    %3030 = vmatpush1.msra.mxu0 %v867
    %3031 = vmatprep.subr.mxu0 %v884
    %3032 = vmatpush1.msra.mxu0 %v883
    %3033 = vmatprep.subr.mxu0 %v900
    %3034 = vmatpush1.msra.mxu0 %v899
    %3035 = vmatprep.subr.mxu0 %v916
    %3036 = vmatpush1.msra.mxu0 %v915
    %3037 = vmatprep.subr.mxu0 %v932
    %3038 = vmatpush1.msra.mxu0 %v931
    %3039 = vmatprep.subr.mxu0 %v948
    %3040 = vmatpush1.msra.mxu0 %v947
    %3041 = vmatprep.subr.mxu0 %v964
    %3042 = vmatpush1.msra.mxu0 %v963
    %3043 = vmatprep.subr.mxu0 %v980
    %3044 = vmatpush1.msra.mxu0 %v979
    %3045 = vmatprep.subr.mxu0 %v996
    %3046 = vmatpush1.msra.mxu0 %v995
    %3047 = vmatprep.subr.mxu0 %v1012
    %3048 = vmatpush1.msra.mxu0 %v1011
    %3049 = vmatprep.subr.mxu0 %v1028
    %3050 = vmatpush1.msra.mxu0 %v1027
    %3051 = vmatprep.subr.mxu0 %v1044
    %3052 = vmatpush1.msra.mxu0 %v1043
    %3053 = vmatprep.subr.mxu0 %v1060
    %3054 = vmatpush1.msra.mxu0 %v1059
    %3055 = vmatprep.subr.mxu0 %v1076
    %3056 = vmatpush1.msra.mxu0 %v1075
    %3057 = vmatprep.mubr.f32.mxu0 %v570
    %3058 = vmatmul.mubr.f32.gmra.mrb[0].mxu0 %v569
    %v3059 = vpop.f32.mrb[0].mxu0
    %v3060 = vadd.f32 %v2640, %v3059
    %v3061 = vpop.f32.mrb[0].mxu0
    %v3062 = vadd.f32 %v2644, %v3061
    %3063 = vdwg.mxu0
    %3064 = vmatprep.subr.mxu0 %v1092
    %3065 = vmatpush1.msra.mxu0 %v1091
    %3066 = vmatprep.subr.mxu0 %v1108
    %3067 = vmatpush1.msra.mxu0 %v1107
    %3068 = vmatprep.subr.mxu0 %v1124
    %3069 = vmatpush1.msra.mxu0 %v1123
    %3070 = vmatprep.subr.mxu0 %v1140
    %3071 = vmatpush1.msra.mxu0 %v1139
    %3072 = vmatprep.subr.mxu0 %v1156
    %3073 = vmatpush1.msra.mxu0 %v1155
    %3074 = vmatprep.subr.mxu0 %v1172
    %3075 = vmatpush1.msra.mxu0 %v1171
    %3076 = vmatprep.subr.mxu0 %v1188
    %3077 = vmatpush1.msra.mxu0 %v1187
    %3078 = vmatprep.subr.mxu0 %v1204
    %3079 = vmatpush1.msra.mxu0 %v1203
    %3080 = vmatprep.subr.mxu0 %v1220
    %3081 = vmatpush1.msra.mxu0 %v1219
    %3082 = vmatprep.subr.mxu0 %v1236
    %3083 = vmatpush1.msra.mxu0 %v1235
    %3084 = vmatprep.subr.mxu0 %v1252
    %3085 = vmatpush1.msra.mxu0 %v1251
    %3086 = vmatprep.subr.mxu0 %v1268
    %3087 = vmatpush1.msra.mxu0 %v1267
    %3088 = vmatprep.subr.mxu0 %v1284
    %3089 = vmatpush1.msra.mxu0 %v1283
    %3090 = vmatprep.subr.mxu0 %v1300
    %3091 = vmatpush1.msra.mxu0 %v1299
    %3092 = vmatprep.subr.mxu0 %v1316
    %3093 = vmatpush1.msra.mxu0 %v1315
    %3094 = vmatprep.subr.mxu0 %v1332
    %3095 = vmatpush1.msra.mxu0 %v1331
    %3096 = vmatprep.subr.mxu0 %v1348
    %3097 = vmatpush1.msra.mxu0 %v1347
    %3098 = vmatprep.subr.mxu0 %v1364
    %3099 = vmatpush1.msra.mxu0 %v1363
    %3100 = vmatprep.subr.mxu0 %v1380
    %3101 = vmatpush1.msra.mxu0 %v1379
    %3102 = vmatprep.subr.mxu0 %v1396
    %3103 = vmatpush1.msra.mxu0 %v1395
    %3104 = vmatprep.subr.mxu0 %v1412
    %3105 = vmatpush1.msra.mxu0 %v1411
    %3106 = vmatprep.subr.mxu0 %v1428
    %3107 = vmatpush1.msra.mxu0 %v1427
    %3108 = vmatprep.subr.mxu0 %v1444
    %3109 = vmatpush1.msra.mxu0 %v1443
    %3110 = vmatprep.subr.mxu0 %v1460
    %3111 = vmatpush1.msra.mxu0 %v1459
    %3112 = vmatprep.subr.mxu0 %v1476
    %3113 = vmatpush1.msra.mxu0 %v1475
    %3114 = vmatprep.subr.mxu0 %v1492
    %3115 = vmatpush1.msra.mxu0 %v1491
    %3116 = vmatprep.subr.mxu0 %v1508
    %3117 = vmatpush1.msra.mxu0 %v1507
    %3118 = vmatprep.subr.mxu0 %v1524
    %3119 = vmatpush1.msra.mxu0 %v1523
    %3120 = vmatprep.subr.mxu0 %v1540
    %3121 = vmatpush1.msra.mxu0 %v1539
    %3122 = vmatprep.subr.mxu0 %v1556
    %3123 = vmatpush1.msra.mxu0 %v1555
    %3124 = vmatprep.subr.mxu0 %v1572
    %3125 = vmatpush1.msra.mxu0 %v1571
    %3126 = vmatprep.subr.mxu0 %v1588
    %3127 = vmatpush1.msra.mxu0 %v1587
    %3128 = vmatprep.mubr.f32.mxu0 %v572
    %3129 = vmatmul.mubr.f32.gmra.mrb[0].mxu0 %v571
    %v3130 = vpop.f32.mrb[0].mxu0
    %v3131 = vadd.f32 %v3060, %v3130
    %v3132 = vpop.f32.mrb[0].mxu0
    %v3133 = vadd.f32 %v3062, %v3132
    %3134 = vdwg.mxu0
    %3135 = vmatprep.subr.mxu0 %v1604
    %3136 = vmatpush1.msra.mxu0 %v1603
    %3137 = vmatprep.subr.mxu0 %v1620
    %3138 = vmatpush1.msra.mxu0 %v1619
    %3139 = vmatprep.subr.mxu0 %v1636
    %3140 = vmatpush1.msra.mxu0 %v1635
    %3141 = vmatprep.subr.mxu0 %v1652
    %3142 = vmatpush1.msra.mxu0 %v1651
    %3143 = vmatprep.subr.mxu0 %v1668
    %3144 = vmatpush1.msra.mxu0 %v1667
    %3145 = vmatprep.subr.mxu0 %v1684
    %3146 = vmatpush1.msra.mxu0 %v1683
    %3147 = vmatprep.subr.mxu0 %v1700
    %3148 = vmatpush1.msra.mxu0 %v1699
    %3149 = vmatprep.subr.mxu0 %v1716
    %3150 = vmatpush1.msra.mxu0 %v1715
    %3151 = vmatprep.subr.mxu0 %v1732
    %3152 = vmatpush1.msra.mxu0 %v1731
    %3153 = vmatprep.subr.mxu0 %v1748
    %3154 = vmatpush1.msra.mxu0 %v1747
    %3155 = vmatprep.subr.mxu0 %v1764
    %3156 = vmatpush1.msra.mxu0 %v1763
    %3157 = vmatprep.subr.mxu0 %v1780
    %3158 = vmatpush1.msra.mxu0 %v1779
    %3159 = vmatprep.subr.mxu0 %v1796
    %3160 = vmatpush1.msra.mxu0 %v1795
    %3161 = vmatprep.subr.mxu0 %v1812
    %3162 = vmatpush1.msra.mxu0 %v1811
    %3163 = vmatprep.subr.mxu0 %v1828
    %3164 = vmatpush1.msra.mxu0 %v1827
    %3165 = vmatprep.subr.mxu0 %v1844
    %3166 = vmatpush1.msra.mxu0 %v1843
    %3167 = vmatprep.subr.mxu0 %v1860
    %3168 = vmatpush1.msra.mxu0 %v1859
    %3169 = vmatprep.subr.mxu0 %v1876
    %3170 = vmatpush1.msra.mxu0 %v1875
    %3171 = vmatprep.subr.mxu0 %v1892
    %3172 = vmatpush1.msra.mxu0 %v1891
    %3173 = vmatprep.subr.mxu0 %v1908
    %3174 = vmatpush1.msra.mxu0 %v1907
    %3175 = vmatprep.subr.mxu0 %v1924
    %3176 = vmatpush1.msra.mxu0 %v1923
    %3177 = vmatprep.subr.mxu0 %v1940
    %3178 = vmatpush1.msra.mxu0 %v1939
    %3179 = vmatprep.subr.mxu0 %v1956
    %3180 = vmatpush1.msra.mxu0 %v1955
    %3181 = vmatprep.subr.mxu0 %v1972
    %3182 = vmatpush1.msra.mxu0 %v1971
    %3183 = vmatprep.subr.mxu0 %v1988
    %3184 = vmatpush1.msra.mxu0 %v1987
    %3185 = vmatprep.subr.mxu0 %v2004
    %3186 = vmatpush1.msra.mxu0 %v2003
    %3187 = vmatprep.subr.mxu0 %v2020
    %3188 = vmatpush1.msra.mxu0 %v2019
    %3189 = vmatprep.subr.mxu0 %v2036
    %3190 = vmatpush1.msra.mxu0 %v2035
    %3191 = vmatprep.subr.mxu0 %v2052
    %3192 = vmatpush1.msra.mxu0 %v2051
    %3193 = vmatprep.subr.mxu0 %v2068
    %3194 = vmatpush1.msra.mxu0 %v2067
    %3195 = vmatprep.subr.mxu0 %v2084
    %3196 = vmatpush1.msra.mxu0 %v2083
    %3197 = vmatprep.subr.mxu0 %v2100
    %3198 = vmatpush1.msra.mxu0 %v2099
    %3199 = vmatprep.mubr.f32.mxu0 %v574
    %3200 = vmatmul.mubr.f32.gmra.mrb[0].mxu0 %v573
    %v3201 = vpop.f32.mrb[0].mxu0
    %v3202 = vadd.f32 %v3131, %v3201
    %v3203 = vpop.f32.mrb[0].mxu0
    %v3204 = vadd.f32 %v3133, %v3203
    %3205 = vdwg.mxu0
    %3206 = vmatprep.subr.mxu0 %v2116
    %3207 = vmatpush1.msra.mxu0 %v2115
    %3208 = vmatprep.subr.mxu0 %v2132
    %3209 = vmatpush1.msra.mxu0 %v2131
    %3210 = vmatprep.subr.mxu0 %v2148
    %3211 = vmatpush1.msra.mxu0 %v2147
    %3212 = vmatprep.subr.mxu0 %v2164
    %3213 = vmatpush1.msra.mxu0 %v2163
    %3214 = vmatprep.subr.mxu0 %v2180
    %3215 = vmatpush1.msra.mxu0 %v2179
    %3216 = vmatprep.subr.mxu0 %v2196
    %3217 = vmatpush1.msra.mxu0 %v2195
    %3218 = vmatprep.subr.mxu0 %v2212
    %3219 = vmatpush1.msra.mxu0 %v2211
    %3220 = vmatprep.subr.mxu0 %v2228
    %3221 = vmatpush1.msra.mxu0 %v2227
    %3222 = vmatprep.subr.mxu0 %v2244
    %3223 = vmatpush1.msra.mxu0 %v2243
    %3224 = vmatprep.subr.mxu0 %v2260
    %3225 = vmatpush1.msra.mxu0 %v2259
    %3226 = vmatprep.subr.mxu0 %v2276
    %3227 = vmatpush1.msra.mxu0 %v2275
    %3228 = vmatprep.subr.mxu0 %v2292
    %3229 = vmatpush1.msra.mxu0 %v2291
    %3230 = vmatprep.subr.mxu0 %v2308
    %3231 = vmatpush1.msra.mxu0 %v2307
    %3232 = vmatprep.subr.mxu0 %v2324
    %3233 = vmatpush1.msra.mxu0 %v2323
    %3234 = vmatprep.subr.mxu0 %v2340
    %3235 = vmatpush1.msra.mxu0 %v2339
    %3236 = vmatprep.subr.mxu0 %v2356
    %3237 = vmatpush1.msra.mxu0 %v2355
    %3238 = vmatprep.subr.mxu0 %v2372
    %3239 = vmatpush1.msra.mxu0 %v2371
    %3240 = vmatprep.subr.mxu0 %v2388
    %3241 = vmatpush1.msra.mxu0 %v2387
    %3242 = vmatprep.subr.mxu0 %v2404
    %3243 = vmatpush1.msra.mxu0 %v2403
    %3244 = vmatprep.subr.mxu0 %v2420
    %3245 = vmatpush1.msra.mxu0 %v2419
    %3246 = vmatprep.subr.mxu0 %v2436
    %3247 = vmatpush1.msra.mxu0 %v2435
    %3248 = vmatprep.subr.mxu0 %v2452
    %3249 = vmatpush1.msra.mxu0 %v2451
    %3250 = vmatprep.subr.mxu0 %v2468
    %3251 = vmatpush1.msra.mxu0 %v2467
    %3252 = vmatprep.subr.mxu0 %v2484
    %3253 = vmatpush1.msra.mxu0 %v2483
    %3254 = vmatprep.subr.mxu0 %v2500
    %3255 = vmatpush1.msra.mxu0 %v2499
    %3256 = vmatprep.subr.mxu0 %v2516
    %3257 = vmatpush1.msra.mxu0 %v2515
    %3258 = vmatprep.subr.mxu0 %v2532
    %3259 = vmatpush1.msra.mxu0 %v2531
    %3260 = vmatprep.subr.mxu0 %v2548
    %3261 = vmatpush1.msra.mxu0 %v2547
    %3262 = vmatprep.subr.mxu0 %v2564
    %3263 = vmatpush1.msra.mxu0 %v2563
    %3264 = vmatprep.subr.mxu0 %v2580
    %3265 = vmatpush1.msra.mxu0 %v2579
    %3266 = vmatprep.subr.mxu0 %v2596
    %3267 = vmatpush1.msra.mxu0 %v2595
    %3268 = vmatprep.subr.mxu0 %v2612
    %3269 = vmatpush1.msra.mxu0 %v2611
    %3270 = vmatprep.mubr.f32.mxu0 %v576
    %3271 = vmatmul.mubr.f32.gmra.mrb[0].mxu0 %v575
    %v3272 = vpop.f32.mrb[0].mxu0
    %v3273 = vadd.f32 %v3202, %v3272
    %v3274 = vpop.f32.mrb[0].mxu0
    %v3275 = vadd.f32 %v3204, %v3274
    %3276 = vdwg.mxu0
    %3277 = vmatprep.subr.mxu0 %v582
    %3278 = vmatpush1.msra.mxu0 %v581
    %3279 = vmatprep.subr.mxu0 %v598
    %3280 = vmatpush1.msra.mxu0 %v597
    %3281 = vmatprep.subr.mxu0 %v614
    %3282 = vmatpush1.msra.mxu0 %v613
    %3283 = vmatprep.subr.mxu0 %v630
    %3284 = vmatpush1.msra.mxu0 %v629
    %3285 = vmatprep.subr.mxu0 %v646
    %3286 = vmatpush1.msra.mxu0 %v645
    %3287 = vmatprep.subr.mxu0 %v662
    %3288 = vmatpush1.msra.mxu0 %v661
    %3289 = vmatprep.subr.mxu0 %v678
    %3290 = vmatpush1.msra.mxu0 %v677
    %3291 = vmatprep.subr.mxu0 %v694
    %3292 = vmatpush1.msra.mxu0 %v693
    %3293 = vmatprep.subr.mxu0 %v710
    %3294 = vmatpush1.msra.mxu0 %v709
    %3295 = vmatprep.subr.mxu0 %v726
    %3296 = vmatpush1.msra.mxu0 %v725
    %3297 = vmatprep.subr.mxu0 %v742
    %3298 = vmatpush1.msra.mxu0 %v741
    %3299 = vmatprep.subr.mxu0 %v758
    %3300 = vmatpush1.msra.mxu0 %v757
    %3301 = vmatprep.subr.mxu0 %v774
    %3302 = vmatpush1.msra.mxu0 %v773
    %3303 = vmatprep.subr.mxu0 %v790
    %3304 = vmatpush1.msra.mxu0 %v789
    %3305 = vmatprep.subr.mxu0 %v806
    %3306 = vmatpush1.msra.mxu0 %v805
    %3307 = vmatprep.subr.mxu0 %v822
    %3308 = vmatpush1.msra.mxu0 %v821
    %3309 = vmatprep.subr.mxu0 %v838
    %3310 = vmatpush1.msra.mxu0 %v837
    %3311 = vmatprep.subr.mxu0 %v854
    %3312 = vmatpush1.msra.mxu0 %v853
    %3313 = vmatprep.subr.mxu0 %v870
    %3314 = vmatpush1.msra.mxu0 %v869
    %3315 = vmatprep.subr.mxu0 %v886
    %3316 = vmatpush1.msra.mxu0 %v885
    %3317 = vmatprep.subr.mxu0 %v902
    %3318 = vmatpush1.msra.mxu0 %v901
    %3319 = vmatprep.subr.mxu0 %v918
    %3320 = vmatpush1.msra.mxu0 %v917
    %3321 = vmatprep.subr.mxu0 %v934
    %3322 = vmatpush1.msra.mxu0 %v933
    %3323 = vmatprep.subr.mxu0 %v950
    %3324 = vmatpush1.msra.mxu0 %v949
    %3325 = vmatprep.subr.mxu0 %v966
    %3326 = vmatpush1.msra.mxu0 %v965
    %3327 = vmatprep.subr.mxu0 %v982
    %3328 = vmatpush1.msra.mxu0 %v981
    %3329 = vmatprep.subr.mxu0 %v998
    %3330 = vmatpush1.msra.mxu0 %v997
    %3331 = vmatprep.subr.mxu0 %v1014
    %3332 = vmatpush1.msra.mxu0 %v1013
    %3333 = vmatprep.subr.mxu0 %v1030
    %3334 = vmatpush1.msra.mxu0 %v1029
    %3335 = vmatprep.subr.mxu0 %v1046
    %3336 = vmatpush1.msra.mxu0 %v1045
    %3337 = vmatprep.subr.mxu0 %v1062
    %3338 = vmatpush1.msra.mxu0 %v1061
    %3339 = vmatprep.subr.mxu0 %v1078
    %3340 = vmatpush1.msra.mxu0 %v1077
    %3341 = vmatprep.mubr.f32.mxu0 %v570
    %3342 = vmatmul.mubr.f32.gmra.mrb[0].mxu0 %v569
    %v3343 = vpop.f32.mrb[0].mxu0
    %v3344 = vadd.f32 %v2648, %v3343
    %v3345 = vpop.f32.mrb[0].mxu0
    %v3346 = vadd.f32 %v2652, %v3345
    %3347 = vdwg.mxu0
    %3348 = vmatprep.subr.mxu0 %v1094
    %3349 = vmatpush1.msra.mxu0 %v1093
    %3350 = vmatprep.subr.mxu0 %v1110
    %3351 = vmatpush1.msra.mxu0 %v1109
    %3352 = vmatprep.subr.mxu0 %v1126
    %3353 = vmatpush1.msra.mxu0 %v1125
    %3354 = vmatprep.subr.mxu0 %v1142
    %3355 = vmatpush1.msra.mxu0 %v1141
    %3356 = vmatprep.subr.mxu0 %v1158
    %3357 = vmatpush1.msra.mxu0 %v1157
    %3358 = vmatprep.subr.mxu0 %v1174
    %3359 = vmatpush1.msra.mxu0 %v1173
    %3360 = vmatprep.subr.mxu0 %v1190
    %3361 = vmatpush1.msra.mxu0 %v1189
    %3362 = vmatprep.subr.mxu0 %v1206
    %3363 = vmatpush1.msra.mxu0 %v1205
    %3364 = vmatprep.subr.mxu0 %v1222
    %3365 = vmatpush1.msra.mxu0 %v1221
    %3366 = vmatprep.subr.mxu0 %v1238
    %3367 = vmatpush1.msra.mxu0 %v1237
    %3368 = vmatprep.subr.mxu0 %v1254
    %3369 = vmatpush1.msra.mxu0 %v1253
    %3370 = vmatprep.subr.mxu0 %v1270
    %3371 = vmatpush1.msra.mxu0 %v1269
    %3372 = vmatprep.subr.mxu0 %v1286
    %3373 = vmatpush1.msra.mxu0 %v1285
    %3374 = vmatprep.subr.mxu0 %v1302
    %3375 = vmatpush1.msra.mxu0 %v1301
    %3376 = vmatprep.subr.mxu0 %v1318
    %3377 = vmatpush1.msra.mxu0 %v1317
    %3378 = vmatprep.subr.mxu0 %v1334
    %3379 = vmatpush1.msra.mxu0 %v1333
    %3380 = vmatprep.subr.mxu0 %v1350
    %3381 = vmatpush1.msra.mxu0 %v1349
    %3382 = vmatprep.subr.mxu0 %v1366
    %3383 = vmatpush1.msra.mxu0 %v1365
    %3384 = vmatprep.subr.mxu0 %v1382
    %3385 = vmatpush1.msra.mxu0 %v1381
    %3386 = vmatprep.subr.mxu0 %v1398
    %3387 = vmatpush1.msra.mxu0 %v1397
    %3388 = vmatprep.subr.mxu0 %v1414
    %3389 = vmatpush1.msra.mxu0 %v1413
    %3390 = vmatprep.subr.mxu0 %v1430
    %3391 = vmatpush1.msra.mxu0 %v1429
    %3392 = vmatprep.subr.mxu0 %v1446
    %3393 = vmatpush1.msra.mxu0 %v1445
    %3394 = vmatprep.subr.mxu0 %v1462
    %3395 = vmatpush1.msra.mxu0 %v1461
    %3396 = vmatprep.subr.mxu0 %v1478
    %3397 = vmatpush1.msra.mxu0 %v1477
    %3398 = vmatprep.subr.mxu0 %v1494
    %3399 = vmatpush1.msra.mxu0 %v1493
    %3400 = vmatprep.subr.mxu0 %v1510
    %3401 = vmatpush1.msra.mxu0 %v1509
    %3402 = vmatprep.subr.mxu0 %v1526
    %3403 = vmatpush1.msra.mxu0 %v1525
    %3404 = vmatprep.subr.mxu0 %v1542
    %3405 = vmatpush1.msra.mxu0 %v1541
    %3406 = vmatprep.subr.mxu0 %v1558
    %3407 = vmatpush1.msra.mxu0 %v1557
    %3408 = vmatprep.subr.mxu0 %v1574
    %3409 = vmatpush1.msra.mxu0 %v1573
    %3410 = vmatprep.subr.mxu0 %v1590
    %3411 = vmatpush1.msra.mxu0 %v1589
    %3412 = vmatprep.mubr.f32.mxu0 %v572
    %3413 = vmatmul.mubr.f32.gmra.mrb[0].mxu0 %v571
    %v3414 = vpop.f32.mrb[0].mxu0
    %v3415 = vadd.f32 %v3344, %v3414
    %v3416 = vpop.f32.mrb[0].mxu0
    %v3417 = vadd.f32 %v3346, %v3416
    %3418 = vdwg.mxu0
    %3419 = vmatprep.subr.mxu0 %v1606
    %3420 = vmatpush1.msra.mxu0 %v1605
    %3421 = vmatprep.subr.mxu0 %v1622
    %3422 = vmatpush1.msra.mxu0 %v1621
    %3423 = vmatprep.subr.mxu0 %v1638
    %3424 = vmatpush1.msra.mxu0 %v1637
    %3425 = vmatprep.subr.mxu0 %v1654
    %3426 = vmatpush1.msra.mxu0 %v1653
    %3427 = vmatprep.subr.mxu0 %v1670
    %3428 = vmatpush1.msra.mxu0 %v1669
    %3429 = vmatprep.subr.mxu0 %v1686
    %3430 = vmatpush1.msra.mxu0 %v1685
    %3431 = vmatprep.subr.mxu0 %v1702
    %3432 = vmatpush1.msra.mxu0 %v1701
    %3433 = vmatprep.subr.mxu0 %v1718
    %3434 = vmatpush1.msra.mxu0 %v1717
    %3435 = vmatprep.subr.mxu0 %v1734
    %3436 = vmatpush1.msra.mxu0 %v1733
    %3437 = vmatprep.subr.mxu0 %v1750
    %3438 = vmatpush1.msra.mxu0 %v1749
    %3439 = vmatprep.subr.mxu0 %v1766
    %3440 = vmatpush1.msra.mxu0 %v1765
    %3441 = vmatprep.subr.mxu0 %v1782
    %3442 = vmatpush1.msra.mxu0 %v1781
    %3443 = vmatprep.subr.mxu0 %v1798
    %3444 = vmatpush1.msra.mxu0 %v1797
    %3445 = vmatprep.subr.mxu0 %v1814
    %3446 = vmatpush1.msra.mxu0 %v1813
    %3447 = vmatprep.subr.mxu0 %v1830
    %3448 = vmatpush1.msra.mxu0 %v1829
    %3449 = vmatprep.subr.mxu0 %v1846
    %3450 = vmatpush1.msra.mxu0 %v1845
    %3451 = vmatprep.subr.mxu0 %v1862
    %3452 = vmatpush1.msra.mxu0 %v1861
    %3453 = vmatprep.subr.mxu0 %v1878
    %3454 = vmatpush1.msra.mxu0 %v1877
    %3455 = vmatprep.subr.mxu0 %v1894
    %3456 = vmatpush1.msra.mxu0 %v1893
    %3457 = vmatprep.subr.mxu0 %v1910
    %3458 = vmatpush1.msra.mxu0 %v1909
    %3459 = vmatprep.subr.mxu0 %v1926
    %3460 = vmatpush1.msra.mxu0 %v1925
    %3461 = vmatprep.subr.mxu0 %v1942
    %3462 = vmatpush1.msra.mxu0 %v1941
    %3463 = vmatprep.subr.mxu0 %v1958
    %3464 = vmatpush1.msra.mxu0 %v1957
    %3465 = vmatprep.subr.mxu0 %v1974
    %3466 = vmatpush1.msra.mxu0 %v1973
    %3467 = vmatprep.subr.mxu0 %v1990
    %3468 = vmatpush1.msra.mxu0 %v1989
    %3469 = vmatprep.subr.mxu0 %v2006
    %3470 = vmatpush1.msra.mxu0 %v2005
    %3471 = vmatprep.subr.mxu0 %v2022
    %3472 = vmatpush1.msra.mxu0 %v2021
    %3473 = vmatprep.subr.mxu0 %v2038
    %3474 = vmatpush1.msra.mxu0 %v2037
    %3475 = vmatprep.subr.mxu0 %v2054
    %3476 = vmatpush1.msra.mxu0 %v2053
    %3477 = vmatprep.subr.mxu0 %v2070
    %3478 = vmatpush1.msra.mxu0 %v2069
    %3479 = vmatprep.subr.mxu0 %v2086
    %3480 = vmatpush1.msra.mxu0 %v2085
    %3481 = vmatprep.subr.mxu0 %v2102
    %3482 = vmatpush1.msra.mxu0 %v2101
    %3483 = vmatprep.mubr.f32.mxu0 %v574
    %3484 = vmatmul.mubr.f32.gmra.mrb[0].mxu0 %v573
    %v3485 = vpop.f32.mrb[0].mxu0
    %v3486 = vadd.f32 %v3415, %v3485
    %v3487 = vpop.f32.mrb[0].mxu0
    %v3488 = vadd.f32 %v3417, %v3487
    %3489 = vdwg.mxu0
    %3490 = vmatprep.subr.mxu0 %v2118
    %3491 = vmatpush1.msra.mxu0 %v2117
    %3492 = vmatprep.subr.mxu0 %v2134
    %3493 = vmatpush1.msra.mxu0 %v2133
    %3494 = vmatprep.subr.mxu0 %v2150
    %3495 = vmatpush1.msra.mxu0 %v2149
    %3496 = vmatprep.subr.mxu0 %v2166
    %3497 = vmatpush1.msra.mxu0 %v2165
    %3498 = vmatprep.subr.mxu0 %v2182
    %3499 = vmatpush1.msra.mxu0 %v2181
    %3500 = vmatprep.subr.mxu0 %v2198
    %3501 = vmatpush1.msra.mxu0 %v2197
    %3502 = vmatprep.subr.mxu0 %v2214
    %3503 = vmatpush1.msra.mxu0 %v2213
    %3504 = vmatprep.subr.mxu0 %v2230
    %3505 = vmatpush1.msra.mxu0 %v2229
    %3506 = vmatprep.subr.mxu0 %v2246
    %3507 = vmatpush1.msra.mxu0 %v2245
    %3508 = vmatprep.subr.mxu0 %v2262
    %3509 = vmatpush1.msra.mxu0 %v2261
    %3510 = vmatprep.subr.mxu0 %v2278
    %3511 = vmatpush1.msra.mxu0 %v2277
    %3512 = vmatprep.subr.mxu0 %v2294
    %3513 = vmatpush1.msra.mxu0 %v2293
    %3514 = vmatprep.subr.mxu0 %v2310
    %3515 = vmatpush1.msra.mxu0 %v2309
    %3516 = vmatprep.subr.mxu0 %v2326
    %3517 = vmatpush1.msra.mxu0 %v2325
    %3518 = vmatprep.subr.mxu0 %v2342
    %3519 = vmatpush1.msra.mxu0 %v2341
    %3520 = vmatprep.subr.mxu0 %v2358
    %3521 = vmatpush1.msra.mxu0 %v2357
    %3522 = vmatprep.subr.mxu0 %v2374
    %3523 = vmatpush1.msra.mxu0 %v2373
    %3524 = vmatprep.subr.mxu0 %v2390
    %3525 = vmatpush1.msra.mxu0 %v2389
    %3526 = vmatprep.subr.mxu0 %v2406
    %3527 = vmatpush1.msra.mxu0 %v2405
    %3528 = vmatprep.subr.mxu0 %v2422
    %3529 = vmatpush1.msra.mxu0 %v2421
    %3530 = vmatprep.subr.mxu0 %v2438
    %3531 = vmatpush1.msra.mxu0 %v2437
    %3532 = vmatprep.subr.mxu0 %v2454
    %3533 = vmatpush1.msra.mxu0 %v2453
    %3534 = vmatprep.subr.mxu0 %v2470
    %3535 = vmatpush1.msra.mxu0 %v2469
    %3536 = vmatprep.subr.mxu0 %v2486
    %3537 = vmatpush1.msra.mxu0 %v2485
    %3538 = vmatprep.subr.mxu0 %v2502
    %3539 = vmatpush1.msra.mxu0 %v2501
    %3540 = vmatprep.subr.mxu0 %v2518
    %3541 = vmatpush1.msra.mxu0 %v2517
    %3542 = vmatprep.subr.mxu0 %v2534
    %3543 = vmatpush1.msra.mxu0 %v2533
    %3544 = vmatprep.subr.mxu0 %v2550
    %3545 = vmatpush1.msra.mxu0 %v2549
    %3546 = vmatprep.subr.mxu0 %v2566
    %3547 = vmatpush1.msra.mxu0 %v2565
    %3548 = vmatprep.subr.mxu0 %v2582
    %3549 = vmatpush1.msra.mxu0 %v2581
    %3550 = vmatprep.subr.mxu0 %v2598
    %3551 = vmatpush1.msra.mxu0 %v2597
    %3552 = vmatprep.subr.mxu0 %v2614
    %3553 = vmatpush1.msra.mxu0 %v2613
    %3554 = vmatprep.mubr.f32.mxu0 %v576
    %3555 = vmatmul.mubr.f32.gmra.mrb[0].mxu0 %v575
    %v3556 = vpop.f32.mrb[0].mxu0
    %v3557 = vadd.f32 %v3486, %v3556
    %v3558 = vpop.f32.mrb[0].mxu0
    %v3559 = vadd.f32 %v3488, %v3558
    %3560 = vdwg.mxu0
    %3561 = vmatprep.subr.mxu0 %v584
    %3562 = vmatpush1.msra.mxu0 %v583
    %3563 = vmatprep.subr.mxu0 %v600
    %3564 = vmatpush1.msra.mxu0 %v599
    %3565 = vmatprep.subr.mxu0 %v616
    %3566 = vmatpush1.msra.mxu0 %v615
    %3567 = vmatprep.subr.mxu0 %v632
    %3568 = vmatpush1.msra.mxu0 %v631
    %3569 = vmatprep.subr.mxu0 %v648
    %3570 = vmatpush1.msra.mxu0 %v647
    %3571 = vmatprep.subr.mxu0 %v664
    %3572 = vmatpush1.msra.mxu0 %v663
    %3573 = vmatprep.subr.mxu0 %v680
    %3574 = vmatpush1.msra.mxu0 %v679
    %3575 = vmatprep.subr.mxu0 %v696
    %3576 = vmatpush1.msra.mxu0 %v695
    %3577 = vmatprep.subr.mxu0 %v712
    %3578 = vmatpush1.msra.mxu0 %v711
    %3579 = vmatprep.subr.mxu0 %v728
    %3580 = vmatpush1.msra.mxu0 %v727
    %3581 = vmatprep.subr.mxu0 %v744
    %3582 = vmatpush1.msra.mxu0 %v743
    %3583 = vmatprep.subr.mxu0 %v760
    %3584 = vmatpush1.msra.mxu0 %v759
    %3585 = vmatprep.subr.mxu0 %v776
    %3586 = vmatpush1.msra.mxu0 %v775
    %3587 = vmatprep.subr.mxu0 %v792
    %3588 = vmatpush1.msra.mxu0 %v791
    %3589 = vmatprep.subr.mxu0 %v808
    %3590 = vmatpush1.msra.mxu0 %v807
    %3591 = vmatprep.subr.mxu0 %v824
    %3592 = vmatpush1.msra.mxu0 %v823
    %3593 = vmatprep.subr.mxu0 %v840
    %3594 = vmatpush1.msra.mxu0 %v839
    %3595 = vmatprep.subr.mxu0 %v856
    %3596 = vmatpush1.msra.mxu0 %v855
    %3597 = vmatprep.subr.mxu0 %v872
    %3598 = vmatpush1.msra.mxu0 %v871
    %3599 = vmatprep.subr.mxu0 %v888
    %3600 = vmatpush1.msra.mxu0 %v887
    %3601 = vmatprep.subr.mxu0 %v904
    %3602 = vmatpush1.msra.mxu0 %v903
    %3603 = vmatprep.subr.mxu0 %v920
    %3604 = vmatpush1.msra.mxu0 %v919
    %3605 = vmatprep.subr.mxu0 %v936
    %3606 = vmatpush1.msra.mxu0 %v935
    %3607 = vmatprep.subr.mxu0 %v952
    %3608 = vmatpush1.msra.mxu0 %v951
    %3609 = vmatprep.subr.mxu0 %v968
    %3610 = vmatpush1.msra.mxu0 %v967
    %3611 = vmatprep.subr.mxu0 %v984
    %3612 = vmatpush1.msra.mxu0 %v983
    %3613 = vmatprep.subr.mxu0 %v1000
    %3614 = vmatpush1.msra.mxu0 %v999
    %3615 = vmatprep.subr.mxu0 %v1016
    %3616 = vmatpush1.msra.mxu0 %v1015
    %3617 = vmatprep.subr.mxu0 %v1032
    %3618 = vmatpush1.msra.mxu0 %v1031
    %3619 = vmatprep.subr.mxu0 %v1048
    %3620 = vmatpush1.msra.mxu0 %v1047
    %3621 = vmatprep.subr.mxu0 %v1064
    %3622 = vmatpush1.msra.mxu0 %v1063
    %3623 = vmatprep.subr.mxu0 %v1080
    %3624 = vmatpush1.msra.mxu0 %v1079
    %3625 = vmatprep.mubr.f32.mxu0 %v570
    %3626 = vmatmul.mubr.f32.gmra.mrb[0].mxu0 %v569
    %v3627 = vpop.f32.mrb[0].mxu0
    %v3628 = vadd.f32 %v2656, %v3627
    %v3629 = vpop.f32.mrb[0].mxu0
    %v3630 = vadd.f32 %v2660, %v3629
    %3631 = vdwg.mxu0
    %3632 = vmatprep.subr.mxu0 %v1096
    %3633 = vmatpush1.msra.mxu0 %v1095
    %3634 = vmatprep.subr.mxu0 %v1112
    %3635 = vmatpush1.msra.mxu0 %v1111
    %3636 = vmatprep.subr.mxu0 %v1128
    %3637 = vmatpush1.msra.mxu0 %v1127
    %3638 = vmatprep.subr.mxu0 %v1144
    %3639 = vmatpush1.msra.mxu0 %v1143
    %3640 = vmatprep.subr.mxu0 %v1160
    %3641 = vmatpush1.msra.mxu0 %v1159
    %3642 = vmatprep.subr.mxu0 %v1176
    %3643 = vmatpush1.msra.mxu0 %v1175
    %3644 = vmatprep.subr.mxu0 %v1192
    %3645 = vmatpush1.msra.mxu0 %v1191
    %3646 = vmatprep.subr.mxu0 %v1208
    %3647 = vmatpush1.msra.mxu0 %v1207
    %3648 = vmatprep.subr.mxu0 %v1224
    %3649 = vmatpush1.msra.mxu0 %v1223
    %3650 = vmatprep.subr.mxu0 %v1240
    %3651 = vmatpush1.msra.mxu0 %v1239
    %3652 = vmatprep.subr.mxu0 %v1256
    %3653 = vmatpush1.msra.mxu0 %v1255
    %3654 = vmatprep.subr.mxu0 %v1272
    %3655 = vmatpush1.msra.mxu0 %v1271
    %3656 = vmatprep.subr.mxu0 %v1288
    %3657 = vmatpush1.msra.mxu0 %v1287
    %3658 = vmatprep.subr.mxu0 %v1304
    %3659 = vmatpush1.msra.mxu0 %v1303
    %3660 = vmatprep.subr.mxu0 %v1320
    %3661 = vmatpush1.msra.mxu0 %v1319
    %3662 = vmatprep.subr.mxu0 %v1336
    %3663 = vmatpush1.msra.mxu0 %v1335
    %3664 = vmatprep.subr.mxu0 %v1352
    %3665 = vmatpush1.msra.mxu0 %v1351
    %3666 = vmatprep.subr.mxu0 %v1368
    %3667 = vmatpush1.msra.mxu0 %v1367
    %3668 = vmatprep.subr.mxu0 %v1384
    %3669 = vmatpush1.msra.mxu0 %v1383
    %3670 = vmatprep.subr.mxu0 %v1400
    %3671 = vmatpush1.msra.mxu0 %v1399
    %3672 = vmatprep.subr.mxu0 %v1416
    %3673 = vmatpush1.msra.mxu0 %v1415
    %3674 = vmatprep.subr.mxu0 %v1432
    %3675 = vmatpush1.msra.mxu0 %v1431
    %3676 = vmatprep.subr.mxu0 %v1448
    %3677 = vmatpush1.msra.mxu0 %v1447
    %3678 = vmatprep.subr.mxu0 %v1464
    %3679 = vmatpush1.msra.mxu0 %v1463
    %3680 = vmatprep.subr.mxu0 %v1480
    %3681 = vmatpush1.msra.mxu0 %v1479
    %3682 = vmatprep.subr.mxu0 %v1496
    %3683 = vmatpush1.msra.mxu0 %v1495
    %3684 = vmatprep.subr.mxu0 %v1512
    %3685 = vmatpush1.msra.mxu0 %v1511
    %3686 = vmatprep.subr.mxu0 %v1528
    %3687 = vmatpush1.msra.mxu0 %v1527
    %3688 = vmatprep.subr.mxu0 %v1544
    %3689 = vmatpush1.msra.mxu0 %v1543
    %3690 = vmatprep.subr.mxu0 %v1560
    %3691 = vmatpush1.msra.mxu0 %v1559
    %3692 = vmatprep.subr.mxu0 %v1576
    %3693 = vmatpush1.msra.mxu0 %v1575
    %3694 = vmatprep.subr.mxu0 %v1592
    %3695 = vmatpush1.msra.mxu0 %v1591
    %3696 = vmatprep.mubr.f32.mxu0 %v572
    %3697 = vmatmul.mubr.f32.gmra.mrb[0].mxu0 %v571
    %v3698 = vpop.f32.mrb[0].mxu0
    %v3699 = vadd.f32 %v3628, %v3698
    %v3700 = vpop.f32.mrb[0].mxu0
    %v3701 = vadd.f32 %v3630, %v3700
    %3702 = vdwg.mxu0
    %3703 = vmatprep.subr.mxu0 %v1608
    %3704 = vmatpush1.msra.mxu0 %v1607
    %3705 = vmatprep.subr.mxu0 %v1624
    %3706 = vmatpush1.msra.mxu0 %v1623
    %3707 = vmatprep.subr.mxu0 %v1640
    %3708 = vmatpush1.msra.mxu0 %v1639
    %3709 = vmatprep.subr.mxu0 %v1656
    %3710 = vmatpush1.msra.mxu0 %v1655
    %3711 = vmatprep.subr.mxu0 %v1672
    %3712 = vmatpush1.msra.mxu0 %v1671
    %3713 = vmatprep.subr.mxu0 %v1688
    %3714 = vmatpush1.msra.mxu0 %v1687
    %3715 = vmatprep.subr.mxu0 %v1704
    %3716 = vmatpush1.msra.mxu0 %v1703
    %3717 = vmatprep.subr.mxu0 %v1720
    %3718 = vmatpush1.msra.mxu0 %v1719
    %3719 = vmatprep.subr.mxu0 %v1736
    %3720 = vmatpush1.msra.mxu0 %v1735
    %3721 = vmatprep.subr.mxu0 %v1752
    %3722 = vmatpush1.msra.mxu0 %v1751
    %3723 = vmatprep.subr.mxu0 %v1768
    %3724 = vmatpush1.msra.mxu0 %v1767
    %3725 = vmatprep.subr.mxu0 %v1784
    %3726 = vmatpush1.msra.mxu0 %v1783
    %3727 = vmatprep.subr.mxu0 %v1800
    %3728 = vmatpush1.msra.mxu0 %v1799
    %3729 = vmatprep.subr.mxu0 %v1816
    %3730 = vmatpush1.msra.mxu0 %v1815
    %3731 = vmatprep.subr.mxu0 %v1832
    %3732 = vmatpush1.msra.mxu0 %v1831
    %3733 = vmatprep.subr.mxu0 %v1848
    %3734 = vmatpush1.msra.mxu0 %v1847
    %3735 = vmatprep.subr.mxu0 %v1864
    %3736 = vmatpush1.msra.mxu0 %v1863
    %3737 = vmatprep.subr.mxu0 %v1880
    %3738 = vmatpush1.msra.mxu0 %v1879
    %3739 = vmatprep.subr.mxu0 %v1896
    %3740 = vmatpush1.msra.mxu0 %v1895
    %3741 = vmatprep.subr.mxu0 %v1912
    %3742 = vmatpush1.msra.mxu0 %v1911
    %3743 = vmatprep.subr.mxu0 %v1928
    %3744 = vmatpush1.msra.mxu0 %v1927
    %3745 = vmatprep.subr.mxu0 %v1944
    %3746 = vmatpush1.msra.mxu0 %v1943
    %3747 = vmatprep.subr.mxu0 %v1960
    %3748 = vmatpush1.msra.mxu0 %v1959
    %3749 = vmatprep.subr.mxu0 %v1976
    %3750 = vmatpush1.msra.mxu0 %v1975
    %3751 = vmatprep.subr.mxu0 %v1992
    %3752 = vmatpush1.msra.mxu0 %v1991
    %3753 = vmatprep.subr.mxu0 %v2008
    %3754 = vmatpush1.msra.mxu0 %v2007
    %3755 = vmatprep.subr.mxu0 %v2024
    %3756 = vmatpush1.msra.mxu0 %v2023
    %3757 = vmatprep.subr.mxu0 %v2040
    %3758 = vmatpush1.msra.mxu0 %v2039
    %3759 = vmatprep.subr.mxu0 %v2056
    %3760 = vmatpush1.msra.mxu0 %v2055
    %3761 = vmatprep.subr.mxu0 %v2072
    %3762 = vmatpush1.msra.mxu0 %v2071
    %3763 = vmatprep.subr.mxu0 %v2088
    %3764 = vmatpush1.msra.mxu0 %v2087
    %3765 = vmatprep.subr.mxu0 %v2104
    %3766 = vmatpush1.msra.mxu0 %v2103
    %3767 = vmatprep.mubr.f32.mxu0 %v574
    %3768 = vmatmul.mubr.f32.gmra.mrb[0].mxu0 %v573
    %v3769 = vpop.f32.mrb[0].mxu0
    %v3770 = vadd.f32 %v3699, %v3769
    %v3771 = vpop.f32.mrb[0].mxu0
    %v3772 = vadd.f32 %v3701, %v3771
    %3773 = vdwg.mxu0
    %3774 = vmatprep.subr.mxu0 %v2120
    %3775 = vmatpush1.msra.mxu0 %v2119
    %3776 = vmatprep.subr.mxu0 %v2136
    %3777 = vmatpush1.msra.mxu0 %v2135
    %3778 = vmatprep.subr.mxu0 %v2152
    %3779 = vmatpush1.msra.mxu0 %v2151
    %3780 = vmatprep.subr.mxu0 %v2168
    %3781 = vmatpush1.msra.mxu0 %v2167
    %3782 = vmatprep.subr.mxu0 %v2184
    %3783 = vmatpush1.msra.mxu0 %v2183
    %3784 = vmatprep.subr.mxu0 %v2200
    %3785 = vmatpush1.msra.mxu0 %v2199
    %3786 = vmatprep.subr.mxu0 %v2216
    %3787 = vmatpush1.msra.mxu0 %v2215
    %3788 = vmatprep.subr.mxu0 %v2232
    %3789 = vmatpush1.msra.mxu0 %v2231
    %3790 = vmatprep.subr.mxu0 %v2248
    %3791 = vmatpush1.msra.mxu0 %v2247
    %3792 = vmatprep.subr.mxu0 %v2264
    %3793 = vmatpush1.msra.mxu0 %v2263
    %3794 = vmatprep.subr.mxu0 %v2280
    %3795 = vmatpush1.msra.mxu0 %v2279
    %3796 = vmatprep.subr.mxu0 %v2296
    %3797 = vmatpush1.msra.mxu0 %v2295
    %3798 = vmatprep.subr.mxu0 %v2312
    %3799 = vmatpush1.msra.mxu0 %v2311
    %3800 = vmatprep.subr.mxu0 %v2328
    %3801 = vmatpush1.msra.mxu0 %v2327
    %3802 = vmatprep.subr.mxu0 %v2344
    %3803 = vmatpush1.msra.mxu0 %v2343
    %3804 = vmatprep.subr.mxu0 %v2360
    %3805 = vmatpush1.msra.mxu0 %v2359
    %3806 = vmatprep.subr.mxu0 %v2376
    %3807 = vmatpush1.msra.mxu0 %v2375
    %3808 = vmatprep.subr.mxu0 %v2392
    %3809 = vmatpush1.msra.mxu0 %v2391
    %3810 = vmatprep.subr.mxu0 %v2408
    %3811 = vmatpush1.msra.mxu0 %v2407
    %3812 = vmatprep.subr.mxu0 %v2424
    %3813 = vmatpush1.msra.mxu0 %v2423
    %3814 = vmatprep.subr.mxu0 %v2440
    %3815 = vmatpush1.msra.mxu0 %v2439
    %3816 = vmatprep.subr.mxu0 %v2456
    %3817 = vmatpush1.msra.mxu0 %v2455
    %3818 = vmatprep.subr.mxu0 %v2472
    %3819 = vmatpush1.msra.mxu0 %v2471
    %3820 = vmatprep.subr.mxu0 %v2488
    %3821 = vmatpush1.msra.mxu0 %v2487
    %3822 = vmatprep.subr.mxu0 %v2504
    %3823 = vmatpush1.msra.mxu0 %v2503
    %3824 = vmatprep.subr.mxu0 %v2520
    %3825 = vmatpush1.msra.mxu0 %v2519
    %3826 = vmatprep.subr.mxu0 %v2536
    %3827 = vmatpush1.msra.mxu0 %v2535
    %3828 = vmatprep.subr.mxu0 %v2552
    %3829 = vmatpush1.msra.mxu0 %v2551
    %3830 = vmatprep.subr.mxu0 %v2568
    %3831 = vmatpush1.msra.mxu0 %v2567
    %3832 = vmatprep.subr.mxu0 %v2584
    %3833 = vmatpush1.msra.mxu0 %v2583
    %3834 = vmatprep.subr.mxu0 %v2600
    %3835 = vmatpush1.msra.mxu0 %v2599
    %3836 = vmatprep.subr.mxu0 %v2616
    %3837 = vmatpush1.msra.mxu0 %v2615
    %3838 = vmatprep.mubr.f32.mxu0 %v576
    %3839 = vmatmul.mubr.f32.gmra.mrb[0].mxu0 %v575
    %v3840 = vpop.f32.mrb[0].mxu0
    %v3841 = vadd.f32 %v3770, %v3840
    %v3842 = vpop.f32.mrb[0].mxu0
    %v3843 = vadd.f32 %v3772, %v3842
    %3844 = vdwg.mxu0
    %3845 = vmatprep.subr.mxu0 %v586
    %3846 = vmatpush1.msra.mxu0 %v585
    %3847 = vmatprep.subr.mxu0 %v602
    %3848 = vmatpush1.msra.mxu0 %v601
    %3849 = vmatprep.subr.mxu0 %v618
    %3850 = vmatpush1.msra.mxu0 %v617
    %3851 = vmatprep.subr.mxu0 %v634
    %3852 = vmatpush1.msra.mxu0 %v633
    %3853 = vmatprep.subr.mxu0 %v650
    %3854 = vmatpush1.msra.mxu0 %v649
    %3855 = vmatprep.subr.mxu0 %v666
    %3856 = vmatpush1.msra.mxu0 %v665
    %3857 = vmatprep.subr.mxu0 %v682
    %3858 = vmatpush1.msra.mxu0 %v681
    %3859 = vmatprep.subr.mxu0 %v698
    %3860 = vmatpush1.msra.mxu0 %v697
    %3861 = vmatprep.subr.mxu0 %v714
    %3862 = vmatpush1.msra.mxu0 %v713
    %3863 = vmatprep.subr.mxu0 %v730
    %3864 = vmatpush1.msra.mxu0 %v729
    %3865 = vmatprep.subr.mxu0 %v746
    %3866 = vmatpush1.msra.mxu0 %v745
    %3867 = vmatprep.subr.mxu0 %v762
    %3868 = vmatpush1.msra.mxu0 %v761
    %3869 = vmatprep.subr.mxu0 %v778
    %3870 = vmatpush1.msra.mxu0 %v777
    %3871 = vmatprep.subr.mxu0 %v794
    %3872 = vmatpush1.msra.mxu0 %v793
    %3873 = vmatprep.subr.mxu0 %v810
    %3874 = vmatpush1.msra.mxu0 %v809
    %3875 = vmatprep.subr.mxu0 %v826
    %3876 = vmatpush1.msra.mxu0 %v825
    %3877 = vmatprep.subr.mxu0 %v842
    %3878 = vmatpush1.msra.mxu0 %v841
    %3879 = vmatprep.subr.mxu0 %v858
    %3880 = vmatpush1.msra.mxu0 %v857
    %3881 = vmatprep.subr.mxu0 %v874
    %3882 = vmatpush1.msra.mxu0 %v873
    %3883 = vmatprep.subr.mxu0 %v890
    %3884 = vmatpush1.msra.mxu0 %v889
    %3885 = vmatprep.subr.mxu0 %v906
    %3886 = vmatpush1.msra.mxu0 %v905
    %3887 = vmatprep.subr.mxu0 %v922
    %3888 = vmatpush1.msra.mxu0 %v921
    %3889 = vmatprep.subr.mxu0 %v938
    %3890 = vmatpush1.msra.mxu0 %v937
    %3891 = vmatprep.subr.mxu0 %v954
    %3892 = vmatpush1.msra.mxu0 %v953
    %3893 = vmatprep.subr.mxu0 %v970
    %3894 = vmatpush1.msra.mxu0 %v969
    %3895 = vmatprep.subr.mxu0 %v986
    %3896 = vmatpush1.msra.mxu0 %v985
    %3897 = vmatprep.subr.mxu0 %v1002
    %3898 = vmatpush1.msra.mxu0 %v1001
    %3899 = vmatprep.subr.mxu0 %v1018
    %3900 = vmatpush1.msra.mxu0 %v1017
    %3901 = vmatprep.subr.mxu0 %v1034
    %3902 = vmatpush1.msra.mxu0 %v1033
    %3903 = vmatprep.subr.mxu0 %v1050
    %3904 = vmatpush1.msra.mxu0 %v1049
    %3905 = vmatprep.subr.mxu0 %v1066
    %3906 = vmatpush1.msra.mxu0 %v1065
    %3907 = vmatprep.subr.mxu0 %v1082
    %3908 = vmatpush1.msra.mxu0 %v1081
    %3909 = vmatprep.mubr.f32.mxu0 %v570
    %3910 = vmatmul.mubr.f32.gmra.mrb[0].mxu0 %v569
    %v3911 = vpop.f32.mrb[0].mxu0
    %v3912 = vadd.f32 %v2664, %v3911
    %v3913 = vpop.f32.mrb[0].mxu0
    %v3914 = vadd.f32 %v2668, %v3913
    %3915 = vdwg.mxu0
    %3916 = vmatprep.subr.mxu0 %v1098
    %3917 = vmatpush1.msra.mxu0 %v1097
    %3918 = vmatprep.subr.mxu0 %v1114
    %3919 = vmatpush1.msra.mxu0 %v1113
    %3920 = vmatprep.subr.mxu0 %v1130
    %3921 = vmatpush1.msra.mxu0 %v1129
    %3922 = vmatprep.subr.mxu0 %v1146
    %3923 = vmatpush1.msra.mxu0 %v1145
    %3924 = vmatprep.subr.mxu0 %v1162
    %3925 = vmatpush1.msra.mxu0 %v1161
    %3926 = vmatprep.subr.mxu0 %v1178
    %3927 = vmatpush1.msra.mxu0 %v1177
    %3928 = vmatprep.subr.mxu0 %v1194
    %3929 = vmatpush1.msra.mxu0 %v1193
    %3930 = vmatprep.subr.mxu0 %v1210
    %3931 = vmatpush1.msra.mxu0 %v1209
    %3932 = vmatprep.subr.mxu0 %v1226
    %3933 = vmatpush1.msra.mxu0 %v1225
    %3934 = vmatprep.subr.mxu0 %v1242
    %3935 = vmatpush1.msra.mxu0 %v1241
    %3936 = vmatprep.subr.mxu0 %v1258
    %3937 = vmatpush1.msra.mxu0 %v1257
    %3938 = vmatprep.subr.mxu0 %v1274
    %3939 = vmatpush1.msra.mxu0 %v1273
    %3940 = vmatprep.subr.mxu0 %v1290
    %3941 = vmatpush1.msra.mxu0 %v1289
    %3942 = vmatprep.subr.mxu0 %v1306
    %3943 = vmatpush1.msra.mxu0 %v1305
    %3944 = vmatprep.subr.mxu0 %v1322
    %3945 = vmatpush1.msra.mxu0 %v1321
    %3946 = vmatprep.subr.mxu0 %v1338
    %3947 = vmatpush1.msra.mxu0 %v1337
    %3948 = vmatprep.subr.mxu0 %v1354
    %3949 = vmatpush1.msra.mxu0 %v1353
    %3950 = vmatprep.subr.mxu0 %v1370
    %3951 = vmatpush1.msra.mxu0 %v1369
    %3952 = vmatprep.subr.mxu0 %v1386
    %3953 = vmatpush1.msra.mxu0 %v1385
    %3954 = vmatprep.subr.mxu0 %v1402
    %3955 = vmatpush1.msra.mxu0 %v1401
    %3956 = vmatprep.subr.mxu0 %v1418
    %3957 = vmatpush1.msra.mxu0 %v1417
    %3958 = vmatprep.subr.mxu0 %v1434
    %3959 = vmatpush1.msra.mxu0 %v1433
    %3960 = vmatprep.subr.mxu0 %v1450
    %3961 = vmatpush1.msra.mxu0 %v1449
    %3962 = vmatprep.subr.mxu0 %v1466
    %3963 = vmatpush1.msra.mxu0 %v1465
    %3964 = vmatprep.subr.mxu0 %v1482
    %3965 = vmatpush1.msra.mxu0 %v1481
    %3966 = vmatprep.subr.mxu0 %v1498
    %3967 = vmatpush1.msra.mxu0 %v1497
    %3968 = vmatprep.subr.mxu0 %v1514
    %3969 = vmatpush1.msra.mxu0 %v1513
    %3970 = vmatprep.subr.mxu0 %v1530
    %3971 = vmatpush1.msra.mxu0 %v1529
    %3972 = vmatprep.subr.mxu0 %v1546
    %3973 = vmatpush1.msra.mxu0 %v1545
    %3974 = vmatprep.subr.mxu0 %v1562
    %3975 = vmatpush1.msra.mxu0 %v1561
    %3976 = vmatprep.subr.mxu0 %v1578
    %3977 = vmatpush1.msra.mxu0 %v1577
    %3978 = vmatprep.subr.mxu0 %v1594
    %3979 = vmatpush1.msra.mxu0 %v1593
    %3980 = vmatprep.mubr.f32.mxu0 %v572
    %3981 = vmatmul.mubr.f32.gmra.mrb[0].mxu0 %v571
    %v3982 = vpop.f32.mrb[0].mxu0
    %v3983 = vadd.f32 %v3912, %v3982
    %v3984 = vpop.f32.mrb[0].mxu0
    %v3985 = vadd.f32 %v3914, %v3984
    %3986 = vdwg.mxu0
    %3987 = vmatprep.subr.mxu0 %v1610
    %3988 = vmatpush1.msra.mxu0 %v1609
    %3989 = vmatprep.subr.mxu0 %v1626
    %3990 = vmatpush1.msra.mxu0 %v1625
    %3991 = vmatprep.subr.mxu0 %v1642
    %3992 = vmatpush1.msra.mxu0 %v1641
    %3993 = vmatprep.subr.mxu0 %v1658
    %3994 = vmatpush1.msra.mxu0 %v1657
    %3995 = vmatprep.subr.mxu0 %v1674
    %3996 = vmatpush1.msra.mxu0 %v1673
    %3997 = vmatprep.subr.mxu0 %v1690
    %3998 = vmatpush1.msra.mxu0 %v1689
    %3999 = vmatprep.subr.mxu0 %v1706
    %4000 = vmatpush1.msra.mxu0 %v1705
    %4001 = vmatprep.subr.mxu0 %v1722
    %4002 = vmatpush1.msra.mxu0 %v1721
    %4003 = vmatprep.subr.mxu0 %v1738
    %4004 = vmatpush1.msra.mxu0 %v1737
    %4005 = vmatprep.subr.mxu0 %v1754
    %4006 = vmatpush1.msra.mxu0 %v1753
    %4007 = vmatprep.subr.mxu0 %v1770
    %4008 = vmatpush1.msra.mxu0 %v1769
    %4009 = vmatprep.subr.mxu0 %v1786
    %4010 = vmatpush1.msra.mxu0 %v1785
    %4011 = vmatprep.subr.mxu0 %v1802
    %4012 = vmatpush1.msra.mxu0 %v1801
    %4013 = vmatprep.subr.mxu0 %v1818
    %4014 = vmatpush1.msra.mxu0 %v1817
    %4015 = vmatprep.subr.mxu0 %v1834
    %4016 = vmatpush1.msra.mxu0 %v1833
    %4017 = vmatprep.subr.mxu0 %v1850
    %4018 = vmatpush1.msra.mxu0 %v1849
    %4019 = vmatprep.subr.mxu0 %v1866
    %4020 = vmatpush1.msra.mxu0 %v1865
    %4021 = vmatprep.subr.mxu0 %v1882
    %4022 = vmatpush1.msra.mxu0 %v1881
    %4023 = vmatprep.subr.mxu0 %v1898
    %4024 = vmatpush1.msra.mxu0 %v1897
    %4025 = vmatprep.subr.mxu0 %v1914
    %4026 = vmatpush1.msra.mxu0 %v1913
    %4027 = vmatprep.subr.mxu0 %v1930
    %4028 = vmatpush1.msra.mxu0 %v1929
    %4029 = vmatprep.subr.mxu0 %v1946
    %4030 = vmatpush1.msra.mxu0 %v1945
    %4031 = vmatprep.subr.mxu0 %v1962
    %4032 = vmatpush1.msra.mxu0 %v1961
    %4033 = vmatprep.subr.mxu0 %v1978
    %4034 = vmatpush1.msra.mxu0 %v1977
    %4035 = vmatprep.subr.mxu0 %v1994
    %4036 = vmatpush1.msra.mxu0 %v1993
    %4037 = vmatprep.subr.mxu0 %v2010
    %4038 = vmatpush1.msra.mxu0 %v2009
    %4039 = vmatprep.subr.mxu0 %v2026
    %4040 = vmatpush1.msra.mxu0 %v2025
    %4041 = vmatprep.subr.mxu0 %v2042
    %4042 = vmatpush1.msra.mxu0 %v2041
    %4043 = vmatprep.subr.mxu0 %v2058
    %4044 = vmatpush1.msra.mxu0 %v2057
    %4045 = vmatprep.subr.mxu0 %v2074
    %4046 = vmatpush1.msra.mxu0 %v2073
    %4047 = vmatprep.subr.mxu0 %v2090
    %4048 = vmatpush1.msra.mxu0 %v2089
    %4049 = vmatprep.subr.mxu0 %v2106
    %4050 = vmatpush1.msra.mxu0 %v2105
    %4051 = vmatprep.mubr.f32.mxu0 %v574
    %4052 = vmatmul.mubr.f32.gmra.mrb[0].mxu0 %v573
    %v4053 = vpop.f32.mrb[0].mxu0
    %v4054 = vadd.f32 %v3983, %v4053
    %v4055 = vpop.f32.mrb[0].mxu0
    %v4056 = vadd.f32 %v3985, %v4055
    %4057 = vdwg.mxu0
    %4058 = vmatprep.subr.mxu0 %v2122
    %4059 = vmatpush1.msra.mxu0 %v2121
    %4060 = vmatprep.subr.mxu0 %v2138
    %4061 = vmatpush1.msra.mxu0 %v2137
    %4062 = vmatprep.subr.mxu0 %v2154
    %4063 = vmatpush1.msra.mxu0 %v2153
    %4064 = vmatprep.subr.mxu0 %v2170
    %4065 = vmatpush1.msra.mxu0 %v2169
    %4066 = vmatprep.subr.mxu0 %v2186
    %4067 = vmatpush1.msra.mxu0 %v2185
    %4068 = vmatprep.subr.mxu0 %v2202
    %4069 = vmatpush1.msra.mxu0 %v2201
    %4070 = vmatprep.subr.mxu0 %v2218
    %4071 = vmatpush1.msra.mxu0 %v2217
    %4072 = vmatprep.subr.mxu0 %v2234
    %4073 = vmatpush1.msra.mxu0 %v2233
    %4074 = vmatprep.subr.mxu0 %v2250
    %4075 = vmatpush1.msra.mxu0 %v2249
    %4076 = vmatprep.subr.mxu0 %v2266
    %4077 = vmatpush1.msra.mxu0 %v2265
    %4078 = vmatprep.subr.mxu0 %v2282
    %4079 = vmatpush1.msra.mxu0 %v2281
    %4080 = vmatprep.subr.mxu0 %v2298
    %4081 = vmatpush1.msra.mxu0 %v2297
    %4082 = vmatprep.subr.mxu0 %v2314
    %4083 = vmatpush1.msra.mxu0 %v2313
    %4084 = vmatprep.subr.mxu0 %v2330
    %4085 = vmatpush1.msra.mxu0 %v2329
    %4086 = vmatprep.subr.mxu0 %v2346
    %4087 = vmatpush1.msra.mxu0 %v2345
    %4088 = vmatprep.subr.mxu0 %v2362
    %4089 = vmatpush1.msra.mxu0 %v2361
    %4090 = vmatprep.subr.mxu0 %v2378
    %4091 = vmatpush1.msra.mxu0 %v2377
    %4092 = vmatprep.subr.mxu0 %v2394
    %4093 = vmatpush1.msra.mxu0 %v2393
    %4094 = vmatprep.subr.mxu0 %v2410
    %4095 = vmatpush1.msra.mxu0 %v2409
    %4096 = vmatprep.subr.mxu0 %v2426
    %4097 = vmatpush1.msra.mxu0 %v2425
    %4098 = vmatprep.subr.mxu0 %v2442
    %4099 = vmatpush1.msra.mxu0 %v2441
    %4100 = vmatprep.subr.mxu0 %v2458
    %4101 = vmatpush1.msra.mxu0 %v2457
    %4102 = vmatprep.subr.mxu0 %v2474
    %4103 = vmatpush1.msra.mxu0 %v2473
    %4104 = vmatprep.subr.mxu0 %v2490
    %4105 = vmatpush1.msra.mxu0 %v2489
    %4106 = vmatprep.subr.mxu0 %v2506
    %4107 = vmatpush1.msra.mxu0 %v2505
    %4108 = vmatprep.subr.mxu0 %v2522
    %4109 = vmatpush1.msra.mxu0 %v2521
    %4110 = vmatprep.subr.mxu0 %v2538
    %4111 = vmatpush1.msra.mxu0 %v2537
    %4112 = vmatprep.subr.mxu0 %v2554
    %4113 = vmatpush1.msra.mxu0 %v2553
    %4114 = vmatprep.subr.mxu0 %v2570
    %4115 = vmatpush1.msra.mxu0 %v2569
    %4116 = vmatprep.subr.mxu0 %v2586
    %4117 = vmatpush1.msra.mxu0 %v2585
    %4118 = vmatprep.subr.mxu0 %v2602
    %4119 = vmatpush1.msra.mxu0 %v2601
    %4120 = vmatprep.subr.mxu0 %v2618
    %4121 = vmatpush1.msra.mxu0 %v2617
    %4122 = vmatprep.mubr.f32.mxu0 %v576
    %4123 = vmatmul.mubr.f32.gmra.mrb[0].mxu0 %v575
    %v4124 = vpop.f32.mrb[0].mxu0
    %v4125 = vadd.f32 %v4054, %v4124
    %v4126 = vpop.f32.mrb[0].mxu0
    %v4127 = vadd.f32 %v4056, %v4126
    %4128 = vdwg.mxu0
    %4129 = vmatprep.subr.mxu0 %v588
    %4130 = vmatpush1.msra.mxu0 %v587
    %4131 = vmatprep.subr.mxu0 %v604
    %4132 = vmatpush1.msra.mxu0 %v603
    %4133 = vmatprep.subr.mxu0 %v620
    %4134 = vmatpush1.msra.mxu0 %v619
    %4135 = vmatprep.subr.mxu0 %v636
    %4136 = vmatpush1.msra.mxu0 %v635
    %4137 = vmatprep.subr.mxu0 %v652
    %4138 = vmatpush1.msra.mxu0 %v651
    %4139 = vmatprep.subr.mxu0 %v668
    %4140 = vmatpush1.msra.mxu0 %v667
    %4141 = vmatprep.subr.mxu0 %v684
    %4142 = vmatpush1.msra.mxu0 %v683
    %4143 = vmatprep.subr.mxu0 %v700
    %4144 = vmatpush1.msra.mxu0 %v699
    %4145 = vmatprep.subr.mxu0 %v716
    %4146 = vmatpush1.msra.mxu0 %v715
    %4147 = vmatprep.subr.mxu0 %v732
    %4148 = vmatpush1.msra.mxu0 %v731
    %4149 = vmatprep.subr.mxu0 %v748
    %4150 = vmatpush1.msra.mxu0 %v747
    %4151 = vmatprep.subr.mxu0 %v764
    %4152 = vmatpush1.msra.mxu0 %v763
    %4153 = vmatprep.subr.mxu0 %v780
    %4154 = vmatpush1.msra.mxu0 %v779
    %4155 = vmatprep.subr.mxu0 %v796
    %4156 = vmatpush1.msra.mxu0 %v795
    %4157 = vmatprep.subr.mxu0 %v812
    %4158 = vmatpush1.msra.mxu0 %v811
    %4159 = vmatprep.subr.mxu0 %v828
    %4160 = vmatpush1.msra.mxu0 %v827
    %4161 = vmatprep.subr.mxu0 %v844
    %4162 = vmatpush1.msra.mxu0 %v843
    %4163 = vmatprep.subr.mxu0 %v860
    %4164 = vmatpush1.msra.mxu0 %v859
    %4165 = vmatprep.subr.mxu0 %v876
    %4166 = vmatpush1.msra.mxu0 %v875
    %4167 = vmatprep.subr.mxu0 %v892
    %4168 = vmatpush1.msra.mxu0 %v891
    %4169 = vmatprep.subr.mxu0 %v908
    %4170 = vmatpush1.msra.mxu0 %v907
    %4171 = vmatprep.subr.mxu0 %v924
    %4172 = vmatpush1.msra.mxu0 %v923
    %4173 = vmatprep.subr.mxu0 %v940
    %4174 = vmatpush1.msra.mxu0 %v939
    %4175 = vmatprep.subr.mxu0 %v956
    %4176 = vmatpush1.msra.mxu0 %v955
    %4177 = vmatprep.subr.mxu0 %v972
    %4178 = vmatpush1.msra.mxu0 %v971
    %4179 = vmatprep.subr.mxu0 %v988
    %4180 = vmatpush1.msra.mxu0 %v987
    %4181 = vmatprep.subr.mxu0 %v1004
    %4182 = vmatpush1.msra.mxu0 %v1003
    %4183 = vmatprep.subr.mxu0 %v1020
    %4184 = vmatpush1.msra.mxu0 %v1019
    %4185 = vmatprep.subr.mxu0 %v1036
    %4186 = vmatpush1.msra.mxu0 %v1035
    %4187 = vmatprep.subr.mxu0 %v1052
    %4188 = vmatpush1.msra.mxu0 %v1051
    %4189 = vmatprep.subr.mxu0 %v1068
    %4190 = vmatpush1.msra.mxu0 %v1067
    %4191 = vmatprep.subr.mxu0 %v1084
    %4192 = vmatpush1.msra.mxu0 %v1083
    %4193 = vmatprep.mubr.f32.mxu0 %v570
    %4194 = vmatmul.mubr.f32.gmra.mrb[0].mxu0 %v569
    %v4195 = vpop.f32.mrb[0].mxu0
    %v4196 = vadd.f32 %v2672, %v4195
    %v4197 = vpop.f32.mrb[0].mxu0
    %v4198 = vadd.f32 %v2676, %v4197
    %4199 = vdwg.mxu0
    %4200 = vmatprep.subr.mxu0 %v1100
    %4201 = vmatpush1.msra.mxu0 %v1099
    %4202 = vmatprep.subr.mxu0 %v1116
    %4203 = vmatpush1.msra.mxu0 %v1115
    %4204 = vmatprep.subr.mxu0 %v1132
    %4205 = vmatpush1.msra.mxu0 %v1131
    %4206 = vmatprep.subr.mxu0 %v1148
    %4207 = vmatpush1.msra.mxu0 %v1147
    %4208 = vmatprep.subr.mxu0 %v1164
    %4209 = vmatpush1.msra.mxu0 %v1163
    %4210 = vmatprep.subr.mxu0 %v1180
    %4211 = vmatpush1.msra.mxu0 %v1179
    %4212 = vmatprep.subr.mxu0 %v1196
    %4213 = vmatpush1.msra.mxu0 %v1195
    %4214 = vmatprep.subr.mxu0 %v1212
    %4215 = vmatpush1.msra.mxu0 %v1211
    %4216 = vmatprep.subr.mxu0 %v1228
    %4217 = vmatpush1.msra.mxu0 %v1227
    %4218 = vmatprep.subr.mxu0 %v1244
    %4219 = vmatpush1.msra.mxu0 %v1243
    %4220 = vmatprep.subr.mxu0 %v1260
    %4221 = vmatpush1.msra.mxu0 %v1259
    %4222 = vmatprep.subr.mxu0 %v1276
    %4223 = vmatpush1.msra.mxu0 %v1275
    %4224 = vmatprep.subr.mxu0 %v1292
    %4225 = vmatpush1.msra.mxu0 %v1291
    %4226 = vmatprep.subr.mxu0 %v1308
    %4227 = vmatpush1.msra.mxu0 %v1307
    %4228 = vmatprep.subr.mxu0 %v1324
    %4229 = vmatpush1.msra.mxu0 %v1323
    %4230 = vmatprep.subr.mxu0 %v1340
    %4231 = vmatpush1.msra.mxu0 %v1339
    %4232 = vmatprep.subr.mxu0 %v1356
    %4233 = vmatpush1.msra.mxu0 %v1355
    %4234 = vmatprep.subr.mxu0 %v1372
    %4235 = vmatpush1.msra.mxu0 %v1371
    %4236 = vmatprep.subr.mxu0 %v1388
    %4237 = vmatpush1.msra.mxu0 %v1387
    %4238 = vmatprep.subr.mxu0 %v1404
    %4239 = vmatpush1.msra.mxu0 %v1403
    %4240 = vmatprep.subr.mxu0 %v1420
    %4241 = vmatpush1.msra.mxu0 %v1419
    %4242 = vmatprep.subr.mxu0 %v1436
    %4243 = vmatpush1.msra.mxu0 %v1435
    %4244 = vmatprep.subr.mxu0 %v1452
    %4245 = vmatpush1.msra.mxu0 %v1451
    %4246 = vmatprep.subr.mxu0 %v1468
    %4247 = vmatpush1.msra.mxu0 %v1467
    %4248 = vmatprep.subr.mxu0 %v1484
    %4249 = vmatpush1.msra.mxu0 %v1483
    %4250 = vmatprep.subr.mxu0 %v1500
    %4251 = vmatpush1.msra.mxu0 %v1499
    %4252 = vmatprep.subr.mxu0 %v1516
    %4253 = vmatpush1.msra.mxu0 %v1515
    %4254 = vmatprep.subr.mxu0 %v1532
    %4255 = vmatpush1.msra.mxu0 %v1531
    %4256 = vmatprep.subr.mxu0 %v1548
    %4257 = vmatpush1.msra.mxu0 %v1547
    %4258 = vmatprep.subr.mxu0 %v1564
    %4259 = vmatpush1.msra.mxu0 %v1563
    %4260 = vmatprep.subr.mxu0 %v1580
    %4261 = vmatpush1.msra.mxu0 %v1579
    %4262 = vmatprep.subr.mxu0 %v1596
    %4263 = vmatpush1.msra.mxu0 %v1595
    %4264 = vmatprep.mubr.f32.mxu0 %v572
    %4265 = vmatmul.mubr.f32.gmra.mrb[0].mxu0 %v571
    %v4266 = vpop.f32.mrb[0].mxu0
    %v4267 = vadd.f32 %v4196, %v4266
    %v4268 = vpop.f32.mrb[0].mxu0
    %v4269 = vadd.f32 %v4198, %v4268
    %4270 = vdwg.mxu0
    %4271 = vmatprep.subr.mxu0 %v1612
    %4272 = vmatpush1.msra.mxu0 %v1611
    %4273 = vmatprep.subr.mxu0 %v1628
    %4274 = vmatpush1.msra.mxu0 %v1627
    %4275 = vmatprep.subr.mxu0 %v1644
    %4276 = vmatpush1.msra.mxu0 %v1643
    %4277 = vmatprep.subr.mxu0 %v1660
    %4278 = vmatpush1.msra.mxu0 %v1659
    %4279 = vmatprep.subr.mxu0 %v1676
    %4280 = vmatpush1.msra.mxu0 %v1675
    %4281 = vmatprep.subr.mxu0 %v1692
    %4282 = vmatpush1.msra.mxu0 %v1691
    %4283 = vmatprep.subr.mxu0 %v1708
    %4284 = vmatpush1.msra.mxu0 %v1707
    %4285 = vmatprep.subr.mxu0 %v1724
    %4286 = vmatpush1.msra.mxu0 %v1723
    %4287 = vmatprep.subr.mxu0 %v1740
    %4288 = vmatpush1.msra.mxu0 %v1739
    %4289 = vmatprep.subr.mxu0 %v1756
    %4290 = vmatpush1.msra.mxu0 %v1755
    %4291 = vmatprep.subr.mxu0 %v1772
    %4292 = vmatpush1.msra.mxu0 %v1771
    %4293 = vmatprep.subr.mxu0 %v1788
    %4294 = vmatpush1.msra.mxu0 %v1787
    %4295 = vmatprep.subr.mxu0 %v1804
    %4296 = vmatpush1.msra.mxu0 %v1803
    %4297 = vmatprep.subr.mxu0 %v1820
    %4298 = vmatpush1.msra.mxu0 %v1819
    %4299 = vmatprep.subr.mxu0 %v1836
    %4300 = vmatpush1.msra.mxu0 %v1835
    %4301 = vmatprep.subr.mxu0 %v1852
    %4302 = vmatpush1.msra.mxu0 %v1851
    %4303 = vmatprep.subr.mxu0 %v1868
    %4304 = vmatpush1.msra.mxu0 %v1867
    %4305 = vmatprep.subr.mxu0 %v1884
    %4306 = vmatpush1.msra.mxu0 %v1883
    %4307 = vmatprep.subr.mxu0 %v1900
    %4308 = vmatpush1.msra.mxu0 %v1899
    %4309 = vmatprep.subr.mxu0 %v1916
    %4310 = vmatpush1.msra.mxu0 %v1915
    %4311 = vmatprep.subr.mxu0 %v1932
    %4312 = vmatpush1.msra.mxu0 %v1931
    %4313 = vmatprep.subr.mxu0 %v1948
    %4314 = vmatpush1.msra.mxu0 %v1947
    %4315 = vmatprep.subr.mxu0 %v1964
    %4316 = vmatpush1.msra.mxu0 %v1963
    %4317 = vmatprep.subr.mxu0 %v1980
    %4318 = vmatpush1.msra.mxu0 %v1979
    %4319 = vmatprep.subr.mxu0 %v1996
    %4320 = vmatpush1.msra.mxu0 %v1995
    %4321 = vmatprep.subr.mxu0 %v2012
    %4322 = vmatpush1.msra.mxu0 %v2011
    %4323 = vmatprep.subr.mxu0 %v2028
    %4324 = vmatpush1.msra.mxu0 %v2027
    %4325 = vmatprep.subr.mxu0 %v2044
    %4326 = vmatpush1.msra.mxu0 %v2043
    %4327 = vmatprep.subr.mxu0 %v2060
    %4328 = vmatpush1.msra.mxu0 %v2059
    %4329 = vmatprep.subr.mxu0 %v2076
    %4330 = vmatpush1.msra.mxu0 %v2075
    %4331 = vmatprep.subr.mxu0 %v2092
    %4332 = vmatpush1.msra.mxu0 %v2091
    %4333 = vmatprep.subr.mxu0 %v2108
    %4334 = vmatpush1.msra.mxu0 %v2107
    %4335 = vmatprep.mubr.f32.mxu0 %v574
    %4336 = vmatmul.mubr.f32.gmra.mrb[0].mxu0 %v573
    %v4337 = vpop.f32.mrb[0].mxu0
    %v4338 = vadd.f32 %v4267, %v4337
    %v4339 = vpop.f32.mrb[0].mxu0
    %v4340 = vadd.f32 %v4269, %v4339
    %4341 = vdwg.mxu0
    %4342 = vmatprep.subr.mxu0 %v2124
    %4343 = vmatpush1.msra.mxu0 %v2123
    %4344 = vmatprep.subr.mxu0 %v2140
    %4345 = vmatpush1.msra.mxu0 %v2139
    %4346 = vmatprep.subr.mxu0 %v2156
    %4347 = vmatpush1.msra.mxu0 %v2155
    %4348 = vmatprep.subr.mxu0 %v2172
    %4349 = vmatpush1.msra.mxu0 %v2171
    %4350 = vmatprep.subr.mxu0 %v2188
    %4351 = vmatpush1.msra.mxu0 %v2187
    %4352 = vmatprep.subr.mxu0 %v2204
    %4353 = vmatpush1.msra.mxu0 %v2203
    %4354 = vmatprep.subr.mxu0 %v2220
    %4355 = vmatpush1.msra.mxu0 %v2219
    %4356 = vmatprep.subr.mxu0 %v2236
    %4357 = vmatpush1.msra.mxu0 %v2235
    %4358 = vmatprep.subr.mxu0 %v2252
    %4359 = vmatpush1.msra.mxu0 %v2251
    %4360 = vmatprep.subr.mxu0 %v2268
    %4361 = vmatpush1.msra.mxu0 %v2267
    %4362 = vmatprep.subr.mxu0 %v2284
    %4363 = vmatpush1.msra.mxu0 %v2283
    %4364 = vmatprep.subr.mxu0 %v2300
    %4365 = vmatpush1.msra.mxu0 %v2299
    %4366 = vmatprep.subr.mxu0 %v2316
    %4367 = vmatpush1.msra.mxu0 %v2315
    %4368 = vmatprep.subr.mxu0 %v2332
    %4369 = vmatpush1.msra.mxu0 %v2331
    %4370 = vmatprep.subr.mxu0 %v2348
    %4371 = vmatpush1.msra.mxu0 %v2347
    %4372 = vmatprep.subr.mxu0 %v2364
    %4373 = vmatpush1.msra.mxu0 %v2363
    %4374 = vmatprep.subr.mxu0 %v2380
    %4375 = vmatpush1.msra.mxu0 %v2379
    %4376 = vmatprep.subr.mxu0 %v2396
    %4377 = vmatpush1.msra.mxu0 %v2395
    %4378 = vmatprep.subr.mxu0 %v2412
    %4379 = vmatpush1.msra.mxu0 %v2411
    %4380 = vmatprep.subr.mxu0 %v2428
    %4381 = vmatpush1.msra.mxu0 %v2427
    %4382 = vmatprep.subr.mxu0 %v2444
    %4383 = vmatpush1.msra.mxu0 %v2443
    %4384 = vmatprep.subr.mxu0 %v2460
    %4385 = vmatpush1.msra.mxu0 %v2459
    %4386 = vmatprep.subr.mxu0 %v2476
    %4387 = vmatpush1.msra.mxu0 %v2475
    %4388 = vmatprep.subr.mxu0 %v2492
    %4389 = vmatpush1.msra.mxu0 %v2491
    %4390 = vmatprep.subr.mxu0 %v2508
    %4391 = vmatpush1.msra.mxu0 %v2507
    %4392 = vmatprep.subr.mxu0 %v2524
    %4393 = vmatpush1.msra.mxu0 %v2523
    %4394 = vmatprep.subr.mxu0 %v2540
    %4395 = vmatpush1.msra.mxu0 %v2539
    %4396 = vmatprep.subr.mxu0 %v2556
    %4397 = vmatpush1.msra.mxu0 %v2555
    %4398 = vmatprep.subr.mxu0 %v2572
    %4399 = vmatpush1.msra.mxu0 %v2571
    %4400 = vmatprep.subr.mxu0 %v2588
    %4401 = vmatpush1.msra.mxu0 %v2587
    %4402 = vmatprep.subr.mxu0 %v2604
    %4403 = vmatpush1.msra.mxu0 %v2603
    %4404 = vmatprep.subr.mxu0 %v2620
    %4405 = vmatpush1.msra.mxu0 %v2619
    %4406 = vmatprep.mubr.f32.mxu0 %v576
    %4407 = vmatmul.mubr.f32.gmra.mrb[0].mxu0 %v575
    %v4408 = vpop.f32.mrb[0].mxu0
    %v4409 = vadd.f32 %v4338, %v4408
    %v4410 = vpop.f32.mrb[0].mxu0
    %v4411 = vadd.f32 %v4340, %v4410
    %4412 = vdwg.mxu0
    %4413 = vmatprep.subr.mxu0 %v590
    %4414 = vmatpush1.msra.mxu0 %v589
    %4415 = vmatprep.subr.mxu0 %v606
    %4416 = vmatpush1.msra.mxu0 %v605
    %4417 = vmatprep.subr.mxu0 %v622
    %4418 = vmatpush1.msra.mxu0 %v621
    %4419 = vmatprep.subr.mxu0 %v638
    %4420 = vmatpush1.msra.mxu0 %v637
    %4421 = vmatprep.subr.mxu0 %v654
    %4422 = vmatpush1.msra.mxu0 %v653
    %4423 = vmatprep.subr.mxu0 %v670
    %4424 = vmatpush1.msra.mxu0 %v669
    %4425 = vmatprep.subr.mxu0 %v686
    %4426 = vmatpush1.msra.mxu0 %v685
    %4427 = vmatprep.subr.mxu0 %v702
    %4428 = vmatpush1.msra.mxu0 %v701
    %4429 = vmatprep.subr.mxu0 %v718
    %4430 = vmatpush1.msra.mxu0 %v717
    %4431 = vmatprep.subr.mxu0 %v734
    %4432 = vmatpush1.msra.mxu0 %v733
    %4433 = vmatprep.subr.mxu0 %v750
    %4434 = vmatpush1.msra.mxu0 %v749
    %4435 = vmatprep.subr.mxu0 %v766
    %4436 = vmatpush1.msra.mxu0 %v765
    %4437 = vmatprep.subr.mxu0 %v782
    %4438 = vmatpush1.msra.mxu0 %v781
    %4439 = vmatprep.subr.mxu0 %v798
    %4440 = vmatpush1.msra.mxu0 %v797
    %4441 = vmatprep.subr.mxu0 %v814
    %4442 = vmatpush1.msra.mxu0 %v813
    %4443 = vmatprep.subr.mxu0 %v830
    %4444 = vmatpush1.msra.mxu0 %v829
    %4445 = vmatprep.subr.mxu0 %v846
    %4446 = vmatpush1.msra.mxu0 %v845
    %4447 = vmatprep.subr.mxu0 %v862
    %4448 = vmatpush1.msra.mxu0 %v861
    %4449 = vmatprep.subr.mxu0 %v878
    %4450 = vmatpush1.msra.mxu0 %v877
    %4451 = vmatprep.subr.mxu0 %v894
    %4452 = vmatpush1.msra.mxu0 %v893
    %4453 = vmatprep.subr.mxu0 %v910
    %4454 = vmatpush1.msra.mxu0 %v909
    %4455 = vmatprep.subr.mxu0 %v926
    %4456 = vmatpush1.msra.mxu0 %v925
    %4457 = vmatprep.subr.mxu0 %v942
    %4458 = vmatpush1.msra.mxu0 %v941
    %4459 = vmatprep.subr.mxu0 %v958
    %4460 = vmatpush1.msra.mxu0 %v957
    %4461 = vmatprep.subr.mxu0 %v974
    %4462 = vmatpush1.msra.mxu0 %v973
    %4463 = vmatprep.subr.mxu0 %v990
    %4464 = vmatpush1.msra.mxu0 %v989
    %4465 = vmatprep.subr.mxu0 %v1006
    %4466 = vmatpush1.msra.mxu0 %v1005
    %4467 = vmatprep.subr.mxu0 %v1022
    %4468 = vmatpush1.msra.mxu0 %v1021
    %4469 = vmatprep.subr.mxu0 %v1038
    %4470 = vmatpush1.msra.mxu0 %v1037
    %4471 = vmatprep.subr.mxu0 %v1054
    %4472 = vmatpush1.msra.mxu0 %v1053
    %4473 = vmatprep.subr.mxu0 %v1070
    %4474 = vmatpush1.msra.mxu0 %v1069
    %4475 = vmatprep.subr.mxu0 %v1086
    %4476 = vmatpush1.msra.mxu0 %v1085
    %4477 = vmatprep.mubr.f32.mxu0 %v570
    %4478 = vmatmul.mubr.f32.gmra.mrb[0].mxu0 %v569
    %v4479 = vpop.f32.mrb[0].mxu0
    %v4480 = vadd.f32 %v2680, %v4479
    %v4481 = vpop.f32.mrb[0].mxu0
    %v4482 = vadd.f32 %v2684, %v4481
    %4483 = vdwg.mxu0
    %4484 = vmatprep.subr.mxu0 %v1102
    %4485 = vmatpush1.msra.mxu0 %v1101
    %4486 = vmatprep.subr.mxu0 %v1118
    %4487 = vmatpush1.msra.mxu0 %v1117
    %4488 = vmatprep.subr.mxu0 %v1134
    %4489 = vmatpush1.msra.mxu0 %v1133
    %4490 = vmatprep.subr.mxu0 %v1150
    %4491 = vmatpush1.msra.mxu0 %v1149
    %4492 = vmatprep.subr.mxu0 %v1166
    %4493 = vmatpush1.msra.mxu0 %v1165
    %4494 = vmatprep.subr.mxu0 %v1182
    %4495 = vmatpush1.msra.mxu0 %v1181
    %4496 = vmatprep.subr.mxu0 %v1198
    %4497 = vmatpush1.msra.mxu0 %v1197
    %4498 = vmatprep.subr.mxu0 %v1214
    %4499 = vmatpush1.msra.mxu0 %v1213
    %4500 = vmatprep.subr.mxu0 %v1230
    %4501 = vmatpush1.msra.mxu0 %v1229
    %4502 = vmatprep.subr.mxu0 %v1246
    %4503 = vmatpush1.msra.mxu0 %v1245
    %4504 = vmatprep.subr.mxu0 %v1262
    %4505 = vmatpush1.msra.mxu0 %v1261
    %4506 = vmatprep.subr.mxu0 %v1278
    %4507 = vmatpush1.msra.mxu0 %v1277
    %4508 = vmatprep.subr.mxu0 %v1294
    %4509 = vmatpush1.msra.mxu0 %v1293
    %4510 = vmatprep.subr.mxu0 %v1310
    %4511 = vmatpush1.msra.mxu0 %v1309
    %4512 = vmatprep.subr.mxu0 %v1326
    %4513 = vmatpush1.msra.mxu0 %v1325
    %4514 = vmatprep.subr.mxu0 %v1342
    %4515 = vmatpush1.msra.mxu0 %v1341
    %4516 = vmatprep.subr.mxu0 %v1358
    %4517 = vmatpush1.msra.mxu0 %v1357
    %4518 = vmatprep.subr.mxu0 %v1374
    %4519 = vmatpush1.msra.mxu0 %v1373
    %4520 = vmatprep.subr.mxu0 %v1390
    %4521 = vmatpush1.msra.mxu0 %v1389
    %4522 = vmatprep.subr.mxu0 %v1406
    %4523 = vmatpush1.msra.mxu0 %v1405
    %4524 = vmatprep.subr.mxu0 %v1422
    %4525 = vmatpush1.msra.mxu0 %v1421
    %4526 = vmatprep.subr.mxu0 %v1438
    %4527 = vmatpush1.msra.mxu0 %v1437
    %4528 = vmatprep.subr.mxu0 %v1454
    %4529 = vmatpush1.msra.mxu0 %v1453
    %4530 = vmatprep.subr.mxu0 %v1470
    %4531 = vmatpush1.msra.mxu0 %v1469
    %4532 = vmatprep.subr.mxu0 %v1486
    %4533 = vmatpush1.msra.mxu0 %v1485
    %4534 = vmatprep.subr.mxu0 %v1502
    %4535 = vmatpush1.msra.mxu0 %v1501
    %4536 = vmatprep.subr.mxu0 %v1518
    %4537 = vmatpush1.msra.mxu0 %v1517
    %4538 = vmatprep.subr.mxu0 %v1534
    %4539 = vmatpush1.msra.mxu0 %v1533
    %4540 = vmatprep.subr.mxu0 %v1550
    %4541 = vmatpush1.msra.mxu0 %v1549
    %4542 = vmatprep.subr.mxu0 %v1566
    %4543 = vmatpush1.msra.mxu0 %v1565
    %4544 = vmatprep.subr.mxu0 %v1582
    %4545 = vmatpush1.msra.mxu0 %v1581
    %4546 = vmatprep.subr.mxu0 %v1598
    %4547 = vmatpush1.msra.mxu0 %v1597
    %4548 = vmatprep.mubr.f32.mxu0 %v572
    %4549 = vmatmul.mubr.f32.gmra.mrb[0].mxu0 %v571
    %v4550 = vpop.f32.mrb[0].mxu0
    %v4551 = vadd.f32 %v4480, %v4550
    %v4552 = vpop.f32.mrb[0].mxu0
    %v4553 = vadd.f32 %v4482, %v4552
    %4554 = vdwg.mxu0
    %4555 = vmatprep.subr.mxu0 %v1614
    %4556 = vmatpush1.msra.mxu0 %v1613
    %4557 = vmatprep.subr.mxu0 %v1630
    %4558 = vmatpush1.msra.mxu0 %v1629
    %4559 = vmatprep.subr.mxu0 %v1646
    %4560 = vmatpush1.msra.mxu0 %v1645
    %4561 = vmatprep.subr.mxu0 %v1662
    %4562 = vmatpush1.msra.mxu0 %v1661
    %4563 = vmatprep.subr.mxu0 %v1678
    %4564 = vmatpush1.msra.mxu0 %v1677
    %4565 = vmatprep.subr.mxu0 %v1694
    %4566 = vmatpush1.msra.mxu0 %v1693
    %4567 = vmatprep.subr.mxu0 %v1710
    %4568 = vmatpush1.msra.mxu0 %v1709
    %4569 = vmatprep.subr.mxu0 %v1726
    %4570 = vmatpush1.msra.mxu0 %v1725
    %4571 = vmatprep.subr.mxu0 %v1742
    %4572 = vmatpush1.msra.mxu0 %v1741
    %4573 = vmatprep.subr.mxu0 %v1758
    %4574 = vmatpush1.msra.mxu0 %v1757
    %4575 = vmatprep.subr.mxu0 %v1774
    %4576 = vmatpush1.msra.mxu0 %v1773
    %4577 = vmatprep.subr.mxu0 %v1790
    %4578 = vmatpush1.msra.mxu0 %v1789
    %4579 = vmatprep.subr.mxu0 %v1806
    %4580 = vmatpush1.msra.mxu0 %v1805
    %4581 = vmatprep.subr.mxu0 %v1822
    %4582 = vmatpush1.msra.mxu0 %v1821
    %4583 = vmatprep.subr.mxu0 %v1838
    %4584 = vmatpush1.msra.mxu0 %v1837
    %4585 = vmatprep.subr.mxu0 %v1854
    %4586 = vmatpush1.msra.mxu0 %v1853
    %4587 = vmatprep.subr.mxu0 %v1870
    %4588 = vmatpush1.msra.mxu0 %v1869
    %4589 = vmatprep.subr.mxu0 %v1886
    %4590 = vmatpush1.msra.mxu0 %v1885
    %4591 = vmatprep.subr.mxu0 %v1902
    %4592 = vmatpush1.msra.mxu0 %v1901
    %4593 = vmatprep.subr.mxu0 %v1918
    %4594 = vmatpush1.msra.mxu0 %v1917
    %4595 = vmatprep.subr.mxu0 %v1934
    %4596 = vmatpush1.msra.mxu0 %v1933
    %4597 = vmatprep.subr.mxu0 %v1950
    %4598 = vmatpush1.msra.mxu0 %v1949
    %4599 = vmatprep.subr.mxu0 %v1966
    %4600 = vmatpush1.msra.mxu0 %v1965
    %4601 = vmatprep.subr.mxu0 %v1982
    %4602 = vmatpush1.msra.mxu0 %v1981
    %4603 = vmatprep.subr.mxu0 %v1998
    %4604 = vmatpush1.msra.mxu0 %v1997
    %4605 = vmatprep.subr.mxu0 %v2014
    %4606 = vmatpush1.msra.mxu0 %v2013
    %4607 = vmatprep.subr.mxu0 %v2030
    %4608 = vmatpush1.msra.mxu0 %v2029
    %4609 = vmatprep.subr.mxu0 %v2046
    %4610 = vmatpush1.msra.mxu0 %v2045
    %4611 = vmatprep.subr.mxu0 %v2062
    %4612 = vmatpush1.msra.mxu0 %v2061
    %4613 = vmatprep.subr.mxu0 %v2078
    %4614 = vmatpush1.msra.mxu0 %v2077
    %4615 = vmatprep.subr.mxu0 %v2094
    %4616 = vmatpush1.msra.mxu0 %v2093
    %4617 = vmatprep.subr.mxu0 %v2110
    %4618 = vmatpush1.msra.mxu0 %v2109
    %4619 = vmatprep.mubr.f32.mxu0 %v574
    %4620 = vmatmul.mubr.f32.gmra.mrb[0].mxu0 %v573
    %v4621 = vpop.f32.mrb[0].mxu0
    %v4622 = vadd.f32 %v4551, %v4621
    %v4623 = vpop.f32.mrb[0].mxu0
    %v4624 = vadd.f32 %v4553, %v4623
    %4625 = vdwg.mxu0
    %4626 = vmatprep.subr.mxu0 %v2126
    %4627 = vmatpush1.msra.mxu0 %v2125
    %4628 = vmatprep.subr.mxu0 %v2142
    %4629 = vmatpush1.msra.mxu0 %v2141
    %4630 = vmatprep.subr.mxu0 %v2158
    %4631 = vmatpush1.msra.mxu0 %v2157
    %4632 = vmatprep.subr.mxu0 %v2174
    %4633 = vmatpush1.msra.mxu0 %v2173
    %4634 = vmatprep.subr.mxu0 %v2190
    %4635 = vmatpush1.msra.mxu0 %v2189
    %4636 = vmatprep.subr.mxu0 %v2206
    %4637 = vmatpush1.msra.mxu0 %v2205
    %4638 = vmatprep.subr.mxu0 %v2222
    %4639 = vmatpush1.msra.mxu0 %v2221
    %4640 = vmatprep.subr.mxu0 %v2238
    %4641 = vmatpush1.msra.mxu0 %v2237
    %4642 = vmatprep.subr.mxu0 %v2254
    %4643 = vmatpush1.msra.mxu0 %v2253
    %4644 = vmatprep.subr.mxu0 %v2270
    %4645 = vmatpush1.msra.mxu0 %v2269
    %4646 = vmatprep.subr.mxu0 %v2286
    %4647 = vmatpush1.msra.mxu0 %v2285
    %4648 = vmatprep.subr.mxu0 %v2302
    %4649 = vmatpush1.msra.mxu0 %v2301
    %4650 = vmatprep.subr.mxu0 %v2318
    %4651 = vmatpush1.msra.mxu0 %v2317
    %4652 = vmatprep.subr.mxu0 %v2334
    %4653 = vmatpush1.msra.mxu0 %v2333
    %4654 = vmatprep.subr.mxu0 %v2350
    %4655 = vmatpush1.msra.mxu0 %v2349
    %4656 = vmatprep.subr.mxu0 %v2366
    %4657 = vmatpush1.msra.mxu0 %v2365
    %4658 = vmatprep.subr.mxu0 %v2382
    %4659 = vmatpush1.msra.mxu0 %v2381
    %4660 = vmatprep.subr.mxu0 %v2398
    %4661 = vmatpush1.msra.mxu0 %v2397
    %4662 = vmatprep.subr.mxu0 %v2414
    %4663 = vmatpush1.msra.mxu0 %v2413
    %4664 = vmatprep.subr.mxu0 %v2430
    %4665 = vmatpush1.msra.mxu0 %v2429
    %4666 = vmatprep.subr.mxu0 %v2446
    %4667 = vmatpush1.msra.mxu0 %v2445
    %4668 = vmatprep.subr.mxu0 %v2462
    %4669 = vmatpush1.msra.mxu0 %v2461
    %4670 = vmatprep.subr.mxu0 %v2478
    %4671 = vmatpush1.msra.mxu0 %v2477
    %4672 = vmatprep.subr.mxu0 %v2494
    %4673 = vmatpush1.msra.mxu0 %v2493
    %4674 = vmatprep.subr.mxu0 %v2510
    %4675 = vmatpush1.msra.mxu0 %v2509
    %4676 = vmatprep.subr.mxu0 %v2526
    %4677 = vmatpush1.msra.mxu0 %v2525
    %4678 = vmatprep.subr.mxu0 %v2542
    %4679 = vmatpush1.msra.mxu0 %v2541
    %4680 = vmatprep.subr.mxu0 %v2558
    %4681 = vmatpush1.msra.mxu0 %v2557
    %4682 = vmatprep.subr.mxu0 %v2574
    %4683 = vmatpush1.msra.mxu0 %v2573
    %4684 = vmatprep.subr.mxu0 %v2590
    %4685 = vmatpush1.msra.mxu0 %v2589
    %4686 = vmatprep.subr.mxu0 %v2606
    %4687 = vmatpush1.msra.mxu0 %v2605
    %4688 = vmatprep.subr.mxu0 %v2622
    %4689 = vmatpush1.msra.mxu0 %v2621
    %4690 = vmatprep.mubr.f32.mxu0 %v576
    %4691 = vmatmul.mubr.f32.gmra.mrb[0].mxu0 %v575
    %v4692 = vpop.f32.mrb[0].mxu0
    %v4693 = vadd.f32 %v4622, %v4692
    %v4694 = vpop.f32.mrb[0].mxu0
    %v4695 = vadd.f32 %v4624, %v4694
    %4696 = vdwg.mxu0
    %4697 = vmatprep.subr.mxu0 %v592
    %4698 = vmatpush1.msra.mxu0 %v591
    %4699 = vmatprep.subr.mxu0 %v608
    %4700 = vmatpush1.msra.mxu0 %v607
    %4701 = vmatprep.subr.mxu0 %v624
    %4702 = vmatpush1.msra.mxu0 %v623
    %4703 = vmatprep.subr.mxu0 %v640
    %4704 = vmatpush1.msra.mxu0 %v639
    %4705 = vmatprep.subr.mxu0 %v656
    %4706 = vmatpush1.msra.mxu0 %v655
    %4707 = vmatprep.subr.mxu0 %v672
    %4708 = vmatpush1.msra.mxu0 %v671
    %4709 = vmatprep.subr.mxu0 %v688
    %4710 = vmatpush1.msra.mxu0 %v687
    %4711 = vmatprep.subr.mxu0 %v704
    %4712 = vmatpush1.msra.mxu0 %v703
    %4713 = vmatprep.subr.mxu0 %v720
    %4714 = vmatpush1.msra.mxu0 %v719
    %4715 = vmatprep.subr.mxu0 %v736
    %4716 = vmatpush1.msra.mxu0 %v735
    %4717 = vmatprep.subr.mxu0 %v752
    %4718 = vmatpush1.msra.mxu0 %v751
    %4719 = vmatprep.subr.mxu0 %v768
    %4720 = vmatpush1.msra.mxu0 %v767
    %4721 = vmatprep.subr.mxu0 %v784
    %4722 = vmatpush1.msra.mxu0 %v783
    %4723 = vmatprep.subr.mxu0 %v800
    %4724 = vmatpush1.msra.mxu0 %v799
    %4725 = vmatprep.subr.mxu0 %v816
    %4726 = vmatpush1.msra.mxu0 %v815
    %4727 = vmatprep.subr.mxu0 %v832
    %4728 = vmatpush1.msra.mxu0 %v831
    %4729 = vmatprep.subr.mxu0 %v848
    %4730 = vmatpush1.msra.mxu0 %v847
    %4731 = vmatprep.subr.mxu0 %v864
    %4732 = vmatpush1.msra.mxu0 %v863
    %4733 = vmatprep.subr.mxu0 %v880
    %4734 = vmatpush1.msra.mxu0 %v879
    %4735 = vmatprep.subr.mxu0 %v896
    %4736 = vmatpush1.msra.mxu0 %v895
    %4737 = vmatprep.subr.mxu0 %v912
    %4738 = vmatpush1.msra.mxu0 %v911
    %4739 = vmatprep.subr.mxu0 %v928
    %4740 = vmatpush1.msra.mxu0 %v927
    %4741 = vmatprep.subr.mxu0 %v944
    %4742 = vmatpush1.msra.mxu0 %v943
    %4743 = vmatprep.subr.mxu0 %v960
    %4744 = vmatpush1.msra.mxu0 %v959
    %4745 = vmatprep.subr.mxu0 %v976
    %4746 = vmatpush1.msra.mxu0 %v975
    %4747 = vmatprep.subr.mxu0 %v992
    %4748 = vmatpush1.msra.mxu0 %v991
    %4749 = vmatprep.subr.mxu0 %v1008
    %4750 = vmatpush1.msra.mxu0 %v1007
    %4751 = vmatprep.subr.mxu0 %v1024
    %4752 = vmatpush1.msra.mxu0 %v1023
    %4753 = vmatprep.subr.mxu0 %v1040
    %4754 = vmatpush1.msra.mxu0 %v1039
    %4755 = vmatprep.subr.mxu0 %v1056
    %4756 = vmatpush1.msra.mxu0 %v1055
    %4757 = vmatprep.subr.mxu0 %v1072
    %4758 = vmatpush1.msra.mxu0 %v1071
    %4759 = vmatprep.subr.mxu0 %v1088
    %4760 = vmatpush1.msra.mxu0 %v1087
    %4761 = vmatprep.mubr.f32.mxu0 %v570
    %4762 = vmatmul.mubr.f32.gmra.mrb[0].mxu0 %v569
    %v4763 = vpop.f32.mrb[0].mxu0
    %v4764 = vadd.f32 %v2688, %v4763
    %v4765 = vpop.f32.mrb[0].mxu0
    %v4766 = vadd.f32 %v2692, %v4765
    %4767 = vdwg.mxu0
    %4768 = vmatprep.subr.mxu0 %v1104
    %4769 = vmatpush1.msra.mxu0 %v1103
    %4770 = vmatprep.subr.mxu0 %v1120
    %4771 = vmatpush1.msra.mxu0 %v1119
    %4772 = vmatprep.subr.mxu0 %v1136
    %4773 = vmatpush1.msra.mxu0 %v1135
    %4774 = vmatprep.subr.mxu0 %v1152
    %4775 = vmatpush1.msra.mxu0 %v1151
    %4776 = vmatprep.subr.mxu0 %v1168
    %4777 = vmatpush1.msra.mxu0 %v1167
    %4778 = vmatprep.subr.mxu0 %v1184
    %4779 = vmatpush1.msra.mxu0 %v1183
    %4780 = vmatprep.subr.mxu0 %v1200
    %4781 = vmatpush1.msra.mxu0 %v1199
    %4782 = vmatprep.subr.mxu0 %v1216
    %4783 = vmatpush1.msra.mxu0 %v1215
    %4784 = vmatprep.subr.mxu0 %v1232
    %4785 = vmatpush1.msra.mxu0 %v1231
    %4786 = vmatprep.subr.mxu0 %v1248
    %4787 = vmatpush1.msra.mxu0 %v1247
    %4788 = vmatprep.subr.mxu0 %v1264
    %4789 = vmatpush1.msra.mxu0 %v1263
    %4790 = vmatprep.subr.mxu0 %v1280
    %4791 = vmatpush1.msra.mxu0 %v1279
    %4792 = vmatprep.subr.mxu0 %v1296
    %4793 = vmatpush1.msra.mxu0 %v1295
    %4794 = vmatprep.subr.mxu0 %v1312
    %4795 = vmatpush1.msra.mxu0 %v1311
    %4796 = vmatprep.subr.mxu0 %v1328
    %4797 = vmatpush1.msra.mxu0 %v1327
    %4798 = vmatprep.subr.mxu0 %v1344
    %4799 = vmatpush1.msra.mxu0 %v1343
    %4800 = vmatprep.subr.mxu0 %v1360
    %4801 = vmatpush1.msra.mxu0 %v1359
    %4802 = vmatprep.subr.mxu0 %v1376
    %4803 = vmatpush1.msra.mxu0 %v1375
    %4804 = vmatprep.subr.mxu0 %v1392
    %4805 = vmatpush1.msra.mxu0 %v1391
    %4806 = vmatprep.subr.mxu0 %v1408
    %4807 = vmatpush1.msra.mxu0 %v1407
    %4808 = vmatprep.subr.mxu0 %v1424
    %4809 = vmatpush1.msra.mxu0 %v1423
    %4810 = vmatprep.subr.mxu0 %v1440
    %4811 = vmatpush1.msra.mxu0 %v1439
    %4812 = vmatprep.subr.mxu0 %v1456
    %4813 = vmatpush1.msra.mxu0 %v1455
    %4814 = vmatprep.subr.mxu0 %v1472
    %4815 = vmatpush1.msra.mxu0 %v1471
    %4816 = vmatprep.subr.mxu0 %v1488
    %4817 = vmatpush1.msra.mxu0 %v1487
    %4818 = vmatprep.subr.mxu0 %v1504
    %4819 = vmatpush1.msra.mxu0 %v1503
    %4820 = vmatprep.subr.mxu0 %v1520
    %4821 = vmatpush1.msra.mxu0 %v1519
    %4822 = vmatprep.subr.mxu0 %v1536
    %4823 = vmatpush1.msra.mxu0 %v1535
    %4824 = vmatprep.subr.mxu0 %v1552
    %4825 = vmatpush1.msra.mxu0 %v1551
    %4826 = vmatprep.subr.mxu0 %v1568
    %4827 = vmatpush1.msra.mxu0 %v1567
    %4828 = vmatprep.subr.mxu0 %v1584
    %4829 = vmatpush1.msra.mxu0 %v1583
    %4830 = vmatprep.subr.mxu0 %v1600
    %4831 = vmatpush1.msra.mxu0 %v1599
    %4832 = vmatprep.mubr.f32.mxu0 %v572
    %4833 = vmatmul.mubr.f32.gmra.mrb[0].mxu0 %v571
    %v4834 = vpop.f32.mrb[0].mxu0
    %v4835 = vadd.f32 %v4764, %v4834
    %v4836 = vpop.f32.mrb[0].mxu0
    %v4837 = vadd.f32 %v4766, %v4836
    %4838 = vdwg.mxu0
    %4839 = vmatprep.subr.mxu0 %v1616
    %4840 = vmatpush1.msra.mxu0 %v1615
    %4841 = vmatprep.subr.mxu0 %v1632
    %4842 = vmatpush1.msra.mxu0 %v1631
    %4843 = vmatprep.subr.mxu0 %v1648
    %4844 = vmatpush1.msra.mxu0 %v1647
    %4845 = vmatprep.subr.mxu0 %v1664
    %4846 = vmatpush1.msra.mxu0 %v1663
    %4847 = vmatprep.subr.mxu0 %v1680
    %4848 = vmatpush1.msra.mxu0 %v1679
    %4849 = vmatprep.subr.mxu0 %v1696
    %4850 = vmatpush1.msra.mxu0 %v1695
    %4851 = vmatprep.subr.mxu0 %v1712
    %4852 = vmatpush1.msra.mxu0 %v1711
    %4853 = vmatprep.subr.mxu0 %v1728
    %4854 = vmatpush1.msra.mxu0 %v1727
    %4855 = vmatprep.subr.mxu0 %v1744
    %4856 = vmatpush1.msra.mxu0 %v1743
    %4857 = vmatprep.subr.mxu0 %v1760
    %4858 = vmatpush1.msra.mxu0 %v1759
    %4859 = vmatprep.subr.mxu0 %v1776
    %4860 = vmatpush1.msra.mxu0 %v1775
    %4861 = vmatprep.subr.mxu0 %v1792
    %4862 = vmatpush1.msra.mxu0 %v1791
    %4863 = vmatprep.subr.mxu0 %v1808
    %4864 = vmatpush1.msra.mxu0 %v1807
    %4865 = vmatprep.subr.mxu0 %v1824
    %4866 = vmatpush1.msra.mxu0 %v1823
    %4867 = vmatprep.subr.mxu0 %v1840
    %4868 = vmatpush1.msra.mxu0 %v1839
    %4869 = vmatprep.subr.mxu0 %v1856
    %4870 = vmatpush1.msra.mxu0 %v1855
    %4871 = vmatprep.subr.mxu0 %v1872
    %4872 = vmatpush1.msra.mxu0 %v1871
    %4873 = vmatprep.subr.mxu0 %v1888
    %4874 = vmatpush1.msra.mxu0 %v1887
    %4875 = vmatprep.subr.mxu0 %v1904
    %4876 = vmatpush1.msra.mxu0 %v1903
    %4877 = vmatprep.subr.mxu0 %v1920
    %4878 = vmatpush1.msra.mxu0 %v1919
    %4879 = vmatprep.subr.mxu0 %v1936
    %4880 = vmatpush1.msra.mxu0 %v1935
    %4881 = vmatprep.subr.mxu0 %v1952
    %4882 = vmatpush1.msra.mxu0 %v1951
    %4883 = vmatprep.subr.mxu0 %v1968
    %4884 = vmatpush1.msra.mxu0 %v1967
    %4885 = vmatprep.subr.mxu0 %v1984
    %4886 = vmatpush1.msra.mxu0 %v1983
    %4887 = vmatprep.subr.mxu0 %v2000
    %4888 = vmatpush1.msra.mxu0 %v1999
    %4889 = vmatprep.subr.mxu0 %v2016
    %4890 = vmatpush1.msra.mxu0 %v2015
    %4891 = vmatprep.subr.mxu0 %v2032
    %4892 = vmatpush1.msra.mxu0 %v2031
    %4893 = vmatprep.subr.mxu0 %v2048
    %4894 = vmatpush1.msra.mxu0 %v2047
    %4895 = vmatprep.subr.mxu0 %v2064
    %4896 = vmatpush1.msra.mxu0 %v2063
    %4897 = vmatprep.subr.mxu0 %v2080
    %4898 = vmatpush1.msra.mxu0 %v2079
    %4899 = vmatprep.subr.mxu0 %v2096
    %4900 = vmatpush1.msra.mxu0 %v2095
    %4901 = vmatprep.subr.mxu0 %v2112
    %4902 = vmatpush1.msra.mxu0 %v2111
    %4903 = vmatprep.mubr.f32.mxu0 %v574
    %4904 = vmatmul.mubr.f32.gmra.mrb[0].mxu0 %v573
    %v4905 = vpop.f32.mrb[0].mxu0
    %v4906 = vadd.f32 %v4835, %v4905
    %v4907 = vpop.f32.mrb[0].mxu0
    %v4908 = vadd.f32 %v4837, %v4907
    %4909 = vdwg.mxu0
    %4910 = vmatprep.subr.mxu0 %v2128
    %4911 = vmatpush1.msra.mxu0 %v2127
    %4912 = vmatprep.subr.mxu0 %v2144
    %4913 = vmatpush1.msra.mxu0 %v2143
    %4914 = vmatprep.subr.mxu0 %v2160
    %4915 = vmatpush1.msra.mxu0 %v2159
    %4916 = vmatprep.subr.mxu0 %v2176
    %4917 = vmatpush1.msra.mxu0 %v2175
    %4918 = vmatprep.subr.mxu0 %v2192
    %4919 = vmatpush1.msra.mxu0 %v2191
    %4920 = vmatprep.subr.mxu0 %v2208
    %4921 = vmatpush1.msra.mxu0 %v2207
    %4922 = vmatprep.subr.mxu0 %v2224
    %4923 = vmatpush1.msra.mxu0 %v2223
    %4924 = vmatprep.subr.mxu0 %v2240
    %4925 = vmatpush1.msra.mxu0 %v2239
    %4926 = vmatprep.subr.mxu0 %v2256
    %4927 = vmatpush1.msra.mxu0 %v2255
    %4928 = vmatprep.subr.mxu0 %v2272
    %4929 = vmatpush1.msra.mxu0 %v2271
    %4930 = vmatprep.subr.mxu0 %v2288
    %4931 = vmatpush1.msra.mxu0 %v2287
    %4932 = vmatprep.subr.mxu0 %v2304
    %4933 = vmatpush1.msra.mxu0 %v2303
    %4934 = vmatprep.subr.mxu0 %v2320
    %4935 = vmatpush1.msra.mxu0 %v2319
    %4936 = vmatprep.subr.mxu0 %v2336
    %4937 = vmatpush1.msra.mxu0 %v2335
    %4938 = vmatprep.subr.mxu0 %v2352
    %4939 = vmatpush1.msra.mxu0 %v2351
    %4940 = vmatprep.subr.mxu0 %v2368
    %4941 = vmatpush1.msra.mxu0 %v2367
    %4942 = vmatprep.subr.mxu0 %v2384
    %4943 = vmatpush1.msra.mxu0 %v2383
    %4944 = vmatprep.subr.mxu0 %v2400
    %4945 = vmatpush1.msra.mxu0 %v2399
    %4946 = vmatprep.subr.mxu0 %v2416
    %4947 = vmatpush1.msra.mxu0 %v2415
    %4948 = vmatprep.subr.mxu0 %v2432
    %4949 = vmatpush1.msra.mxu0 %v2431
    %4950 = vmatprep.subr.mxu0 %v2448
    %4951 = vmatpush1.msra.mxu0 %v2447
    %4952 = vmatprep.subr.mxu0 %v2464
    %4953 = vmatpush1.msra.mxu0 %v2463
    %4954 = vmatprep.subr.mxu0 %v2480
    %4955 = vmatpush1.msra.mxu0 %v2479
    %4956 = vmatprep.subr.mxu0 %v2496
    %4957 = vmatpush1.msra.mxu0 %v2495
    %4958 = vmatprep.subr.mxu0 %v2512
    %4959 = vmatpush1.msra.mxu0 %v2511
    %4960 = vmatprep.subr.mxu0 %v2528
    %4961 = vmatpush1.msra.mxu0 %v2527
    %4962 = vmatprep.subr.mxu0 %v2544
    %4963 = vmatpush1.msra.mxu0 %v2543
    %4964 = vmatprep.subr.mxu0 %v2560
    %4965 = vmatpush1.msra.mxu0 %v2559
    %4966 = vmatprep.subr.mxu0 %v2576
    %4967 = vmatpush1.msra.mxu0 %v2575
    %4968 = vmatprep.subr.mxu0 %v2592
    %4969 = vmatpush1.msra.mxu0 %v2591
    %4970 = vmatprep.subr.mxu0 %v2608
    %4971 = vmatpush1.msra.mxu0 %v2607
    %4972 = vmatprep.subr.mxu0 %v2624
    %4973 = vmatpush1.msra.mxu0 %v2623
    %4974 = vmatprep.mubr.f32.mxu0 %v576
    %4975 = vmatmul.mubr.f32.gmra.mrb[0].mxu0 %v575
    %v4976 = vpop.f32.mrb[0].mxu0
    %v4977 = vadd.f32 %v4906, %v4976
    %v4978 = vpop.f32.mrb[0].mxu0
    %v4979 = vadd.f32 %v4908, %v4978
    %4980 = vdwg.mxu0
    %v4981 = vmax.f32 %v2989, 0.0
    %v4982 = vmax.f32 %v2991, 0.0
    %v4983 = vmax.f32 %v3273, 0.0
    %v4984 = vmax.f32 %v3275, 0.0
    %v4985 = vmax.f32 %v3557, 0.0
    %v4986 = vmax.f32 %v3559, 0.0
    %v4987 = vmax.f32 %v3841, 0.0
    %v4988 = vmax.f32 %v3843, 0.0
    %v4989 = vmax.f32 %v4125, 0.0
    %v4990 = vmax.f32 %v4127, 0.0
    %v4991 = vmax.f32 %v4409, 0.0
    %v4992 = vmax.f32 %v4411, 0.0
    %v4993 = vmax.f32 %v4693, 0.0
    %v4994 = vmax.f32 %v4695, 0.0
    %v4995 = vmax.f32 %v4977, 0.0
    %v4996 = vmax.f32 %v4979, 0.0
    %v4997 = vld [vmem:[#allocation11] sm:$0xff]
    %v4998 = vld [vmem:[#allocation11 + $0x8] sm:$0xff]
    %v4999 = vld [vmem:[#allocation11 + $0x10] sm:$0xff]
    %v5000 = vld [vmem:[#allocation11 + $0x18] sm:$0xff]
    %v5001 = vld [vmem:[#allocation11 + $0x20] sm:$0xff]
    %v5002 = vld [vmem:[#allocation11 + $0x28] sm:$0xff]
    %v5003 = vld [vmem:[#allocation11 + $0x30] sm:$0xff]
    %v5004 = vld [vmem:[#allocation11 + $0x38] sm:$0xff]
    %v5005 = vld [vmem:[#allocation11 + $0x40] sm:$0xff]
    %v5006 = vld [vmem:[#allocation11 + $0x48] sm:$0xff]
    %v5007 = vld [vmem:[#allocation11 + $0x50] sm:$0xff]
    %v5008 = vld [vmem:[#allocation11 + $0x58] sm:$0xff]
    %v5009 = vld [vmem:[#allocation11 + $0x60] sm:$0xff]
    %v5010 = vld [vmem:[#allocation11 + $0x68] sm:$0xff]
    %v5011 = vld [vmem:[#allocation11 + $0x70] sm:$0xff]
    %v5012 = vld [vmem:[#allocation11 + $0x78] sm:$0xff]
    %v5013 = vld [vmem:[#allocation11 + $0x80] sm:$0xff]
    %v5014 = vld [vmem:[#allocation11 + $0x88] sm:$0xff]
    %v5015 = vld [vmem:[#allocation11 + $0x90] sm:$0xff]
    %v5016 = vld [vmem:[#allocation11 + $0x98] sm:$0xff]
    %v5017 = vld [vmem:[#allocation11 + $0xa0] sm:$0xff]
    %v5018 = vld [vmem:[#allocation11 + $0xa8] sm:$0xff]
    %v5019 = vld [vmem:[#allocation11 + $0xb0] sm:$0xff]
    %v5020 = vld [vmem:[#allocation11 + $0xb8] sm:$0xff]
    %v5021 = vld [vmem:[#allocation11 + $0xc0] sm:$0xff]
    %v5022 = vld [vmem:[#allocation11 + $0xc8] sm:$0xff]
    %v5023 = vld [vmem:[#allocation11 + $0xd0] sm:$0xff]
    %v5024 = vld [vmem:[#allocation11 + $0xd8] sm:$0xff]
    %v5025 = vld [vmem:[#allocation11 + $0xe0] sm:$0xff]
    %v5026 = vld [vmem:[#allocation11 + $0xe8] sm:$0xff]
    %v5027 = vld [vmem:[#allocation11 + $0xf0] sm:$0xff]
    %v5028 = vld [vmem:[#allocation11 + $0xf8] sm:$0xff]
    %v5029 = vld [vmem:[#allocation11 + $0x100] sm:$0xff]
    %v5030 = vld [vmem:[#allocation11 + $0x108] sm:$0xff]
    %v5031 = vld [vmem:[#allocation11 + $0x110] sm:$0xff]
    %v5032 = vld [vmem:[#allocation11 + $0x118] sm:$0xff]
    %v5033 = vld [vmem:[#allocation11 + $0x120] sm:$0xff]
    %v5034 = vld [vmem:[#allocation11 + $0x128] sm:$0xff]
    %v5035 = vld [vmem:[#allocation11 + $0x130] sm:$0xff]
    %v5036 = vld [vmem:[#allocation11 + $0x138] sm:$0xff]
    %v5037 = vld [vmem:[#allocation11 + $0x140] sm:$0xff]
    %v5038 = vld [vmem:[#allocation11 + $0x148] sm:$0xff]
    %v5039 = vld [vmem:[#allocation11 + $0x150] sm:$0xff]
    %v5040 = vld [vmem:[#allocation11 + $0x158] sm:$0xff]
    %v5041 = vld [vmem:[#allocation11 + $0x160] sm:$0xff]
    %v5042 = vld [vmem:[#allocation11 + $0x168] sm:$0xff]
    %v5043 = vld [vmem:[#allocation11 + $0x170] sm:$0xff]
    %v5044 = vld [vmem:[#allocation11 + $0x178] sm:$0xff]
    %v5045 = vld [vmem:[#allocation11 + $0x180] sm:$0xff]
    %v5046 = vld [vmem:[#allocation11 + $0x188] sm:$0xff]
    %v5047 = vld [vmem:[#allocation11 + $0x190] sm:$0xff]
    %v5048 = vld [vmem:[#allocation11 + $0x198] sm:$0xff]
    %v5049 = vld [vmem:[#allocation11 + $0x1a0] sm:$0xff]
    %v5050 = vld [vmem:[#allocation11 + $0x1a8] sm:$0xff]
    %v5051 = vld [vmem:[#allocation11 + $0x1b0] sm:$0xff]
    %v5052 = vld [vmem:[#allocation11 + $0x1b8] sm:$0xff]
    %v5053 = vld [vmem:[#allocation11 + $0x1c0] sm:$0xff]
    %v5054 = vld [vmem:[#allocation11 + $0x1c8] sm:$0xff]
    %v5055 = vld [vmem:[#allocation11 + $0x1d0] sm:$0xff]
    %v5056 = vld [vmem:[#allocation11 + $0x1d8] sm:$0xff]
    %v5057 = vld [vmem:[#allocation11 + $0x1e0] sm:$0xff]
    %v5058 = vld [vmem:[#allocation11 + $0x1e8] sm:$0xff]
    %v5059 = vld [vmem:[#allocation11 + $0x1f0] sm:$0xff]
    %v5060 = vld [vmem:[#allocation11 + $0x1f8] sm:$0xff]
    %v5061 = vld [vmem:[#allocation11 + $0x200] sm:$0xff]
    %v5062 = vld [vmem:[#allocation11 + $0x208] sm:$0xff]
    %v5063 = vld [vmem:[#allocation11 + $0x210] sm:$0xff]
    %v5064 = vld [vmem:[#allocation11 + $0x218] sm:$0xff]
    %v5065 = vld [vmem:[#allocation11 + $0x220] sm:$0xff]
    %v5066 = vld [vmem:[#allocation11 + $0x228] sm:$0xff]
    %v5067 = vld [vmem:[#allocation11 + $0x230] sm:$0xff]
    %v5068 = vld [vmem:[#allocation11 + $0x238] sm:$0xff]
    %v5069 = vld [vmem:[#allocation11 + $0x240] sm:$0xff]
    %v5070 = vld [vmem:[#allocation11 + $0x248] sm:$0xff]
    %v5071 = vld [vmem:[#allocation11 + $0x250] sm:$0xff]
    %v5072 = vld [vmem:[#allocation11 + $0x258] sm:$0xff]
    %v5073 = vld [vmem:[#allocation11 + $0x260] sm:$0xff]
    %v5074 = vld [vmem:[#allocation11 + $0x268] sm:$0xff]
    %v5075 = vld [vmem:[#allocation11 + $0x270] sm:$0xff]
    %v5076 = vld [vmem:[#allocation11 + $0x278] sm:$0xff]
    %v5077 = vld [vmem:[#allocation11 + $0x280] sm:$0xff]
    %v5078 = vld [vmem:[#allocation11 + $0x288] sm:$0xff]
    %v5079 = vld [vmem:[#allocation11 + $0x290] sm:$0xff]
    %v5080 = vld [vmem:[#allocation11 + $0x298] sm:$0xff]
    %v5081 = vld [vmem:[#allocation11 + $0x2a0] sm:$0xff]
    %v5082 = vld [vmem:[#allocation11 + $0x2a8] sm:$0xff]
    %v5083 = vld [vmem:[#allocation11 + $0x2b0] sm:$0xff]
    %v5084 = vld [vmem:[#allocation11 + $0x2b8] sm:$0xff]
    %v5085 = vld [vmem:[#allocation11 + $0x2c0] sm:$0xff]
    %v5086 = vld [vmem:[#allocation11 + $0x2c8] sm:$0xff]
    %v5087 = vld [vmem:[#allocation11 + $0x2d0] sm:$0xff]
    %v5088 = vld [vmem:[#allocation11 + $0x2d8] sm:$0xff]
    %v5089 = vld [vmem:[#allocation11 + $0x2e0] sm:$0xff]
    %v5090 = vld [vmem:[#allocation11 + $0x2e8] sm:$0xff]
    %v5091 = vld [vmem:[#allocation11 + $0x2f0] sm:$0xff]
    %v5092 = vld [vmem:[#allocation11 + $0x2f8] sm:$0xff]
    %v5093 = vld [vmem:[#allocation11 + $0x300] sm:$0xff]
    %v5094 = vld [vmem:[#allocation11 + $0x308] sm:$0xff]
    %v5095 = vld [vmem:[#allocation11 + $0x310] sm:$0xff]
    %v5096 = vld [vmem:[#allocation11 + $0x318] sm:$0xff]
    %v5097 = vld [vmem:[#allocation11 + $0x320] sm:$0xff]
    %v5098 = vld [vmem:[#allocation11 + $0x328] sm:$0xff]
    %v5099 = vld [vmem:[#allocation11 + $0x330] sm:$0xff]
    %v5100 = vld [vmem:[#allocation11 + $0x338] sm:$0xff]
    %v5101 = vld [vmem:[#allocation11 + $0x340] sm:$0xff]
    %v5102 = vld [vmem:[#allocation11 + $0x348] sm:$0xff]
    %v5103 = vld [vmem:[#allocation11 + $0x350] sm:$0xff]
    %v5104 = vld [vmem:[#allocation11 + $0x358] sm:$0xff]
    %v5105 = vld [vmem:[#allocation11 + $0x360] sm:$0xff]
    %v5106 = vld [vmem:[#allocation11 + $0x368] sm:$0xff]
    %v5107 = vld [vmem:[#allocation11 + $0x370] sm:$0xff]
    %v5108 = vld [vmem:[#allocation11 + $0x378] sm:$0xff]
    %v5109 = vld [vmem:[#allocation11 + $0x380] sm:$0xff]
    %v5110 = vld [vmem:[#allocation11 + $0x388] sm:$0xff]
    %v5111 = vld [vmem:[#allocation11 + $0x390] sm:$0xff]
    %v5112 = vld [vmem:[#allocation11 + $0x398] sm:$0xff]
    %v5113 = vld [vmem:[#allocation11 + $0x3a0] sm:$0xff]
    %v5114 = vld [vmem:[#allocation11 + $0x3a8] sm:$0xff]
    %v5115 = vld [vmem:[#allocation11 + $0x3b0] sm:$0xff]
    %v5116 = vld [vmem:[#allocation11 + $0x3b8] sm:$0xff]
    %v5117 = vld [vmem:[#allocation11 + $0x3c0] sm:$0xff]
    %v5118 = vld [vmem:[#allocation11 + $0x3c8] sm:$0xff]
    %v5119 = vld [vmem:[#allocation11 + $0x3d0] sm:$0xff]
    %v5120 = vld [vmem:[#allocation11 + $0x3d8] sm:$0xff]
    %v5121 = vld [vmem:[#allocation11 + $0x3e0] sm:$0xff]
    %v5122 = vld [vmem:[#allocation11 + $0x3e8] sm:$0xff]
    %v5123 = vld [vmem:[#allocation11 + $0x3f0] sm:$0xff]
    %v5124 = vld [vmem:[#allocation11 + $0x3f8] sm:$0xff]
    %v5125 = vld [vmem:[#allocation11 + $0x400] sm:$0xff]
    %v5126 = vld [vmem:[#allocation11 + $0x408] sm:$0xff]
    %v5127 = vld [vmem:[#allocation11 + $0x410] sm:$0xff]
    %v5128 = vld [vmem:[#allocation11 + $0x418] sm:$0xff]
    %v5129 = vld [vmem:[#allocation11 + $0x420] sm:$0xff]
    %v5130 = vld [vmem:[#allocation11 + $0x428] sm:$0xff]
    %v5131 = vld [vmem:[#allocation11 + $0x430] sm:$0xff]
    %v5132 = vld [vmem:[#allocation11 + $0x438] sm:$0xff]
    %v5133 = vld [vmem:[#allocation11 + $0x440] sm:$0xff]
    %v5134 = vld [vmem:[#allocation11 + $0x448] sm:$0xff]
    %v5135 = vld [vmem:[#allocation11 + $0x450] sm:$0xff]
    %v5136 = vld [vmem:[#allocation11 + $0x458] sm:$0xff]
    %v5137 = vld [vmem:[#allocation11 + $0x460] sm:$0xff]
    %v5138 = vld [vmem:[#allocation11 + $0x468] sm:$0xff]
    %v5139 = vld [vmem:[#allocation11 + $0x470] sm:$0xff]
    %v5140 = vld [vmem:[#allocation11 + $0x478] sm:$0xff]
    %v5141 = vld [vmem:[#allocation11 + $0x480] sm:$0xff]
    %v5142 = vld [vmem:[#allocation11 + $0x488] sm:$0xff]
    %v5143 = vld [vmem:[#allocation11 + $0x490] sm:$0xff]
    %v5144 = vld [vmem:[#allocation11 + $0x498] sm:$0xff]
    %v5145 = vld [vmem:[#allocation11 + $0x4a0] sm:$0xff]
    %v5146 = vld [vmem:[#allocation11 + $0x4a8] sm:$0xff]
    %v5147 = vld [vmem:[#allocation11 + $0x4b0] sm:$0xff]
    %v5148 = vld [vmem:[#allocation11 + $0x4b8] sm:$0xff]
    %v5149 = vld [vmem:[#allocation11 + $0x4c0] sm:$0xff]
    %v5150 = vld [vmem:[#allocation11 + $0x4c8] sm:$0xff]
    %v5151 = vld [vmem:[#allocation11 + $0x4d0] sm:$0xff]
    %v5152 = vld [vmem:[#allocation11 + $0x4d8] sm:$0xff]
    %v5153 = vld [vmem:[#allocation11 + $0x4e0] sm:$0xff]
    %v5154 = vld [vmem:[#allocation11 + $0x4e8] sm:$0xff]
    %v5155 = vld [vmem:[#allocation11 + $0x4f0] sm:$0xff]
    %v5156 = vld [vmem:[#allocation11 + $0x4f8] sm:$0xff]
    %v5157 = vld [vmem:[#allocation11 + $0x500] sm:$0xff]
    %v5158 = vld [vmem:[#allocation11 + $0x508] sm:$0xff]
    %v5159 = vld [vmem:[#allocation11 + $0x510] sm:$0xff]
    %v5160 = vld [vmem:[#allocation11 + $0x518] sm:$0xff]
    %v5161 = vld [vmem:[#allocation11 + $0x520] sm:$0xff]
    %v5162 = vld [vmem:[#allocation11 + $0x528] sm:$0xff]
    %v5163 = vld [vmem:[#allocation11 + $0x530] sm:$0xff]
    %v5164 = vld [vmem:[#allocation11 + $0x538] sm:$0xff]
    %v5165 = vld [vmem:[#allocation11 + $0x540] sm:$0xff]
    %v5166 = vld [vmem:[#allocation11 + $0x548] sm:$0xff]
    %v5167 = vld [vmem:[#allocation11 + $0x550] sm:$0xff]
    %v5168 = vld [vmem:[#allocation11 + $0x558] sm:$0xff]
    %v5169 = vld [vmem:[#allocation11 + $0x560] sm:$0xff]
    %v5170 = vld [vmem:[#allocation11 + $0x568] sm:$0xff]
    %v5171 = vld [vmem:[#allocation11 + $0x570] sm:$0xff]
    %v5172 = vld [vmem:[#allocation11 + $0x578] sm:$0xff]
    %v5173 = vld [vmem:[#allocation11 + $0x580] sm:$0xff]
    %v5174 = vld [vmem:[#allocation11 + $0x588] sm:$0xff]
    %v5175 = vld [vmem:[#allocation11 + $0x590] sm:$0xff]
    %v5176 = vld [vmem:[#allocation11 + $0x598] sm:$0xff]
    %v5177 = vld [vmem:[#allocation11 + $0x5a0] sm:$0xff]
    %v5178 = vld [vmem:[#allocation11 + $0x5a8] sm:$0xff]
    %v5179 = vld [vmem:[#allocation11 + $0x5b0] sm:$0xff]
    %v5180 = vld [vmem:[#allocation11 + $0x5b8] sm:$0xff]
    %v5181 = vld [vmem:[#allocation11 + $0x5c0] sm:$0xff]
    %v5182 = vld [vmem:[#allocation11 + $0x5c8] sm:$0xff]
    %v5183 = vld [vmem:[#allocation11 + $0x5d0] sm:$0xff]
    %v5184 = vld [vmem:[#allocation11 + $0x5d8] sm:$0xff]
    %v5185 = vld [vmem:[#allocation11 + $0x5e0] sm:$0xff]
    %v5186 = vld [vmem:[#allocation11 + $0x5e8] sm:$0xff]
    %v5187 = vld [vmem:[#allocation11 + $0x5f0] sm:$0xff]
    %v5188 = vld [vmem:[#allocation11 + $0x5f8] sm:$0xff]
    %v5189 = vld [vmem:[#allocation11 + $0x600] sm:$0xff]
    %v5190 = vld [vmem:[#allocation11 + $0x608] sm:$0xff]
    %v5191 = vld [vmem:[#allocation11 + $0x610] sm:$0xff]
    %v5192 = vld [vmem:[#allocation11 + $0x618] sm:$0xff]
    %v5193 = vld [vmem:[#allocation11 + $0x620] sm:$0xff]
    %v5194 = vld [vmem:[#allocation11 + $0x628] sm:$0xff]
    %v5195 = vld [vmem:[#allocation11 + $0x630] sm:$0xff]
    %v5196 = vld [vmem:[#allocation11 + $0x638] sm:$0xff]
    %v5197 = vld [vmem:[#allocation11 + $0x640] sm:$0xff]
    %v5198 = vld [vmem:[#allocation11 + $0x648] sm:$0xff]
    %v5199 = vld [vmem:[#allocation11 + $0x650] sm:$0xff]
    %v5200 = vld [vmem:[#allocation11 + $0x658] sm:$0xff]
    %v5201 = vld [vmem:[#allocation11 + $0x660] sm:$0xff]
    %v5202 = vld [vmem:[#allocation11 + $0x668] sm:$0xff]
    %v5203 = vld [vmem:[#allocation11 + $0x670] sm:$0xff]
    %v5204 = vld [vmem:[#allocation11 + $0x678] sm:$0xff]
    %v5205 = vld [vmem:[#allocation11 + $0x680] sm:$0xff]
    %v5206 = vld [vmem:[#allocation11 + $0x688] sm:$0xff]
    %v5207 = vld [vmem:[#allocation11 + $0x690] sm:$0xff]
    %v5208 = vld [vmem:[#allocation11 + $0x698] sm:$0xff]
    %v5209 = vld [vmem:[#allocation11 + $0x6a0] sm:$0xff]
    %v5210 = vld [vmem:[#allocation11 + $0x6a8] sm:$0xff]
    %v5211 = vld [vmem:[#allocation11 + $0x6b0] sm:$0xff]
    %v5212 = vld [vmem:[#allocation11 + $0x6b8] sm:$0xff]
    %v5213 = vld [vmem:[#allocation11 + $0x6c0] sm:$0xff]
    %v5214 = vld [vmem:[#allocation11 + $0x6c8] sm:$0xff]
    %v5215 = vld [vmem:[#allocation11 + $0x6d0] sm:$0xff]
    %v5216 = vld [vmem:[#allocation11 + $0x6d8] sm:$0xff]
    %v5217 = vld [vmem:[#allocation11 + $0x6e0] sm:$0xff]
    %v5218 = vld [vmem:[#allocation11 + $0x6e8] sm:$0xff]
    %v5219 = vld [vmem:[#allocation11 + $0x6f0] sm:$0xff]
    %v5220 = vld [vmem:[#allocation11 + $0x6f8] sm:$0xff]
    %v5221 = vld [vmem:[#allocation11 + $0x700] sm:$0xff]
    %v5222 = vld [vmem:[#allocation11 + $0x708] sm:$0xff]
    %v5223 = vld [vmem:[#allocation11 + $0x710] sm:$0xff]
    %v5224 = vld [vmem:[#allocation11 + $0x718] sm:$0xff]
    %v5225 = vld [vmem:[#allocation11 + $0x720] sm:$0xff]
    %v5226 = vld [vmem:[#allocation11 + $0x728] sm:$0xff]
    %v5227 = vld [vmem:[#allocation11 + $0x730] sm:$0xff]
    %v5228 = vld [vmem:[#allocation11 + $0x738] sm:$0xff]
    %v5229 = vld [vmem:[#allocation11 + $0x740] sm:$0xff]
    %v5230 = vld [vmem:[#allocation11 + $0x748] sm:$0xff]
    %v5231 = vld [vmem:[#allocation11 + $0x750] sm:$0xff]
    %v5232 = vld [vmem:[#allocation11 + $0x758] sm:$0xff]
    %v5233 = vld [vmem:[#allocation11 + $0x760] sm:$0xff]
    %v5234 = vld [vmem:[#allocation11 + $0x768] sm:$0xff]
    %v5235 = vld [vmem:[#allocation11 + $0x770] sm:$0xff]
    %v5236 = vld [vmem:[#allocation11 + $0x778] sm:$0xff]
    %v5237 = vld [vmem:[#allocation11 + $0x780] sm:$0xff]
    %v5238 = vld [vmem:[#allocation11 + $0x788] sm:$0xff]
    %v5239 = vld [vmem:[#allocation11 + $0x790] sm:$0xff]
    %v5240 = vld [vmem:[#allocation11 + $0x798] sm:$0xff]
    %v5241 = vld [vmem:[#allocation11 + $0x7a0] sm:$0xff]
    %v5242 = vld [vmem:[#allocation11 + $0x7a8] sm:$0xff]
    %v5243 = vld [vmem:[#allocation11 + $0x7b0] sm:$0xff]
    %v5244 = vld [vmem:[#allocation11 + $0x7b8] sm:$0xff]
    %v5245 = vld [vmem:[#allocation11 + $0x7c0] sm:$0xff]
    %v5246 = vld [vmem:[#allocation11 + $0x7c8] sm:$0xff]
    %v5247 = vld [vmem:[#allocation11 + $0x7d0] sm:$0xff]
    %v5248 = vld [vmem:[#allocation11 + $0x7d8] sm:$0xff]
    %v5249 = vld [vmem:[#allocation11 + $0x7e0] sm:$0xff]
    %v5250 = vld [vmem:[#allocation11 + $0x7e8] sm:$0xff]
    %v5251 = vld [vmem:[#allocation11 + $0x7f0] sm:$0xff]
    %v5252 = vld [vmem:[#allocation11 + $0x7f8] sm:$0xff]
    %v5253 = vld [vmem:[#allocation13] sm:$0x1]
    %5254 = vmatprep.subr.mxu0 0.0
    %5255 = vmatpush1.msra.mxu0 %v4997
    %5256 = vmatprep.subr.mxu0 0.0
    %5257 = vmatpush1.msra.mxu0 %v4998
    %5258 = vmatprep.subr.mxu0 0.0
    %5259 = vmatpush1.msra.mxu0 %v4999
    %5260 = vmatprep.subr.mxu0 0.0
    %5261 = vmatpush1.msra.mxu0 %v5000
    %5262 = vmatprep.subr.mxu0 0.0
    %5263 = vmatpush1.msra.mxu0 %v5001
    %5264 = vmatprep.subr.mxu0 0.0
    %5265 = vmatpush1.msra.mxu0 %v5002
    %5266 = vmatprep.subr.mxu0 0.0
    %5267 = vmatpush1.msra.mxu0 %v5003
    %5268 = vmatprep.subr.mxu0 0.0
    %5269 = vmatpush1.msra.mxu0 %v5004
    %5270 = vmatprep.subr.mxu0 0.0
    %5271 = vmatpush1.msra.mxu0 %v5005
    %5272 = vmatprep.subr.mxu0 0.0
    %5273 = vmatpush1.msra.mxu0 %v5006
    %5274 = vmatprep.subr.mxu0 0.0
    %5275 = vmatpush1.msra.mxu0 %v5007
    %5276 = vmatprep.subr.mxu0 0.0
    %5277 = vmatpush1.msra.mxu0 %v5008
    %5278 = vmatprep.subr.mxu0 0.0
    %5279 = vmatpush1.msra.mxu0 %v5009
    %5280 = vmatprep.subr.mxu0 0.0
    %5281 = vmatpush1.msra.mxu0 %v5010
    %5282 = vmatprep.subr.mxu0 0.0
    %5283 = vmatpush1.msra.mxu0 %v5011
    %5284 = vmatprep.subr.mxu0 0.0
    %5285 = vmatpush1.msra.mxu0 %v5012
    %5286 = vmatprep.subr.mxu0 0.0
    %5287 = vmatpush1.msra.mxu0 %v5013
    %5288 = vmatprep.subr.mxu0 0.0
    %5289 = vmatpush1.msra.mxu0 %v5014
    %5290 = vmatprep.subr.mxu0 0.0
    %5291 = vmatpush1.msra.mxu0 %v5015
    %5292 = vmatprep.subr.mxu0 0.0
    %5293 = vmatpush1.msra.mxu0 %v5016
    %5294 = vmatprep.subr.mxu0 0.0
    %5295 = vmatpush1.msra.mxu0 %v5017
    %5296 = vmatprep.subr.mxu0 0.0
    %5297 = vmatpush1.msra.mxu0 %v5018
    %5298 = vmatprep.subr.mxu0 0.0
    %5299 = vmatpush1.msra.mxu0 %v5019
    %5300 = vmatprep.subr.mxu0 0.0
    %5301 = vmatpush1.msra.mxu0 %v5020
    %5302 = vmatprep.subr.mxu0 0.0
    %5303 = vmatpush1.msra.mxu0 %v5021
    %5304 = vmatprep.subr.mxu0 0.0
    %5305 = vmatpush1.msra.mxu0 %v5022
    %5306 = vmatprep.subr.mxu0 0.0
    %5307 = vmatpush1.msra.mxu0 %v5023
    %5308 = vmatprep.subr.mxu0 0.0
    %5309 = vmatpush1.msra.mxu0 %v5024
    %5310 = vmatprep.subr.mxu0 0.0
    %5311 = vmatpush1.msra.mxu0 %v5025
    %5312 = vmatprep.subr.mxu0 0.0
    %5313 = vmatpush1.msra.mxu0 %v5026
    %5314 = vmatprep.subr.mxu0 0.0
    %5315 = vmatpush1.msra.mxu0 %v5027
    %5316 = vmatprep.subr.mxu0 0.0
    %5317 = vmatpush1.msra.mxu0 %v5028
    %5318 = vmatprep.mubr.f32.mxu0 %v4982
    %5319 = vmatmul.mubr.f32.gmra.mrb[0].mxu0 %v4981
    %v5320 = vpop.f32.mrb[0].mxu0
    %v5321 = vadd.f32 %v5253, %v5320
    %v5322 = vpop.f32.mrb[0].mxu0
    %5323 = vdwg.mxu0
    %5324 = vmatprep.subr.mxu0 0.0
    %5325 = vmatpush1.msra.mxu0 %v5029
    %5326 = vmatprep.subr.mxu0 0.0
    %5327 = vmatpush1.msra.mxu0 %v5030
    %5328 = vmatprep.subr.mxu0 0.0
    %5329 = vmatpush1.msra.mxu0 %v5031
    %5330 = vmatprep.subr.mxu0 0.0
    %5331 = vmatpush1.msra.mxu0 %v5032
    %5332 = vmatprep.subr.mxu0 0.0
    %5333 = vmatpush1.msra.mxu0 %v5033
    %5334 = vmatprep.subr.mxu0 0.0
    %5335 = vmatpush1.msra.mxu0 %v5034
    %5336 = vmatprep.subr.mxu0 0.0
    %5337 = vmatpush1.msra.mxu0 %v5035
    %5338 = vmatprep.subr.mxu0 0.0
    %5339 = vmatpush1.msra.mxu0 %v5036
    %5340 = vmatprep.subr.mxu0 0.0
    %5341 = vmatpush1.msra.mxu0 %v5037
    %5342 = vmatprep.subr.mxu0 0.0
    %5343 = vmatpush1.msra.mxu0 %v5038
    %5344 = vmatprep.subr.mxu0 0.0
    %5345 = vmatpush1.msra.mxu0 %v5039
    %5346 = vmatprep.subr.mxu0 0.0
    %5347 = vmatpush1.msra.mxu0 %v5040
    %5348 = vmatprep.subr.mxu0 0.0
    %5349 = vmatpush1.msra.mxu0 %v5041
    %5350 = vmatprep.subr.mxu0 0.0
    %5351 = vmatpush1.msra.mxu0 %v5042
    %5352 = vmatprep.subr.mxu0 0.0
    %5353 = vmatpush1.msra.mxu0 %v5043
    %5354 = vmatprep.subr.mxu0 0.0
    %5355 = vmatpush1.msra.mxu0 %v5044
    %5356 = vmatprep.subr.mxu0 0.0
    %5357 = vmatpush1.msra.mxu0 %v5045
    %5358 = vmatprep.subr.mxu0 0.0
    %5359 = vmatpush1.msra.mxu0 %v5046
    %5360 = vmatprep.subr.mxu0 0.0
    %5361 = vmatpush1.msra.mxu0 %v5047
    %5362 = vmatprep.subr.mxu0 0.0
    %5363 = vmatpush1.msra.mxu0 %v5048
    %5364 = vmatprep.subr.mxu0 0.0
    %5365 = vmatpush1.msra.mxu0 %v5049
    %5366 = vmatprep.subr.mxu0 0.0
    %5367 = vmatpush1.msra.mxu0 %v5050
    %5368 = vmatprep.subr.mxu0 0.0
    %5369 = vmatpush1.msra.mxu0 %v5051
    %5370 = vmatprep.subr.mxu0 0.0
    %5371 = vmatpush1.msra.mxu0 %v5052
    %5372 = vmatprep.subr.mxu0 0.0
    %5373 = vmatpush1.msra.mxu0 %v5053
    %5374 = vmatprep.subr.mxu0 0.0
    %5375 = vmatpush1.msra.mxu0 %v5054
    %5376 = vmatprep.subr.mxu0 0.0
    %5377 = vmatpush1.msra.mxu0 %v5055
    %5378 = vmatprep.subr.mxu0 0.0
    %5379 = vmatpush1.msra.mxu0 %v5056
    %5380 = vmatprep.subr.mxu0 0.0
    %5381 = vmatpush1.msra.mxu0 %v5057
    %5382 = vmatprep.subr.mxu0 0.0
    %5383 = vmatpush1.msra.mxu0 %v5058
    %5384 = vmatprep.subr.mxu0 0.0
    %5385 = vmatpush1.msra.mxu0 %v5059
    %5386 = vmatprep.subr.mxu0 0.0
    %5387 = vmatpush1.msra.mxu0 %v5060
    %5388 = vmatprep.mubr.f32.mxu0 %v4984
    %5389 = vmatmul.mubr.f32.gmra.mrb[0].mxu0 %v4983
    %v5390 = vpop.f32.mrb[0].mxu0
    %v5391 = vadd.f32 %v5321, %v5390
    %v5392 = vpop.f32.mrb[0].mxu0
    %5393 = vdwg.mxu0
    %5394 = vmatprep.subr.mxu0 0.0
    %5395 = vmatpush1.msra.mxu0 %v5061
    %5396 = vmatprep.subr.mxu0 0.0
    %5397 = vmatpush1.msra.mxu0 %v5062
    %5398 = vmatprep.subr.mxu0 0.0
    %5399 = vmatpush1.msra.mxu0 %v5063
    %5400 = vmatprep.subr.mxu0 0.0
    %5401 = vmatpush1.msra.mxu0 %v5064
    %5402 = vmatprep.subr.mxu0 0.0
    %5403 = vmatpush1.msra.mxu0 %v5065
    %5404 = vmatprep.subr.mxu0 0.0
    %5405 = vmatpush1.msra.mxu0 %v5066
    %5406 = vmatprep.subr.mxu0 0.0
    %5407 = vmatpush1.msra.mxu0 %v5067
    %5408 = vmatprep.subr.mxu0 0.0
    %5409 = vmatpush1.msra.mxu0 %v5068
    %5410 = vmatprep.subr.mxu0 0.0
    %5411 = vmatpush1.msra.mxu0 %v5069
    %5412 = vmatprep.subr.mxu0 0.0
    %5413 = vmatpush1.msra.mxu0 %v5070
    %5414 = vmatprep.subr.mxu0 0.0
    %5415 = vmatpush1.msra.mxu0 %v5071
    %5416 = vmatprep.subr.mxu0 0.0
    %5417 = vmatpush1.msra.mxu0 %v5072
    %5418 = vmatprep.subr.mxu0 0.0
    %5419 = vmatpush1.msra.mxu0 %v5073
    %5420 = vmatprep.subr.mxu0 0.0
    %5421 = vmatpush1.msra.mxu0 %v5074
    %5422 = vmatprep.subr.mxu0 0.0
    %5423 = vmatpush1.msra.mxu0 %v5075
    %5424 = vmatprep.subr.mxu0 0.0
    %5425 = vmatpush1.msra.mxu0 %v5076
    %5426 = vmatprep.subr.mxu0 0.0
    %5427 = vmatpush1.msra.mxu0 %v5077
    %5428 = vmatprep.subr.mxu0 0.0
    %5429 = vmatpush1.msra.mxu0 %v5078
    %5430 = vmatprep.subr.mxu0 0.0
    %5431 = vmatpush1.msra.mxu0 %v5079
    %5432 = vmatprep.subr.mxu0 0.0
    %5433 = vmatpush1.msra.mxu0 %v5080
    %5434 = vmatprep.subr.mxu0 0.0
    %5435 = vmatpush1.msra.mxu0 %v5081
    %5436 = vmatprep.subr.mxu0 0.0
    %5437 = vmatpush1.msra.mxu0 %v5082
    %5438 = vmatprep.subr.mxu0 0.0
    %5439 = vmatpush1.msra.mxu0 %v5083
    %5440 = vmatprep.subr.mxu0 0.0
    %5441 = vmatpush1.msra.mxu0 %v5084
    %5442 = vmatprep.subr.mxu0 0.0
    %5443 = vmatpush1.msra.mxu0 %v5085
    %5444 = vmatprep.subr.mxu0 0.0
    %5445 = vmatpush1.msra.mxu0 %v5086
    %5446 = vmatprep.subr.mxu0 0.0
    %5447 = vmatpush1.msra.mxu0 %v5087
    %5448 = vmatprep.subr.mxu0 0.0
    %5449 = vmatpush1.msra.mxu0 %v5088
    %5450 = vmatprep.subr.mxu0 0.0
    %5451 = vmatpush1.msra.mxu0 %v5089
    %5452 = vmatprep.subr.mxu0 0.0
    %5453 = vmatpush1.msra.mxu0 %v5090
    %5454 = vmatprep.subr.mxu0 0.0
    %5455 = vmatpush1.msra.mxu0 %v5091
    %5456 = vmatprep.subr.mxu0 0.0
    %5457 = vmatpush1.msra.mxu0 %v5092
    %5458 = vmatprep.mubr.f32.mxu0 %v4986
    %5459 = vmatmul.mubr.f32.gmra.mrb[0].mxu0 %v4985
    %v5460 = vpop.f32.mrb[0].mxu0
    %v5461 = vadd.f32 %v5391, %v5460
    %v5462 = vpop.f32.mrb[0].mxu0
    %5463 = vdwg.mxu0
    %5464 = vmatprep.subr.mxu0 0.0
    %5465 = vmatpush1.msra.mxu0 %v5093
    %5466 = vmatprep.subr.mxu0 0.0
    %5467 = vmatpush1.msra.mxu0 %v5094
    %5468 = vmatprep.subr.mxu0 0.0
    %5469 = vmatpush1.msra.mxu0 %v5095
    %5470 = vmatprep.subr.mxu0 0.0
    %5471 = vmatpush1.msra.mxu0 %v5096
    %5472 = vmatprep.subr.mxu0 0.0
    %5473 = vmatpush1.msra.mxu0 %v5097
    %5474 = vmatprep.subr.mxu0 0.0
    %5475 = vmatpush1.msra.mxu0 %v5098
    %5476 = vmatprep.subr.mxu0 0.0
    %5477 = vmatpush1.msra.mxu0 %v5099
    %5478 = vmatprep.subr.mxu0 0.0
    %5479 = vmatpush1.msra.mxu0 %v5100
    %5480 = vmatprep.subr.mxu0 0.0
    %5481 = vmatpush1.msra.mxu0 %v5101
    %5482 = vmatprep.subr.mxu0 0.0
    %5483 = vmatpush1.msra.mxu0 %v5102
    %5484 = vmatprep.subr.mxu0 0.0
    %5485 = vmatpush1.msra.mxu0 %v5103
    %5486 = vmatprep.subr.mxu0 0.0
    %5487 = vmatpush1.msra.mxu0 %v5104
    %5488 = vmatprep.subr.mxu0 0.0
    %5489 = vmatpush1.msra.mxu0 %v5105
    %5490 = vmatprep.subr.mxu0 0.0
    %5491 = vmatpush1.msra.mxu0 %v5106
    %5492 = vmatprep.subr.mxu0 0.0
    %5493 = vmatpush1.msra.mxu0 %v5107
    %5494 = vmatprep.subr.mxu0 0.0
    %5495 = vmatpush1.msra.mxu0 %v5108
    %5496 = vmatprep.subr.mxu0 0.0
    %5497 = vmatpush1.msra.mxu0 %v5109
    %5498 = vmatprep.subr.mxu0 0.0
    %5499 = vmatpush1.msra.mxu0 %v5110
    %5500 = vmatprep.subr.mxu0 0.0
    %5501 = vmatpush1.msra.mxu0 %v5111
    %5502 = vmatprep.subr.mxu0 0.0
    %5503 = vmatpush1.msra.mxu0 %v5112
    %5504 = vmatprep.subr.mxu0 0.0
    %5505 = vmatpush1.msra.mxu0 %v5113
    %5506 = vmatprep.subr.mxu0 0.0
    %5507 = vmatpush1.msra.mxu0 %v5114
    %5508 = vmatprep.subr.mxu0 0.0
    %5509 = vmatpush1.msra.mxu0 %v5115
    %5510 = vmatprep.subr.mxu0 0.0
    %5511 = vmatpush1.msra.mxu0 %v5116
    %5512 = vmatprep.subr.mxu0 0.0
    %5513 = vmatpush1.msra.mxu0 %v5117
    %5514 = vmatprep.subr.mxu0 0.0
    %5515 = vmatpush1.msra.mxu0 %v5118
    %5516 = vmatprep.subr.mxu0 0.0
    %5517 = vmatpush1.msra.mxu0 %v5119
    %5518 = vmatprep.subr.mxu0 0.0
    %5519 = vmatpush1.msra.mxu0 %v5120
    %5520 = vmatprep.subr.mxu0 0.0
    %5521 = vmatpush1.msra.mxu0 %v5121
    %5522 = vmatprep.subr.mxu0 0.0
    %5523 = vmatpush1.msra.mxu0 %v5122
    %5524 = vmatprep.subr.mxu0 0.0
    %5525 = vmatpush1.msra.mxu0 %v5123
    %5526 = vmatprep.subr.mxu0 0.0
    %5527 = vmatpush1.msra.mxu0 %v5124
    %5528 = vmatprep.mubr.f32.mxu0 %v4988
    %5529 = vmatmul.mubr.f32.gmra.mrb[0].mxu0 %v4987
    %v5530 = vpop.f32.mrb[0].mxu0
    %v5531 = vadd.f32 %v5461, %v5530
    %v5532 = vpop.f32.mrb[0].mxu0
    %5533 = vdwg.mxu0
    %5534 = vmatprep.subr.mxu0 0.0
    %5535 = vmatpush1.msra.mxu0 %v5125
    %5536 = vmatprep.subr.mxu0 0.0
    %5537 = vmatpush1.msra.mxu0 %v5126
    %5538 = vmatprep.subr.mxu0 0.0
    %5539 = vmatpush1.msra.mxu0 %v5127
    %5540 = vmatprep.subr.mxu0 0.0
    %5541 = vmatpush1.msra.mxu0 %v5128
    %5542 = vmatprep.subr.mxu0 0.0
    %5543 = vmatpush1.msra.mxu0 %v5129
    %5544 = vmatprep.subr.mxu0 0.0
    %5545 = vmatpush1.msra.mxu0 %v5130
    %5546 = vmatprep.subr.mxu0 0.0
    %5547 = vmatpush1.msra.mxu0 %v5131
    %5548 = vmatprep.subr.mxu0 0.0
    %5549 = vmatpush1.msra.mxu0 %v5132
    %5550 = vmatprep.subr.mxu0 0.0
    %5551 = vmatpush1.msra.mxu0 %v5133
    %5552 = vmatprep.subr.mxu0 0.0
    %5553 = vmatpush1.msra.mxu0 %v5134
    %5554 = vmatprep.subr.mxu0 0.0
    %5555 = vmatpush1.msra.mxu0 %v5135
    %5556 = vmatprep.subr.mxu0 0.0
    %5557 = vmatpush1.msra.mxu0 %v5136
    %5558 = vmatprep.subr.mxu0 0.0
    %5559 = vmatpush1.msra.mxu0 %v5137
    %5560 = vmatprep.subr.mxu0 0.0
    %5561 = vmatpush1.msra.mxu0 %v5138
    %5562 = vmatprep.subr.mxu0 0.0
    %5563 = vmatpush1.msra.mxu0 %v5139
    %5564 = vmatprep.subr.mxu0 0.0
    %5565 = vmatpush1.msra.mxu0 %v5140
    %5566 = vmatprep.subr.mxu0 0.0
    %5567 = vmatpush1.msra.mxu0 %v5141
    %5568 = vmatprep.subr.mxu0 0.0
    %5569 = vmatpush1.msra.mxu0 %v5142
    %5570 = vmatprep.subr.mxu0 0.0
    %5571 = vmatpush1.msra.mxu0 %v5143
    %5572 = vmatprep.subr.mxu0 0.0
    %5573 = vmatpush1.msra.mxu0 %v5144
    %5574 = vmatprep.subr.mxu0 0.0
    %5575 = vmatpush1.msra.mxu0 %v5145
    %5576 = vmatprep.subr.mxu0 0.0
    %5577 = vmatpush1.msra.mxu0 %v5146
    %5578 = vmatprep.subr.mxu0 0.0
    %5579 = vmatpush1.msra.mxu0 %v5147
    %5580 = vmatprep.subr.mxu0 0.0
    %5581 = vmatpush1.msra.mxu0 %v5148
    %5582 = vmatprep.subr.mxu0 0.0
    %5583 = vmatpush1.msra.mxu0 %v5149
    %5584 = vmatprep.subr.mxu0 0.0
    %5585 = vmatpush1.msra.mxu0 %v5150
    %5586 = vmatprep.subr.mxu0 0.0
    %5587 = vmatpush1.msra.mxu0 %v5151
    %5588 = vmatprep.subr.mxu0 0.0
    %5589 = vmatpush1.msra.mxu0 %v5152
    %5590 = vmatprep.subr.mxu0 0.0
    %5591 = vmatpush1.msra.mxu0 %v5153
    %5592 = vmatprep.subr.mxu0 0.0
    %5593 = vmatpush1.msra.mxu0 %v5154
    %5594 = vmatprep.subr.mxu0 0.0
    %5595 = vmatpush1.msra.mxu0 %v5155
    %5596 = vmatprep.subr.mxu0 0.0
    %5597 = vmatpush1.msra.mxu0 %v5156
    %5598 = vmatprep.mubr.f32.mxu0 %v4990
    %5599 = vmatmul.mubr.f32.gmra.mrb[0].mxu0 %v4989
    %v5600 = vpop.f32.mrb[0].mxu0
    %v5601 = vadd.f32 %v5531, %v5600
    %v5602 = vpop.f32.mrb[0].mxu0
    %5603 = vdwg.mxu0
    %5604 = vmatprep.subr.mxu0 0.0
    %5605 = vmatpush1.msra.mxu0 %v5157
    %5606 = vmatprep.subr.mxu0 0.0
    %5607 = vmatpush1.msra.mxu0 %v5158
    %5608 = vmatprep.subr.mxu0 0.0
    %5609 = vmatpush1.msra.mxu0 %v5159
    %5610 = vmatprep.subr.mxu0 0.0
    %5611 = vmatpush1.msra.mxu0 %v5160
    %5612 = vmatprep.subr.mxu0 0.0
    %5613 = vmatpush1.msra.mxu0 %v5161
    %5614 = vmatprep.subr.mxu0 0.0
    %5615 = vmatpush1.msra.mxu0 %v5162
    %5616 = vmatprep.subr.mxu0 0.0
    %5617 = vmatpush1.msra.mxu0 %v5163
    %5618 = vmatprep.subr.mxu0 0.0
    %5619 = vmatpush1.msra.mxu0 %v5164
    %5620 = vmatprep.subr.mxu0 0.0
    %5621 = vmatpush1.msra.mxu0 %v5165
    %5622 = vmatprep.subr.mxu0 0.0
    %5623 = vmatpush1.msra.mxu0 %v5166
    %5624 = vmatprep.subr.mxu0 0.0
    %5625 = vmatpush1.msra.mxu0 %v5167
    %5626 = vmatprep.subr.mxu0 0.0
    %5627 = vmatpush1.msra.mxu0 %v5168
    %5628 = vmatprep.subr.mxu0 0.0
    %5629 = vmatpush1.msra.mxu0 %v5169
    %5630 = vmatprep.subr.mxu0 0.0
    %5631 = vmatpush1.msra.mxu0 %v5170
    %5632 = vmatprep.subr.mxu0 0.0
    %5633 = vmatpush1.msra.mxu0 %v5171
    %5634 = vmatprep.subr.mxu0 0.0
    %5635 = vmatpush1.msra.mxu0 %v5172
    %5636 = vmatprep.subr.mxu0 0.0
    %5637 = vmatpush1.msra.mxu0 %v5173
    %5638 = vmatprep.subr.mxu0 0.0
    %5639 = vmatpush1.msra.mxu0 %v5174
    %5640 = vmatprep.subr.mxu0 0.0
    %5641 = vmatpush1.msra.mxu0 %v5175
    %5642 = vmatprep.subr.mxu0 0.0
    %5643 = vmatpush1.msra.mxu0 %v5176
    %5644 = vmatprep.subr.mxu0 0.0
    %5645 = vmatpush1.msra.mxu0 %v5177
    %5646 = vmatprep.subr.mxu0 0.0
    %5647 = vmatpush1.msra.mxu0 %v5178
    %5648 = vmatprep.subr.mxu0 0.0
    %5649 = vmatpush1.msra.mxu0 %v5179
    %5650 = vmatprep.subr.mxu0 0.0
    %5651 = vmatpush1.msra.mxu0 %v5180
    %5652 = vmatprep.subr.mxu0 0.0
    %5653 = vmatpush1.msra.mxu0 %v5181
    %5654 = vmatprep.subr.mxu0 0.0
    %5655 = vmatpush1.msra.mxu0 %v5182
    %5656 = vmatprep.subr.mxu0 0.0
    %5657 = vmatpush1.msra.mxu0 %v5183
    %5658 = vmatprep.subr.mxu0 0.0
    %5659 = vmatpush1.msra.mxu0 %v5184
    %5660 = vmatprep.subr.mxu0 0.0
    %5661 = vmatpush1.msra.mxu0 %v5185
    %5662 = vmatprep.subr.mxu0 0.0
    %5663 = vmatpush1.msra.mxu0 %v5186
    %5664 = vmatprep.subr.mxu0 0.0
    %5665 = vmatpush1.msra.mxu0 %v5187
    %5666 = vmatprep.subr.mxu0 0.0
    %5667 = vmatpush1.msra.mxu0 %v5188
    %5668 = vmatprep.mubr.f32.mxu0 %v4992
    %5669 = vmatmul.mubr.f32.gmra.mrb[0].mxu0 %v4991
    %v5670 = vpop.f32.mrb[0].mxu0
    %v5671 = vadd.f32 %v5601, %v5670
    %v5672 = vpop.f32.mrb[0].mxu0
    %5673 = vdwg.mxu0
    %5674 = vmatprep.subr.mxu0 0.0
    %5675 = vmatpush1.msra.mxu0 %v5189
    %5676 = vmatprep.subr.mxu0 0.0
    %5677 = vmatpush1.msra.mxu0 %v5190
    %5678 = vmatprep.subr.mxu0 0.0
    %5679 = vmatpush1.msra.mxu0 %v5191
    %5680 = vmatprep.subr.mxu0 0.0
    %5681 = vmatpush1.msra.mxu0 %v5192
    %5682 = vmatprep.subr.mxu0 0.0
    %5683 = vmatpush1.msra.mxu0 %v5193
    %5684 = vmatprep.subr.mxu0 0.0
    %5685 = vmatpush1.msra.mxu0 %v5194
    %5686 = vmatprep.subr.mxu0 0.0
    %5687 = vmatpush1.msra.mxu0 %v5195
    %5688 = vmatprep.subr.mxu0 0.0
    %5689 = vmatpush1.msra.mxu0 %v5196
    %5690 = vmatprep.subr.mxu0 0.0
    %5691 = vmatpush1.msra.mxu0 %v5197
    %5692 = vmatprep.subr.mxu0 0.0
    %5693 = vmatpush1.msra.mxu0 %v5198
    %5694 = vmatprep.subr.mxu0 0.0
    %5695 = vmatpush1.msra.mxu0 %v5199
    %5696 = vmatprep.subr.mxu0 0.0
    %5697 = vmatpush1.msra.mxu0 %v5200
    %5698 = vmatprep.subr.mxu0 0.0
    %5699 = vmatpush1.msra.mxu0 %v5201
    %5700 = vmatprep.subr.mxu0 0.0
    %5701 = vmatpush1.msra.mxu0 %v5202
    %5702 = vmatprep.subr.mxu0 0.0
    %5703 = vmatpush1.msra.mxu0 %v5203
    %5704 = vmatprep.subr.mxu0 0.0
    %5705 = vmatpush1.msra.mxu0 %v5204
    %5706 = vmatprep.subr.mxu0 0.0
    %5707 = vmatpush1.msra.mxu0 %v5205
    %5708 = vmatprep.subr.mxu0 0.0
    %5709 = vmatpush1.msra.mxu0 %v5206
    %5710 = vmatprep.subr.mxu0 0.0
    %5711 = vmatpush1.msra.mxu0 %v5207
    %5712 = vmatprep.subr.mxu0 0.0
    %5713 = vmatpush1.msra.mxu0 %v5208
    %5714 = vmatprep.subr.mxu0 0.0
    %5715 = vmatpush1.msra.mxu0 %v5209
    %5716 = vmatprep.subr.mxu0 0.0
    %5717 = vmatpush1.msra.mxu0 %v5210
    %5718 = vmatprep.subr.mxu0 0.0
    %5719 = vmatpush1.msra.mxu0 %v5211
    %5720 = vmatprep.subr.mxu0 0.0
    %5721 = vmatpush1.msra.mxu0 %v5212
    %5722 = vmatprep.subr.mxu0 0.0
    %5723 = vmatpush1.msra.mxu0 %v5213
    %5724 = vmatprep.subr.mxu0 0.0
    %5725 = vmatpush1.msra.mxu0 %v5214
    %5726 = vmatprep.subr.mxu0 0.0
    %5727 = vmatpush1.msra.mxu0 %v5215
    %5728 = vmatprep.subr.mxu0 0.0
    %5729 = vmatpush1.msra.mxu0 %v5216
    %5730 = vmatprep.subr.mxu0 0.0
    %5731 = vmatpush1.msra.mxu0 %v5217
    %5732 = vmatprep.subr.mxu0 0.0
    %5733 = vmatpush1.msra.mxu0 %v5218
    %5734 = vmatprep.subr.mxu0 0.0
    %5735 = vmatpush1.msra.mxu0 %v5219
    %5736 = vmatprep.subr.mxu0 0.0
    %5737 = vmatpush1.msra.mxu0 %v5220
    %5738 = vmatprep.mubr.f32.mxu0 %v4994
    %5739 = vmatmul.mubr.f32.gmra.mrb[0].mxu0 %v4993
    %v5740 = vpop.f32.mrb[0].mxu0
    %v5741 = vadd.f32 %v5671, %v5740
    %v5742 = vpop.f32.mrb[0].mxu0
    %5743 = vdwg.mxu0
    %5744 = vmatprep.subr.mxu0 0.0
    %5745 = vmatpush1.msra.mxu0 %v5221
    %5746 = vmatprep.subr.mxu0 0.0
    %5747 = vmatpush1.msra.mxu0 %v5222
    %5748 = vmatprep.subr.mxu0 0.0
    %5749 = vmatpush1.msra.mxu0 %v5223
    %5750 = vmatprep.subr.mxu0 0.0
    %5751 = vmatpush1.msra.mxu0 %v5224
    %5752 = vmatprep.subr.mxu0 0.0
    %5753 = vmatpush1.msra.mxu0 %v5225
    %5754 = vmatprep.subr.mxu0 0.0
    %5755 = vmatpush1.msra.mxu0 %v5226
    %5756 = vmatprep.subr.mxu0 0.0
    %5757 = vmatpush1.msra.mxu0 %v5227
    %5758 = vmatprep.subr.mxu0 0.0
    %5759 = vmatpush1.msra.mxu0 %v5228
    %5760 = vmatprep.subr.mxu0 0.0
    %5761 = vmatpush1.msra.mxu0 %v5229
    %5762 = vmatprep.subr.mxu0 0.0
    %5763 = vmatpush1.msra.mxu0 %v5230
    %5764 = vmatprep.subr.mxu0 0.0
    %5765 = vmatpush1.msra.mxu0 %v5231
    %5766 = vmatprep.subr.mxu0 0.0
    %5767 = vmatpush1.msra.mxu0 %v5232
    %5768 = vmatprep.subr.mxu0 0.0
    %5769 = vmatpush1.msra.mxu0 %v5233
    %5770 = vmatprep.subr.mxu0 0.0
    %5771 = vmatpush1.msra.mxu0 %v5234
    %5772 = vmatprep.subr.mxu0 0.0
    %5773 = vmatpush1.msra.mxu0 %v5235
    %5774 = vmatprep.subr.mxu0 0.0
    %5775 = vmatpush1.msra.mxu0 %v5236
    %5776 = vmatprep.subr.mxu0 0.0
    %5777 = vmatpush1.msra.mxu0 %v5237
    %5778 = vmatprep.subr.mxu0 0.0
    %5779 = vmatpush1.msra.mxu0 %v5238
    %5780 = vmatprep.subr.mxu0 0.0
    %5781 = vmatpush1.msra.mxu0 %v5239
    %5782 = vmatprep.subr.mxu0 0.0
    %5783 = vmatpush1.msra.mxu0 %v5240
    %5784 = vmatprep.subr.mxu0 0.0
    %5785 = vmatpush1.msra.mxu0 %v5241
    %5786 = vmatprep.subr.mxu0 0.0
    %5787 = vmatpush1.msra.mxu0 %v5242
    %5788 = vmatprep.subr.mxu0 0.0
    %5789 = vmatpush1.msra.mxu0 %v5243
    %5790 = vmatprep.subr.mxu0 0.0
    %5791 = vmatpush1.msra.mxu0 %v5244
    %5792 = vmatprep.subr.mxu0 0.0
    %5793 = vmatpush1.msra.mxu0 %v5245
    %5794 = vmatprep.subr.mxu0 0.0
    %5795 = vmatpush1.msra.mxu0 %v5246
    %5796 = vmatprep.subr.mxu0 0.0
    %5797 = vmatpush1.msra.mxu0 %v5247
    %5798 = vmatprep.subr.mxu0 0.0
    %5799 = vmatpush1.msra.mxu0 %v5248
    %5800 = vmatprep.subr.mxu0 0.0
    %5801 = vmatpush1.msra.mxu0 %v5249
    %5802 = vmatprep.subr.mxu0 0.0
    %5803 = vmatpush1.msra.mxu0 %v5250
    %5804 = vmatprep.subr.mxu0 0.0
    %5805 = vmatpush1.msra.mxu0 %v5251
    %5806 = vmatprep.subr.mxu0 0.0
    %5807 = vmatpush1.msra.mxu0 %v5252
    %5808 = vmatprep.mubr.f32.mxu0 %v4996
    %5809 = vmatmul.mubr.f32.gmra.mrb[0].mxu0 %v4995
    %v5810 = vpop.f32.mrb[0].mxu0
    %v5811 = vadd.f32 %v5741, %v5810
    %v5812 = vpop.f32.mrb[0].mxu0
    %5813 = vdwg.mxu0
    %5814 = vst [vmem:[#allocation14] sm:$0x1] %v5811
    // Predicated region
    $region58: #{tpu_custom_call.1} parent=1 // pred_check
      _
    $region59: #{tpu_custom_call.1} parent=1 // pred_check_branch
      %5816 = sbr.rel (0) target = $region61
    $region60: #{tpu_custom_call.1} parent=1 // pred_region
      %s5818 = ssub.s32 16, 16
      %5819 = vsyncadd [#allocation4], %s5818
      %s5821 = sshll.u32 [#allocation14], 4
      %s5822 = int_to_ptr.vmem [resolvable:$true] %s5821
      %5824 = dma.vmem_to_hbm [thread:$0]  %s5822, 16, %s7, [#allocation4]
    $region61: #{tpu_custom_call.1} parent=1 // pred_fallthru
      _
    // Predicated region
    $region62: #{tpu_custom_call.1} parent=1 // pred_check
      _
    $region63: #{tpu_custom_call.1} parent=1 // pred_check_branch
      %5826 = sbr.rel (0) target = $region65
    $region64: #{tpu_custom_call.1} parent=1 // pred_region
      %5827 = dma.done [#allocation4], 16
    $region65: #{tpu_custom_call.1} parent=1 // pred_fallthru
      _
    %5828 = vsyncpa [#allocation3], 1
    %5829 = vsyncpa [#allocation6], 1
    %5830 = vsyncpa [#allocation9], 1
    %5831 = vsyncpa [#allocation12], 1
    %5832 = vsyncpa [#allocation4], 1

</llo_original>
